<compile_context>
chip_gen: v7x
topology: tpu7x:2x2x1
jax: 0.10.0
libtpu: 0.0.40
codegen_flags: <defaults>
</compile_context>

<pallas_src>
import math
import jax
import jax.numpy as jnp
import numpy as np
from jax.experimental import pallas as pl
from jax.experimental.pallas import tpu as pltpu

VOCAB = 80
EMBED = 8
HIDDEN = 256
LAYERS = 2
V_PAD = 128  # lane-dense padded logits width


# --------------------------- Fused LSTM+Linear kernel --------------------------
def _fused_kernel(g0_ref, whh0_ref, w1_ref, b1_ref, wout_ref, bout_ref, o_ref):
    """g0_ref: (T, Bp, 4H) f32 precomputed layer-0 gates (x@W_ih0 + b0 via LUT).
    whh0: (H, 4H) bf16; w1 = [W_ih1; W_hh1]: (2H, 4H) bf16; all gate-order [i,f,o,g]."""
    T = g0_ref.shape[0]
    Bp = g0_ref.shape[1]
    H = HIDDEN
    H3 = 3 * H

    whh0 = whh0_ref[...]   # (H, 4H)  bf16
    w1 = w1_ref[...]       # (2H, 4H) bf16
    b1 = b1_ref[...]       # (1, 4H)  f32

    def cell(gates, c):
        # gates columns: [i | f | o | g]; one sigmoid slab + one tanh slab.
        ifo = jax.nn.sigmoid(gates[:, :H3])
        g = jnp.tanh(gates[:, H3:])
        i = ifo[:, 0:H]
        f = ifo[:, H:2 * H]
        o = ifo[:, 2 * H:H3]
        c_new = f * c + i * g
        h_new = o * jnp.tanh(c_new)
        return h_new, c_new

    def step(t, carry):
        h0, h1, c0, c1 = carry  # h0, h1: (Bp, H) bf16; c0, c1: (Bp, H) f32
        # Layer 0: input projection + bias already folded into g0_ref[t].
        gates0 = g0_ref[t] + jnp.dot(h0, whh0, preferred_element_type=jnp.float32)
        h0f, c0 = cell(gates0, c0)
        h0 = h0f.astype(jnp.bfloat16)
        # Layer 1: fused input+hidden projection, one MXU call with K=2H.
        x1 = jnp.concatenate([h0, h1], axis=-1)            # (Bp, 2H) bf16
        gates1 = jnp.dot(x1, w1, preferred_element_type=jnp.float32) + b1
        h1f, c1 = cell(gates1, c1)
        h1 = h1f.astype(jnp.bfloat16)
        return h0, h1, c0, c1

    zb = jnp.zeros((Bp, H), jnp.bfloat16)
    zf = jnp.zeros((Bp, H), jnp.float32)
    _, h1, _, _ = jax.lax.fori_loop(0, T, step, (zb, zb, zf, zf), unroll=True)

    # Final Linear on the last hidden state (Dropout is identity in eval mode).
    o_ref[...] = (jnp.dot(h1, wout_ref[...], preferred_element_type=jnp.float32)
                  + bout_ref[...])


# ------------------------------ Parameter prep ---------------------------------
def prepare_params(params):
    """One-time weight prep: gate reorder [i,f,g,o]->[i,f,o,g], transposes,
    layer-0 embedding+W_ih+bias folded into a LUT, layer-1 weight fusion,
    bf16 casts, V padding."""
    H = HIDDEN

    def reorder(a):  # leading axis is the 4H gate axis
        return jnp.concatenate([a[:2 * H], a[3 * H:], a[2 * H:3 * H]], axis=0)

    prep = {}
    # Layer 0: lut[v] = embed[v] @ W_ih0^T + (b_ih0 + b_hh0), gate-reordered.
    w_ih0 = reorder(params["w_ih_l0"])                         # (4H, E)
    b0 = reorder(params["b_ih_l0"] + params["b_hh_l0"])        # (4H,)
    prep["lut"] = (jnp.dot(params["embed"], w_ih0.T,
                           precision=jax.lax.Precision.HIGHEST) + b0)  # (VOCAB, 4H) f32

    prep["whh0"] = reorder(params["w_hh_l0"]).T.astype(jnp.bfloat16)   # (H, 4H)

    # Layer 1: fuse input + hidden projections into one (2H, 4H) weight.
    wih1 = reorder(params["w_ih_l1"]).T                                # (H, 4H)
    whh1 = reorder(params["w_hh_l1"]).T                                # (H, 4H)
    prep["w1"] = jnp.concatenate([wih1, whh1], axis=0).astype(jnp.bfloat16)  # (2H, 4H)
    prep["b1"] = reorder(params["b_ih_l1"] + params["b_hh_l1"]).reshape(1, 4 * H)

    # Output Linear, padded V -> 128 for lane-dense stores.
    wout_p = jnp.zeros((V_PAD, H), jnp.float32).at[:VOCAB].set(params["out_w"])
    bout_p = jnp.zeros((V_PAD,), jnp.float32).at[:VOCAB].set(params["out_b"])
    prep["wout"] = wout_p.T.astype(jnp.bfloat16)               # (H, V_PAD)
    prep["bout"] = bout_p.reshape(1, V_PAD)                    # (1, V_PAD) f32
    return prep


# ------------------------------ Model forward ----------------------------------
def char_lstm_forward(prep, tokens):
    """tokens: (B, T) int32 -> logits (B, VOCAB) f32."""
    B, T = tokens.shape
    Bp = max(8, ((B + 7) // 8) * 8)  # sublane-aligned batch

    # Layer-0 gate precompute via LUT gather (glue), time-major, batch-padded.
    g0 = prep["lut"][tokens]                      # (B, T, 4H) f32
    g0 = jnp.transpose(g0, (1, 0, 2))             # (T, B, 4H)
    g0 = jnp.pad(g0, ((0, 0), (0, Bp - B), (0, 0)))

    vmem = pl.BlockSpec(memory_space=pltpu.MemorySpace.VMEM)
    logits_p = pl.pallas_call(
        _fused_kernel,
        out_shape=jax.ShapeDtypeStruct((Bp, V_PAD), jnp.float32),
        in_specs=[vmem] * 6,
        out_specs=vmem,
    )(g0, prep["whh0"], prep["w1"], prep["b1"], prep["wout"], prep["bout"])

    return logits_p[:B, :VOCAB]


# --------------------------- Pure-JAX reference --------------------------------
def char_lstm_reference(params, tokens):
    emb = params["embed"][tokens]                 # (B, T, E)
    B, T, _ = emb.shape
    x = emb
    for l in range(LAYERS):
        w_ih = params[f"w_ih_l{l}"]
        w_hh = params[f"w_hh_l{l}"]
        b = params[f"b_ih_l{l}"] + params[f"b_hh_l{l}"]
        h = jnp.zeros((B, HIDDEN), jnp.float32)
        c = jnp.zeros((B, HIDDEN), jnp.float32)
        outs = []
        for t in range(T):
            gates = (
                jnp.einsum("bf,gf->bg", x[:, t, :], w_ih, precision="highest")
                + jnp.einsum("bh,gh->bg", h, w_hh, precision="highest")
                + b
            )
            i = jax.nn.sigmoid(gates[:, 0 * HIDDEN:1 * HIDDEN])
            f = jax.nn.sigmoid(gates[:, 1 * HIDDEN:2 * HIDDEN])
            g = jnp.tanh(gates[:, 2 * HIDDEN:3 * HIDDEN])
            o = jax.nn.sigmoid(gates[:, 3 * HIDDEN:4 * HIDDEN])
            c = f * c + i * g
            h = o * jnp.tanh(c)
            outs.append(h)
        x = jnp.stack(outs, axis=1)
    return (
        jnp.einsum("bh,vh->bv", x[:, -1, :], params["out_w"], precision="highest")
        + params["out_b"]
    )


# -------------------------------- Parameters -----------------------------------
def init_params(key):
    ks = jax.random.split(key, 12)
    stdv = 1.0 / math.sqrt(HIDDEN)

    def u(k, shape, bound):
        return jax.random.uniform(k, shape, jnp.float32, -bound, bound)

    params = {"embed": jax.random.normal(ks[0], (VOCAB, EMBED), jnp.float32)}
    ki = 1
    for l in range(LAYERS):
        in_f = EMBED if l == 0 else HIDDEN
        params[f"w_ih_l{l}"] = u(ks[ki], (4 * HIDDEN, in_f), stdv); ki += 1
        params[f"w_hh_l{l}"] = u(ks[ki], (4 * HIDDEN, HIDDEN), stdv); ki += 1
        params[f"b_ih_l{l}"] = u(ks[ki], (4 * HIDDEN,), stdv); ki += 1
        params[f"b_hh_l{l}"] = u(ks[ki], (4 * HIDDEN,), stdv); ki += 1
    params["out_w"] = u(ks[ki], (VOCAB, HIDDEN), stdv); ki += 1
    params["out_b"] = u(ks[ki], (VOCAB,), stdv)
    return params


if __name__ == "__main__":
    key = jax.random.PRNGKey(0)
    pkey, tkey = jax.random.split(key)
    params = init_params(pkey)
    prep = jax.tree_util.tree_map(jax.block_until_ready, prepare_params(params))

    B, T = 2, 8
    tokens = jax.random.randint(tkey, (B, T), 0, VOCAB, dtype=jnp.int32)

    fwd = jax.jit(char_lstm_forward)
    logits = jax.block_until_ready(fwd(prep, tokens))
    assert logits.shape == (B, VOCAB) and logits.dtype == jnp.float32

    ref = jax.block_until_ready(char_lstm_reference(params, tokens))
    np.testing.assert_allclose(np.asarray(logits), np.asarray(ref),
                               rtol=2e-2, atol=2e-2)

    print("KERNEL_OK")
</pallas_src>

<mosaic_0001>
module attributes {stable_mosaic.version = 11 : i64} {
  func.func @_fused_kernel(%arg0: memref<8x8x1024xf32, #tpu.memory_space<vmem>>, %arg1: memref<256x1024xbf16, #tpu.memory_space<vmem>>, %arg2: memref<512x1024xbf16, #tpu.memory_space<vmem>>, %arg3: memref<1x1024xf32, #tpu.memory_space<vmem>>, %arg4: memref<256x128xbf16, #tpu.memory_space<vmem>>, %arg5: memref<1x128xf32, #tpu.memory_space<vmem>>, %arg6: memref<8x128xf32, #tpu.memory_space<vmem>>) attributes {dimension_semantics = [], scalar_prefetch = 0 : i64, scratch_operands = 0 : i64, tpu.core_type = #tpu.core_type<tc>} {
    %c0 = arith.constant 0 : index
    %c0_0 = arith.constant 0 : index
    %0 = vector.load %arg1[%c0, %c0_0] : memref<256x1024xbf16, #tpu.memory_space<vmem>>, vector<256x1024xbf16>
    %c0_1 = arith.constant 0 : index
    %c0_2 = arith.constant 0 : index
    %1 = vector.load %arg2[%c0_1, %c0_2] : memref<512x1024xbf16, #tpu.memory_space<vmem>>, vector<512x1024xbf16>
    %c0_3 = arith.constant 0 : index
    %c0_4 = arith.constant 0 : index
    %2 = vector.load %arg3[%c0_3, %c0_4] : memref<1x1024xf32, #tpu.memory_space<vmem>>, vector<1x1024xf32>
    %cst = arith.constant 0.000000e+00 : bf16
    %3 = vector.broadcast %cst : bf16 to vector<8x256xbf16>
    %cst_5 = arith.constant 0.000000e+00 : f32
    %4 = vector.broadcast %cst_5 : f32 to vector<8x256xf32>
    %c0_i32 = arith.constant 0 : i32
    %5 = arith.index_cast %c0_i32 : i32 to index
    %c0_6 = arith.constant 0 : index
    %c0_7 = arith.constant 0 : index
    %6 = vector.load %arg0[%5, %c0_6, %c0_7] : memref<8x8x1024xf32, #tpu.memory_space<vmem>>, vector<1x8x1024xf32>
    %7 = vector.shape_cast %6 : vector<1x8x1024xf32> to vector<8x1024xf32>
    %cst_8 = arith.constant dense<0.000000e+00> : vector<8x1024xf32>
    %8 = tpu.matmul %3, %0, %cst_8 {dimension_numbers = #tpu.dot_dimension_numbers<[1], [0], [0], [1], [0, 0, 1, 1], [], []>} : vector<8x256xbf16>, vector<256x1024xbf16>, vector<8x1024xf32> -> vector<8x1024xf32>
    %9 = arith.addf %7, %8 : vector<8x1024xf32>
    %10 = vector.extract_strided_slice %9 {offsets = [0, 0], sizes = [8, 768], strides = [1, 1]} : vector<8x1024xf32> to vector<8x768xf32>
    %11 = arith.negf %10 : vector<8x768xf32>
    %12 = math.exp %11 : vector<8x768xf32>
    %cst_9 = arith.constant 1.000000e+00 : f32
    %13 = vector.broadcast %cst_9 : f32 to vector<8x768xf32>
    %14 = arith.addf %13, %12 : vector<8x768xf32>
    %15 = arith.divf %13, %14 : vector<8x768xf32>
    %16 = vector.extract_strided_slice %9 {offsets = [0, 768], sizes = [8, 256], strides = [1, 1]} : vector<8x1024xf32> to vector<8x256xf32>
    %17 = math.tanh %16 : vector<8x256xf32>
    %18 = vector.extract_strided_slice %15 {offsets = [0, 0], sizes = [8, 256], strides = [1, 1]} : vector<8x768xf32> to vector<8x256xf32>
    %19 = vector.extract_strided_slice %15 {offsets = [0, 256], sizes = [8, 256], strides = [1, 1]} : vector<8x768xf32> to vector<8x256xf32>
    %20 = vector.extract_strided_slice %15 {offsets = [0, 512], sizes = [8, 256], strides = [1, 1]} : vector<8x768xf32> to vector<8x256xf32>
    %21 = arith.mulf %19, %4 : vector<8x256xf32>
    %22 = arith.mulf %18, %17 : vector<8x256xf32>
    %23 = arith.addf %21, %22 : vector<8x256xf32>
    %24 = math.tanh %23 : vector<8x256xf32>
    %25 = arith.mulf %20, %24 : vector<8x256xf32>
    %26 = arith.truncf %25 : vector<8x256xf32> to vector<8x256xbf16>
    %27 = tpu.concatenate %26, %3 in 1 : vector<8x256xbf16>, vector<8x256xbf16> -> vector<8x512xbf16>
    %cst_10 = arith.constant dense<0.000000e+00> : vector<8x1024xf32>
    %28 = tpu.matmul %27, %1, %cst_10 {dimension_numbers = #tpu.dot_dimension_numbers<[1], [0], [0], [1], [0, 0, 1, 1], [], []>} : vector<8x512xbf16>, vector<512x1024xbf16>, vector<8x1024xf32> -> vector<8x1024xf32>
    %29 = vector.broadcast %2 : vector<1x1024xf32> to vector<8x1024xf32>
    %30 = arith.addf %28, %29 : vector<8x1024xf32>
    %31 = vector.extract_strided_slice %30 {offsets = [0, 0], sizes = [8, 768], strides = [1, 1]} : vector<8x1024xf32> to vector<8x768xf32>
    %32 = arith.negf %31 : vector<8x768xf32>
    %33 = math.exp %32 : vector<8x768xf32>
    %cst_11 = arith.constant 1.000000e+00 : f32
    %34 = vector.broadcast %cst_11 : f32 to vector<8x768xf32>
    %35 = arith.addf %34, %33 : vector<8x768xf32>
    %36 = arith.divf %34, %35 : vector<8x768xf32>
    %37 = vector.extract_strided_slice %30 {offsets = [0, 768], sizes = [8, 256], strides = [1, 1]} : vector<8x1024xf32> to vector<8x256xf32>
    %38 = math.tanh %37 : vector<8x256xf32>
    %39 = vector.extract_strided_slice %36 {offsets = [0, 0], sizes = [8, 256], strides = [1, 1]} : vector<8x768xf32> to vector<8x256xf32>
    %40 = vector.extract_strided_slice %36 {offsets = [0, 256], sizes = [8, 256], strides = [1, 1]} : vector<8x768xf32> to vector<8x256xf32>
    %41 = vector.extract_strided_slice %36 {offsets = [0, 512], sizes = [8, 256], strides = [1, 1]} : vector<8x768xf32> to vector<8x256xf32>
    %42 = arith.mulf %40, %4 : vector<8x256xf32>
    %43 = arith.mulf %39, %38 : vector<8x256xf32>
    %44 = arith.addf %42, %43 : vector<8x256xf32>
    %45 = math.tanh %44 : vector<8x256xf32>
    %46 = arith.mulf %41, %45 : vector<8x256xf32>
    %47 = arith.truncf %46 : vector<8x256xf32> to vector<8x256xbf16>
    %c1_i32 = arith.constant 1 : i32
    %48 = arith.index_cast %c1_i32 : i32 to index
    %c0_12 = arith.constant 0 : index
    %c0_13 = arith.constant 0 : index
    %49 = vector.load %arg0[%48, %c0_12, %c0_13] : memref<8x8x1024xf32, #tpu.memory_space<vmem>>, vector<1x8x1024xf32>
    %50 = vector.shape_cast %49 : vector<1x8x1024xf32> to vector<8x1024xf32>
    %cst_14 = arith.constant dense<0.000000e+00> : vector<8x1024xf32>
    %51 = tpu.matmul %26, %0, %cst_14 {dimension_numbers = #tpu.dot_dimension_numbers<[1], [0], [0], [1], [0, 0, 1, 1], [], []>} : vector<8x256xbf16>, vector<256x1024xbf16>, vector<8x1024xf32> -> vector<8x1024xf32>
    %52 = arith.addf %50, %51 : vector<8x1024xf32>
    %53 = vector.extract_strided_slice %52 {offsets = [0, 0], sizes = [8, 768], strides = [1, 1]} : vector<8x1024xf32> to vector<8x768xf32>
    %54 = arith.negf %53 : vector<8x768xf32>
    %55 = math.exp %54 : vector<8x768xf32>
    %cst_15 = arith.constant 1.000000e+00 : f32
    %56 = vector.broadcast %cst_15 : f32 to vector<8x768xf32>
    %57 = arith.addf %56, %55 : vector<8x768xf32>
    %58 = arith.divf %56, %57 : vector<8x768xf32>
    %59 = vector.extract_strided_slice %52 {offsets = [0, 768], sizes = [8, 256], strides = [1, 1]} : vector<8x1024xf32> to vector<8x256xf32>
    %60 = math.tanh %59 : vector<8x256xf32>
    %61 = vector.extract_strided_slice %58 {offsets = [0, 0], sizes = [8, 256], strides = [1, 1]} : vector<8x768xf32> to vector<8x256xf32>
    %62 = vector.extract_strided_slice %58 {offsets = [0, 256], sizes = [8, 256], strides = [1, 1]} : vector<8x768xf32> to vector<8x256xf32>
    %63 = vector.extract_strided_slice %58 {offsets = [0, 512], sizes = [8, 256], strides = [1, 1]} : vector<8x768xf32> to vector<8x256xf32>
    %64 = arith.mulf %62, %23 : vector<8x256xf32>
    %65 = arith.mulf %61, %60 : vector<8x256xf32>
    %66 = arith.addf %64, %65 : vector<8x256xf32>
    %67 = math.tanh %66 : vector<8x256xf32>
    %68 = arith.mulf %63, %67 : vector<8x256xf32>
    %69 = arith.truncf %68 : vector<8x256xf32> to vector<8x256xbf16>
    %70 = tpu.concatenate %69, %47 in 1 : vector<8x256xbf16>, vector<8x256xbf16> -> vector<8x512xbf16>
    %cst_16 = arith.constant dense<0.000000e+00> : vector<8x1024xf32>
    %71 = tpu.matmul %70, %1, %cst_16 {dimension_numbers = #tpu.dot_dimension_numbers<[1], [0], [0], [1], [0, 0, 1, 1], [], []>} : vector<8x512xbf16>, vector<512x1024xbf16>, vector<8x1024xf32> -> vector<8x1024xf32>
    %72 = vector.broadcast %2 : vector<1x1024xf32> to vector<8x1024xf32>
    %73 = arith.addf %71, %72 : vector<8x1024xf32>
    %74 = vector.extract_strided_slice %73 {offsets = [0, 0], sizes = [8, 768], strides = [1, 1]} : vector<8x1024xf32> to vector<8x768xf32>
    %75 = arith.negf %74 : vector<8x768xf32>
    %76 = math.exp %75 : vector<8x768xf32>
    %cst_17 = arith.constant 1.000000e+00 : f32
    %77 = vector.broadcast %cst_17 : f32 to vector<8x768xf32>
    %78 = arith.addf %77, %76 : vector<8x768xf32>
    %79 = arith.divf %77, %78 : vector<8x768xf32>
    %80 = vector.extract_strided_slice %73 {offsets = [0, 768], sizes = [8, 256], strides = [1, 1]} : vector<8x1024xf32> to vector<8x256xf32>
    %81 = math.tanh %80 : vector<8x256xf32>
    %82 = vector.extract_strided_slice %79 {offsets = [0, 0], sizes = [8, 256], strides = [1, 1]} : vector<8x768xf32> to vector<8x256xf32>
    %83 = vector.extract_strided_slice %79 {offsets = [0, 256], sizes = [8, 256], strides = [1, 1]} : vector<8x768xf32> to vector<8x256xf32>
    %84 = vector.extract_strided_slice %79 {offsets = [0, 512], sizes = [8, 256], strides = [1, 1]} : vector<8x768xf32> to vector<8x256xf32>
    %85 = arith.mulf %83, %44 : vector<8x256xf32>
    %86 = arith.mulf %82, %81 : vector<8x256xf32>
    %87 = arith.addf %85, %86 : vector<8x256xf32>
    %88 = math.tanh %87 : vector<8x256xf32>
    %89 = arith.mulf %84, %88 : vector<8x256xf32>
    %90 = arith.truncf %89 : vector<8x256xf32> to vector<8x256xbf16>
    %c2_i32 = arith.constant 2 : i32
    %91 = arith.index_cast %c2_i32 : i32 to index
    %c0_18 = arith.constant 0 : index
    %c0_19 = arith.constant 0 : index
    %92 = vector.load %arg0[%91, %c0_18, %c0_19] : memref<8x8x1024xf32, #tpu.memory_space<vmem>>, vector<1x8x1024xf32>
    %93 = vector.shape_cast %92 : vector<1x8x1024xf32> to vector<8x1024xf32>
    %cst_20 = arith.constant dense<0.000000e+00> : vector<8x1024xf32>
    %94 = tpu.matmul %69, %0, %cst_20 {dimension_numbers = #tpu.dot_dimension_numbers<[1], [0], [0], [1], [0, 0, 1, 1], [], []>} : vector<8x256xbf16>, vector<256x1024xbf16>, vector<8x1024xf32> -> vector<8x1024xf32>
    %95 = arith.addf %93, %94 : vector<8x1024xf32>
    %96 = vector.extract_strided_slice %95 {offsets = [0, 0], sizes = [8, 768], strides = [1, 1]} : vector<8x1024xf32> to vector<8x768xf32>
    %97 = arith.negf %96 : vector<8x768xf32>
    %98 = math.exp %97 : vector<8x768xf32>
    %cst_21 = arith.constant 1.000000e+00 : f32
    %99 = vector.broadcast %cst_21 : f32 to vector<8x768xf32>
    %100 = arith.addf %99, %98 : vector<8x768xf32>
    %101 = arith.divf %99, %100 : vector<8x768xf32>
    %102 = vector.extract_strided_slice %95 {offsets = [0, 768], sizes = [8, 256], strides = [1, 1]} : vector<8x1024xf32> to vector<8x256xf32>
    %103 = math.tanh %102 : vector<8x256xf32>
    %104 = vector.extract_strided_slice %101 {offsets = [0, 0], sizes = [8, 256], strides = [1, 1]} : vector<8x768xf32> to vector<8x256xf32>
    %105 = vector.extract_strided_slice %101 {offsets = [0, 256], sizes = [8, 256], strides = [1, 1]} : vector<8x768xf32> to vector<8x256xf32>
    %106 = vector.extract_strided_slice %101 {offsets = [0, 512], sizes = [8, 256], strides = [1, 1]} : vector<8x768xf32> to vector<8x256xf32>
    %107 = arith.mulf %105, %66 : vector<8x256xf32>
    %108 = arith.mulf %104, %103 : vector<8x256xf32>
    %109 = arith.addf %107, %108 : vector<8x256xf32>
    %110 = math.tanh %109 : vector<8x256xf32>
    %111 = arith.mulf %106, %110 : vector<8x256xf32>
    %112 = arith.truncf %111 : vector<8x256xf32> to vector<8x256xbf16>
    %113 = tpu.concatenate %112, %90 in 1 : vector<8x256xbf16>, vector<8x256xbf16> -> vector<8x512xbf16>
    %cst_22 = arith.constant dense<0.000000e+00> : vector<8x1024xf32>
    %114 = tpu.matmul %113, %1, %cst_22 {dimension_numbers = #tpu.dot_dimension_numbers<[1], [0], [0], [1], [0, 0, 1, 1], [], []>} : vector<8x512xbf16>, vector<512x1024xbf16>, vector<8x1024xf32> -> vector<8x1024xf32>
    %115 = vector.broadcast %2 : vector<1x1024xf32> to vector<8x1024xf32>
    %116 = arith.addf %114, %115 : vector<8x1024xf32>
    %117 = vector.extract_strided_slice %116 {offsets = [0, 0], sizes = [8, 768], strides = [1, 1]} : vector<8x1024xf32> to vector<8x768xf32>
    %118 = arith.negf %117 : vector<8x768xf32>
    %119 = math.exp %118 : vector<8x768xf32>
    %cst_23 = arith.constant 1.000000e+00 : f32
    %120 = vector.broadcast %cst_23 : f32 to vector<8x768xf32>
    %121 = arith.addf %120, %119 : vector<8x768xf32>
    %122 = arith.divf %120, %121 : vector<8x768xf32>
    %123 = vector.extract_strided_slice %116 {offsets = [0, 768], sizes = [8, 256], strides = [1, 1]} : vector<8x1024xf32> to vector<8x256xf32>
    %124 = math.tanh %123 : vector<8x256xf32>
    %125 = vector.extract_strided_slice %122 {offsets = [0, 0], sizes = [8, 256], strides = [1, 1]} : vector<8x768xf32> to vector<8x256xf32>
    %126 = vector.extract_strided_slice %122 {offsets = [0, 256], sizes = [8, 256], strides = [1, 1]} : vector<8x768xf32> to vector<8x256xf32>
    %127 = vector.extract_strided_slice %122 {offsets = [0, 512], sizes = [8, 256], strides = [1, 1]} : vector<8x768xf32> to vector<8x256xf32>
    %128 = arith.mulf %126, %87 : vector<8x256xf32>
    %129 = arith.mulf %125, %124 : vector<8x256xf32>
    %130 = arith.addf %128, %129 : vector<8x256xf32>
    %131 = math.tanh %130 : vector<8x256xf32>
    %132 = arith.mulf %127, %131 : vector<8x256xf32>
    %133 = arith.truncf %132 : vector<8x256xf32> to vector<8x256xbf16>
    %c3_i32 = arith.constant 3 : i32
    %134 = arith.index_cast %c3_i32 : i32 to index
    %c0_24 = arith.constant 0 : index
    %c0_25 = arith.constant 0 : index
    %135 = vector.load %arg0[%134, %c0_24, %c0_25] : memref<8x8x1024xf32, #tpu.memory_space<vmem>>, vector<1x8x1024xf32>
    %136 = vector.shape_cast %135 : vector<1x8x1024xf32> to vector<8x1024xf32>
    %cst_26 = arith.constant dense<0.000000e+00> : vector<8x1024xf32>
    %137 = tpu.matmul %112, %0, %cst_26 {dimension_numbers = #tpu.dot_dimension_numbers<[1], [0], [0], [1], [0, 0, 1, 1], [], []>} : vector<8x256xbf16>, vector<256x1024xbf16>, vector<8x1024xf32> -> vector<8x1024xf32>
    %138 = arith.addf %136, %137 : vector<8x1024xf32>
    %139 = vector.extract_strided_slice %138 {offsets = [0, 0], sizes = [8, 768], strides = [1, 1]} : vector<8x1024xf32> to vector<8x768xf32>
    %140 = arith.negf %139 : vector<8x768xf32>
    %141 = math.exp %140 : vector<8x768xf32>
    %cst_27 = arith.constant 1.000000e+00 : f32
    %142 = vector.broadcast %cst_27 : f32 to vector<8x768xf32>
    %143 = arith.addf %142, %141 : vector<8x768xf32>
    %144 = arith.divf %142, %143 : vector<8x768xf32>
    %145 = vector.extract_strided_slice %138 {offsets = [0, 768], sizes = [8, 256], strides = [1, 1]} : vector<8x1024xf32> to vector<8x256xf32>
    %146 = math.tanh %145 : vector<8x256xf32>
    %147 = vector.extract_strided_slice %144 {offsets = [0, 0], sizes = [8, 256], strides = [1, 1]} : vector<8x768xf32> to vector<8x256xf32>
    %148 = vector.extract_strided_slice %144 {offsets = [0, 256], sizes = [8, 256], strides = [1, 1]} : vector<8x768xf32> to vector<8x256xf32>
    %149 = vector.extract_strided_slice %144 {offsets = [0, 512], sizes = [8, 256], strides = [1, 1]} : vector<8x768xf32> to vector<8x256xf32>
    %150 = arith.mulf %148, %109 : vector<8x256xf32>
    %151 = arith.mulf %147, %146 : vector<8x256xf32>
    %152 = arith.addf %150, %151 : vector<8x256xf32>
    %153 = math.tanh %152 : vector<8x256xf32>
    %154 = arith.mulf %149, %153 : vector<8x256xf32>
    %155 = arith.truncf %154 : vector<8x256xf32> to vector<8x256xbf16>
    %156 = tpu.concatenate %155, %133 in 1 : vector<8x256xbf16>, vector<8x256xbf16> -> vector<8x512xbf16>
    %cst_28 = arith.constant dense<0.000000e+00> : vector<8x1024xf32>
    %157 = tpu.matmul %156, %1, %cst_28 {dimension_numbers = #tpu.dot_dimension_numbers<[1], [0], [0], [1], [0, 0, 1, 1], [], []>} : vector<8x512xbf16>, vector<512x1024xbf16>, vector<8x1024xf32> -> vector<8x1024xf32>
    %158 = vector.broadcast %2 : vector<1x1024xf32> to vector<8x1024xf32>
    %159 = arith.addf %157, %158 : vector<8x1024xf32>
    %160 = vector.extract_strided_slice %159 {offsets = [0, 0], sizes = [8, 768], strides = [1, 1]} : vector<8x1024xf32> to vector<8x768xf32>
    %161 = arith.negf %160 : vector<8x768xf32>
    %162 = math.exp %161 : vector<8x768xf32>
    %cst_29 = arith.constant 1.000000e+00 : f32
    %163 = vector.broadcast %cst_29 : f32 to vector<8x768xf32>
    %164 = arith.addf %163, %162 : vector<8x768xf32>
    %165 = arith.divf %163, %164 : vector<8x768xf32>
    %166 = vector.extract_strided_slice %159 {offsets = [0, 768], sizes = [8, 256], strides = [1, 1]} : vector<8x1024xf32> to vector<8x256xf32>
    %167 = math.tanh %166 : vector<8x256xf32>
    %168 = vector.extract_strided_slice %165 {offsets = [0, 0], sizes = [8, 256], strides = [1, 1]} : vector<8x768xf32> to vector<8x256xf32>
    %169 = vector.extract_strided_slice %165 {offsets = [0, 256], sizes = [8, 256], strides = [1, 1]} : vector<8x768xf32> to vector<8x256xf32>
    %170 = vector.extract_strided_slice %165 {offsets = [0, 512], sizes = [8, 256], strides = [1, 1]} : vector<8x768xf32> to vector<8x256xf32>
    %171 = arith.mulf %169, %130 : vector<8x256xf32>
    %172 = arith.mulf %168, %167 : vector<8x256xf32>
    %173 = arith.addf %171, %172 : vector<8x256xf32>
    %174 = math.tanh %173 : vector<8x256xf32>
    %175 = arith.mulf %170, %174 : vector<8x256xf32>
    %176 = arith.truncf %175 : vector<8x256xf32> to vector<8x256xbf16>
    %c4_i32 = arith.constant 4 : i32
    %177 = arith.index_cast %c4_i32 : i32 to index
    %c0_30 = arith.constant 0 : index
    %c0_31 = arith.constant 0 : index
    %178 = vector.load %arg0[%177, %c0_30, %c0_31] : memref<8x8x1024xf32, #tpu.memory_space<vmem>>, vector<1x8x1024xf32>
    %179 = vector.shape_cast %178 : vector<1x8x1024xf32> to vector<8x1024xf32>
    %cst_32 = arith.constant dense<0.000000e+00> : vector<8x1024xf32>
    %180 = tpu.matmul %155, %0, %cst_32 {dimension_numbers = #tpu.dot_dimension_numbers<[1], [0], [0], [1], [0, 0, 1, 1], [], []>} : vector<8x256xbf16>, vector<256x1024xbf16>, vector<8x1024xf32> -> vector<8x1024xf32>
    %181 = arith.addf %179, %180 : vector<8x1024xf32>
    %182 = vector.extract_strided_slice %181 {offsets = [0, 0], sizes = [8, 768], strides = [1, 1]} : vector<8x1024xf32> to vector<8x768xf32>
    %183 = arith.negf %182 : vector<8x768xf32>
    %184 = math.exp %183 : vector<8x768xf32>
    %cst_33 = arith.constant 1.000000e+00 : f32
    %185 = vector.broadcast %cst_33 : f32 to vector<8x768xf32>
    %186 = arith.addf %185, %184 : vector<8x768xf32>
    %187 = arith.divf %185, %186 : vector<8x768xf32>
    %188 = vector.extract_strided_slice %181 {offsets = [0, 768], sizes = [8, 256], strides = [1, 1]} : vector<8x1024xf32> to vector<8x256xf32>
    %189 = math.tanh %188 : vector<8x256xf32>
    %190 = vector.extract_strided_slice %187 {offsets = [0, 0], sizes = [8, 256], strides = [1, 1]} : vector<8x768xf32> to vector<8x256xf32>
    %191 = vector.extract_strided_slice %187 {offsets = [0, 256], sizes = [8, 256], strides = [1, 1]} : vector<8x768xf32> to vector<8x256xf32>
    %192 = vector.extract_strided_slice %187 {offsets = [0, 512], sizes = [8, 256], strides = [1, 1]} : vector<8x768xf32> to vector<8x256xf32>
    %193 = arith.mulf %191, %152 : vector<8x256xf32>
    %194 = arith.mulf %190, %189 : vector<8x256xf32>
    %195 = arith.addf %193, %194 : vector<8x256xf32>
    %196 = math.tanh %195 : vector<8x256xf32>
    %197 = arith.mulf %192, %196 : vector<8x256xf32>
    %198 = arith.truncf %197 : vector<8x256xf32> to vector<8x256xbf16>
    %199 = tpu.concatenate %198, %176 in 1 : vector<8x256xbf16>, vector<8x256xbf16> -> vector<8x512xbf16>
    %cst_34 = arith.constant dense<0.000000e+00> : vector<8x1024xf32>
    %200 = tpu.matmul %199, %1, %cst_34 {dimension_numbers = #tpu.dot_dimension_numbers<[1], [0], [0], [1], [0, 0, 1, 1], [], []>} : vector<8x512xbf16>, vector<512x1024xbf16>, vector<8x1024xf32> -> vector<8x1024xf32>
    %201 = vector.broadcast %2 : vector<1x1024xf32> to vector<8x1024xf32>
    %202 = arith.addf %200, %201 : vector<8x1024xf32>
    %203 = vector.extract_strided_slice %202 {offsets = [0, 0], sizes = [8, 768], strides = [1, 1]} : vector<8x1024xf32> to vector<8x768xf32>
    %204 = arith.negf %203 : vector<8x768xf32>
    %205 = math.exp %204 : vector<8x768xf32>
    %cst_35 = arith.constant 1.000000e+00 : f32
    %206 = vector.broadcast %cst_35 : f32 to vector<8x768xf32>
    %207 = arith.addf %206, %205 : vector<8x768xf32>
    %208 = arith.divf %206, %207 : vector<8x768xf32>
    %209 = vector.extract_strided_slice %202 {offsets = [0, 768], sizes = [8, 256], strides = [1, 1]} : vector<8x1024xf32> to vector<8x256xf32>
    %210 = math.tanh %209 : vector<8x256xf32>
    %211 = vector.extract_strided_slice %208 {offsets = [0, 0], sizes = [8, 256], strides = [1, 1]} : vector<8x768xf32> to vector<8x256xf32>
    %212 = vector.extract_strided_slice %208 {offsets = [0, 256], sizes = [8, 256], strides = [1, 1]} : vector<8x768xf32> to vector<8x256xf32>
    %213 = vector.extract_strided_slice %208 {offsets = [0, 512], sizes = [8, 256], strides = [1, 1]} : vector<8x768xf32> to vector<8x256xf32>
    %214 = arith.mulf %212, %173 : vector<8x256xf32>
    %215 = arith.mulf %211, %210 : vector<8x256xf32>
    %216 = arith.addf %214, %215 : vector<8x256xf32>
    %217 = math.tanh %216 : vector<8x256xf32>
    %218 = arith.mulf %213, %217 : vector<8x256xf32>
    %219 = arith.truncf %218 : vector<8x256xf32> to vector<8x256xbf16>
    %c5_i32 = arith.constant 5 : i32
    %220 = arith.index_cast %c5_i32 : i32 to index
    %c0_36 = arith.constant 0 : index
    %c0_37 = arith.constant 0 : index
    %221 = vector.load %arg0[%220, %c0_36, %c0_37] : memref<8x8x1024xf32, #tpu.memory_space<vmem>>, vector<1x8x1024xf32>
    %222 = vector.shape_cast %221 : vector<1x8x1024xf32> to vector<8x1024xf32>
    %cst_38 = arith.constant dense<0.000000e+00> : vector<8x1024xf32>
    %223 = tpu.matmul %198, %0, %cst_38 {dimension_numbers = #tpu.dot_dimension_numbers<[1], [0], [0], [1], [0, 0, 1, 1], [], []>} : vector<8x256xbf16>, vector<256x1024xbf16>, vector<8x1024xf32> -> vector<8x1024xf32>
    %224 = arith.addf %222, %223 : vector<8x1024xf32>
    %225 = vector.extract_strided_slice %224 {offsets = [0, 0], sizes = [8, 768], strides = [1, 1]} : vector<8x1024xf32> to vector<8x768xf32>
    %226 = arith.negf %225 : vector<8x768xf32>
    %227 = math.exp %226 : vector<8x768xf32>
    %cst_39 = arith.constant 1.000000e+00 : f32
    %228 = vector.broadcast %cst_39 : f32 to vector<8x768xf32>
    %229 = arith.addf %228, %227 : vector<8x768xf32>
    %230 = arith.divf %228, %229 : vector<8x768xf32>
    %231 = vector.extract_strided_slice %224 {offsets = [0, 768], sizes = [8, 256], strides = [1, 1]} : vector<8x1024xf32> to vector<8x256xf32>
    %232 = math.tanh %231 : vector<8x256xf32>
    %233 = vector.extract_strided_slice %230 {offsets = [0, 0], sizes = [8, 256], strides = [1, 1]} : vector<8x768xf32> to vector<8x256xf32>
    %234 = vector.extract_strided_slice %230 {offsets = [0, 256], sizes = [8, 256], strides = [1, 1]} : vector<8x768xf32> to vector<8x256xf32>
    %235 = vector.extract_strided_slice %230 {offsets = [0, 512], sizes = [8, 256], strides = [1, 1]} : vector<8x768xf32> to vector<8x256xf32>
    %236 = arith.mulf %234, %195 : vector<8x256xf32>
    %237 = arith.mulf %233, %232 : vector<8x256xf32>
    %238 = arith.addf %236, %237 : vector<8x256xf32>
    %239 = math.tanh %238 : vector<8x256xf32>
    %240 = arith.mulf %235, %239 : vector<8x256xf32>
    %241 = arith.truncf %240 : vector<8x256xf32> to vector<8x256xbf16>
    %242 = tpu.concatenate %241, %219 in 1 : vector<8x256xbf16>, vector<8x256xbf16> -> vector<8x512xbf16>
    %cst_40 = arith.constant dense<0.000000e+00> : vector<8x1024xf32>
    %243 = tpu.matmul %242, %1, %cst_40 {dimension_numbers = #tpu.dot_dimension_numbers<[1], [0], [0], [1], [0, 0, 1, 1], [], []>} : vector<8x512xbf16>, vector<512x1024xbf16>, vector<8x1024xf32> -> vector<8x1024xf32>
    %244 = vector.broadcast %2 : vector<1x1024xf32> to vector<8x1024xf32>
    %245 = arith.addf %243, %244 : vector<8x1024xf32>
    %246 = vector.extract_strided_slice %245 {offsets = [0, 0], sizes = [8, 768], strides = [1, 1]} : vector<8x1024xf32> to vector<8x768xf32>
    %247 = arith.negf %246 : vector<8x768xf32>
    %248 = math.exp %247 : vector<8x768xf32>
    %cst_41 = arith.constant 1.000000e+00 : f32
    %249 = vector.broadcast %cst_41 : f32 to vector<8x768xf32>
    %250 = arith.addf %249, %248 : vector<8x768xf32>
    %251 = arith.divf %249, %250 : vector<8x768xf32>
    %252 = vector.extract_strided_slice %245 {offsets = [0, 768], sizes = [8, 256], strides = [1, 1]} : vector<8x1024xf32> to vector<8x256xf32>
    %253 = math.tanh %252 : vector<8x256xf32>
    %254 = vector.extract_strided_slice %251 {offsets = [0, 0], sizes = [8, 256], strides = [1, 1]} : vector<8x768xf32> to vector<8x256xf32>
    %255 = vector.extract_strided_slice %251 {offsets = [0, 256], sizes = [8, 256], strides = [1, 1]} : vector<8x768xf32> to vector<8x256xf32>
    %256 = vector.extract_strided_slice %251 {offsets = [0, 512], sizes = [8, 256], strides = [1, 1]} : vector<8x768xf32> to vector<8x256xf32>
    %257 = arith.mulf %255, %216 : vector<8x256xf32>
    %258 = arith.mulf %254, %253 : vector<8x256xf32>
    %259 = arith.addf %257, %258 : vector<8x256xf32>
    %260 = math.tanh %259 : vector<8x256xf32>
    %261 = arith.mulf %256, %260 : vector<8x256xf32>
    %262 = arith.truncf %261 : vector<8x256xf32> to vector<8x256xbf16>
    %c6_i32 = arith.constant 6 : i32
    %263 = arith.index_cast %c6_i32 : i32 to index
    %c0_42 = arith.constant 0 : index
    %c0_43 = arith.constant 0 : index
    %264 = vector.load %arg0[%263, %c0_42, %c0_43] : memref<8x8x1024xf32, #tpu.memory_space<vmem>>, vector<1x8x1024xf32>
    %265 = vector.shape_cast %264 : vector<1x8x1024xf32> to vector<8x1024xf32>
    %cst_44 = arith.constant dense<0.000000e+00> : vector<8x1024xf32>
    %266 = tpu.matmul %241, %0, %cst_44 {dimension_numbers = #tpu.dot_dimension_numbers<[1], [0], [0], [1], [0, 0, 1, 1], [], []>} : vector<8x256xbf16>, vector<256x1024xbf16>, vector<8x1024xf32> -> vector<8x1024xf32>
    %267 = arith.addf %265, %266 : vector<8x1024xf32>
    %268 = vector.extract_strided_slice %267 {offsets = [0, 0], sizes = [8, 768], strides = [1, 1]} : vector<8x1024xf32> to vector<8x768xf32>
    %269 = arith.negf %268 : vector<8x768xf32>
    %270 = math.exp %269 : vector<8x768xf32>
    %cst_45 = arith.constant 1.000000e+00 : f32
    %271 = vector.broadcast %cst_45 : f32 to vector<8x768xf32>
    %272 = arith.addf %271, %270 : vector<8x768xf32>
    %273 = arith.divf %271, %272 : vector<8x768xf32>
    %274 = vector.extract_strided_slice %267 {offsets = [0, 768], sizes = [8, 256], strides = [1, 1]} : vector<8x1024xf32> to vector<8x256xf32>
    %275 = math.tanh %274 : vector<8x256xf32>
    %276 = vector.extract_strided_slice %273 {offsets = [0, 0], sizes = [8, 256], strides = [1, 1]} : vector<8x768xf32> to vector<8x256xf32>
    %277 = vector.extract_strided_slice %273 {offsets = [0, 256], sizes = [8, 256], strides = [1, 1]} : vector<8x768xf32> to vector<8x256xf32>
    %278 = vector.extract_strided_slice %273 {offsets = [0, 512], sizes = [8, 256], strides = [1, 1]} : vector<8x768xf32> to vector<8x256xf32>
    %279 = arith.mulf %277, %238 : vector<8x256xf32>
    %280 = arith.mulf %276, %275 : vector<8x256xf32>
    %281 = arith.addf %279, %280 : vector<8x256xf32>
    %282 = math.tanh %281 : vector<8x256xf32>
    %283 = arith.mulf %278, %282 : vector<8x256xf32>
    %284 = arith.truncf %283 : vector<8x256xf32> to vector<8x256xbf16>
    %285 = tpu.concatenate %284, %262 in 1 : vector<8x256xbf16>, vector<8x256xbf16> -> vector<8x512xbf16>
    %cst_46 = arith.constant dense<0.000000e+00> : vector<8x1024xf32>
    %286 = tpu.matmul %285, %1, %cst_46 {dimension_numbers = #tpu.dot_dimension_numbers<[1], [0], [0], [1], [0, 0, 1, 1], [], []>} : vector<8x512xbf16>, vector<512x1024xbf16>, vector<8x1024xf32> -> vector<8x1024xf32>
    %287 = vector.broadcast %2 : vector<1x1024xf32> to vector<8x1024xf32>
    %288 = arith.addf %286, %287 : vector<8x1024xf32>
    %289 = vector.extract_strided_slice %288 {offsets = [0, 0], sizes = [8, 768], strides = [1, 1]} : vector<8x1024xf32> to vector<8x768xf32>
    %290 = arith.negf %289 : vector<8x768xf32>
    %291 = math.exp %290 : vector<8x768xf32>
    %cst_47 = arith.constant 1.000000e+00 : f32
    %292 = vector.broadcast %cst_47 : f32 to vector<8x768xf32>
    %293 = arith.addf %292, %291 : vector<8x768xf32>
    %294 = arith.divf %292, %293 : vector<8x768xf32>
    %295 = vector.extract_strided_slice %288 {offsets = [0, 768], sizes = [8, 256], strides = [1, 1]} : vector<8x1024xf32> to vector<8x256xf32>
    %296 = math.tanh %295 : vector<8x256xf32>
    %297 = vector.extract_strided_slice %294 {offsets = [0, 0], sizes = [8, 256], strides = [1, 1]} : vector<8x768xf32> to vector<8x256xf32>
    %298 = vector.extract_strided_slice %294 {offsets = [0, 256], sizes = [8, 256], strides = [1, 1]} : vector<8x768xf32> to vector<8x256xf32>
    %299 = vector.extract_strided_slice %294 {offsets = [0, 512], sizes = [8, 256], strides = [1, 1]} : vector<8x768xf32> to vector<8x256xf32>
    %300 = arith.mulf %298, %259 : vector<8x256xf32>
    %301 = arith.mulf %297, %296 : vector<8x256xf32>
    %302 = arith.addf %300, %301 : vector<8x256xf32>
    %303 = math.tanh %302 : vector<8x256xf32>
    %304 = arith.mulf %299, %303 : vector<8x256xf32>
    %305 = arith.truncf %304 : vector<8x256xf32> to vector<8x256xbf16>
    %c7_i32 = arith.constant 7 : i32
    %306 = arith.index_cast %c7_i32 : i32 to index
    %c0_48 = arith.constant 0 : index
    %c0_49 = arith.constant 0 : index
    %307 = vector.load %arg0[%306, %c0_48, %c0_49] : memref<8x8x1024xf32, #tpu.memory_space<vmem>>, vector<1x8x1024xf32>
    %308 = vector.shape_cast %307 : vector<1x8x1024xf32> to vector<8x1024xf32>
    %cst_50 = arith.constant dense<0.000000e+00> : vector<8x1024xf32>
    %309 = tpu.matmul %284, %0, %cst_50 {dimension_numbers = #tpu.dot_dimension_numbers<[1], [0], [0], [1], [0, 0, 1, 1], [], []>} : vector<8x256xbf16>, vector<256x1024xbf16>, vector<8x1024xf32> -> vector<8x1024xf32>
    %310 = arith.addf %308, %309 : vector<8x1024xf32>
    %311 = vector.extract_strided_slice %310 {offsets = [0, 0], sizes = [8, 768], strides = [1, 1]} : vector<8x1024xf32> to vector<8x768xf32>
    %312 = arith.negf %311 : vector<8x768xf32>
    %313 = math.exp %312 : vector<8x768xf32>
    %cst_51 = arith.constant 1.000000e+00 : f32
    %314 = vector.broadcast %cst_51 : f32 to vector<8x768xf32>
    %315 = arith.addf %314, %313 : vector<8x768xf32>
    %316 = arith.divf %314, %315 : vector<8x768xf32>
    %317 = vector.extract_strided_slice %310 {offsets = [0, 768], sizes = [8, 256], strides = [1, 1]} : vector<8x1024xf32> to vector<8x256xf32>
    %318 = math.tanh %317 : vector<8x256xf32>
    %319 = vector.extract_strided_slice %316 {offsets = [0, 0], sizes = [8, 256], strides = [1, 1]} : vector<8x768xf32> to vector<8x256xf32>
    %320 = vector.extract_strided_slice %316 {offsets = [0, 256], sizes = [8, 256], strides = [1, 1]} : vector<8x768xf32> to vector<8x256xf32>
    %321 = vector.extract_strided_slice %316 {offsets = [0, 512], sizes = [8, 256], strides = [1, 1]} : vector<8x768xf32> to vector<8x256xf32>
    %322 = arith.mulf %320, %281 : vector<8x256xf32>
    %323 = arith.mulf %319, %318 : vector<8x256xf32>
    %324 = arith.addf %322, %323 : vector<8x256xf32>
    %325 = math.tanh %324 : vector<8x256xf32>
    %326 = arith.mulf %321, %325 : vector<8x256xf32>
    %327 = arith.truncf %326 : vector<8x256xf32> to vector<8x256xbf16>
    %328 = tpu.concatenate %327, %305 in 1 : vector<8x256xbf16>, vector<8x256xbf16> -> vector<8x512xbf16>
    %cst_52 = arith.constant dense<0.000000e+00> : vector<8x1024xf32>
    %329 = tpu.matmul %328, %1, %cst_52 {dimension_numbers = #tpu.dot_dimension_numbers<[1], [0], [0], [1], [0, 0, 1, 1], [], []>} : vector<8x512xbf16>, vector<512x1024xbf16>, vector<8x1024xf32> -> vector<8x1024xf32>
    %330 = vector.broadcast %2 : vector<1x1024xf32> to vector<8x1024xf32>
    %331 = arith.addf %329, %330 : vector<8x1024xf32>
    %332 = vector.extract_strided_slice %331 {offsets = [0, 0], sizes = [8, 768], strides = [1, 1]} : vector<8x1024xf32> to vector<8x768xf32>
    %333 = arith.negf %332 : vector<8x768xf32>
    %334 = math.exp %333 : vector<8x768xf32>
    %cst_53 = arith.constant 1.000000e+00 : f32
    %335 = vector.broadcast %cst_53 : f32 to vector<8x768xf32>
    %336 = arith.addf %335, %334 : vector<8x768xf32>
    %337 = arith.divf %335, %336 : vector<8x768xf32>
    %338 = vector.extract_strided_slice %331 {offsets = [0, 768], sizes = [8, 256], strides = [1, 1]} : vector<8x1024xf32> to vector<8x256xf32>
    %339 = math.tanh %338 : vector<8x256xf32>
    %340 = vector.extract_strided_slice %337 {offsets = [0, 0], sizes = [8, 256], strides = [1, 1]} : vector<8x768xf32> to vector<8x256xf32>
    %341 = vector.extract_strided_slice %337 {offsets = [0, 256], sizes = [8, 256], strides = [1, 1]} : vector<8x768xf32> to vector<8x256xf32>
    %342 = vector.extract_strided_slice %337 {offsets = [0, 512], sizes = [8, 256], strides = [1, 1]} : vector<8x768xf32> to vector<8x256xf32>
    %343 = arith.mulf %341, %302 : vector<8x256xf32>
    %344 = arith.mulf %340, %339 : vector<8x256xf32>
    %345 = arith.addf %343, %344 : vector<8x256xf32>
    %346 = math.tanh %345 : vector<8x256xf32>
    %347 = arith.mulf %342, %346 : vector<8x256xf32>
    %348 = arith.truncf %347 : vector<8x256xf32> to vector<8x256xbf16>
    %c8_i32 = arith.constant 8 : i32
    %c0_54 = arith.constant 0 : index
    %c0_55 = arith.constant 0 : index
    %349 = vector.load %arg4[%c0_54, %c0_55] : memref<256x128xbf16, #tpu.memory_space<vmem>>, vector<256x128xbf16>
    %cst_56 = arith.constant dense<0.000000e+00> : vector<8x128xf32>
    %350 = tpu.matmul %348, %349, %cst_56 {dimension_numbers = #tpu.dot_dimension_numbers<[1], [0], [0], [1], [0, 0, 1, 1], [], []>} : vector<8x256xbf16>, vector<256x128xbf16>, vector<8x128xf32> -> vector<8x128xf32>
    %c0_57 = arith.constant 0 : index
    %c0_58 = arith.constant 0 : index
    %351 = vector.load %arg5[%c0_57, %c0_58] : memref<1x128xf32, #tpu.memory_space<vmem>>, vector<1x128xf32>
    %352 = vector.broadcast %351 : vector<1x128xf32> to vector<8x128xf32>
    %353 = arith.addf %350, %352 : vector<8x128xf32>
    %c0_59 = arith.constant 0 : index
    %c0_60 = arith.constant 0 : index
    %354 = vector.load %arg6[%c0_59, %c0_60] : memref<8x128xf32, #tpu.memory_space<vmem>>, vector<8x128xf32>
    tpu.vector_store %arg6[%c0_59, %c0_60], %353 {strides = array<i32>} : memref<8x128xf32, #tpu.memory_space<vmem>>, vector<8x128xf32>,
    return
  }
}

</mosaic_0001>

<llo_original>
// kernel: char_lstm_forward.1
$region0: #{char_lstm_forward.1}
  #allocation0 [shape = 'u32[]', space=smem, size = 0x4, offset = 0x4, fixed_abs, tag = 'smem constant byte address 0x4 - core index']
  #allocation1 [shape = 'u32[144,128]{1,0:T(1,128)}', space=vmem, size = 0x12000, scoped, tag = 'internal scratch']
  %s0 = inlined_call_operand.vmem [shape: f32[8,8,1024], index: 0, kind: input, shape index: {}]
  %s1 = inlined_call_operand.hbm [shape: bf16[256,1024], index: 1, kind: input, shape index: {}]
  %s2 = inlined_call_operand.vmem [shape: bf16[512,1024], index: 2, kind: input, shape index: {}]
  %s3 = inlined_call_operand.vmem [shape: f32[1,1024], index: 3, kind: input, shape index: {}]
  %s4 = inlined_call_operand.hbm [shape: bf16[256,128], index: 4, kind: input, shape index: {}]
  %s5 = inlined_call_operand.vmem [shape: f32[1,128], index: 5, kind: input, shape index: {}]
  %s6 = inlined_call_operand.vmem [shape: f32[8,128], index: 6, kind: output, shape index: {}]
  %s7 = sld [smem:[#allocation0]]
  $region42: #{char_lstm_forward.1} parent=0
    _
  %s9 = ssub.s32 1, %s7
  %s10 = scalar_select 0, %s9, %s7
  $region1: #{char_lstm_forward.1} parent=0
    #allocation2 [shape = 'u8[524288]{0}', space=vmem, size = 0x80000, scoped, tag = 'input window, operand 1, single buffered']
    #allocation3 [shape = 's32[1]{0}', space=sflag, size = 0x4, scoped, tag = 'scoped memory for char_lstm_forward.1']
    #allocation4 [shape = 'u8[65536]{0}', space=vmem, size = 0x10000, scoped, tag = 'input window, operand 4, single buffered']
    #allocation5 [shape = 's32[1]{0}', space=sflag, size = 0x4, scoped, tag = 'scoped memory for char_lstm_forward.1']
    %11 = vsyncpa [#allocation3], 0
    %12 = vsyncpa [#allocation5], 0
    // Predicated region
    $region2: #{char_lstm_forward.1} parent=1 // pred_check
      _
    $region3: #{char_lstm_forward.1} parent=1 // pred_check_branch
      %14 = sbr.rel (0) target = $region5
    $region4: #{char_lstm_forward.1} parent=1 // pred_region
      _
    $region5: #{char_lstm_forward.1} parent=1 // pred_fallthru
      _
    // Predicated region
    $region6: #{char_lstm_forward.1} parent=1 // pred_check
      _
    $region7: #{char_lstm_forward.1} parent=1 // pred_check_branch
      %16 = sbr.rel (0) target = $region9
    $region8: #{char_lstm_forward.1} parent=1 // pred_region
      %s18 = ssub.s32 16384, 16384
      %19 = vsyncadd [#allocation3], %s18
      %s20 = sshll.u32 [#allocation2], 4
      %s21 = int_to_ptr.vmem [resolvable:$true] %s20
      %26 = dma.hbm_to_vmem [thread:$0]  %s1, 16384, %s21, [#allocation3], 512, 512, 32
    $region9: #{char_lstm_forward.1} parent=1 // pred_fallthru
      _
    // Predicated region
    $region10: #{char_lstm_forward.1} parent=1 // pred_check
      _
    $region11: #{char_lstm_forward.1} parent=1 // pred_check_branch
      %28 = sbr.rel (0) target = $region13
    $region12: #{char_lstm_forward.1} parent=1 // pred_region
      _
    $region13: #{char_lstm_forward.1} parent=1 // pred_fallthru
      _
    // Predicated region
    $region14: #{char_lstm_forward.1} parent=1 // pred_check
      _
    $region15: #{char_lstm_forward.1} parent=1 // pred_check_branch
      %30 = sbr.rel (0) target = $region17
    $region16: #{char_lstm_forward.1} parent=1 // pred_region
      _
    $region17: #{char_lstm_forward.1} parent=1 // pred_fallthru
      _
    // Predicated region
    $region18: #{char_lstm_forward.1} parent=1 // pred_check
      _
    $region19: #{char_lstm_forward.1} parent=1 // pred_check_branch
      %32 = sbr.rel (0) target = $region21
    $region20: #{char_lstm_forward.1} parent=1 // pred_region
      %s34 = ssub.s32 2048, 2048
      %35 = vsyncadd [#allocation5], %s34
      %s36 = sshll.u32 [#allocation4], 4
      %s37 = int_to_ptr.vmem [resolvable:$true] %s36
      %42 = dma.hbm_to_vmem [thread:$0]  %s4, 2048, %s37, [#allocation5], 64, 64, 4
    $region21: #{char_lstm_forward.1} parent=1 // pred_fallthru
      _
    // Predicated region
    $region22: #{char_lstm_forward.1} parent=1 // pred_check
      _
    $region23: #{char_lstm_forward.1} parent=1 // pred_check_branch
      %44 = sbr.rel (0) target = $region25
    $region24: #{char_lstm_forward.1} parent=1 // pred_region
      _
    $region25: #{char_lstm_forward.1} parent=1 // pred_fallthru
      _
    // Predicated region
    $region26: #{char_lstm_forward.1} parent=1 // pred_check
      _
    $region27: #{char_lstm_forward.1} parent=1 // pred_check_branch
      %46 = sbr.rel (0) target = $region29
    $region28: #{char_lstm_forward.1} parent=1 // pred_region
      %47 = dma.done [#allocation3], 16384
    $region29: #{char_lstm_forward.1} parent=1 // pred_fallthru
      _
    // Predicated region
    $region30: #{char_lstm_forward.1} parent=1 // pred_check
      _
    $region31: #{char_lstm_forward.1} parent=1 // pred_check_branch
      %49 = sbr.rel (0) target = $region33
    $region32: #{char_lstm_forward.1} parent=1 // pred_region
      %50 = dma.done [#allocation5], 2048
    $region33: #{char_lstm_forward.1} parent=1 // pred_fallthru
      _
    %v52 = vld [vmem:[#allocation2] sm:$0xff]
    %v53 = vld [vmem:[#allocation2 + $0x8] sm:$0xff]
    %v54 = vld [vmem:[#allocation2 + $0x10] sm:$0xff]
    %v55 = vld [vmem:[#allocation2 + $0x18] sm:$0xff]
    %v56 = vld [vmem:[#allocation2 + $0x20] sm:$0xff]
    %v57 = vld [vmem:[#allocation2 + $0x28] sm:$0xff]
    %v58 = vld [vmem:[#allocation2 + $0x30] sm:$0xff]
    %v59 = vld [vmem:[#allocation2 + $0x38] sm:$0xff]
    %v60 = vld [vmem:[#allocation2 + $0x40] sm:$0xff]
    %v61 = vld [vmem:[#allocation2 + $0x48] sm:$0xff]
    %v62 = vld [vmem:[#allocation2 + $0x50] sm:$0xff]
    %v63 = vld [vmem:[#allocation2 + $0x58] sm:$0xff]
    %v64 = vld [vmem:[#allocation2 + $0x60] sm:$0xff]
    %v65 = vld [vmem:[#allocation2 + $0x68] sm:$0xff]
    %v66 = vld [vmem:[#allocation2 + $0x70] sm:$0xff]
    %v67 = vld [vmem:[#allocation2 + $0x78] sm:$0xff]
    %v68 = vld [vmem:[#allocation2 + $0x80] sm:$0xff]
    %v69 = vld [vmem:[#allocation2 + $0x88] sm:$0xff]
    %v70 = vld [vmem:[#allocation2 + $0x90] sm:$0xff]
    %v71 = vld [vmem:[#allocation2 + $0x98] sm:$0xff]
    %v72 = vld [vmem:[#allocation2 + $0xa0] sm:$0xff]
    %v73 = vld [vmem:[#allocation2 + $0xa8] sm:$0xff]
    %v74 = vld [vmem:[#allocation2 + $0xb0] sm:$0xff]
    %v75 = vld [vmem:[#allocation2 + $0xb8] sm:$0xff]
    %v76 = vld [vmem:[#allocation2 + $0xc0] sm:$0xff]
    %v77 = vld [vmem:[#allocation2 + $0xc8] sm:$0xff]
    %v78 = vld [vmem:[#allocation2 + $0xd0] sm:$0xff]
    %v79 = vld [vmem:[#allocation2 + $0xd8] sm:$0xff]
    %v80 = vld [vmem:[#allocation2 + $0xe0] sm:$0xff]
    %v81 = vld [vmem:[#allocation2 + $0xe8] sm:$0xff]
    %v82 = vld [vmem:[#allocation2 + $0xf0] sm:$0xff]
    %v83 = vld [vmem:[#allocation2 + $0xf8] sm:$0xff]
    %v84 = vld [vmem:[#allocation2 + $0x100] sm:$0xff]
    %v85 = vld [vmem:[#allocation2 + $0x108] sm:$0xff]
    %v86 = vld [vmem:[#allocation2 + $0x110] sm:$0xff]
    %v87 = vld [vmem:[#allocation2 + $0x118] sm:$0xff]
    %v88 = vld [vmem:[#allocation2 + $0x120] sm:$0xff]
    %v89 = vld [vmem:[#allocation2 + $0x128] sm:$0xff]
    %v90 = vld [vmem:[#allocation2 + $0x130] sm:$0xff]
    %v91 = vld [vmem:[#allocation2 + $0x138] sm:$0xff]
    %v92 = vld [vmem:[#allocation2 + $0x140] sm:$0xff]
    %v93 = vld [vmem:[#allocation2 + $0x148] sm:$0xff]
    %v94 = vld [vmem:[#allocation2 + $0x150] sm:$0xff]
    %v95 = vld [vmem:[#allocation2 + $0x158] sm:$0xff]
    %v96 = vld [vmem:[#allocation2 + $0x160] sm:$0xff]
    %v97 = vld [vmem:[#allocation2 + $0x168] sm:$0xff]
    %v98 = vld [vmem:[#allocation2 + $0x170] sm:$0xff]
    %v99 = vld [vmem:[#allocation2 + $0x178] sm:$0xff]
    %v100 = vld [vmem:[#allocation2 + $0x180] sm:$0xff]
    %v101 = vld [vmem:[#allocation2 + $0x188] sm:$0xff]
    %v102 = vld [vmem:[#allocation2 + $0x190] sm:$0xff]
    %v103 = vld [vmem:[#allocation2 + $0x198] sm:$0xff]
    %v104 = vld [vmem:[#allocation2 + $0x1a0] sm:$0xff]
    %v105 = vld [vmem:[#allocation2 + $0x1a8] sm:$0xff]
    %v106 = vld [vmem:[#allocation2 + $0x1b0] sm:$0xff]
    %v107 = vld [vmem:[#allocation2 + $0x1b8] sm:$0xff]
    %v108 = vld [vmem:[#allocation2 + $0x1c0] sm:$0xff]
    %v109 = vld [vmem:[#allocation2 + $0x1c8] sm:$0xff]
    %v110 = vld [vmem:[#allocation2 + $0x1d0] sm:$0xff]
    %v111 = vld [vmem:[#allocation2 + $0x1d8] sm:$0xff]
    %v112 = vld [vmem:[#allocation2 + $0x1e0] sm:$0xff]
    %v113 = vld [vmem:[#allocation2 + $0x1e8] sm:$0xff]
    %v114 = vld [vmem:[#allocation2 + $0x1f0] sm:$0xff]
    %v115 = vld [vmem:[#allocation2 + $0x1f8] sm:$0xff]
    %v116 = vld [vmem:[#allocation2 + $0x200] sm:$0xff]
    %v117 = vld [vmem:[#allocation2 + $0x208] sm:$0xff]
    %v118 = vld [vmem:[#allocation2 + $0x210] sm:$0xff]
    %v119 = vld [vmem:[#allocation2 + $0x218] sm:$0xff]
    %v120 = vld [vmem:[#allocation2 + $0x220] sm:$0xff]
    %v121 = vld [vmem:[#allocation2 + $0x228] sm:$0xff]
    %v122 = vld [vmem:[#allocation2 + $0x230] sm:$0xff]
    %v123 = vld [vmem:[#allocation2 + $0x238] sm:$0xff]
    %v124 = vld [vmem:[#allocation2 + $0x240] sm:$0xff]
    %v125 = vld [vmem:[#allocation2 + $0x248] sm:$0xff]
    %v126 = vld [vmem:[#allocation2 + $0x250] sm:$0xff]
    %v127 = vld [vmem:[#allocation2 + $0x258] sm:$0xff]
    %v128 = vld [vmem:[#allocation2 + $0x260] sm:$0xff]
    %v129 = vld [vmem:[#allocation2 + $0x268] sm:$0xff]
    %v130 = vld [vmem:[#allocation2 + $0x270] sm:$0xff]
    %v131 = vld [vmem:[#allocation2 + $0x278] sm:$0xff]
    %v132 = vld [vmem:[#allocation2 + $0x280] sm:$0xff]
    %v133 = vld [vmem:[#allocation2 + $0x288] sm:$0xff]
    %v134 = vld [vmem:[#allocation2 + $0x290] sm:$0xff]
    %v135 = vld [vmem:[#allocation2 + $0x298] sm:$0xff]
    %v136 = vld [vmem:[#allocation2 + $0x2a0] sm:$0xff]
    %v137 = vld [vmem:[#allocation2 + $0x2a8] sm:$0xff]
    %v138 = vld [vmem:[#allocation2 + $0x2b0] sm:$0xff]
    %v139 = vld [vmem:[#allocation2 + $0x2b8] sm:$0xff]
    %v140 = vld [vmem:[#allocation2 + $0x2c0] sm:$0xff]
    %v141 = vld [vmem:[#allocation2 + $0x2c8] sm:$0xff]
    %v142 = vld [vmem:[#allocation2 + $0x2d0] sm:$0xff]
    %v143 = vld [vmem:[#allocation2 + $0x2d8] sm:$0xff]
    %v144 = vld [vmem:[#allocation2 + $0x2e0] sm:$0xff]
    %v145 = vld [vmem:[#allocation2 + $0x2e8] sm:$0xff]
    %v146 = vld [vmem:[#allocation2 + $0x2f0] sm:$0xff]
    %v147 = vld [vmem:[#allocation2 + $0x2f8] sm:$0xff]
    %v148 = vld [vmem:[#allocation2 + $0x300] sm:$0xff]
    %v149 = vld [vmem:[#allocation2 + $0x308] sm:$0xff]
    %v150 = vld [vmem:[#allocation2 + $0x310] sm:$0xff]
    %v151 = vld [vmem:[#allocation2 + $0x318] sm:$0xff]
    %v152 = vld [vmem:[#allocation2 + $0x320] sm:$0xff]
    %v153 = vld [vmem:[#allocation2 + $0x328] sm:$0xff]
    %v154 = vld [vmem:[#allocation2 + $0x330] sm:$0xff]
    %v155 = vld [vmem:[#allocation2 + $0x338] sm:$0xff]
    %v156 = vld [vmem:[#allocation2 + $0x340] sm:$0xff]
    %v157 = vld [vmem:[#allocation2 + $0x348] sm:$0xff]
    %v158 = vld [vmem:[#allocation2 + $0x350] sm:$0xff]
    %v159 = vld [vmem:[#allocation2 + $0x358] sm:$0xff]
    %v160 = vld [vmem:[#allocation2 + $0x360] sm:$0xff]
    %v161 = vld [vmem:[#allocation2 + $0x368] sm:$0xff]
    %v162 = vld [vmem:[#allocation2 + $0x370] sm:$0xff]
    %v163 = vld [vmem:[#allocation2 + $0x378] sm:$0xff]
    %v164 = vld [vmem:[#allocation2 + $0x380] sm:$0xff]
    %v165 = vld [vmem:[#allocation2 + $0x388] sm:$0xff]
    %v166 = vld [vmem:[#allocation2 + $0x390] sm:$0xff]
    %v167 = vld [vmem:[#allocation2 + $0x398] sm:$0xff]
    %v168 = vld [vmem:[#allocation2 + $0x3a0] sm:$0xff]
    %v169 = vld [vmem:[#allocation2 + $0x3a8] sm:$0xff]
    %v170 = vld [vmem:[#allocation2 + $0x3b0] sm:$0xff]
    %v171 = vld [vmem:[#allocation2 + $0x3b8] sm:$0xff]
    %v172 = vld [vmem:[#allocation2 + $0x3c0] sm:$0xff]
    %v173 = vld [vmem:[#allocation2 + $0x3c8] sm:$0xff]
    %v174 = vld [vmem:[#allocation2 + $0x3d0] sm:$0xff]
    %v175 = vld [vmem:[#allocation2 + $0x3d8] sm:$0xff]
    %v176 = vld [vmem:[#allocation2 + $0x3e0] sm:$0xff]
    %v177 = vld [vmem:[#allocation2 + $0x3e8] sm:$0xff]
    %v178 = vld [vmem:[#allocation2 + $0x3f0] sm:$0xff]
    %v179 = vld [vmem:[#allocation2 + $0x3f8] sm:$0xff]
    %v180 = vld [vmem:[%s2] sm:$0xff]
    %v181 = vld [vmem:[%s2 + $0x8] sm:$0xff]
    %v182 = vld [vmem:[%s2 + $0x10] sm:$0xff]
    %v183 = vld [vmem:[%s2 + $0x18] sm:$0xff]
    %v184 = vld [vmem:[%s2 + $0x20] sm:$0xff]
    %v185 = vld [vmem:[%s2 + $0x28] sm:$0xff]
    %v186 = vld [vmem:[%s2 + $0x30] sm:$0xff]
    %v187 = vld [vmem:[%s2 + $0x38] sm:$0xff]
    %v188 = vld [vmem:[%s2 + $0x40] sm:$0xff]
    %v189 = vld [vmem:[%s2 + $0x48] sm:$0xff]
    %v190 = vld [vmem:[%s2 + $0x50] sm:$0xff]
    %v191 = vld [vmem:[%s2 + $0x58] sm:$0xff]
    %v192 = vld [vmem:[%s2 + $0x60] sm:$0xff]
    %v193 = vld [vmem:[%s2 + $0x68] sm:$0xff]
    %v194 = vld [vmem:[%s2 + $0x70] sm:$0xff]
    %v195 = vld [vmem:[%s2 + $0x78] sm:$0xff]
    %v196 = vld [vmem:[%s2 + $0x80] sm:$0xff]
    %v197 = vld [vmem:[%s2 + $0x88] sm:$0xff]
    %v198 = vld [vmem:[%s2 + $0x90] sm:$0xff]
    %v199 = vld [vmem:[%s2 + $0x98] sm:$0xff]
    %v200 = vld [vmem:[%s2 + $0xa0] sm:$0xff]
    %v201 = vld [vmem:[%s2 + $0xa8] sm:$0xff]
    %v202 = vld [vmem:[%s2 + $0xb0] sm:$0xff]
    %v203 = vld [vmem:[%s2 + $0xb8] sm:$0xff]
    %v204 = vld [vmem:[%s2 + $0xc0] sm:$0xff]
    %v205 = vld [vmem:[%s2 + $0xc8] sm:$0xff]
    %v206 = vld [vmem:[%s2 + $0xd0] sm:$0xff]
    %v207 = vld [vmem:[%s2 + $0xd8] sm:$0xff]
    %v208 = vld [vmem:[%s2 + $0xe0] sm:$0xff]
    %v209 = vld [vmem:[%s2 + $0xe8] sm:$0xff]
    %v210 = vld [vmem:[%s2 + $0xf0] sm:$0xff]
    %v211 = vld [vmem:[%s2 + $0xf8] sm:$0xff]
    %v212 = vld [vmem:[%s2 + $0x100] sm:$0xff]
    %v213 = vld [vmem:[%s2 + $0x108] sm:$0xff]
    %v214 = vld [vmem:[%s2 + $0x110] sm:$0xff]
    %v215 = vld [vmem:[%s2 + $0x118] sm:$0xff]
    %v216 = vld [vmem:[%s2 + $0x120] sm:$0xff]
    %v217 = vld [vmem:[%s2 + $0x128] sm:$0xff]
    %v218 = vld [vmem:[%s2 + $0x130] sm:$0xff]
    %v219 = vld [vmem:[%s2 + $0x138] sm:$0xff]
    %v220 = vld [vmem:[%s2 + $0x140] sm:$0xff]
    %v221 = vld [vmem:[%s2 + $0x148] sm:$0xff]
    %v222 = vld [vmem:[%s2 + $0x150] sm:$0xff]
    %v223 = vld [vmem:[%s2 + $0x158] sm:$0xff]
    %v224 = vld [vmem:[%s2 + $0x160] sm:$0xff]
    %v225 = vld [vmem:[%s2 + $0x168] sm:$0xff]
    %v226 = vld [vmem:[%s2 + $0x170] sm:$0xff]
    %v227 = vld [vmem:[%s2 + $0x178] sm:$0xff]
    %v228 = vld [vmem:[%s2 + $0x180] sm:$0xff]
    %v229 = vld [vmem:[%s2 + $0x188] sm:$0xff]
    %v230 = vld [vmem:[%s2 + $0x190] sm:$0xff]
    %v231 = vld [vmem:[%s2 + $0x198] sm:$0xff]
    %v232 = vld [vmem:[%s2 + $0x1a0] sm:$0xff]
    %v233 = vld [vmem:[%s2 + $0x1a8] sm:$0xff]
    %v234 = vld [vmem:[%s2 + $0x1b0] sm:$0xff]
    %v235 = vld [vmem:[%s2 + $0x1b8] sm:$0xff]
    %v236 = vld [vmem:[%s2 + $0x1c0] sm:$0xff]
    %v237 = vld [vmem:[%s2 + $0x1c8] sm:$0xff]
    %v238 = vld [vmem:[%s2 + $0x1d0] sm:$0xff]
    %v239 = vld [vmem:[%s2 + $0x1d8] sm:$0xff]
    %v240 = vld [vmem:[%s2 + $0x1e0] sm:$0xff]
    %v241 = vld [vmem:[%s2 + $0x1e8] sm:$0xff]
    %v242 = vld [vmem:[%s2 + $0x1f0] sm:$0xff]
    %v243 = vld [vmem:[%s2 + $0x1f8] sm:$0xff]
    %v244 = vld [vmem:[%s2 + $0x200] sm:$0xff]
    %v245 = vld [vmem:[%s2 + $0x208] sm:$0xff]
    %v246 = vld [vmem:[%s2 + $0x210] sm:$0xff]
    %v247 = vld [vmem:[%s2 + $0x218] sm:$0xff]
    %v248 = vld [vmem:[%s2 + $0x220] sm:$0xff]
    %v249 = vld [vmem:[%s2 + $0x228] sm:$0xff]
    %v250 = vld [vmem:[%s2 + $0x230] sm:$0xff]
    %v251 = vld [vmem:[%s2 + $0x238] sm:$0xff]
    %v252 = vld [vmem:[%s2 + $0x240] sm:$0xff]
    %v253 = vld [vmem:[%s2 + $0x248] sm:$0xff]
    %v254 = vld [vmem:[%s2 + $0x250] sm:$0xff]
    %v255 = vld [vmem:[%s2 + $0x258] sm:$0xff]
    %v256 = vld [vmem:[%s2 + $0x260] sm:$0xff]
    %v257 = vld [vmem:[%s2 + $0x268] sm:$0xff]
    %v258 = vld [vmem:[%s2 + $0x270] sm:$0xff]
    %v259 = vld [vmem:[%s2 + $0x278] sm:$0xff]
    %v260 = vld [vmem:[%s2 + $0x280] sm:$0xff]
    %v261 = vld [vmem:[%s2 + $0x288] sm:$0xff]
    %v262 = vld [vmem:[%s2 + $0x290] sm:$0xff]
    %v263 = vld [vmem:[%s2 + $0x298] sm:$0xff]
    %v264 = vld [vmem:[%s2 + $0x2a0] sm:$0xff]
    %v265 = vld [vmem:[%s2 + $0x2a8] sm:$0xff]
    %v266 = vld [vmem:[%s2 + $0x2b0] sm:$0xff]
    %v267 = vld [vmem:[%s2 + $0x2b8] sm:$0xff]
    %v268 = vld [vmem:[%s2 + $0x2c0] sm:$0xff]
    %v269 = vld [vmem:[%s2 + $0x2c8] sm:$0xff]
    %v270 = vld [vmem:[%s2 + $0x2d0] sm:$0xff]
    %v271 = vld [vmem:[%s2 + $0x2d8] sm:$0xff]
    %v272 = vld [vmem:[%s2 + $0x2e0] sm:$0xff]
    %v273 = vld [vmem:[%s2 + $0x2e8] sm:$0xff]
    %v274 = vld [vmem:[%s2 + $0x2f0] sm:$0xff]
    %v275 = vld [vmem:[%s2 + $0x2f8] sm:$0xff]
    %v276 = vld [vmem:[%s2 + $0x300] sm:$0xff]
    %v277 = vld [vmem:[%s2 + $0x308] sm:$0xff]
    %v278 = vld [vmem:[%s2 + $0x310] sm:$0xff]
    %v279 = vld [vmem:[%s2 + $0x318] sm:$0xff]
    %v280 = vld [vmem:[%s2 + $0x320] sm:$0xff]
    %v281 = vld [vmem:[%s2 + $0x328] sm:$0xff]
    %v282 = vld [vmem:[%s2 + $0x330] sm:$0xff]
    %v283 = vld [vmem:[%s2 + $0x338] sm:$0xff]
    %v284 = vld [vmem:[%s2 + $0x340] sm:$0xff]
    %v285 = vld [vmem:[%s2 + $0x348] sm:$0xff]
    %v286 = vld [vmem:[%s2 + $0x350] sm:$0xff]
    %v287 = vld [vmem:[%s2 + $0x358] sm:$0xff]
    %v288 = vld [vmem:[%s2 + $0x360] sm:$0xff]
    %v289 = vld [vmem:[%s2 + $0x368] sm:$0xff]
    %v290 = vld [vmem:[%s2 + $0x370] sm:$0xff]
    %v291 = vld [vmem:[%s2 + $0x378] sm:$0xff]
    %v292 = vld [vmem:[%s2 + $0x380] sm:$0xff]
    %v293 = vld [vmem:[%s2 + $0x388] sm:$0xff]
    %v294 = vld [vmem:[%s2 + $0x390] sm:$0xff]
    %v295 = vld [vmem:[%s2 + $0x398] sm:$0xff]
    %v296 = vld [vmem:[%s2 + $0x3a0] sm:$0xff]
    %v297 = vld [vmem:[%s2 + $0x3a8] sm:$0xff]
    %v298 = vld [vmem:[%s2 + $0x3b0] sm:$0xff]
    %v299 = vld [vmem:[%s2 + $0x3b8] sm:$0xff]
    %v300 = vld [vmem:[%s2 + $0x3c0] sm:$0xff]
    %v301 = vld [vmem:[%s2 + $0x3c8] sm:$0xff]
    %v302 = vld [vmem:[%s2 + $0x3d0] sm:$0xff]
    %v303 = vld [vmem:[%s2 + $0x3d8] sm:$0xff]
    %v304 = vld [vmem:[%s2 + $0x3e0] sm:$0xff]
    %v305 = vld [vmem:[%s2 + $0x3e8] sm:$0xff]
    %v306 = vld [vmem:[%s2 + $0x3f0] sm:$0xff]
    %v307 = vld [vmem:[%s2 + $0x3f8] sm:$0xff]
    %v308 = vld [vmem:[%s2 + $0x400] sm:$0xff]
    %v309 = vld [vmem:[%s2 + $0x408] sm:$0xff]
    %v310 = vld [vmem:[%s2 + $0x410] sm:$0xff]
    %v311 = vld [vmem:[%s2 + $0x418] sm:$0xff]
    %v312 = vld [vmem:[%s2 + $0x420] sm:$0xff]
    %v313 = vld [vmem:[%s2 + $0x428] sm:$0xff]
    %v314 = vld [vmem:[%s2 + $0x430] sm:$0xff]
    %v315 = vld [vmem:[%s2 + $0x438] sm:$0xff]
    %v316 = vld [vmem:[%s2 + $0x440] sm:$0xff]
    %v317 = vld [vmem:[%s2 + $0x448] sm:$0xff]
    %v318 = vld [vmem:[%s2 + $0x450] sm:$0xff]
    %v319 = vld [vmem:[%s2 + $0x458] sm:$0xff]
    %v320 = vld [vmem:[%s2 + $0x460] sm:$0xff]
    %v321 = vld [vmem:[%s2 + $0x468] sm:$0xff]
    %v322 = vld [vmem:[%s2 + $0x470] sm:$0xff]
    %v323 = vld [vmem:[%s2 + $0x478] sm:$0xff]
    %v324 = vld [vmem:[%s2 + $0x480] sm:$0xff]
    %v325 = vld [vmem:[%s2 + $0x488] sm:$0xff]
    %v326 = vld [vmem:[%s2 + $0x490] sm:$0xff]
    %v327 = vld [vmem:[%s2 + $0x498] sm:$0xff]
    %v328 = vld [vmem:[%s2 + $0x4a0] sm:$0xff]
    %v329 = vld [vmem:[%s2 + $0x4a8] sm:$0xff]
    %v330 = vld [vmem:[%s2 + $0x4b0] sm:$0xff]
    %v331 = vld [vmem:[%s2 + $0x4b8] sm:$0xff]
    %v332 = vld [vmem:[%s2 + $0x4c0] sm:$0xff]
    %v333 = vld [vmem:[%s2 + $0x4c8] sm:$0xff]
    %v334 = vld [vmem:[%s2 + $0x4d0] sm:$0xff]
    %v335 = vld [vmem:[%s2 + $0x4d8] sm:$0xff]
    %v336 = vld [vmem:[%s2 + $0x4e0] sm:$0xff]
    %v337 = vld [vmem:[%s2 + $0x4e8] sm:$0xff]
    %v338 = vld [vmem:[%s2 + $0x4f0] sm:$0xff]
    %v339 = vld [vmem:[%s2 + $0x4f8] sm:$0xff]
    %v340 = vld [vmem:[%s2 + $0x500] sm:$0xff]
    %v341 = vld [vmem:[%s2 + $0x508] sm:$0xff]
    %v342 = vld [vmem:[%s2 + $0x510] sm:$0xff]
    %v343 = vld [vmem:[%s2 + $0x518] sm:$0xff]
    %v344 = vld [vmem:[%s2 + $0x520] sm:$0xff]
    %v345 = vld [vmem:[%s2 + $0x528] sm:$0xff]
    %v346 = vld [vmem:[%s2 + $0x530] sm:$0xff]
    %v347 = vld [vmem:[%s2 + $0x538] sm:$0xff]
    %v348 = vld [vmem:[%s2 + $0x540] sm:$0xff]
    %v349 = vld [vmem:[%s2 + $0x548] sm:$0xff]
    %v350 = vld [vmem:[%s2 + $0x550] sm:$0xff]
    %v351 = vld [vmem:[%s2 + $0x558] sm:$0xff]
    %v352 = vld [vmem:[%s2 + $0x560] sm:$0xff]
    %v353 = vld [vmem:[%s2 + $0x568] sm:$0xff]
    %v354 = vld [vmem:[%s2 + $0x570] sm:$0xff]
    %v355 = vld [vmem:[%s2 + $0x578] sm:$0xff]
    %v356 = vld [vmem:[%s2 + $0x580] sm:$0xff]
    %v357 = vld [vmem:[%s2 + $0x588] sm:$0xff]
    %v358 = vld [vmem:[%s2 + $0x590] sm:$0xff]
    %v359 = vld [vmem:[%s2 + $0x598] sm:$0xff]
    %v360 = vld [vmem:[%s2 + $0x5a0] sm:$0xff]
    %v361 = vld [vmem:[%s2 + $0x5a8] sm:$0xff]
    %v362 = vld [vmem:[%s2 + $0x5b0] sm:$0xff]
    %v363 = vld [vmem:[%s2 + $0x5b8] sm:$0xff]
    %v364 = vld [vmem:[%s2 + $0x5c0] sm:$0xff]
    %v365 = vld [vmem:[%s2 + $0x5c8] sm:$0xff]
    %v366 = vld [vmem:[%s2 + $0x5d0] sm:$0xff]
    %v367 = vld [vmem:[%s2 + $0x5d8] sm:$0xff]
    %v368 = vld [vmem:[%s2 + $0x5e0] sm:$0xff]
    %v369 = vld [vmem:[%s2 + $0x5e8] sm:$0xff]
    %v370 = vld [vmem:[%s2 + $0x5f0] sm:$0xff]
    %v371 = vld [vmem:[%s2 + $0x5f8] sm:$0xff]
    %v372 = vld [vmem:[%s2 + $0x600] sm:$0xff]
    %v373 = vld [vmem:[%s2 + $0x608] sm:$0xff]
    %v374 = vld [vmem:[%s2 + $0x610] sm:$0xff]
    %v375 = vld [vmem:[%s2 + $0x618] sm:$0xff]
    %v376 = vld [vmem:[%s2 + $0x620] sm:$0xff]
    %v377 = vld [vmem:[%s2 + $0x628] sm:$0xff]
    %v378 = vld [vmem:[%s2 + $0x630] sm:$0xff]
    %v379 = vld [vmem:[%s2 + $0x638] sm:$0xff]
    %v380 = vld [vmem:[%s2 + $0x640] sm:$0xff]
    %v381 = vld [vmem:[%s2 + $0x648] sm:$0xff]
    %v382 = vld [vmem:[%s2 + $0x650] sm:$0xff]
    %v383 = vld [vmem:[%s2 + $0x658] sm:$0xff]
    %v384 = vld [vmem:[%s2 + $0x660] sm:$0xff]
    %v385 = vld [vmem:[%s2 + $0x668] sm:$0xff]
    %v386 = vld [vmem:[%s2 + $0x670] sm:$0xff]
    %v387 = vld [vmem:[%s2 + $0x678] sm:$0xff]
    %v388 = vld [vmem:[%s2 + $0x680] sm:$0xff]
    %v389 = vld [vmem:[%s2 + $0x688] sm:$0xff]
    %v390 = vld [vmem:[%s2 + $0x690] sm:$0xff]
    %v391 = vld [vmem:[%s2 + $0x698] sm:$0xff]
    %v392 = vld [vmem:[%s2 + $0x6a0] sm:$0xff]
    %v393 = vld [vmem:[%s2 + $0x6a8] sm:$0xff]
    %v394 = vld [vmem:[%s2 + $0x6b0] sm:$0xff]
    %v395 = vld [vmem:[%s2 + $0x6b8] sm:$0xff]
    %v396 = vld [vmem:[%s2 + $0x6c0] sm:$0xff]
    %v397 = vld [vmem:[%s2 + $0x6c8] sm:$0xff]
    %v398 = vld [vmem:[%s2 + $0x6d0] sm:$0xff]
    %v399 = vld [vmem:[%s2 + $0x6d8] sm:$0xff]
    %v400 = vld [vmem:[%s2 + $0x6e0] sm:$0xff]
    %v401 = vld [vmem:[%s2 + $0x6e8] sm:$0xff]
    %v402 = vld [vmem:[%s2 + $0x6f0] sm:$0xff]
    %v403 = vld [vmem:[%s2 + $0x6f8] sm:$0xff]
    %v404 = vld [vmem:[%s2 + $0x700] sm:$0xff]
    %v405 = vld [vmem:[%s2 + $0x708] sm:$0xff]
    %v406 = vld [vmem:[%s2 + $0x710] sm:$0xff]
    %v407 = vld [vmem:[%s2 + $0x718] sm:$0xff]
    %v408 = vld [vmem:[%s2 + $0x720] sm:$0xff]
    %v409 = vld [vmem:[%s2 + $0x728] sm:$0xff]
    %v410 = vld [vmem:[%s2 + $0x730] sm:$0xff]
    %v411 = vld [vmem:[%s2 + $0x738] sm:$0xff]
    %v412 = vld [vmem:[%s2 + $0x740] sm:$0xff]
    %v413 = vld [vmem:[%s2 + $0x748] sm:$0xff]
    %v414 = vld [vmem:[%s2 + $0x750] sm:$0xff]
    %v415 = vld [vmem:[%s2 + $0x758] sm:$0xff]
    %v416 = vld [vmem:[%s2 + $0x760] sm:$0xff]
    %v417 = vld [vmem:[%s2 + $0x768] sm:$0xff]
    %v418 = vld [vmem:[%s2 + $0x770] sm:$0xff]
    %v419 = vld [vmem:[%s2 + $0x778] sm:$0xff]
    %v420 = vld [vmem:[%s2 + $0x780] sm:$0xff]
    %v421 = vld [vmem:[%s2 + $0x788] sm:$0xff]
    %v422 = vld [vmem:[%s2 + $0x790] sm:$0xff]
    %v423 = vld [vmem:[%s2 + $0x798] sm:$0xff]
    %v424 = vld [vmem:[%s2 + $0x7a0] sm:$0xff]
    %v425 = vld [vmem:[%s2 + $0x7a8] sm:$0xff]
    %v426 = vld [vmem:[%s2 + $0x7b0] sm:$0xff]
    %v427 = vld [vmem:[%s2 + $0x7b8] sm:$0xff]
    %v428 = vld [vmem:[%s2 + $0x7c0] sm:$0xff]
    %v429 = vld [vmem:[%s2 + $0x7c8] sm:$0xff]
    %v430 = vld [vmem:[%s2 + $0x7d0] sm:$0xff]
    %v431 = vld [vmem:[%s2 + $0x7d8] sm:$0xff]
    %v432 = vld [vmem:[%s2 + $0x7e0] sm:$0xff]
    %v433 = vld [vmem:[%s2 + $0x7e8] sm:$0xff]
    %v434 = vld [vmem:[%s2 + $0x7f0] sm:$0xff]
    %v435 = vld [vmem:[%s2 + $0x7f8] sm:$0xff]
    %v436 = vld [vmem:[%s3] sm:$0xff]
    %v437 = vld [vmem:[%s0] sm:$0xff]
    %v438 = vld [vmem:[%s0 + $0x8] sm:$0xff]
    %v439 = vld [vmem:[%s0 + $0x10] sm:$0xff]
    %v440 = vld [vmem:[%s0 + $0x18] sm:$0xff]
    %v441 = vld [vmem:[%s0 + $0x20] sm:$0xff]
    %v442 = vld [vmem:[%s0 + $0x28] sm:$0xff]
    %v443 = vld [vmem:[%s0 + $0x30] sm:$0xff]
    %v444 = vld [vmem:[%s0 + $0x38] sm:$0xff]
    %v573 = vunpack.c.l.b16 %v52
    %v574 = vunpack.c.h.b16 %v52
    %v575 = vunpack.c.l.b16 %v53
    %v576 = vunpack.c.h.b16 %v53
    %v577 = vunpack.c.l.b16 %v54
    %v578 = vunpack.c.h.b16 %v54
    %v579 = vunpack.c.l.b16 %v55
    %v580 = vunpack.c.h.b16 %v55
    %v581 = vunpack.c.l.b16 %v56
    %v582 = vunpack.c.h.b16 %v56
    %v583 = vunpack.c.l.b16 %v57
    %v584 = vunpack.c.h.b16 %v57
    %v585 = vunpack.c.l.b16 %v58
    %v586 = vunpack.c.h.b16 %v58
    %v587 = vunpack.c.l.b16 %v59
    %v588 = vunpack.c.h.b16 %v59
    %v589 = vunpack.c.l.b16 %v60
    %v590 = vunpack.c.h.b16 %v60
    %v591 = vunpack.c.l.b16 %v61
    %v592 = vunpack.c.h.b16 %v61
    %v593 = vunpack.c.l.b16 %v62
    %v594 = vunpack.c.h.b16 %v62
    %v595 = vunpack.c.l.b16 %v63
    %v596 = vunpack.c.h.b16 %v63
    %v597 = vunpack.c.l.b16 %v64
    %v598 = vunpack.c.h.b16 %v64
    %v599 = vunpack.c.l.b16 %v65
    %v600 = vunpack.c.h.b16 %v65
    %v601 = vunpack.c.l.b16 %v66
    %v602 = vunpack.c.h.b16 %v66
    %v603 = vunpack.c.l.b16 %v67
    %v604 = vunpack.c.h.b16 %v67
    %v605 = vunpack.c.l.b16 %v68
    %v606 = vunpack.c.h.b16 %v68
    %v607 = vunpack.c.l.b16 %v69
    %v608 = vunpack.c.h.b16 %v69
    %v609 = vunpack.c.l.b16 %v70
    %v610 = vunpack.c.h.b16 %v70
    %v611 = vunpack.c.l.b16 %v71
    %v612 = vunpack.c.h.b16 %v71
    %v613 = vunpack.c.l.b16 %v72
    %v614 = vunpack.c.h.b16 %v72
    %v615 = vunpack.c.l.b16 %v73
    %v616 = vunpack.c.h.b16 %v73
    %v617 = vunpack.c.l.b16 %v74
    %v618 = vunpack.c.h.b16 %v74
    %v619 = vunpack.c.l.b16 %v75
    %v620 = vunpack.c.h.b16 %v75
    %v621 = vunpack.c.l.b16 %v76
    %v622 = vunpack.c.h.b16 %v76
    %v623 = vunpack.c.l.b16 %v77
    %v624 = vunpack.c.h.b16 %v77
    %v625 = vunpack.c.l.b16 %v78
    %v626 = vunpack.c.h.b16 %v78
    %v627 = vunpack.c.l.b16 %v79
    %v628 = vunpack.c.h.b16 %v79
    %v629 = vunpack.c.l.b16 %v80
    %v630 = vunpack.c.h.b16 %v80
    %v631 = vunpack.c.l.b16 %v81
    %v632 = vunpack.c.h.b16 %v81
    %v633 = vunpack.c.l.b16 %v82
    %v634 = vunpack.c.h.b16 %v82
    %v635 = vunpack.c.l.b16 %v83
    %v636 = vunpack.c.h.b16 %v83
    %v637 = vunpack.c.l.b16 %v84
    %v638 = vunpack.c.h.b16 %v84
    %v639 = vunpack.c.l.b16 %v85
    %v640 = vunpack.c.h.b16 %v85
    %v641 = vunpack.c.l.b16 %v86
    %v642 = vunpack.c.h.b16 %v86
    %v643 = vunpack.c.l.b16 %v87
    %v644 = vunpack.c.h.b16 %v87
    %v645 = vunpack.c.l.b16 %v88
    %v646 = vunpack.c.h.b16 %v88
    %v647 = vunpack.c.l.b16 %v89
    %v648 = vunpack.c.h.b16 %v89
    %v649 = vunpack.c.l.b16 %v90
    %v650 = vunpack.c.h.b16 %v90
    %v651 = vunpack.c.l.b16 %v91
    %v652 = vunpack.c.h.b16 %v91
    %v653 = vunpack.c.l.b16 %v92
    %v654 = vunpack.c.h.b16 %v92
    %v655 = vunpack.c.l.b16 %v93
    %v656 = vunpack.c.h.b16 %v93
    %v657 = vunpack.c.l.b16 %v94
    %v658 = vunpack.c.h.b16 %v94
    %v659 = vunpack.c.l.b16 %v95
    %v660 = vunpack.c.h.b16 %v95
    %v661 = vunpack.c.l.b16 %v96
    %v662 = vunpack.c.h.b16 %v96
    %v663 = vunpack.c.l.b16 %v97
    %v664 = vunpack.c.h.b16 %v97
    %v665 = vunpack.c.l.b16 %v98
    %v666 = vunpack.c.h.b16 %v98
    %v667 = vunpack.c.l.b16 %v99
    %v668 = vunpack.c.h.b16 %v99
    %v669 = vunpack.c.l.b16 %v100
    %v670 = vunpack.c.h.b16 %v100
    %v671 = vunpack.c.l.b16 %v101
    %v672 = vunpack.c.h.b16 %v101
    %v673 = vunpack.c.l.b16 %v102
    %v674 = vunpack.c.h.b16 %v102
    %v675 = vunpack.c.l.b16 %v103
    %v676 = vunpack.c.h.b16 %v103
    %v677 = vunpack.c.l.b16 %v104
    %v678 = vunpack.c.h.b16 %v104
    %v679 = vunpack.c.l.b16 %v105
    %v680 = vunpack.c.h.b16 %v105
    %v681 = vunpack.c.l.b16 %v106
    %v682 = vunpack.c.h.b16 %v106
    %v683 = vunpack.c.l.b16 %v107
    %v684 = vunpack.c.h.b16 %v107
    %v685 = vunpack.c.l.b16 %v108
    %v686 = vunpack.c.h.b16 %v108
    %v687 = vunpack.c.l.b16 %v109
    %v688 = vunpack.c.h.b16 %v109
    %v689 = vunpack.c.l.b16 %v110
    %v690 = vunpack.c.h.b16 %v110
    %v691 = vunpack.c.l.b16 %v111
    %v692 = vunpack.c.h.b16 %v111
    %v693 = vunpack.c.l.b16 %v112
    %v694 = vunpack.c.h.b16 %v112
    %v695 = vunpack.c.l.b16 %v113
    %v696 = vunpack.c.h.b16 %v113
    %v697 = vunpack.c.l.b16 %v114
    %v698 = vunpack.c.h.b16 %v114
    %v699 = vunpack.c.l.b16 %v115
    %v700 = vunpack.c.h.b16 %v115
    %v701 = vunpack.c.l.b16 %v116
    %v702 = vunpack.c.h.b16 %v116
    %v703 = vunpack.c.l.b16 %v117
    %v704 = vunpack.c.h.b16 %v117
    %v705 = vunpack.c.l.b16 %v118
    %v706 = vunpack.c.h.b16 %v118
    %v707 = vunpack.c.l.b16 %v119
    %v708 = vunpack.c.h.b16 %v119
    %v709 = vunpack.c.l.b16 %v120
    %v710 = vunpack.c.h.b16 %v120
    %v711 = vunpack.c.l.b16 %v121
    %v712 = vunpack.c.h.b16 %v121
    %v713 = vunpack.c.l.b16 %v122
    %v714 = vunpack.c.h.b16 %v122
    %v715 = vunpack.c.l.b16 %v123
    %v716 = vunpack.c.h.b16 %v123
    %v717 = vunpack.c.l.b16 %v124
    %v718 = vunpack.c.h.b16 %v124
    %v719 = vunpack.c.l.b16 %v125
    %v720 = vunpack.c.h.b16 %v125
    %v721 = vunpack.c.l.b16 %v126
    %v722 = vunpack.c.h.b16 %v126
    %v723 = vunpack.c.l.b16 %v127
    %v724 = vunpack.c.h.b16 %v127
    %v725 = vunpack.c.l.b16 %v128
    %v726 = vunpack.c.h.b16 %v128
    %v727 = vunpack.c.l.b16 %v129
    %v728 = vunpack.c.h.b16 %v129
    %v729 = vunpack.c.l.b16 %v130
    %v730 = vunpack.c.h.b16 %v130
    %v731 = vunpack.c.l.b16 %v131
    %v732 = vunpack.c.h.b16 %v131
    %v733 = vunpack.c.l.b16 %v132
    %v734 = vunpack.c.h.b16 %v132
    %v735 = vunpack.c.l.b16 %v133
    %v736 = vunpack.c.h.b16 %v133
    %v737 = vunpack.c.l.b16 %v134
    %v738 = vunpack.c.h.b16 %v134
    %v739 = vunpack.c.l.b16 %v135
    %v740 = vunpack.c.h.b16 %v135
    %v741 = vunpack.c.l.b16 %v136
    %v742 = vunpack.c.h.b16 %v136
    %v743 = vunpack.c.l.b16 %v137
    %v744 = vunpack.c.h.b16 %v137
    %v745 = vunpack.c.l.b16 %v138
    %v746 = vunpack.c.h.b16 %v138
    %v747 = vunpack.c.l.b16 %v139
    %v748 = vunpack.c.h.b16 %v139
    %v749 = vunpack.c.l.b16 %v140
    %v750 = vunpack.c.h.b16 %v140
    %v751 = vunpack.c.l.b16 %v141
    %v752 = vunpack.c.h.b16 %v141
    %v753 = vunpack.c.l.b16 %v142
    %v754 = vunpack.c.h.b16 %v142
    %v755 = vunpack.c.l.b16 %v143
    %v756 = vunpack.c.h.b16 %v143
    %v757 = vunpack.c.l.b16 %v144
    %v758 = vunpack.c.h.b16 %v144
    %v759 = vunpack.c.l.b16 %v145
    %v760 = vunpack.c.h.b16 %v145
    %v761 = vunpack.c.l.b16 %v146
    %v762 = vunpack.c.h.b16 %v146
    %v763 = vunpack.c.l.b16 %v147
    %v764 = vunpack.c.h.b16 %v147
    %v765 = vunpack.c.l.b16 %v148
    %v766 = vunpack.c.h.b16 %v148
    %v767 = vunpack.c.l.b16 %v149
    %v768 = vunpack.c.h.b16 %v149
    %v769 = vunpack.c.l.b16 %v150
    %v770 = vunpack.c.h.b16 %v150
    %v771 = vunpack.c.l.b16 %v151
    %v772 = vunpack.c.h.b16 %v151
    %v773 = vunpack.c.l.b16 %v152
    %v774 = vunpack.c.h.b16 %v152
    %v775 = vunpack.c.l.b16 %v153
    %v776 = vunpack.c.h.b16 %v153
    %v777 = vunpack.c.l.b16 %v154
    %v778 = vunpack.c.h.b16 %v154
    %v779 = vunpack.c.l.b16 %v155
    %v780 = vunpack.c.h.b16 %v155
    %v781 = vunpack.c.l.b16 %v156
    %v782 = vunpack.c.h.b16 %v156
    %v783 = vunpack.c.l.b16 %v157
    %v784 = vunpack.c.h.b16 %v157
    %v785 = vunpack.c.l.b16 %v158
    %v786 = vunpack.c.h.b16 %v158
    %v787 = vunpack.c.l.b16 %v159
    %v788 = vunpack.c.h.b16 %v159
    %v789 = vunpack.c.l.b16 %v160
    %v790 = vunpack.c.h.b16 %v160
    %v791 = vunpack.c.l.b16 %v161
    %v792 = vunpack.c.h.b16 %v161
    %v793 = vunpack.c.l.b16 %v162
    %v794 = vunpack.c.h.b16 %v162
    %v795 = vunpack.c.l.b16 %v163
    %v796 = vunpack.c.h.b16 %v163
    %v797 = vunpack.c.l.b16 %v164
    %v798 = vunpack.c.h.b16 %v164
    %v799 = vunpack.c.l.b16 %v165
    %v800 = vunpack.c.h.b16 %v165
    %v801 = vunpack.c.l.b16 %v166
    %v802 = vunpack.c.h.b16 %v166
    %v803 = vunpack.c.l.b16 %v167
    %v804 = vunpack.c.h.b16 %v167
    %v805 = vunpack.c.l.b16 %v168
    %v806 = vunpack.c.h.b16 %v168
    %v807 = vunpack.c.l.b16 %v169
    %v808 = vunpack.c.h.b16 %v169
    %v809 = vunpack.c.l.b16 %v170
    %v810 = vunpack.c.h.b16 %v170
    %v811 = vunpack.c.l.b16 %v171
    %v812 = vunpack.c.h.b16 %v171
    %v813 = vunpack.c.l.b16 %v172
    %v814 = vunpack.c.h.b16 %v172
    %v815 = vunpack.c.l.b16 %v173
    %v816 = vunpack.c.h.b16 %v173
    %v817 = vunpack.c.l.b16 %v174
    %v818 = vunpack.c.h.b16 %v174
    %v819 = vunpack.c.l.b16 %v175
    %v820 = vunpack.c.h.b16 %v175
    %v821 = vunpack.c.l.b16 %v176
    %v822 = vunpack.c.h.b16 %v176
    %v823 = vunpack.c.l.b16 %v177
    %v824 = vunpack.c.h.b16 %v177
    %v825 = vunpack.c.l.b16 %v178
    %v826 = vunpack.c.h.b16 %v178
    %v827 = vunpack.c.l.b16 %v179
    %v828 = vunpack.c.h.b16 %v179
    %v829 = vpack.c.b16 %v581, %v573
    %v830 = vpack.c.b16 %v582, %v574
    %v831 = vpack.c.b16 %v583, %v575
    %v832 = vpack.c.b16 %v584, %v576
    %v833 = vpack.c.b16 %v585, %v577
    %v834 = vpack.c.b16 %v586, %v578
    %v835 = vpack.c.b16 %v587, %v579
    %v836 = vpack.c.b16 %v588, %v580
    %v837 = vpack.c.b16 %v597, %v589
    %v838 = vpack.c.b16 %v598, %v590
    %v839 = vpack.c.b16 %v599, %v591
    %v840 = vpack.c.b16 %v600, %v592
    %v841 = vpack.c.b16 %v601, %v593
    %v842 = vpack.c.b16 %v602, %v594
    %v843 = vpack.c.b16 %v603, %v595
    %v844 = vpack.c.b16 %v604, %v596
    %v845 = vpack.c.b16 %v613, %v605
    %v846 = vpack.c.b16 %v614, %v606
    %v847 = vpack.c.b16 %v615, %v607
    %v848 = vpack.c.b16 %v616, %v608
    %v849 = vpack.c.b16 %v617, %v609
    %v850 = vpack.c.b16 %v618, %v610
    %v851 = vpack.c.b16 %v619, %v611
    %v852 = vpack.c.b16 %v620, %v612
    %v853 = vpack.c.b16 %v629, %v621
    %v854 = vpack.c.b16 %v630, %v622
    %v855 = vpack.c.b16 %v631, %v623
    %v856 = vpack.c.b16 %v632, %v624
    %v857 = vpack.c.b16 %v633, %v625
    %v858 = vpack.c.b16 %v634, %v626
    %v859 = vpack.c.b16 %v635, %v627
    %v860 = vpack.c.b16 %v636, %v628
    %v861 = vpack.c.b16 %v645, %v637
    %v862 = vpack.c.b16 %v646, %v638
    %v863 = vpack.c.b16 %v647, %v639
    %v864 = vpack.c.b16 %v648, %v640
    %v865 = vpack.c.b16 %v649, %v641
    %v866 = vpack.c.b16 %v650, %v642
    %v867 = vpack.c.b16 %v651, %v643
    %v868 = vpack.c.b16 %v652, %v644
    %v869 = vpack.c.b16 %v661, %v653
    %v870 = vpack.c.b16 %v662, %v654
    %v871 = vpack.c.b16 %v663, %v655
    %v872 = vpack.c.b16 %v664, %v656
    %v873 = vpack.c.b16 %v665, %v657
    %v874 = vpack.c.b16 %v666, %v658
    %v875 = vpack.c.b16 %v667, %v659
    %v876 = vpack.c.b16 %v668, %v660
    %v877 = vpack.c.b16 %v677, %v669
    %v878 = vpack.c.b16 %v678, %v670
    %v879 = vpack.c.b16 %v679, %v671
    %v880 = vpack.c.b16 %v680, %v672
    %v881 = vpack.c.b16 %v681, %v673
    %v882 = vpack.c.b16 %v682, %v674
    %v883 = vpack.c.b16 %v683, %v675
    %v884 = vpack.c.b16 %v684, %v676
    %v885 = vpack.c.b16 %v693, %v685
    %v886 = vpack.c.b16 %v694, %v686
    %v887 = vpack.c.b16 %v695, %v687
    %v888 = vpack.c.b16 %v696, %v688
    %v889 = vpack.c.b16 %v697, %v689
    %v890 = vpack.c.b16 %v698, %v690
    %v891 = vpack.c.b16 %v699, %v691
    %v892 = vpack.c.b16 %v700, %v692
    %v893 = vpack.c.b16 %v709, %v701
    %v894 = vpack.c.b16 %v710, %v702
    %v895 = vpack.c.b16 %v711, %v703
    %v896 = vpack.c.b16 %v712, %v704
    %v897 = vpack.c.b16 %v713, %v705
    %v898 = vpack.c.b16 %v714, %v706
    %v899 = vpack.c.b16 %v715, %v707
    %v900 = vpack.c.b16 %v716, %v708
    %v901 = vpack.c.b16 %v725, %v717
    %v902 = vpack.c.b16 %v726, %v718
    %v903 = vpack.c.b16 %v727, %v719
    %v904 = vpack.c.b16 %v728, %v720
    %v905 = vpack.c.b16 %v729, %v721
    %v906 = vpack.c.b16 %v730, %v722
    %v907 = vpack.c.b16 %v731, %v723
    %v908 = vpack.c.b16 %v732, %v724
    %v909 = vpack.c.b16 %v741, %v733
    %v910 = vpack.c.b16 %v742, %v734
    %v911 = vpack.c.b16 %v743, %v735
    %v912 = vpack.c.b16 %v744, %v736
    %v913 = vpack.c.b16 %v745, %v737
    %v914 = vpack.c.b16 %v746, %v738
    %v915 = vpack.c.b16 %v747, %v739
    %v916 = vpack.c.b16 %v748, %v740
    %v917 = vpack.c.b16 %v757, %v749
    %v918 = vpack.c.b16 %v758, %v750
    %v919 = vpack.c.b16 %v759, %v751
    %v920 = vpack.c.b16 %v760, %v752
    %v921 = vpack.c.b16 %v761, %v753
    %v922 = vpack.c.b16 %v762, %v754
    %v923 = vpack.c.b16 %v763, %v755
    %v924 = vpack.c.b16 %v764, %v756
    %v925 = vpack.c.b16 %v773, %v765
    %v926 = vpack.c.b16 %v774, %v766
    %v927 = vpack.c.b16 %v775, %v767
    %v928 = vpack.c.b16 %v776, %v768
    %v929 = vpack.c.b16 %v777, %v769
    %v930 = vpack.c.b16 %v778, %v770
    %v931 = vpack.c.b16 %v779, %v771
    %v932 = vpack.c.b16 %v780, %v772
    %v933 = vpack.c.b16 %v789, %v781
    %v934 = vpack.c.b16 %v790, %v782
    %v935 = vpack.c.b16 %v791, %v783
    %v936 = vpack.c.b16 %v792, %v784
    %v937 = vpack.c.b16 %v793, %v785
    %v938 = vpack.c.b16 %v794, %v786
    %v939 = vpack.c.b16 %v795, %v787
    %v940 = vpack.c.b16 %v796, %v788
    %v941 = vpack.c.b16 %v805, %v797
    %v942 = vpack.c.b16 %v806, %v798
    %v943 = vpack.c.b16 %v807, %v799
    %v944 = vpack.c.b16 %v808, %v800
    %v945 = vpack.c.b16 %v809, %v801
    %v946 = vpack.c.b16 %v810, %v802
    %v947 = vpack.c.b16 %v811, %v803
    %v948 = vpack.c.b16 %v812, %v804
    %v949 = vpack.c.b16 %v821, %v813
    %v950 = vpack.c.b16 %v822, %v814
    %v951 = vpack.c.b16 %v823, %v815
    %v952 = vpack.c.b16 %v824, %v816
    %v953 = vpack.c.b16 %v825, %v817
    %v954 = vpack.c.b16 %v826, %v818
    %v955 = vpack.c.b16 %v827, %v819
    %v956 = vpack.c.b16 %v828, %v820
    %1085 = vmatprep.subr.bf16.mxu0 %v830
    %1086 = vmatpush1.bf16.msra.mxu0 %v829
    %1087 = vmatprep.subr.bf16.mxu0 %v838
    %1088 = vmatpush1.bf16.msra.mxu0 %v837
    %1089 = vmatprep.subr.bf16.mxu0 %v846
    %1090 = vmatpush1.bf16.msra.mxu0 %v845
    %1091 = vmatprep.subr.bf16.mxu0 %v854
    %1092 = vmatpush1.bf16.msra.mxu0 %v853
    %1093 = vmatprep.subr.bf16.mxu0 %v862
    %1094 = vmatpush1.bf16.msra.mxu0 %v861
    %1095 = vmatprep.subr.bf16.mxu0 %v870
    %1096 = vmatpush1.bf16.msra.mxu0 %v869
    %1097 = vmatprep.subr.bf16.mxu0 %v878
    %1098 = vmatpush1.bf16.msra.mxu0 %v877
    %1099 = vmatprep.subr.bf16.mxu0 %v886
    %1100 = vmatpush1.bf16.msra.mxu0 %v885
    %1101 = vmatprep.subr.bf16.mxu0 %v894
    %1102 = vmatpush1.bf16.msra.mxu0 %v893
    %1103 = vmatprep.subr.bf16.mxu0 %v902
    %1104 = vmatpush1.bf16.msra.mxu0 %v901
    %1105 = vmatprep.subr.bf16.mxu0 %v910
    %1106 = vmatpush1.bf16.msra.mxu0 %v909
    %1107 = vmatprep.subr.bf16.mxu0 %v918
    %1108 = vmatpush1.bf16.msra.mxu0 %v917
    %1109 = vmatprep.subr.bf16.mxu0 %v926
    %1110 = vmatpush1.bf16.msra.mxu0 %v925
    %1111 = vmatprep.subr.bf16.mxu0 %v934
    %1112 = vmatpush1.bf16.msra.mxu0 %v933
    %1113 = vmatprep.subr.bf16.mxu0 %v942
    %1114 = vmatpush1.bf16.msra.mxu0 %v941
    %1115 = vmatprep.subr.bf16.mxu0 %v950
    %1116 = vmatpush1.bf16.msra.mxu0 %v949
    %1117 = vmatprep.mubr.bf16.mxu0 0
    %1118 = vmatmul.mubr.bf16.gmra.mrb[0].mxu0 0
    %v1119 = vpop.f32.mrb[0].mxu0
    %v1120 = vadd.f32 0.0, %v1119
    %v1121 = vpop.f32.mrb[0].mxu0
    %v1122 = vadd.f32 0.0, %v1121
    %v1123 = vpop.f32.mrb[0].mxu0
    %v1124 = vpop.f32.mrb[0].mxu0
    %1125 = vdwg.mxu0
    %1126 = vmatprep.subr.bf16.mxu0 %v832
    %1127 = vmatpush1.bf16.msra.mxu0 %v831
    %1128 = vmatprep.subr.bf16.mxu0 %v840
    %1129 = vmatpush1.bf16.msra.mxu0 %v839
    %1130 = vmatprep.subr.bf16.mxu0 %v848
    %1131 = vmatpush1.bf16.msra.mxu0 %v847
    %1132 = vmatprep.subr.bf16.mxu0 %v856
    %1133 = vmatpush1.bf16.msra.mxu0 %v855
    %1134 = vmatprep.subr.bf16.mxu0 %v864
    %1135 = vmatpush1.bf16.msra.mxu0 %v863
    %1136 = vmatprep.subr.bf16.mxu0 %v872
    %1137 = vmatpush1.bf16.msra.mxu0 %v871
    %1138 = vmatprep.subr.bf16.mxu0 %v880
    %1139 = vmatpush1.bf16.msra.mxu0 %v879
    %1140 = vmatprep.subr.bf16.mxu0 %v888
    %1141 = vmatpush1.bf16.msra.mxu0 %v887
    %1142 = vmatprep.subr.bf16.mxu0 %v896
    %1143 = vmatpush1.bf16.msra.mxu0 %v895
    %1144 = vmatprep.subr.bf16.mxu0 %v904
    %1145 = vmatpush1.bf16.msra.mxu0 %v903
    %1146 = vmatprep.subr.bf16.mxu0 %v912
    %1147 = vmatpush1.bf16.msra.mxu0 %v911
    %1148 = vmatprep.subr.bf16.mxu0 %v920
    %1149 = vmatpush1.bf16.msra.mxu0 %v919
    %1150 = vmatprep.subr.bf16.mxu0 %v928
    %1151 = vmatpush1.bf16.msra.mxu0 %v927
    %1152 = vmatprep.subr.bf16.mxu0 %v936
    %1153 = vmatpush1.bf16.msra.mxu0 %v935
    %1154 = vmatprep.subr.bf16.mxu0 %v944
    %1155 = vmatpush1.bf16.msra.mxu0 %v943
    %1156 = vmatprep.subr.bf16.mxu0 %v952
    %1157 = vmatpush1.bf16.msra.mxu0 %v951
    %1158 = vmatprep.mubr.bf16.mxu0 0
    %1159 = vmatmul.mubr.bf16.gmra.mrb[0].mxu0 0
    %v1160 = vpop.f32.mrb[0].mxu0
    %v1161 = vadd.f32 0.0, %v1160
    %v1162 = vpop.f32.mrb[0].mxu0
    %v1163 = vadd.f32 0.0, %v1162
    %v1164 = vpop.f32.mrb[0].mxu0
    %v1165 = vpop.f32.mrb[0].mxu0
    %1166 = vdwg.mxu0
    %1167 = vmatprep.subr.bf16.mxu0 %v834
    %1168 = vmatpush1.bf16.msra.mxu0 %v833
    %1169 = vmatprep.subr.bf16.mxu0 %v842
    %1170 = vmatpush1.bf16.msra.mxu0 %v841
    %1171 = vmatprep.subr.bf16.mxu0 %v850
    %1172 = vmatpush1.bf16.msra.mxu0 %v849
    %1173 = vmatprep.subr.bf16.mxu0 %v858
    %1174 = vmatpush1.bf16.msra.mxu0 %v857
    %1175 = vmatprep.subr.bf16.mxu0 %v866
    %1176 = vmatpush1.bf16.msra.mxu0 %v865
    %1177 = vmatprep.subr.bf16.mxu0 %v874
    %1178 = vmatpush1.bf16.msra.mxu0 %v873
    %1179 = vmatprep.subr.bf16.mxu0 %v882
    %1180 = vmatpush1.bf16.msra.mxu0 %v881
    %1181 = vmatprep.subr.bf16.mxu0 %v890
    %1182 = vmatpush1.bf16.msra.mxu0 %v889
    %1183 = vmatprep.subr.bf16.mxu0 %v898
    %1184 = vmatpush1.bf16.msra.mxu0 %v897
    %1185 = vmatprep.subr.bf16.mxu0 %v906
    %1186 = vmatpush1.bf16.msra.mxu0 %v905
    %1187 = vmatprep.subr.bf16.mxu0 %v914
    %1188 = vmatpush1.bf16.msra.mxu0 %v913
    %1189 = vmatprep.subr.bf16.mxu0 %v922
    %1190 = vmatpush1.bf16.msra.mxu0 %v921
    %1191 = vmatprep.subr.bf16.mxu0 %v930
    %1192 = vmatpush1.bf16.msra.mxu0 %v929
    %1193 = vmatprep.subr.bf16.mxu0 %v938
    %1194 = vmatpush1.bf16.msra.mxu0 %v937
    %1195 = vmatprep.subr.bf16.mxu0 %v946
    %1196 = vmatpush1.bf16.msra.mxu0 %v945
    %1197 = vmatprep.subr.bf16.mxu0 %v954
    %1198 = vmatpush1.bf16.msra.mxu0 %v953
    %1199 = vmatprep.mubr.bf16.mxu0 0
    %1200 = vmatmul.mubr.bf16.gmra.mrb[0].mxu0 0
    %v1201 = vpop.f32.mrb[0].mxu0
    %v1202 = vadd.f32 0.0, %v1201
    %v1203 = vpop.f32.mrb[0].mxu0
    %v1204 = vadd.f32 0.0, %v1203
    %v1205 = vpop.f32.mrb[0].mxu0
    %v1206 = vpop.f32.mrb[0].mxu0
    %1207 = vdwg.mxu0
    %1208 = vmatprep.subr.bf16.mxu0 %v836
    %1209 = vmatpush1.bf16.msra.mxu0 %v835
    %1210 = vmatprep.subr.bf16.mxu0 %v844
    %1211 = vmatpush1.bf16.msra.mxu0 %v843
    %1212 = vmatprep.subr.bf16.mxu0 %v852
    %1213 = vmatpush1.bf16.msra.mxu0 %v851
    %1214 = vmatprep.subr.bf16.mxu0 %v860
    %1215 = vmatpush1.bf16.msra.mxu0 %v859
    %1216 = vmatprep.subr.bf16.mxu0 %v868
    %1217 = vmatpush1.bf16.msra.mxu0 %v867
    %1218 = vmatprep.subr.bf16.mxu0 %v876
    %1219 = vmatpush1.bf16.msra.mxu0 %v875
    %1220 = vmatprep.subr.bf16.mxu0 %v884
    %1221 = vmatpush1.bf16.msra.mxu0 %v883
    %1222 = vmatprep.subr.bf16.mxu0 %v892
    %1223 = vmatpush1.bf16.msra.mxu0 %v891
    %1224 = vmatprep.subr.bf16.mxu0 %v900
    %1225 = vmatpush1.bf16.msra.mxu0 %v899
    %1226 = vmatprep.subr.bf16.mxu0 %v908
    %1227 = vmatpush1.bf16.msra.mxu0 %v907
    %1228 = vmatprep.subr.bf16.mxu0 %v916
    %1229 = vmatpush1.bf16.msra.mxu0 %v915
    %1230 = vmatprep.subr.bf16.mxu0 %v924
    %1231 = vmatpush1.bf16.msra.mxu0 %v923
    %1232 = vmatprep.subr.bf16.mxu0 %v932
    %1233 = vmatpush1.bf16.msra.mxu0 %v931
    %1234 = vmatprep.subr.bf16.mxu0 %v940
    %1235 = vmatpush1.bf16.msra.mxu0 %v939
    %1236 = vmatprep.subr.bf16.mxu0 %v948
    %1237 = vmatpush1.bf16.msra.mxu0 %v947
    %1238 = vmatprep.subr.bf16.mxu0 %v956
    %1239 = vmatpush1.bf16.msra.mxu0 %v955
    %1240 = vmatprep.mubr.bf16.mxu0 0
    %1241 = vmatmul.mubr.bf16.gmra.mrb[0].mxu0 0
    %v1242 = vpop.f32.mrb[0].mxu0
    %v1243 = vadd.f32 0.0, %v1242
    %v1244 = vpop.f32.mrb[0].mxu0
    %v1245 = vadd.f32 0.0, %v1244
    %v1246 = vpop.f32.mrb[0].mxu0
    %v1247 = vpop.f32.mrb[0].mxu0
    %1248 = vdwg.mxu0
    %v1249 = vadd.f32 %v437, %v1120
    %v1250 = vadd.f32 %v438, %v1122
    %v1251 = vadd.f32 %v439, %v1161
    %v1252 = vadd.f32 %v440, %v1163
    %v1253 = vadd.f32 %v441, %v1202
    %v1254 = vadd.f32 %v442, %v1204
    %v1255 = vadd.f32 %v443, %v1243
    %v1256 = vadd.f32 %v444, %v1245
    %v1257 = vxor.u32 %v1249, 2147483648
    %v1258 = vxor.u32 %v1250, 2147483648
    %v1259 = vxor.u32 %v1251, 2147483648
    %v1260 = vxor.u32 %v1252, 2147483648
    %v1261 = vxor.u32 %v1253, 2147483648
    %v1262 = vxor.u32 %v1254, 2147483648
    %v1263 = vmul.f32 %v1257, 1.442695
    %v1264 = vpow.pop %v1263
    %v1265 = vmul.f32 %v1258, 1.442695
    %v1266 = vpow.pop %v1265
    %v1267 = vmul.f32 %v1259, 1.442695
    %v1268 = vpow.pop %v1267
    %v1269 = vmul.f32 %v1260, 1.442695
    %v1270 = vpow.pop %v1269
    %v1271 = vmul.f32 %v1261, 1.442695
    %v1272 = vpow.pop %v1271
    %v1273 = vmul.f32 %v1262, 1.442695
    %v1274 = vpow.pop %v1273
    %v1275 = vadd.f32 %v1264, 1.0
    %v1276 = vadd.f32 %v1266, 1.0
    %v1277 = vadd.f32 %v1268, 1.0
    %v1278 = vadd.f32 %v1270, 1.0
    %v1279 = vadd.f32 %v1272, 1.0
    %v1280 = vadd.f32 %v1274, 1.0
    %v1281 = vrcp.pop %v1275
    %v1282 = vmul.f32 1.0, %v1281
    %v1283 = vrcp.pop %v1276
    %v1284 = vmul.f32 1.0, %v1283
    %v1285 = vrcp.pop %v1277
    %v1286 = vmul.f32 1.0, %v1285
    %v1287 = vrcp.pop %v1278
    %v1288 = vmul.f32 1.0, %v1287
    %v1289 = vrcp.pop %v1279
    %v1290 = vmul.f32 1.0, %v1289
    %v1291 = vrcp.pop %v1280
    %v1292 = vmul.f32 1.0, %v1291
    %v1293 = vtanh.pop %v1255
    %v1294 = vtanh.pop %v1256
    %v1295 = vmul.f32 %v1286, 0.0
    %v1296 = vmul.f32 %v1288, 0.0
    %v1297 = vmul.f32 %v1282, %v1293
    %v1298 = vmul.f32 %v1284, %v1294
    %v1299 = vadd.f32 %v1295, %v1297
    %v1300 = vadd.f32 %v1296, %v1298
    %v1301 = vtanh.pop %v1299
    %v1302 = vtanh.pop %v1300
    %v1303 = vmul.f32 %v1290, %v1301
    %v1304 = vmul.f32 %v1292, %v1302
    %v1305 = vpack.c.bf16 %v1303, %v1303
    %v1306 = vpack.c.bf16 %v1304, %v1304
    %v1308 = vlaneseq
    %v1309 = vshrl.u32 %v1308, 7
    %v1310 = vsub.s32 0, %v1309
    %v1311 = vrot.slane %v436, %v1310
    %v1312 = vlaneseq
    %v1313 = vshrl.u32 %v1312, 7
    %v1314 = vsub.s32 1, %v1313
    %v1315 = vrot.slane %v436, %v1314
    %v1316 = vlaneseq
    %v1317 = vshrl.u32 %v1316, 7
    %v1318 = vsub.s32 2, %v1317
    %v1319 = vrot.slane %v436, %v1318
    %v1320 = vlaneseq
    %v1321 = vshrl.u32 %v1320, 7
    %v1322 = vsub.s32 3, %v1321
    %v1323 = vrot.slane %v436, %v1322
    %v1324 = vlaneseq
    %v1325 = vshrl.u32 %v1324, 7
    %v1326 = vsub.s32 4, %v1325
    %v1327 = vrot.slane %v436, %v1326
    %v1328 = vlaneseq
    %v1329 = vshrl.u32 %v1328, 7
    %v1330 = vsub.s32 5, %v1329
    %v1331 = vrot.slane %v436, %v1330
    %v1332 = vlaneseq
    %v1333 = vshrl.u32 %v1332, 7
    %v1334 = vsub.s32 6, %v1333
    %v1335 = vrot.slane %v436, %v1334
    %v1336 = vlaneseq
    %v1337 = vshrl.u32 %v1336, 7
    %v1338 = vsub.s32 7, %v1337
    %v1339 = vrot.slane %v436, %v1338
    %v1604 = vunpack.c.l.b16 %v180
    %v1605 = vunpack.c.h.b16 %v180
    %v1606 = vunpack.c.l.b16 %v181
    %v1607 = vunpack.c.h.b16 %v181
    %v1608 = vunpack.c.l.b16 %v182
    %v1609 = vunpack.c.h.b16 %v182
    %v1610 = vunpack.c.l.b16 %v183
    %v1611 = vunpack.c.h.b16 %v183
    %v1612 = vunpack.c.l.b16 %v184
    %v1613 = vunpack.c.h.b16 %v184
    %v1614 = vunpack.c.l.b16 %v185
    %v1615 = vunpack.c.h.b16 %v185
    %v1616 = vunpack.c.l.b16 %v186
    %v1617 = vunpack.c.h.b16 %v186
    %v1618 = vunpack.c.l.b16 %v187
    %v1619 = vunpack.c.h.b16 %v187
    %v1620 = vunpack.c.l.b16 %v188
    %v1621 = vunpack.c.h.b16 %v188
    %v1622 = vunpack.c.l.b16 %v189
    %v1623 = vunpack.c.h.b16 %v189
    %v1624 = vunpack.c.l.b16 %v190
    %v1625 = vunpack.c.h.b16 %v190
    %v1626 = vunpack.c.l.b16 %v191
    %v1627 = vunpack.c.h.b16 %v191
    %v1628 = vunpack.c.l.b16 %v192
    %v1629 = vunpack.c.h.b16 %v192
    %v1630 = vunpack.c.l.b16 %v193
    %v1631 = vunpack.c.h.b16 %v193
    %v1632 = vunpack.c.l.b16 %v194
    %v1633 = vunpack.c.h.b16 %v194
    %v1634 = vunpack.c.l.b16 %v195
    %v1635 = vunpack.c.h.b16 %v195
    %v1636 = vunpack.c.l.b16 %v196
    %v1637 = vunpack.c.h.b16 %v196
    %v1638 = vunpack.c.l.b16 %v197
    %v1639 = vunpack.c.h.b16 %v197
    %v1640 = vunpack.c.l.b16 %v198
    %v1641 = vunpack.c.h.b16 %v198
    %v1642 = vunpack.c.l.b16 %v199
    %v1643 = vunpack.c.h.b16 %v199
    %v1644 = vunpack.c.l.b16 %v200
    %v1645 = vunpack.c.h.b16 %v200
    %v1646 = vunpack.c.l.b16 %v201
    %v1647 = vunpack.c.h.b16 %v201
    %v1648 = vunpack.c.l.b16 %v202
    %v1649 = vunpack.c.h.b16 %v202
    %v1650 = vunpack.c.l.b16 %v203
    %v1651 = vunpack.c.h.b16 %v203
    %v1652 = vunpack.c.l.b16 %v204
    %v1653 = vunpack.c.h.b16 %v204
    %v1654 = vunpack.c.l.b16 %v205
    %v1655 = vunpack.c.h.b16 %v205
    %v1656 = vunpack.c.l.b16 %v206
    %v1657 = vunpack.c.h.b16 %v206
    %v1658 = vunpack.c.l.b16 %v207
    %v1659 = vunpack.c.h.b16 %v207
    %v1660 = vunpack.c.l.b16 %v208
    %v1661 = vunpack.c.h.b16 %v208
    %v1662 = vunpack.c.l.b16 %v209
    %v1663 = vunpack.c.h.b16 %v209
    %v1664 = vunpack.c.l.b16 %v210
    %v1665 = vunpack.c.h.b16 %v210
    %v1666 = vunpack.c.l.b16 %v211
    %v1667 = vunpack.c.h.b16 %v211
    %v1668 = vunpack.c.l.b16 %v212
    %v1669 = vunpack.c.h.b16 %v212
    %v1670 = vunpack.c.l.b16 %v213
    %v1671 = vunpack.c.h.b16 %v213
    %v1672 = vunpack.c.l.b16 %v214
    %v1673 = vunpack.c.h.b16 %v214
    %v1674 = vunpack.c.l.b16 %v215
    %v1675 = vunpack.c.h.b16 %v215
    %v1676 = vunpack.c.l.b16 %v216
    %v1677 = vunpack.c.h.b16 %v216
    %v1678 = vunpack.c.l.b16 %v217
    %v1679 = vunpack.c.h.b16 %v217
    %v1680 = vunpack.c.l.b16 %v218
    %v1681 = vunpack.c.h.b16 %v218
    %v1682 = vunpack.c.l.b16 %v219
    %v1683 = vunpack.c.h.b16 %v219
    %v1684 = vunpack.c.l.b16 %v220
    %v1685 = vunpack.c.h.b16 %v220
    %v1686 = vunpack.c.l.b16 %v221
    %v1687 = vunpack.c.h.b16 %v221
    %v1688 = vunpack.c.l.b16 %v222
    %v1689 = vunpack.c.h.b16 %v222
    %v1690 = vunpack.c.l.b16 %v223
    %v1691 = vunpack.c.h.b16 %v223
    %v1692 = vunpack.c.l.b16 %v224
    %v1693 = vunpack.c.h.b16 %v224
    %v1694 = vunpack.c.l.b16 %v225
    %v1695 = vunpack.c.h.b16 %v225
    %v1696 = vunpack.c.l.b16 %v226
    %v1697 = vunpack.c.h.b16 %v226
    %v1698 = vunpack.c.l.b16 %v227
    %v1699 = vunpack.c.h.b16 %v227
    %v1700 = vunpack.c.l.b16 %v228
    %v1701 = vunpack.c.h.b16 %v228
    %v1702 = vunpack.c.l.b16 %v229
    %v1703 = vunpack.c.h.b16 %v229
    %v1704 = vunpack.c.l.b16 %v230
    %v1705 = vunpack.c.h.b16 %v230
    %v1706 = vunpack.c.l.b16 %v231
    %v1707 = vunpack.c.h.b16 %v231
    %v1708 = vunpack.c.l.b16 %v232
    %v1709 = vunpack.c.h.b16 %v232
    %v1710 = vunpack.c.l.b16 %v233
    %v1711 = vunpack.c.h.b16 %v233
    %v1712 = vunpack.c.l.b16 %v234
    %v1713 = vunpack.c.h.b16 %v234
    %v1714 = vunpack.c.l.b16 %v235
    %v1715 = vunpack.c.h.b16 %v235
    %v1716 = vunpack.c.l.b16 %v236
    %v1717 = vunpack.c.h.b16 %v236
    %v1718 = vunpack.c.l.b16 %v237
    %v1719 = vunpack.c.h.b16 %v237
    %v1720 = vunpack.c.l.b16 %v238
    %v1721 = vunpack.c.h.b16 %v238
    %v1722 = vunpack.c.l.b16 %v239
    %v1723 = vunpack.c.h.b16 %v239
    %v1724 = vunpack.c.l.b16 %v240
    %v1725 = vunpack.c.h.b16 %v240
    %v1726 = vunpack.c.l.b16 %v241
    %v1727 = vunpack.c.h.b16 %v241
    %v1728 = vunpack.c.l.b16 %v242
    %v1729 = vunpack.c.h.b16 %v242
    %v1730 = vunpack.c.l.b16 %v243
    %v1731 = vunpack.c.h.b16 %v243
    %v1732 = vunpack.c.l.b16 %v244
    %v1733 = vunpack.c.h.b16 %v244
    %v1734 = vunpack.c.l.b16 %v245
    %v1735 = vunpack.c.h.b16 %v245
    %v1736 = vunpack.c.l.b16 %v246
    %v1737 = vunpack.c.h.b16 %v246
    %v1738 = vunpack.c.l.b16 %v247
    %v1739 = vunpack.c.h.b16 %v247
    %v1740 = vunpack.c.l.b16 %v248
    %v1741 = vunpack.c.h.b16 %v248
    %v1742 = vunpack.c.l.b16 %v249
    %v1743 = vunpack.c.h.b16 %v249
    %v1744 = vunpack.c.l.b16 %v250
    %v1745 = vunpack.c.h.b16 %v250
    %v1746 = vunpack.c.l.b16 %v251
    %v1747 = vunpack.c.h.b16 %v251
    %v1748 = vunpack.c.l.b16 %v252
    %v1749 = vunpack.c.h.b16 %v252
    %v1750 = vunpack.c.l.b16 %v253
    %v1751 = vunpack.c.h.b16 %v253
    %v1752 = vunpack.c.l.b16 %v254
    %v1753 = vunpack.c.h.b16 %v254
    %v1754 = vunpack.c.l.b16 %v255
    %v1755 = vunpack.c.h.b16 %v255
    %v1756 = vunpack.c.l.b16 %v256
    %v1757 = vunpack.c.h.b16 %v256
    %v1758 = vunpack.c.l.b16 %v257
    %v1759 = vunpack.c.h.b16 %v257
    %v1760 = vunpack.c.l.b16 %v258
    %v1761 = vunpack.c.h.b16 %v258
    %v1762 = vunpack.c.l.b16 %v259
    %v1763 = vunpack.c.h.b16 %v259
    %v1764 = vunpack.c.l.b16 %v260
    %v1765 = vunpack.c.h.b16 %v260
    %v1766 = vunpack.c.l.b16 %v261
    %v1767 = vunpack.c.h.b16 %v261
    %v1768 = vunpack.c.l.b16 %v262
    %v1769 = vunpack.c.h.b16 %v262
    %v1770 = vunpack.c.l.b16 %v263
    %v1771 = vunpack.c.h.b16 %v263
    %v1772 = vunpack.c.l.b16 %v264
    %v1773 = vunpack.c.h.b16 %v264
    %v1774 = vunpack.c.l.b16 %v265
    %v1775 = vunpack.c.h.b16 %v265
    %v1776 = vunpack.c.l.b16 %v266
    %v1777 = vunpack.c.h.b16 %v266
    %v1778 = vunpack.c.l.b16 %v267
    %v1779 = vunpack.c.h.b16 %v267
    %v1780 = vunpack.c.l.b16 %v268
    %v1781 = vunpack.c.h.b16 %v268
    %v1782 = vunpack.c.l.b16 %v269
    %v1783 = vunpack.c.h.b16 %v269
    %v1784 = vunpack.c.l.b16 %v270
    %v1785 = vunpack.c.h.b16 %v270
    %v1786 = vunpack.c.l.b16 %v271
    %v1787 = vunpack.c.h.b16 %v271
    %v1788 = vunpack.c.l.b16 %v272
    %v1789 = vunpack.c.h.b16 %v272
    %v1790 = vunpack.c.l.b16 %v273
    %v1791 = vunpack.c.h.b16 %v273
    %v1792 = vunpack.c.l.b16 %v274
    %v1793 = vunpack.c.h.b16 %v274
    %v1794 = vunpack.c.l.b16 %v275
    %v1795 = vunpack.c.h.b16 %v275
    %v1796 = vunpack.c.l.b16 %v276
    %v1797 = vunpack.c.h.b16 %v276
    %v1798 = vunpack.c.l.b16 %v277
    %v1799 = vunpack.c.h.b16 %v277
    %v1800 = vunpack.c.l.b16 %v278
    %v1801 = vunpack.c.h.b16 %v278
    %v1802 = vunpack.c.l.b16 %v279
    %v1803 = vunpack.c.h.b16 %v279
    %v1804 = vunpack.c.l.b16 %v280
    %v1805 = vunpack.c.h.b16 %v280
    %v1806 = vunpack.c.l.b16 %v281
    %v1807 = vunpack.c.h.b16 %v281
    %v1808 = vunpack.c.l.b16 %v282
    %v1809 = vunpack.c.h.b16 %v282
    %v1810 = vunpack.c.l.b16 %v283
    %v1811 = vunpack.c.h.b16 %v283
    %v1812 = vunpack.c.l.b16 %v284
    %v1813 = vunpack.c.h.b16 %v284
    %v1814 = vunpack.c.l.b16 %v285
    %v1815 = vunpack.c.h.b16 %v285
    %v1816 = vunpack.c.l.b16 %v286
    %v1817 = vunpack.c.h.b16 %v286
    %v1818 = vunpack.c.l.b16 %v287
    %v1819 = vunpack.c.h.b16 %v287
    %v1820 = vunpack.c.l.b16 %v288
    %v1821 = vunpack.c.h.b16 %v288
    %v1822 = vunpack.c.l.b16 %v289
    %v1823 = vunpack.c.h.b16 %v289
    %v1824 = vunpack.c.l.b16 %v290
    %v1825 = vunpack.c.h.b16 %v290
    %v1826 = vunpack.c.l.b16 %v291
    %v1827 = vunpack.c.h.b16 %v291
    %v1828 = vunpack.c.l.b16 %v292
    %v1829 = vunpack.c.h.b16 %v292
    %v1830 = vunpack.c.l.b16 %v293
    %v1831 = vunpack.c.h.b16 %v293
    %v1832 = vunpack.c.l.b16 %v294
    %v1833 = vunpack.c.h.b16 %v294
    %v1834 = vunpack.c.l.b16 %v295
    %v1835 = vunpack.c.h.b16 %v295
    %v1836 = vunpack.c.l.b16 %v296
    %v1837 = vunpack.c.h.b16 %v296
    %v1838 = vunpack.c.l.b16 %v297
    %v1839 = vunpack.c.h.b16 %v297
    %v1840 = vunpack.c.l.b16 %v298
    %v1841 = vunpack.c.h.b16 %v298
    %v1842 = vunpack.c.l.b16 %v299
    %v1843 = vunpack.c.h.b16 %v299
    %v1844 = vunpack.c.l.b16 %v300
    %v1845 = vunpack.c.h.b16 %v300
    %v1846 = vunpack.c.l.b16 %v301
    %v1847 = vunpack.c.h.b16 %v301
    %v1848 = vunpack.c.l.b16 %v302
    %v1849 = vunpack.c.h.b16 %v302
    %v1850 = vunpack.c.l.b16 %v303
    %v1851 = vunpack.c.h.b16 %v303
    %v1852 = vunpack.c.l.b16 %v304
    %v1853 = vunpack.c.h.b16 %v304
    %v1854 = vunpack.c.l.b16 %v305
    %v1855 = vunpack.c.h.b16 %v305
    %v1856 = vunpack.c.l.b16 %v306
    %v1857 = vunpack.c.h.b16 %v306
    %v1858 = vunpack.c.l.b16 %v307
    %v1859 = vunpack.c.h.b16 %v307
    %v1860 = vunpack.c.l.b16 %v308
    %v1861 = vunpack.c.h.b16 %v308
    %v1862 = vunpack.c.l.b16 %v309
    %v1863 = vunpack.c.h.b16 %v309
    %v1864 = vunpack.c.l.b16 %v310
    %v1865 = vunpack.c.h.b16 %v310
    %v1866 = vunpack.c.l.b16 %v311
    %v1867 = vunpack.c.h.b16 %v311
    %v1868 = vunpack.c.l.b16 %v312
    %v1869 = vunpack.c.h.b16 %v312
    %v1870 = vunpack.c.l.b16 %v313
    %v1871 = vunpack.c.h.b16 %v313
    %v1872 = vunpack.c.l.b16 %v314
    %v1873 = vunpack.c.h.b16 %v314
    %v1874 = vunpack.c.l.b16 %v315
    %v1875 = vunpack.c.h.b16 %v315
    %v1876 = vunpack.c.l.b16 %v316
    %v1877 = vunpack.c.h.b16 %v316
    %v1878 = vunpack.c.l.b16 %v317
    %v1879 = vunpack.c.h.b16 %v317
    %v1880 = vunpack.c.l.b16 %v318
    %v1881 = vunpack.c.h.b16 %v318
    %v1882 = vunpack.c.l.b16 %v319
    %v1883 = vunpack.c.h.b16 %v319
    %v1884 = vunpack.c.l.b16 %v320
    %v1885 = vunpack.c.h.b16 %v320
    %v1886 = vunpack.c.l.b16 %v321
    %v1887 = vunpack.c.h.b16 %v321
    %v1888 = vunpack.c.l.b16 %v322
    %v1889 = vunpack.c.h.b16 %v322
    %v1890 = vunpack.c.l.b16 %v323
    %v1891 = vunpack.c.h.b16 %v323
    %v1892 = vunpack.c.l.b16 %v324
    %v1893 = vunpack.c.h.b16 %v324
    %v1894 = vunpack.c.l.b16 %v325
    %v1895 = vunpack.c.h.b16 %v325
    %v1896 = vunpack.c.l.b16 %v326
    %v1897 = vunpack.c.h.b16 %v326
    %v1898 = vunpack.c.l.b16 %v327
    %v1899 = vunpack.c.h.b16 %v327
    %v1900 = vunpack.c.l.b16 %v328
    %v1901 = vunpack.c.h.b16 %v328
    %v1902 = vunpack.c.l.b16 %v329
    %v1903 = vunpack.c.h.b16 %v329
    %v1904 = vunpack.c.l.b16 %v330
    %v1905 = vunpack.c.h.b16 %v330
    %v1906 = vunpack.c.l.b16 %v331
    %v1907 = vunpack.c.h.b16 %v331
    %v1908 = vunpack.c.l.b16 %v332
    %v1909 = vunpack.c.h.b16 %v332
    %v1910 = vunpack.c.l.b16 %v333
    %v1911 = vunpack.c.h.b16 %v333
    %v1912 = vunpack.c.l.b16 %v334
    %v1913 = vunpack.c.h.b16 %v334
    %v1914 = vunpack.c.l.b16 %v335
    %v1915 = vunpack.c.h.b16 %v335
    %v1916 = vunpack.c.l.b16 %v336
    %v1917 = vunpack.c.h.b16 %v336
    %v1918 = vunpack.c.l.b16 %v337
    %v1919 = vunpack.c.h.b16 %v337
    %v1920 = vunpack.c.l.b16 %v338
    %v1921 = vunpack.c.h.b16 %v338
    %v1922 = vunpack.c.l.b16 %v339
    %v1923 = vunpack.c.h.b16 %v339
    %v1924 = vunpack.c.l.b16 %v340
    %v1925 = vunpack.c.h.b16 %v340
    %v1926 = vunpack.c.l.b16 %v341
    %v1927 = vunpack.c.h.b16 %v341
    %v1928 = vunpack.c.l.b16 %v342
    %v1929 = vunpack.c.h.b16 %v342
    %v1930 = vunpack.c.l.b16 %v343
    %v1931 = vunpack.c.h.b16 %v343
    %v1932 = vunpack.c.l.b16 %v344
    %v1933 = vunpack.c.h.b16 %v344
    %v1934 = vunpack.c.l.b16 %v345
    %v1935 = vunpack.c.h.b16 %v345
    %v1936 = vunpack.c.l.b16 %v346
    %v1937 = vunpack.c.h.b16 %v346
    %v1938 = vunpack.c.l.b16 %v347
    %v1939 = vunpack.c.h.b16 %v347
    %v1940 = vunpack.c.l.b16 %v348
    %v1941 = vunpack.c.h.b16 %v348
    %v1942 = vunpack.c.l.b16 %v349
    %v1943 = vunpack.c.h.b16 %v349
    %v1944 = vunpack.c.l.b16 %v350
    %v1945 = vunpack.c.h.b16 %v350
    %v1946 = vunpack.c.l.b16 %v351
    %v1947 = vunpack.c.h.b16 %v351
    %v1948 = vunpack.c.l.b16 %v352
    %v1949 = vunpack.c.h.b16 %v352
    %v1950 = vunpack.c.l.b16 %v353
    %v1951 = vunpack.c.h.b16 %v353
    %v1952 = vunpack.c.l.b16 %v354
    %v1953 = vunpack.c.h.b16 %v354
    %v1954 = vunpack.c.l.b16 %v355
    %v1955 = vunpack.c.h.b16 %v355
    %v1956 = vunpack.c.l.b16 %v356
    %v1957 = vunpack.c.h.b16 %v356
    %v1958 = vunpack.c.l.b16 %v357
    %v1959 = vunpack.c.h.b16 %v357
    %v1960 = vunpack.c.l.b16 %v358
    %v1961 = vunpack.c.h.b16 %v358
    %v1962 = vunpack.c.l.b16 %v359
    %v1963 = vunpack.c.h.b16 %v359
    %v1964 = vunpack.c.l.b16 %v360
    %v1965 = vunpack.c.h.b16 %v360
    %v1966 = vunpack.c.l.b16 %v361
    %v1967 = vunpack.c.h.b16 %v361
    %v1968 = vunpack.c.l.b16 %v362
    %v1969 = vunpack.c.h.b16 %v362
    %v1970 = vunpack.c.l.b16 %v363
    %v1971 = vunpack.c.h.b16 %v363
    %v1972 = vunpack.c.l.b16 %v364
    %v1973 = vunpack.c.h.b16 %v364
    %v1974 = vunpack.c.l.b16 %v365
    %v1975 = vunpack.c.h.b16 %v365
    %v1976 = vunpack.c.l.b16 %v366
    %v1977 = vunpack.c.h.b16 %v366
    %v1978 = vunpack.c.l.b16 %v367
    %v1979 = vunpack.c.h.b16 %v367
    %v1980 = vunpack.c.l.b16 %v368
    %v1981 = vunpack.c.h.b16 %v368
    %v1982 = vunpack.c.l.b16 %v369
    %v1983 = vunpack.c.h.b16 %v369
    %v1984 = vunpack.c.l.b16 %v370
    %v1985 = vunpack.c.h.b16 %v370
    %v1986 = vunpack.c.l.b16 %v371
    %v1987 = vunpack.c.h.b16 %v371
    %v1988 = vunpack.c.l.b16 %v372
    %v1989 = vunpack.c.h.b16 %v372
    %v1990 = vunpack.c.l.b16 %v373
    %v1991 = vunpack.c.h.b16 %v373
    %v1992 = vunpack.c.l.b16 %v374
    %v1993 = vunpack.c.h.b16 %v374
    %v1994 = vunpack.c.l.b16 %v375
    %v1995 = vunpack.c.h.b16 %v375
    %v1996 = vunpack.c.l.b16 %v376
    %v1997 = vunpack.c.h.b16 %v376
    %v1998 = vunpack.c.l.b16 %v377
    %v1999 = vunpack.c.h.b16 %v377
    %v2000 = vunpack.c.l.b16 %v378
    %v2001 = vunpack.c.h.b16 %v378
    %v2002 = vunpack.c.l.b16 %v379
    %v2003 = vunpack.c.h.b16 %v379
    %v2004 = vunpack.c.l.b16 %v380
    %v2005 = vunpack.c.h.b16 %v380
    %v2006 = vunpack.c.l.b16 %v381
    %v2007 = vunpack.c.h.b16 %v381
    %v2008 = vunpack.c.l.b16 %v382
    %v2009 = vunpack.c.h.b16 %v382
    %v2010 = vunpack.c.l.b16 %v383
    %v2011 = vunpack.c.h.b16 %v383
    %v2012 = vunpack.c.l.b16 %v384
    %v2013 = vunpack.c.h.b16 %v384
    %v2014 = vunpack.c.l.b16 %v385
    %v2015 = vunpack.c.h.b16 %v385
    %v2016 = vunpack.c.l.b16 %v386
    %v2017 = vunpack.c.h.b16 %v386
    %v2018 = vunpack.c.l.b16 %v387
    %v2019 = vunpack.c.h.b16 %v387
    %v2020 = vunpack.c.l.b16 %v388
    %v2021 = vunpack.c.h.b16 %v388
    %v2022 = vunpack.c.l.b16 %v389
    %v2023 = vunpack.c.h.b16 %v389
    %v2024 = vunpack.c.l.b16 %v390
    %v2025 = vunpack.c.h.b16 %v390
    %v2026 = vunpack.c.l.b16 %v391
    %v2027 = vunpack.c.h.b16 %v391
    %v2028 = vunpack.c.l.b16 %v392
    %v2029 = vunpack.c.h.b16 %v392
    %v2030 = vunpack.c.l.b16 %v393
    %v2031 = vunpack.c.h.b16 %v393
    %v2032 = vunpack.c.l.b16 %v394
    %v2033 = vunpack.c.h.b16 %v394
    %v2034 = vunpack.c.l.b16 %v395
    %v2035 = vunpack.c.h.b16 %v395
    %v2036 = vunpack.c.l.b16 %v396
    %v2037 = vunpack.c.h.b16 %v396
    %v2038 = vunpack.c.l.b16 %v397
    %v2039 = vunpack.c.h.b16 %v397
    %v2040 = vunpack.c.l.b16 %v398
    %v2041 = vunpack.c.h.b16 %v398
    %v2042 = vunpack.c.l.b16 %v399
    %v2043 = vunpack.c.h.b16 %v399
    %v2044 = vunpack.c.l.b16 %v400
    %v2045 = vunpack.c.h.b16 %v400
    %v2046 = vunpack.c.l.b16 %v401
    %v2047 = vunpack.c.h.b16 %v401
    %v2048 = vunpack.c.l.b16 %v402
    %v2049 = vunpack.c.h.b16 %v402
    %v2050 = vunpack.c.l.b16 %v403
    %v2051 = vunpack.c.h.b16 %v403
    %v2052 = vunpack.c.l.b16 %v404
    %v2053 = vunpack.c.h.b16 %v404
    %v2054 = vunpack.c.l.b16 %v405
    %v2055 = vunpack.c.h.b16 %v405
    %v2056 = vunpack.c.l.b16 %v406
    %v2057 = vunpack.c.h.b16 %v406
    %v2058 = vunpack.c.l.b16 %v407
    %v2059 = vunpack.c.h.b16 %v407
    %v2060 = vunpack.c.l.b16 %v408
    %v2061 = vunpack.c.h.b16 %v408
    %v2062 = vunpack.c.l.b16 %v409
    %v2063 = vunpack.c.h.b16 %v409
    %v2064 = vunpack.c.l.b16 %v410
    %v2065 = vunpack.c.h.b16 %v410
    %v2066 = vunpack.c.l.b16 %v411
    %v2067 = vunpack.c.h.b16 %v411
    %v2068 = vunpack.c.l.b16 %v412
    %v2069 = vunpack.c.h.b16 %v412
    %v2070 = vunpack.c.l.b16 %v413
    %v2071 = vunpack.c.h.b16 %v413
    %v2072 = vunpack.c.l.b16 %v414
    %v2073 = vunpack.c.h.b16 %v414
    %v2074 = vunpack.c.l.b16 %v415
    %v2075 = vunpack.c.h.b16 %v415
    %v2076 = vunpack.c.l.b16 %v416
    %v2077 = vunpack.c.h.b16 %v416
    %v2078 = vunpack.c.l.b16 %v417
    %v2079 = vunpack.c.h.b16 %v417
    %v2080 = vunpack.c.l.b16 %v418
    %v2081 = vunpack.c.h.b16 %v418
    %v2082 = vunpack.c.l.b16 %v419
    %v2083 = vunpack.c.h.b16 %v419
    %v2084 = vunpack.c.l.b16 %v420
    %v2085 = vunpack.c.h.b16 %v420
    %v2086 = vunpack.c.l.b16 %v421
    %v2087 = vunpack.c.h.b16 %v421
    %v2088 = vunpack.c.l.b16 %v422
    %v2089 = vunpack.c.h.b16 %v422
    %v2090 = vunpack.c.l.b16 %v423
    %v2091 = vunpack.c.h.b16 %v423
    %v2092 = vunpack.c.l.b16 %v424
    %v2093 = vunpack.c.h.b16 %v424
    %v2094 = vunpack.c.l.b16 %v425
    %v2095 = vunpack.c.h.b16 %v425
    %v2096 = vunpack.c.l.b16 %v426
    %v2097 = vunpack.c.h.b16 %v426
    %v2098 = vunpack.c.l.b16 %v427
    %v2099 = vunpack.c.h.b16 %v427
    %v2100 = vunpack.c.l.b16 %v428
    %v2101 = vunpack.c.h.b16 %v428
    %v2102 = vunpack.c.l.b16 %v429
    %v2103 = vunpack.c.h.b16 %v429
    %v2104 = vunpack.c.l.b16 %v430
    %v2105 = vunpack.c.h.b16 %v430
    %v2106 = vunpack.c.l.b16 %v431
    %v2107 = vunpack.c.h.b16 %v431
    %v2108 = vunpack.c.l.b16 %v432
    %v2109 = vunpack.c.h.b16 %v432
    %v2110 = vunpack.c.l.b16 %v433
    %v2111 = vunpack.c.h.b16 %v433
    %v2112 = vunpack.c.l.b16 %v434
    %v2113 = vunpack.c.h.b16 %v434
    %v2114 = vunpack.c.l.b16 %v435
    %v2115 = vunpack.c.h.b16 %v435
    %v2116 = vpack.c.b16 %v1612, %v1604
    %v2117 = vpack.c.b16 %v1613, %v1605
    %v2118 = vpack.c.b16 %v1614, %v1606
    %v2119 = vpack.c.b16 %v1615, %v1607
    %v2120 = vpack.c.b16 %v1616, %v1608
    %v2121 = vpack.c.b16 %v1617, %v1609
    %v2122 = vpack.c.b16 %v1618, %v1610
    %v2123 = vpack.c.b16 %v1619, %v1611
    %v2124 = vpack.c.b16 %v1628, %v1620
    %v2125 = vpack.c.b16 %v1629, %v1621
    %v2126 = vpack.c.b16 %v1630, %v1622
    %v2127 = vpack.c.b16 %v1631, %v1623
    %v2128 = vpack.c.b16 %v1632, %v1624
    %v2129 = vpack.c.b16 %v1633, %v1625
    %v2130 = vpack.c.b16 %v1634, %v1626
    %v2131 = vpack.c.b16 %v1635, %v1627
    %v2132 = vpack.c.b16 %v1644, %v1636
    %v2133 = vpack.c.b16 %v1645, %v1637
    %v2134 = vpack.c.b16 %v1646, %v1638
    %v2135 = vpack.c.b16 %v1647, %v1639
    %v2136 = vpack.c.b16 %v1648, %v1640
    %v2137 = vpack.c.b16 %v1649, %v1641
    %v2138 = vpack.c.b16 %v1650, %v1642
    %v2139 = vpack.c.b16 %v1651, %v1643
    %v2140 = vpack.c.b16 %v1660, %v1652
    %v2141 = vpack.c.b16 %v1661, %v1653
    %v2142 = vpack.c.b16 %v1662, %v1654
    %v2143 = vpack.c.b16 %v1663, %v1655
    %v2144 = vpack.c.b16 %v1664, %v1656
    %v2145 = vpack.c.b16 %v1665, %v1657
    %v2146 = vpack.c.b16 %v1666, %v1658
    %v2147 = vpack.c.b16 %v1667, %v1659
    %v2148 = vpack.c.b16 %v1676, %v1668
    %v2149 = vpack.c.b16 %v1677, %v1669
    %v2150 = vpack.c.b16 %v1678, %v1670
    %v2151 = vpack.c.b16 %v1679, %v1671
    %v2152 = vpack.c.b16 %v1680, %v1672
    %v2153 = vpack.c.b16 %v1681, %v1673
    %v2154 = vpack.c.b16 %v1682, %v1674
    %v2155 = vpack.c.b16 %v1683, %v1675
    %v2156 = vpack.c.b16 %v1692, %v1684
    %v2157 = vpack.c.b16 %v1693, %v1685
    %v2158 = vpack.c.b16 %v1694, %v1686
    %v2159 = vpack.c.b16 %v1695, %v1687
    %v2160 = vpack.c.b16 %v1696, %v1688
    %v2161 = vpack.c.b16 %v1697, %v1689
    %v2162 = vpack.c.b16 %v1698, %v1690
    %v2163 = vpack.c.b16 %v1699, %v1691
    %v2164 = vpack.c.b16 %v1708, %v1700
    %v2165 = vpack.c.b16 %v1709, %v1701
    %v2166 = vpack.c.b16 %v1710, %v1702
    %v2167 = vpack.c.b16 %v1711, %v1703
    %v2168 = vpack.c.b16 %v1712, %v1704
    %v2169 = vpack.c.b16 %v1713, %v1705
    %v2170 = vpack.c.b16 %v1714, %v1706
    %v2171 = vpack.c.b16 %v1715, %v1707
    %v2172 = vpack.c.b16 %v1724, %v1716
    %v2173 = vpack.c.b16 %v1725, %v1717
    %v2174 = vpack.c.b16 %v1726, %v1718
    %v2175 = vpack.c.b16 %v1727, %v1719
    %v2176 = vpack.c.b16 %v1728, %v1720
    %v2177 = vpack.c.b16 %v1729, %v1721
    %v2178 = vpack.c.b16 %v1730, %v1722
    %v2179 = vpack.c.b16 %v1731, %v1723
    %v2180 = vpack.c.b16 %v1740, %v1732
    %v2181 = vpack.c.b16 %v1741, %v1733
    %v2182 = vpack.c.b16 %v1742, %v1734
    %v2183 = vpack.c.b16 %v1743, %v1735
    %v2184 = vpack.c.b16 %v1744, %v1736
    %v2185 = vpack.c.b16 %v1745, %v1737
    %v2186 = vpack.c.b16 %v1746, %v1738
    %v2187 = vpack.c.b16 %v1747, %v1739
    %v2188 = vpack.c.b16 %v1756, %v1748
    %v2189 = vpack.c.b16 %v1757, %v1749
    %v2190 = vpack.c.b16 %v1758, %v1750
    %v2191 = vpack.c.b16 %v1759, %v1751
    %v2192 = vpack.c.b16 %v1760, %v1752
    %v2193 = vpack.c.b16 %v1761, %v1753
    %v2194 = vpack.c.b16 %v1762, %v1754
    %v2195 = vpack.c.b16 %v1763, %v1755
    %v2196 = vpack.c.b16 %v1772, %v1764
    %v2197 = vpack.c.b16 %v1773, %v1765
    %v2198 = vpack.c.b16 %v1774, %v1766
    %v2199 = vpack.c.b16 %v1775, %v1767
    %v2200 = vpack.c.b16 %v1776, %v1768
    %v2201 = vpack.c.b16 %v1777, %v1769
    %v2202 = vpack.c.b16 %v1778, %v1770
    %v2203 = vpack.c.b16 %v1779, %v1771
    %v2204 = vpack.c.b16 %v1788, %v1780
    %v2205 = vpack.c.b16 %v1789, %v1781
    %v2206 = vpack.c.b16 %v1790, %v1782
    %v2207 = vpack.c.b16 %v1791, %v1783
    %v2208 = vpack.c.b16 %v1792, %v1784
    %v2209 = vpack.c.b16 %v1793, %v1785
    %v2210 = vpack.c.b16 %v1794, %v1786
    %v2211 = vpack.c.b16 %v1795, %v1787
    %v2212 = vpack.c.b16 %v1804, %v1796
    %v2213 = vpack.c.b16 %v1805, %v1797
    %v2214 = vpack.c.b16 %v1806, %v1798
    %v2215 = vpack.c.b16 %v1807, %v1799
    %v2216 = vpack.c.b16 %v1808, %v1800
    %v2217 = vpack.c.b16 %v1809, %v1801
    %v2218 = vpack.c.b16 %v1810, %v1802
    %v2219 = vpack.c.b16 %v1811, %v1803
    %v2220 = vpack.c.b16 %v1820, %v1812
    %v2221 = vpack.c.b16 %v1821, %v1813
    %v2222 = vpack.c.b16 %v1822, %v1814
    %v2223 = vpack.c.b16 %v1823, %v1815
    %v2224 = vpack.c.b16 %v1824, %v1816
    %v2225 = vpack.c.b16 %v1825, %v1817
    %v2226 = vpack.c.b16 %v1826, %v1818
    %v2227 = vpack.c.b16 %v1827, %v1819
    %v2228 = vpack.c.b16 %v1836, %v1828
    %v2229 = vpack.c.b16 %v1837, %v1829
    %v2230 = vpack.c.b16 %v1838, %v1830
    %v2231 = vpack.c.b16 %v1839, %v1831
    %v2232 = vpack.c.b16 %v1840, %v1832
    %v2233 = vpack.c.b16 %v1841, %v1833
    %v2234 = vpack.c.b16 %v1842, %v1834
    %v2235 = vpack.c.b16 %v1843, %v1835
    %v2236 = vpack.c.b16 %v1852, %v1844
    %v2237 = vpack.c.b16 %v1853, %v1845
    %v2238 = vpack.c.b16 %v1854, %v1846
    %v2239 = vpack.c.b16 %v1855, %v1847
    %v2240 = vpack.c.b16 %v1856, %v1848
    %v2241 = vpack.c.b16 %v1857, %v1849
    %v2242 = vpack.c.b16 %v1858, %v1850
    %v2243 = vpack.c.b16 %v1859, %v1851
    %v2244 = vpack.c.b16 %v1868, %v1860
    %v2245 = vpack.c.b16 %v1869, %v1861
    %v2246 = vpack.c.b16 %v1870, %v1862
    %v2247 = vpack.c.b16 %v1871, %v1863
    %v2248 = vpack.c.b16 %v1872, %v1864
    %v2249 = vpack.c.b16 %v1873, %v1865
    %v2250 = vpack.c.b16 %v1874, %v1866
    %v2251 = vpack.c.b16 %v1875, %v1867
    %v2252 = vpack.c.b16 %v1884, %v1876
    %v2253 = vpack.c.b16 %v1885, %v1877
    %v2254 = vpack.c.b16 %v1886, %v1878
    %v2255 = vpack.c.b16 %v1887, %v1879
    %v2256 = vpack.c.b16 %v1888, %v1880
    %v2257 = vpack.c.b16 %v1889, %v1881
    %v2258 = vpack.c.b16 %v1890, %v1882
    %v2259 = vpack.c.b16 %v1891, %v1883
    %v2260 = vpack.c.b16 %v1900, %v1892
    %v2261 = vpack.c.b16 %v1901, %v1893
    %v2262 = vpack.c.b16 %v1902, %v1894
    %v2263 = vpack.c.b16 %v1903, %v1895
    %v2264 = vpack.c.b16 %v1904, %v1896
    %v2265 = vpack.c.b16 %v1905, %v1897
    %v2266 = vpack.c.b16 %v1906, %v1898
    %v2267 = vpack.c.b16 %v1907, %v1899
    %v2268 = vpack.c.b16 %v1916, %v1908
    %v2269 = vpack.c.b16 %v1917, %v1909
    %v2270 = vpack.c.b16 %v1918, %v1910
    %v2271 = vpack.c.b16 %v1919, %v1911
    %v2272 = vpack.c.b16 %v1920, %v1912
    %v2273 = vpack.c.b16 %v1921, %v1913
    %v2274 = vpack.c.b16 %v1922, %v1914
    %v2275 = vpack.c.b16 %v1923, %v1915
    %v2276 = vpack.c.b16 %v1932, %v1924
    %v2277 = vpack.c.b16 %v1933, %v1925
    %v2278 = vpack.c.b16 %v1934, %v1926
    %v2279 = vpack.c.b16 %v1935, %v1927
    %v2280 = vpack.c.b16 %v1936, %v1928
    %v2281 = vpack.c.b16 %v1937, %v1929
    %v2282 = vpack.c.b16 %v1938, %v1930
    %v2283 = vpack.c.b16 %v1939, %v1931
    %v2284 = vpack.c.b16 %v1948, %v1940
    %v2285 = vpack.c.b16 %v1949, %v1941
    %v2286 = vpack.c.b16 %v1950, %v1942
    %v2287 = vpack.c.b16 %v1951, %v1943
    %v2288 = vpack.c.b16 %v1952, %v1944
    %v2289 = vpack.c.b16 %v1953, %v1945
    %v2290 = vpack.c.b16 %v1954, %v1946
    %v2291 = vpack.c.b16 %v1955, %v1947
    %v2292 = vpack.c.b16 %v1964, %v1956
    %v2293 = vpack.c.b16 %v1965, %v1957
    %v2294 = vpack.c.b16 %v1966, %v1958
    %v2295 = vpack.c.b16 %v1967, %v1959
    %v2296 = vpack.c.b16 %v1968, %v1960
    %v2297 = vpack.c.b16 %v1969, %v1961
    %v2298 = vpack.c.b16 %v1970, %v1962
    %v2299 = vpack.c.b16 %v1971, %v1963
    %v2300 = vpack.c.b16 %v1980, %v1972
    %v2301 = vpack.c.b16 %v1981, %v1973
    %v2302 = vpack.c.b16 %v1982, %v1974
    %v2303 = vpack.c.b16 %v1983, %v1975
    %v2304 = vpack.c.b16 %v1984, %v1976
    %v2305 = vpack.c.b16 %v1985, %v1977
    %v2306 = vpack.c.b16 %v1986, %v1978
    %v2307 = vpack.c.b16 %v1987, %v1979
    %v2308 = vpack.c.b16 %v1996, %v1988
    %v2309 = vpack.c.b16 %v1997, %v1989
    %v2310 = vpack.c.b16 %v1998, %v1990
    %v2311 = vpack.c.b16 %v1999, %v1991
    %v2312 = vpack.c.b16 %v2000, %v1992
    %v2313 = vpack.c.b16 %v2001, %v1993
    %v2314 = vpack.c.b16 %v2002, %v1994
    %v2315 = vpack.c.b16 %v2003, %v1995
    %v2316 = vpack.c.b16 %v2012, %v2004
    %v2317 = vpack.c.b16 %v2013, %v2005
    %v2318 = vpack.c.b16 %v2014, %v2006
    %v2319 = vpack.c.b16 %v2015, %v2007
    %v2320 = vpack.c.b16 %v2016, %v2008
    %v2321 = vpack.c.b16 %v2017, %v2009
    %v2322 = vpack.c.b16 %v2018, %v2010
    %v2323 = vpack.c.b16 %v2019, %v2011
    %v2324 = vpack.c.b16 %v2028, %v2020
    %v2325 = vpack.c.b16 %v2029, %v2021
    %v2326 = vpack.c.b16 %v2030, %v2022
    %v2327 = vpack.c.b16 %v2031, %v2023
    %v2328 = vpack.c.b16 %v2032, %v2024
    %v2329 = vpack.c.b16 %v2033, %v2025
    %v2330 = vpack.c.b16 %v2034, %v2026
    %v2331 = vpack.c.b16 %v2035, %v2027
    %v2332 = vpack.c.b16 %v2044, %v2036
    %v2333 = vpack.c.b16 %v2045, %v2037
    %v2334 = vpack.c.b16 %v2046, %v2038
    %v2335 = vpack.c.b16 %v2047, %v2039
    %v2336 = vpack.c.b16 %v2048, %v2040
    %v2337 = vpack.c.b16 %v2049, %v2041
    %v2338 = vpack.c.b16 %v2050, %v2042
    %v2339 = vpack.c.b16 %v2051, %v2043
    %v2340 = vpack.c.b16 %v2060, %v2052
    %v2341 = vpack.c.b16 %v2061, %v2053
    %v2342 = vpack.c.b16 %v2062, %v2054
    %v2343 = vpack.c.b16 %v2063, %v2055
    %v2344 = vpack.c.b16 %v2064, %v2056
    %v2345 = vpack.c.b16 %v2065, %v2057
    %v2346 = vpack.c.b16 %v2066, %v2058
    %v2347 = vpack.c.b16 %v2067, %v2059
    %v2348 = vpack.c.b16 %v2076, %v2068
    %v2349 = vpack.c.b16 %v2077, %v2069
    %v2350 = vpack.c.b16 %v2078, %v2070
    %v2351 = vpack.c.b16 %v2079, %v2071
    %v2352 = vpack.c.b16 %v2080, %v2072
    %v2353 = vpack.c.b16 %v2081, %v2073
    %v2354 = vpack.c.b16 %v2082, %v2074
    %v2355 = vpack.c.b16 %v2083, %v2075
    %v2356 = vpack.c.b16 %v2092, %v2084
    %v2357 = vpack.c.b16 %v2093, %v2085
    %v2358 = vpack.c.b16 %v2094, %v2086
    %v2359 = vpack.c.b16 %v2095, %v2087
    %v2360 = vpack.c.b16 %v2096, %v2088
    %v2361 = vpack.c.b16 %v2097, %v2089
    %v2362 = vpack.c.b16 %v2098, %v2090
    %v2363 = vpack.c.b16 %v2099, %v2091
    %v2364 = vpack.c.b16 %v2108, %v2100
    %v2365 = vpack.c.b16 %v2109, %v2101
    %v2366 = vpack.c.b16 %v2110, %v2102
    %v2367 = vpack.c.b16 %v2111, %v2103
    %v2368 = vpack.c.b16 %v2112, %v2104
    %v2369 = vpack.c.b16 %v2113, %v2105
    %v2370 = vpack.c.b16 %v2114, %v2106
    %v2371 = vpack.c.b16 %v2115, %v2107
    %2628 = vmatprep.subr.bf16.mxu0 %v2117
    %2629 = vmatpush1.bf16.msra.mxu0 %v2116
    %2630 = vmatprep.subr.bf16.mxu0 %v2125
    %2631 = vmatpush1.bf16.msra.mxu0 %v2124
    %2632 = vmatprep.subr.bf16.mxu0 %v2133
    %2633 = vmatpush1.bf16.msra.mxu0 %v2132
    %2634 = vmatprep.subr.bf16.mxu0 %v2141
    %2635 = vmatpush1.bf16.msra.mxu0 %v2140
    %2636 = vmatprep.subr.bf16.mxu0 %v2149
    %2637 = vmatpush1.bf16.msra.mxu0 %v2148
    %2638 = vmatprep.subr.bf16.mxu0 %v2157
    %2639 = vmatpush1.bf16.msra.mxu0 %v2156
    %2640 = vmatprep.subr.bf16.mxu0 %v2165
    %2641 = vmatpush1.bf16.msra.mxu0 %v2164
    %2642 = vmatprep.subr.bf16.mxu0 %v2173
    %2643 = vmatpush1.bf16.msra.mxu0 %v2172
    %2644 = vmatprep.subr.bf16.mxu0 %v2181
    %2645 = vmatpush1.bf16.msra.mxu0 %v2180
    %2646 = vmatprep.subr.bf16.mxu0 %v2189
    %2647 = vmatpush1.bf16.msra.mxu0 %v2188
    %2648 = vmatprep.subr.bf16.mxu0 %v2197
    %2649 = vmatpush1.bf16.msra.mxu0 %v2196
    %2650 = vmatprep.subr.bf16.mxu0 %v2205
    %2651 = vmatpush1.bf16.msra.mxu0 %v2204
    %2652 = vmatprep.subr.bf16.mxu0 %v2213
    %2653 = vmatpush1.bf16.msra.mxu0 %v2212
    %2654 = vmatprep.subr.bf16.mxu0 %v2221
    %2655 = vmatpush1.bf16.msra.mxu0 %v2220
    %2656 = vmatprep.subr.bf16.mxu0 %v2229
    %2657 = vmatpush1.bf16.msra.mxu0 %v2228
    %2658 = vmatprep.subr.bf16.mxu0 %v2237
    %2659 = vmatpush1.bf16.msra.mxu0 %v2236
    %2660 = vmatprep.mubr.bf16.mxu0 %v1306
    %2661 = vmatmul.mubr.bf16.gmra.mrb[0].mxu0 %v1305
    %v2662 = vpop.f32.mrb[0].mxu0
    %v2663 = vadd.f32 %v1311, %v2662
    %v2664 = vpop.f32.mrb[0].mxu0
    %v2665 = vadd.f32 %v1315, %v2664
    %v2666 = vpop.f32.mrb[0].mxu0
    %v2667 = vpop.f32.mrb[0].mxu0
    %2668 = vdwg.mxu0
    %2669 = vmatprep.subr.bf16.mxu0 %v2245
    %2670 = vmatpush1.bf16.msra.mxu0 %v2244
    %2671 = vmatprep.subr.bf16.mxu0 %v2253
    %2672 = vmatpush1.bf16.msra.mxu0 %v2252
    %2673 = vmatprep.subr.bf16.mxu0 %v2261
    %2674 = vmatpush1.bf16.msra.mxu0 %v2260
    %2675 = vmatprep.subr.bf16.mxu0 %v2269
    %2676 = vmatpush1.bf16.msra.mxu0 %v2268
    %2677 = vmatprep.subr.bf16.mxu0 %v2277
    %2678 = vmatpush1.bf16.msra.mxu0 %v2276
    %2679 = vmatprep.subr.bf16.mxu0 %v2285
    %2680 = vmatpush1.bf16.msra.mxu0 %v2284
    %2681 = vmatprep.subr.bf16.mxu0 %v2293
    %2682 = vmatpush1.bf16.msra.mxu0 %v2292
    %2683 = vmatprep.subr.bf16.mxu0 %v2301
    %2684 = vmatpush1.bf16.msra.mxu0 %v2300
    %2685 = vmatprep.subr.bf16.mxu0 %v2309
    %2686 = vmatpush1.bf16.msra.mxu0 %v2308
    %2687 = vmatprep.subr.bf16.mxu0 %v2317
    %2688 = vmatpush1.bf16.msra.mxu0 %v2316
    %2689 = vmatprep.subr.bf16.mxu0 %v2325
    %2690 = vmatpush1.bf16.msra.mxu0 %v2324
    %2691 = vmatprep.subr.bf16.mxu0 %v2333
    %2692 = vmatpush1.bf16.msra.mxu0 %v2332
    %2693 = vmatprep.subr.bf16.mxu0 %v2341
    %2694 = vmatpush1.bf16.msra.mxu0 %v2340
    %2695 = vmatprep.subr.bf16.mxu0 %v2349
    %2696 = vmatpush1.bf16.msra.mxu0 %v2348
    %2697 = vmatprep.subr.bf16.mxu0 %v2357
    %2698 = vmatpush1.bf16.msra.mxu0 %v2356
    %2699 = vmatprep.subr.bf16.mxu0 %v2365
    %2700 = vmatpush1.bf16.msra.mxu0 %v2364
    %2701 = vmatprep.mubr.bf16.mxu0 0
    %2702 = vmatmul.mubr.bf16.gmra.mrb[0].mxu0 0
    %v2703 = vpop.f32.mrb[0].mxu0
    %v2704 = vadd.f32 %v2663, %v2703
    %v2705 = vpop.f32.mrb[0].mxu0
    %v2706 = vadd.f32 %v2665, %v2705
    %v2707 = vpop.f32.mrb[0].mxu0
    %v2708 = vpop.f32.mrb[0].mxu0
    %2709 = vdwg.mxu0
    %2710 = vmatprep.subr.bf16.mxu0 %v2119
    %2711 = vmatpush1.bf16.msra.mxu0 %v2118
    %2712 = vmatprep.subr.bf16.mxu0 %v2127
    %2713 = vmatpush1.bf16.msra.mxu0 %v2126
    %2714 = vmatprep.subr.bf16.mxu0 %v2135
    %2715 = vmatpush1.bf16.msra.mxu0 %v2134
    %2716 = vmatprep.subr.bf16.mxu0 %v2143
    %2717 = vmatpush1.bf16.msra.mxu0 %v2142
    %2718 = vmatprep.subr.bf16.mxu0 %v2151
    %2719 = vmatpush1.bf16.msra.mxu0 %v2150
    %2720 = vmatprep.subr.bf16.mxu0 %v2159
    %2721 = vmatpush1.bf16.msra.mxu0 %v2158
    %2722 = vmatprep.subr.bf16.mxu0 %v2167
    %2723 = vmatpush1.bf16.msra.mxu0 %v2166
    %2724 = vmatprep.subr.bf16.mxu0 %v2175
    %2725 = vmatpush1.bf16.msra.mxu0 %v2174
    %2726 = vmatprep.subr.bf16.mxu0 %v2183
    %2727 = vmatpush1.bf16.msra.mxu0 %v2182
    %2728 = vmatprep.subr.bf16.mxu0 %v2191
    %2729 = vmatpush1.bf16.msra.mxu0 %v2190
    %2730 = vmatprep.subr.bf16.mxu0 %v2199
    %2731 = vmatpush1.bf16.msra.mxu0 %v2198
    %2732 = vmatprep.subr.bf16.mxu0 %v2207
    %2733 = vmatpush1.bf16.msra.mxu0 %v2206
    %2734 = vmatprep.subr.bf16.mxu0 %v2215
    %2735 = vmatpush1.bf16.msra.mxu0 %v2214
    %2736 = vmatprep.subr.bf16.mxu0 %v2223
    %2737 = vmatpush1.bf16.msra.mxu0 %v2222
    %2738 = vmatprep.subr.bf16.mxu0 %v2231
    %2739 = vmatpush1.bf16.msra.mxu0 %v2230
    %2740 = vmatprep.subr.bf16.mxu0 %v2239
    %2741 = vmatpush1.bf16.msra.mxu0 %v2238
    %2742 = vmatprep.mubr.bf16.mxu0 %v1306
    %2743 = vmatmul.mubr.bf16.gmra.mrb[0].mxu0 %v1305
    %v2744 = vpop.f32.mrb[0].mxu0
    %v2745 = vadd.f32 %v1319, %v2744
    %v2746 = vpop.f32.mrb[0].mxu0
    %v2747 = vadd.f32 %v1323, %v2746
    %v2748 = vpop.f32.mrb[0].mxu0
    %v2749 = vpop.f32.mrb[0].mxu0
    %2750 = vdwg.mxu0
    %2751 = vmatprep.subr.bf16.mxu0 %v2247
    %2752 = vmatpush1.bf16.msra.mxu0 %v2246
    %2753 = vmatprep.subr.bf16.mxu0 %v2255
    %2754 = vmatpush1.bf16.msra.mxu0 %v2254
    %2755 = vmatprep.subr.bf16.mxu0 %v2263
    %2756 = vmatpush1.bf16.msra.mxu0 %v2262
    %2757 = vmatprep.subr.bf16.mxu0 %v2271
    %2758 = vmatpush1.bf16.msra.mxu0 %v2270
    %2759 = vmatprep.subr.bf16.mxu0 %v2279
    %2760 = vmatpush1.bf16.msra.mxu0 %v2278
    %2761 = vmatprep.subr.bf16.mxu0 %v2287
    %2762 = vmatpush1.bf16.msra.mxu0 %v2286
    %2763 = vmatprep.subr.bf16.mxu0 %v2295
    %2764 = vmatpush1.bf16.msra.mxu0 %v2294
    %2765 = vmatprep.subr.bf16.mxu0 %v2303
    %2766 = vmatpush1.bf16.msra.mxu0 %v2302
    %2767 = vmatprep.subr.bf16.mxu0 %v2311
    %2768 = vmatpush1.bf16.msra.mxu0 %v2310
    %2769 = vmatprep.subr.bf16.mxu0 %v2319
    %2770 = vmatpush1.bf16.msra.mxu0 %v2318
    %2771 = vmatprep.subr.bf16.mxu0 %v2327
    %2772 = vmatpush1.bf16.msra.mxu0 %v2326
    %2773 = vmatprep.subr.bf16.mxu0 %v2335
    %2774 = vmatpush1.bf16.msra.mxu0 %v2334
    %2775 = vmatprep.subr.bf16.mxu0 %v2343
    %2776 = vmatpush1.bf16.msra.mxu0 %v2342
    %2777 = vmatprep.subr.bf16.mxu0 %v2351
    %2778 = vmatpush1.bf16.msra.mxu0 %v2350
    %2779 = vmatprep.subr.bf16.mxu0 %v2359
    %2780 = vmatpush1.bf16.msra.mxu0 %v2358
    %2781 = vmatprep.subr.bf16.mxu0 %v2367
    %2782 = vmatpush1.bf16.msra.mxu0 %v2366
    %2783 = vmatprep.mubr.bf16.mxu0 0
    %2784 = vmatmul.mubr.bf16.gmra.mrb[0].mxu0 0
    %v2785 = vpop.f32.mrb[0].mxu0
    %v2786 = vadd.f32 %v2745, %v2785
    %v2787 = vpop.f32.mrb[0].mxu0
    %v2788 = vadd.f32 %v2747, %v2787
    %v2789 = vpop.f32.mrb[0].mxu0
    %v2790 = vpop.f32.mrb[0].mxu0
    %2791 = vdwg.mxu0
    %2792 = vmatprep.subr.bf16.mxu0 %v2121
    %2793 = vmatpush1.bf16.msra.mxu0 %v2120
    %2794 = vmatprep.subr.bf16.mxu0 %v2129
    %2795 = vmatpush1.bf16.msra.mxu0 %v2128
    %2796 = vmatprep.subr.bf16.mxu0 %v2137
    %2797 = vmatpush1.bf16.msra.mxu0 %v2136
    %2798 = vmatprep.subr.bf16.mxu0 %v2145
    %2799 = vmatpush1.bf16.msra.mxu0 %v2144
    %2800 = vmatprep.subr.bf16.mxu0 %v2153
    %2801 = vmatpush1.bf16.msra.mxu0 %v2152
    %2802 = vmatprep.subr.bf16.mxu0 %v2161
    %2803 = vmatpush1.bf16.msra.mxu0 %v2160
    %2804 = vmatprep.subr.bf16.mxu0 %v2169
    %2805 = vmatpush1.bf16.msra.mxu0 %v2168
    %2806 = vmatprep.subr.bf16.mxu0 %v2177
    %2807 = vmatpush1.bf16.msra.mxu0 %v2176
    %2808 = vmatprep.subr.bf16.mxu0 %v2185
    %2809 = vmatpush1.bf16.msra.mxu0 %v2184
    %2810 = vmatprep.subr.bf16.mxu0 %v2193
    %2811 = vmatpush1.bf16.msra.mxu0 %v2192
    %2812 = vmatprep.subr.bf16.mxu0 %v2201
    %2813 = vmatpush1.bf16.msra.mxu0 %v2200
    %2814 = vmatprep.subr.bf16.mxu0 %v2209
    %2815 = vmatpush1.bf16.msra.mxu0 %v2208
    %2816 = vmatprep.subr.bf16.mxu0 %v2217
    %2817 = vmatpush1.bf16.msra.mxu0 %v2216
    %2818 = vmatprep.subr.bf16.mxu0 %v2225
    %2819 = vmatpush1.bf16.msra.mxu0 %v2224
    %2820 = vmatprep.subr.bf16.mxu0 %v2233
    %2821 = vmatpush1.bf16.msra.mxu0 %v2232
    %2822 = vmatprep.subr.bf16.mxu0 %v2241
    %2823 = vmatpush1.bf16.msra.mxu0 %v2240
    %2824 = vmatprep.mubr.bf16.mxu0 %v1306
    %2825 = vmatmul.mubr.bf16.gmra.mrb[0].mxu0 %v1305
    %v2826 = vpop.f32.mrb[0].mxu0
    %v2827 = vadd.f32 %v1327, %v2826
    %v2828 = vpop.f32.mrb[0].mxu0
    %v2829 = vadd.f32 %v1331, %v2828
    %v2830 = vpop.f32.mrb[0].mxu0
    %v2831 = vpop.f32.mrb[0].mxu0
    %2832 = vdwg.mxu0
    %2833 = vmatprep.subr.bf16.mxu0 %v2249
    %2834 = vmatpush1.bf16.msra.mxu0 %v2248
    %2835 = vmatprep.subr.bf16.mxu0 %v2257
    %2836 = vmatpush1.bf16.msra.mxu0 %v2256
    %2837 = vmatprep.subr.bf16.mxu0 %v2265
    %2838 = vmatpush1.bf16.msra.mxu0 %v2264
    %2839 = vmatprep.subr.bf16.mxu0 %v2273
    %2840 = vmatpush1.bf16.msra.mxu0 %v2272
    %2841 = vmatprep.subr.bf16.mxu0 %v2281
    %2842 = vmatpush1.bf16.msra.mxu0 %v2280
    %2843 = vmatprep.subr.bf16.mxu0 %v2289
    %2844 = vmatpush1.bf16.msra.mxu0 %v2288
    %2845 = vmatprep.subr.bf16.mxu0 %v2297
    %2846 = vmatpush1.bf16.msra.mxu0 %v2296
    %2847 = vmatprep.subr.bf16.mxu0 %v2305
    %2848 = vmatpush1.bf16.msra.mxu0 %v2304
    %2849 = vmatprep.subr.bf16.mxu0 %v2313
    %2850 = vmatpush1.bf16.msra.mxu0 %v2312
    %2851 = vmatprep.subr.bf16.mxu0 %v2321
    %2852 = vmatpush1.bf16.msra.mxu0 %v2320
    %2853 = vmatprep.subr.bf16.mxu0 %v2329
    %2854 = vmatpush1.bf16.msra.mxu0 %v2328
    %2855 = vmatprep.subr.bf16.mxu0 %v2337
    %2856 = vmatpush1.bf16.msra.mxu0 %v2336
    %2857 = vmatprep.subr.bf16.mxu0 %v2345
    %2858 = vmatpush1.bf16.msra.mxu0 %v2344
    %2859 = vmatprep.subr.bf16.mxu0 %v2353
    %2860 = vmatpush1.bf16.msra.mxu0 %v2352
    %2861 = vmatprep.subr.bf16.mxu0 %v2361
    %2862 = vmatpush1.bf16.msra.mxu0 %v2360
    %2863 = vmatprep.subr.bf16.mxu0 %v2369
    %2864 = vmatpush1.bf16.msra.mxu0 %v2368
    %2865 = vmatprep.mubr.bf16.mxu0 0
    %2866 = vmatmul.mubr.bf16.gmra.mrb[0].mxu0 0
    %v2867 = vpop.f32.mrb[0].mxu0
    %v2868 = vadd.f32 %v2827, %v2867
    %v2869 = vpop.f32.mrb[0].mxu0
    %v2870 = vadd.f32 %v2829, %v2869
    %v2871 = vpop.f32.mrb[0].mxu0
    %v2872 = vpop.f32.mrb[0].mxu0
    %2873 = vdwg.mxu0
    %2874 = vmatprep.subr.bf16.mxu0 %v2123
    %2875 = vmatpush1.bf16.msra.mxu0 %v2122
    %2876 = vmatprep.subr.bf16.mxu0 %v2131
    %2877 = vmatpush1.bf16.msra.mxu0 %v2130
    %2878 = vmatprep.subr.bf16.mxu0 %v2139
    %2879 = vmatpush1.bf16.msra.mxu0 %v2138
    %2880 = vmatprep.subr.bf16.mxu0 %v2147
    %2881 = vmatpush1.bf16.msra.mxu0 %v2146
    %2882 = vmatprep.subr.bf16.mxu0 %v2155
    %2883 = vmatpush1.bf16.msra.mxu0 %v2154
    %2884 = vmatprep.subr.bf16.mxu0 %v2163
    %2885 = vmatpush1.bf16.msra.mxu0 %v2162
    %2886 = vmatprep.subr.bf16.mxu0 %v2171
    %2887 = vmatpush1.bf16.msra.mxu0 %v2170
    %2888 = vmatprep.subr.bf16.mxu0 %v2179
    %2889 = vmatpush1.bf16.msra.mxu0 %v2178
    %2890 = vmatprep.subr.bf16.mxu0 %v2187
    %2891 = vmatpush1.bf16.msra.mxu0 %v2186
    %2892 = vmatprep.subr.bf16.mxu0 %v2195
    %2893 = vmatpush1.bf16.msra.mxu0 %v2194
    %2894 = vmatprep.subr.bf16.mxu0 %v2203
    %2895 = vmatpush1.bf16.msra.mxu0 %v2202
    %2896 = vmatprep.subr.bf16.mxu0 %v2211
    %2897 = vmatpush1.bf16.msra.mxu0 %v2210
    %2898 = vmatprep.subr.bf16.mxu0 %v2219
    %2899 = vmatpush1.bf16.msra.mxu0 %v2218
    %2900 = vmatprep.subr.bf16.mxu0 %v2227
    %2901 = vmatpush1.bf16.msra.mxu0 %v2226
    %2902 = vmatprep.subr.bf16.mxu0 %v2235
    %2903 = vmatpush1.bf16.msra.mxu0 %v2234
    %2904 = vmatprep.subr.bf16.mxu0 %v2243
    %2905 = vmatpush1.bf16.msra.mxu0 %v2242
    %2906 = vmatprep.mubr.bf16.mxu0 %v1306
    %2907 = vmatmul.mubr.bf16.gmra.mrb[0].mxu0 %v1305
    %v2908 = vpop.f32.mrb[0].mxu0
    %v2909 = vadd.f32 %v1335, %v2908
    %v2910 = vpop.f32.mrb[0].mxu0
    %v2911 = vadd.f32 %v1339, %v2910
    %v2912 = vpop.f32.mrb[0].mxu0
    %v2913 = vpop.f32.mrb[0].mxu0
    %2914 = vdwg.mxu0
    %2915 = vmatprep.subr.bf16.mxu0 %v2251
    %2916 = vmatpush1.bf16.msra.mxu0 %v2250
    %2917 = vmatprep.subr.bf16.mxu0 %v2259
    %2918 = vmatpush1.bf16.msra.mxu0 %v2258
    %2919 = vmatprep.subr.bf16.mxu0 %v2267
    %2920 = vmatpush1.bf16.msra.mxu0 %v2266
    %2921 = vmatprep.subr.bf16.mxu0 %v2275
    %2922 = vmatpush1.bf16.msra.mxu0 %v2274
    %2923 = vmatprep.subr.bf16.mxu0 %v2283
    %2924 = vmatpush1.bf16.msra.mxu0 %v2282
    %2925 = vmatprep.subr.bf16.mxu0 %v2291
    %2926 = vmatpush1.bf16.msra.mxu0 %v2290
    %2927 = vmatprep.subr.bf16.mxu0 %v2299
    %2928 = vmatpush1.bf16.msra.mxu0 %v2298
    %2929 = vmatprep.subr.bf16.mxu0 %v2307
    %2930 = vmatpush1.bf16.msra.mxu0 %v2306
    %2931 = vmatprep.subr.bf16.mxu0 %v2315
    %2932 = vmatpush1.bf16.msra.mxu0 %v2314
    %2933 = vmatprep.subr.bf16.mxu0 %v2323
    %2934 = vmatpush1.bf16.msra.mxu0 %v2322
    %2935 = vmatprep.subr.bf16.mxu0 %v2331
    %2936 = vmatpush1.bf16.msra.mxu0 %v2330
    %2937 = vmatprep.subr.bf16.mxu0 %v2339
    %2938 = vmatpush1.bf16.msra.mxu0 %v2338
    %2939 = vmatprep.subr.bf16.mxu0 %v2347
    %2940 = vmatpush1.bf16.msra.mxu0 %v2346
    %2941 = vmatprep.subr.bf16.mxu0 %v2355
    %2942 = vmatpush1.bf16.msra.mxu0 %v2354
    %2943 = vmatprep.subr.bf16.mxu0 %v2363
    %2944 = vmatpush1.bf16.msra.mxu0 %v2362
    %2945 = vmatprep.subr.bf16.mxu0 %v2371
    %2946 = vmatpush1.bf16.msra.mxu0 %v2370
    %2947 = vmatprep.mubr.bf16.mxu0 0
    %2948 = vmatmul.mubr.bf16.gmra.mrb[0].mxu0 0
    %v2949 = vpop.f32.mrb[0].mxu0
    %v2950 = vadd.f32 %v2909, %v2949
    %v2951 = vpop.f32.mrb[0].mxu0
    %v2952 = vadd.f32 %v2911, %v2951
    %v2953 = vpop.f32.mrb[0].mxu0
    %v2954 = vpop.f32.mrb[0].mxu0
    %2955 = vdwg.mxu0
    %v2956 = vxor.u32 %v2704, 2147483648
    %v2957 = vxor.u32 %v2706, 2147483648
    %v2958 = vxor.u32 %v2786, 2147483648
    %v2959 = vxor.u32 %v2788, 2147483648
    %v2960 = vxor.u32 %v2868, 2147483648
    %v2961 = vxor.u32 %v2870, 2147483648
    %v2962 = vmul.f32 %v2956, 1.442695
    %v2963 = vpow.pop %v2962
    %v2964 = vmul.f32 %v2957, 1.442695
    %v2965 = vpow.pop %v2964
    %v2966 = vmul.f32 %v2958, 1.442695
    %v2967 = vpow.pop %v2966
    %v2968 = vmul.f32 %v2959, 1.442695
    %v2969 = vpow.pop %v2968
    %v2970 = vmul.f32 %v2960, 1.442695
    %v2971 = vpow.pop %v2970
    %v2972 = vmul.f32 %v2961, 1.442695
    %v2973 = vpow.pop %v2972
    %v2974 = vadd.f32 %v2963, 1.0
    %v2975 = vadd.f32 %v2965, 1.0
    %v2976 = vadd.f32 %v2967, 1.0
    %v2977 = vadd.f32 %v2969, 1.0
    %v2978 = vadd.f32 %v2971, 1.0
    %v2979 = vadd.f32 %v2973, 1.0
    %v2980 = vrcp.pop %v2974
    %v2981 = vmul.f32 1.0, %v2980
    %v2982 = vrcp.pop %v2975
    %v2983 = vmul.f32 1.0, %v2982
    %v2984 = vrcp.pop %v2976
    %v2985 = vmul.f32 1.0, %v2984
    %v2986 = vrcp.pop %v2977
    %v2987 = vmul.f32 1.0, %v2986
    %v2988 = vrcp.pop %v2978
    %v2989 = vmul.f32 1.0, %v2988
    %v2990 = vrcp.pop %v2979
    %v2991 = vmul.f32 1.0, %v2990
    %v2992 = vtanh.pop %v2950
    %v2993 = vtanh.pop %v2952
    %v2994 = vmul.f32 %v2985, 0.0
    %v2995 = vmul.f32 %v2987, 0.0
    %v2996 = vmul.f32 %v2981, %v2992
    %v2997 = vmul.f32 %v2983, %v2993
    %v2998 = vadd.f32 %v2994, %v2996
    %v2999 = vadd.f32 %v2995, %v2997
    %v3000 = vtanh.pop %v2998
    %v3001 = vtanh.pop %v2999
    %v3002 = vmul.f32 %v2989, %v3000
    %v3003 = vmul.f32 %v2991, %v3001
    %v3004 = vpack.c.bf16 %v3002, %v3002
    %v3005 = vpack.c.bf16 %v3003, %v3003
    %s3006 = scalar_lea.vmem %s0, 64
    %v3007 = vld [vmem:[%s3006] sm:$0xff]
    %v3008 = vld [vmem:[%s3006 + $0x8] sm:$0xff]
    %v3009 = vld [vmem:[%s3006 + $0x10] sm:$0xff]
    %v3010 = vld [vmem:[%s3006 + $0x18] sm:$0xff]
    %v3011 = vld [vmem:[%s3006 + $0x20] sm:$0xff]
    %v3012 = vld [vmem:[%s3006 + $0x28] sm:$0xff]
    %v3013 = vld [vmem:[%s3006 + $0x30] sm:$0xff]
    %v3014 = vld [vmem:[%s3006 + $0x38] sm:$0xff]
    %3015 = vmatprep.subr.bf16.mxu0 %v830
    %3016 = vmatpush1.bf16.msra.mxu0 %v829
    %3017 = vmatprep.subr.bf16.mxu0 %v838
    %3018 = vmatpush1.bf16.msra.mxu0 %v837
    %3019 = vmatprep.subr.bf16.mxu0 %v846
    %3020 = vmatpush1.bf16.msra.mxu0 %v845
    %3021 = vmatprep.subr.bf16.mxu0 %v854
    %3022 = vmatpush1.bf16.msra.mxu0 %v853
    %3023 = vmatprep.subr.bf16.mxu0 %v862
    %3024 = vmatpush1.bf16.msra.mxu0 %v861
    %3025 = vmatprep.subr.bf16.mxu0 %v870
    %3026 = vmatpush1.bf16.msra.mxu0 %v869
    %3027 = vmatprep.subr.bf16.mxu0 %v878
    %3028 = vmatpush1.bf16.msra.mxu0 %v877
    %3029 = vmatprep.subr.bf16.mxu0 %v886
    %3030 = vmatpush1.bf16.msra.mxu0 %v885
    %3031 = vmatprep.subr.bf16.mxu0 %v894
    %3032 = vmatpush1.bf16.msra.mxu0 %v893
    %3033 = vmatprep.subr.bf16.mxu0 %v902
    %3034 = vmatpush1.bf16.msra.mxu0 %v901
    %3035 = vmatprep.subr.bf16.mxu0 %v910
    %3036 = vmatpush1.bf16.msra.mxu0 %v909
    %3037 = vmatprep.subr.bf16.mxu0 %v918
    %3038 = vmatpush1.bf16.msra.mxu0 %v917
    %3039 = vmatprep.subr.bf16.mxu0 %v926
    %3040 = vmatpush1.bf16.msra.mxu0 %v925
    %3041 = vmatprep.subr.bf16.mxu0 %v934
    %3042 = vmatpush1.bf16.msra.mxu0 %v933
    %3043 = vmatprep.subr.bf16.mxu0 %v942
    %3044 = vmatpush1.bf16.msra.mxu0 %v941
    %3045 = vmatprep.subr.bf16.mxu0 %v950
    %3046 = vmatpush1.bf16.msra.mxu0 %v949
    %3047 = vmatprep.mubr.bf16.mxu0 %v1306
    %3048 = vmatmul.mubr.bf16.gmra.mrb[0].mxu0 %v1305
    %v3049 = vpop.f32.mrb[0].mxu0
    %v3050 = vadd.f32 0.0, %v3049
    %v3051 = vpop.f32.mrb[0].mxu0
    %v3052 = vadd.f32 0.0, %v3051
    %v3053 = vpop.f32.mrb[0].mxu0
    %v3054 = vpop.f32.mrb[0].mxu0
    %3055 = vdwg.mxu0
    %3056 = vmatprep.subr.bf16.mxu0 %v832
    %3057 = vmatpush1.bf16.msra.mxu0 %v831
    %3058 = vmatprep.subr.bf16.mxu0 %v840
    %3059 = vmatpush1.bf16.msra.mxu0 %v839
    %3060 = vmatprep.subr.bf16.mxu0 %v848
    %3061 = vmatpush1.bf16.msra.mxu0 %v847
    %3062 = vmatprep.subr.bf16.mxu0 %v856
    %3063 = vmatpush1.bf16.msra.mxu0 %v855
    %3064 = vmatprep.subr.bf16.mxu0 %v864
    %3065 = vmatpush1.bf16.msra.mxu0 %v863
    %3066 = vmatprep.subr.bf16.mxu0 %v872
    %3067 = vmatpush1.bf16.msra.mxu0 %v871
    %3068 = vmatprep.subr.bf16.mxu0 %v880
    %3069 = vmatpush1.bf16.msra.mxu0 %v879
    %3070 = vmatprep.subr.bf16.mxu0 %v888
    %3071 = vmatpush1.bf16.msra.mxu0 %v887
    %3072 = vmatprep.subr.bf16.mxu0 %v896
    %3073 = vmatpush1.bf16.msra.mxu0 %v895
    %3074 = vmatprep.subr.bf16.mxu0 %v904
    %3075 = vmatpush1.bf16.msra.mxu0 %v903
    %3076 = vmatprep.subr.bf16.mxu0 %v912
    %3077 = vmatpush1.bf16.msra.mxu0 %v911
    %3078 = vmatprep.subr.bf16.mxu0 %v920
    %3079 = vmatpush1.bf16.msra.mxu0 %v919
    %3080 = vmatprep.subr.bf16.mxu0 %v928
    %3081 = vmatpush1.bf16.msra.mxu0 %v927
    %3082 = vmatprep.subr.bf16.mxu0 %v936
    %3083 = vmatpush1.bf16.msra.mxu0 %v935
    %3084 = vmatprep.subr.bf16.mxu0 %v944
    %3085 = vmatpush1.bf16.msra.mxu0 %v943
    %3086 = vmatprep.subr.bf16.mxu0 %v952
    %3087 = vmatpush1.bf16.msra.mxu0 %v951
    %3088 = vmatprep.mubr.bf16.mxu0 %v1306
    %3089 = vmatmul.mubr.bf16.gmra.mrb[0].mxu0 %v1305
    %v3090 = vpop.f32.mrb[0].mxu0
    %v3091 = vadd.f32 0.0, %v3090
    %v3092 = vpop.f32.mrb[0].mxu0
    %v3093 = vadd.f32 0.0, %v3092
    %v3094 = vpop.f32.mrb[0].mxu0
    %v3095 = vpop.f32.mrb[0].mxu0
    %3096 = vdwg.mxu0
    %3097 = vmatprep.subr.bf16.mxu0 %v834
    %3098 = vmatpush1.bf16.msra.mxu0 %v833
    %3099 = vmatprep.subr.bf16.mxu0 %v842
    %3100 = vmatpush1.bf16.msra.mxu0 %v841
    %3101 = vmatprep.subr.bf16.mxu0 %v850
    %3102 = vmatpush1.bf16.msra.mxu0 %v849
    %3103 = vmatprep.subr.bf16.mxu0 %v858
    %3104 = vmatpush1.bf16.msra.mxu0 %v857
    %3105 = vmatprep.subr.bf16.mxu0 %v866
    %3106 = vmatpush1.bf16.msra.mxu0 %v865
    %3107 = vmatprep.subr.bf16.mxu0 %v874
    %3108 = vmatpush1.bf16.msra.mxu0 %v873
    %3109 = vmatprep.subr.bf16.mxu0 %v882
    %3110 = vmatpush1.bf16.msra.mxu0 %v881
    %3111 = vmatprep.subr.bf16.mxu0 %v890
    %3112 = vmatpush1.bf16.msra.mxu0 %v889
    %3113 = vmatprep.subr.bf16.mxu0 %v898
    %3114 = vmatpush1.bf16.msra.mxu0 %v897
    %3115 = vmatprep.subr.bf16.mxu0 %v906
    %3116 = vmatpush1.bf16.msra.mxu0 %v905
    %3117 = vmatprep.subr.bf16.mxu0 %v914
    %3118 = vmatpush1.bf16.msra.mxu0 %v913
    %3119 = vmatprep.subr.bf16.mxu0 %v922
    %3120 = vmatpush1.bf16.msra.mxu0 %v921
    %3121 = vmatprep.subr.bf16.mxu0 %v930
    %3122 = vmatpush1.bf16.msra.mxu0 %v929
    %3123 = vmatprep.subr.bf16.mxu0 %v938
    %3124 = vmatpush1.bf16.msra.mxu0 %v937
    %3125 = vmatprep.subr.bf16.mxu0 %v946
    %3126 = vmatpush1.bf16.msra.mxu0 %v945
    %3127 = vmatprep.subr.bf16.mxu0 %v954
    %3128 = vmatpush1.bf16.msra.mxu0 %v953
    %3129 = vmatprep.mubr.bf16.mxu0 %v1306
    %3130 = vmatmul.mubr.bf16.gmra.mrb[0].mxu0 %v1305
    %v3131 = vpop.f32.mrb[0].mxu0
    %v3132 = vadd.f32 0.0, %v3131
    %v3133 = vpop.f32.mrb[0].mxu0
    %v3134 = vadd.f32 0.0, %v3133
    %v3135 = vpop.f32.mrb[0].mxu0
    %v3136 = vpop.f32.mrb[0].mxu0
    %3137 = vdwg.mxu0
    %3138 = vmatprep.subr.bf16.mxu0 %v836
    %3139 = vmatpush1.bf16.msra.mxu0 %v835
    %3140 = vmatprep.subr.bf16.mxu0 %v844
    %3141 = vmatpush1.bf16.msra.mxu0 %v843
    %3142 = vmatprep.subr.bf16.mxu0 %v852
    %3143 = vmatpush1.bf16.msra.mxu0 %v851
    %3144 = vmatprep.subr.bf16.mxu0 %v860
    %3145 = vmatpush1.bf16.msra.mxu0 %v859
    %3146 = vmatprep.subr.bf16.mxu0 %v868
    %3147 = vmatpush1.bf16.msra.mxu0 %v867
    %3148 = vmatprep.subr.bf16.mxu0 %v876
    %3149 = vmatpush1.bf16.msra.mxu0 %v875
    %3150 = vmatprep.subr.bf16.mxu0 %v884
    %3151 = vmatpush1.bf16.msra.mxu0 %v883
    %3152 = vmatprep.subr.bf16.mxu0 %v892
    %3153 = vmatpush1.bf16.msra.mxu0 %v891
    %3154 = vmatprep.subr.bf16.mxu0 %v900
    %3155 = vmatpush1.bf16.msra.mxu0 %v899
    %3156 = vmatprep.subr.bf16.mxu0 %v908
    %3157 = vmatpush1.bf16.msra.mxu0 %v907
    %3158 = vmatprep.subr.bf16.mxu0 %v916
    %3159 = vmatpush1.bf16.msra.mxu0 %v915
    %3160 = vmatprep.subr.bf16.mxu0 %v924
    %3161 = vmatpush1.bf16.msra.mxu0 %v923
    %3162 = vmatprep.subr.bf16.mxu0 %v932
    %3163 = vmatpush1.bf16.msra.mxu0 %v931
    %3164 = vmatprep.subr.bf16.mxu0 %v940
    %3165 = vmatpush1.bf16.msra.mxu0 %v939
    %3166 = vmatprep.subr.bf16.mxu0 %v948
    %3167 = vmatpush1.bf16.msra.mxu0 %v947
    %3168 = vmatprep.subr.bf16.mxu0 %v956
    %3169 = vmatpush1.bf16.msra.mxu0 %v955
    %3170 = vmatprep.mubr.bf16.mxu0 %v1306
    %3171 = vmatmul.mubr.bf16.gmra.mrb[0].mxu0 %v1305
    %v3172 = vpop.f32.mrb[0].mxu0
    %v3173 = vadd.f32 0.0, %v3172
    %v3174 = vpop.f32.mrb[0].mxu0
    %v3175 = vadd.f32 0.0, %v3174
    %v3176 = vpop.f32.mrb[0].mxu0
    %v3177 = vpop.f32.mrb[0].mxu0
    %3178 = vdwg.mxu0
    %v3179 = vadd.f32 %v3007, %v3050
    %v3180 = vadd.f32 %v3008, %v3052
    %v3181 = vadd.f32 %v3009, %v3091
    %v3182 = vadd.f32 %v3010, %v3093
    %v3183 = vadd.f32 %v3011, %v3132
    %v3184 = vadd.f32 %v3012, %v3134
    %v3185 = vadd.f32 %v3013, %v3173
    %v3186 = vadd.f32 %v3014, %v3175
    %v3187 = vxor.u32 %v3179, 2147483648
    %v3188 = vxor.u32 %v3180, 2147483648
    %v3189 = vxor.u32 %v3181, 2147483648
    %v3190 = vxor.u32 %v3182, 2147483648
    %v3191 = vxor.u32 %v3183, 2147483648
    %v3192 = vxor.u32 %v3184, 2147483648
    %v3193 = vmul.f32 %v3187, 1.442695
    %v3194 = vpow.pop %v3193
    %v3195 = vmul.f32 %v3188, 1.442695
    %v3196 = vpow.pop %v3195
    %v3197 = vmul.f32 %v3189, 1.442695
    %v3198 = vpow.pop %v3197
    %v3199 = vmul.f32 %v3190, 1.442695
    %v3200 = vpow.pop %v3199
    %v3201 = vmul.f32 %v3191, 1.442695
    %v3202 = vpow.pop %v3201
    %v3203 = vmul.f32 %v3192, 1.442695
    %v3204 = vpow.pop %v3203
    %v3205 = vadd.f32 %v3194, 1.0
    %v3206 = vadd.f32 %v3196, 1.0
    %v3207 = vadd.f32 %v3198, 1.0
    %v3208 = vadd.f32 %v3200, 1.0
    %v3209 = vadd.f32 %v3202, 1.0
    %v3210 = vadd.f32 %v3204, 1.0
    %v3211 = vrcp.pop %v3205
    %v3212 = vmul.f32 1.0, %v3211
    %v3213 = vrcp.pop %v3206
    %v3214 = vmul.f32 1.0, %v3213
    %v3215 = vrcp.pop %v3207
    %v3216 = vmul.f32 1.0, %v3215
    %v3217 = vrcp.pop %v3208
    %v3218 = vmul.f32 1.0, %v3217
    %v3219 = vrcp.pop %v3209
    %v3220 = vmul.f32 1.0, %v3219
    %v3221 = vrcp.pop %v3210
    %v3222 = vmul.f32 1.0, %v3221
    %v3223 = vtanh.pop %v3185
    %v3224 = vtanh.pop %v3186
    %v3225 = vmul.f32 %v3216, %v1299
    %v3226 = vmul.f32 %v3218, %v1300
    %v3227 = vmul.f32 %v3212, %v3223
    %v3228 = vmul.f32 %v3214, %v3224
    %v3229 = vadd.f32 %v3225, %v3227
    %v3230 = vadd.f32 %v3226, %v3228
    %v3231 = vtanh.pop %v3229
    %v3232 = vtanh.pop %v3230
    %v3233 = vmul.f32 %v3220, %v3231
    %v3234 = vmul.f32 %v3222, %v3232
    %v3235 = vpack.c.bf16 %v3233, %v3233
    %v3236 = vpack.c.bf16 %v3234, %v3234
    %3237 = vmatprep.subr.bf16.mxu0 %v2117
    %3238 = vmatpush1.bf16.msra.mxu0 %v2116
    %3239 = vmatprep.subr.bf16.mxu0 %v2125
    %3240 = vmatpush1.bf16.msra.mxu0 %v2124
    %3241 = vmatprep.subr.bf16.mxu0 %v2133
    %3242 = vmatpush1.bf16.msra.mxu0 %v2132
    %3243 = vmatprep.subr.bf16.mxu0 %v2141
    %3244 = vmatpush1.bf16.msra.mxu0 %v2140
    %3245 = vmatprep.subr.bf16.mxu0 %v2149
    %3246 = vmatpush1.bf16.msra.mxu0 %v2148
    %3247 = vmatprep.subr.bf16.mxu0 %v2157
    %3248 = vmatpush1.bf16.msra.mxu0 %v2156
    %3249 = vmatprep.subr.bf16.mxu0 %v2165
    %3250 = vmatpush1.bf16.msra.mxu0 %v2164
    %3251 = vmatprep.subr.bf16.mxu0 %v2173
    %3252 = vmatpush1.bf16.msra.mxu0 %v2172
    %3253 = vmatprep.subr.bf16.mxu0 %v2181
    %3254 = vmatpush1.bf16.msra.mxu0 %v2180
    %3255 = vmatprep.subr.bf16.mxu0 %v2189
    %3256 = vmatpush1.bf16.msra.mxu0 %v2188
    %3257 = vmatprep.subr.bf16.mxu0 %v2197
    %3258 = vmatpush1.bf16.msra.mxu0 %v2196
    %3259 = vmatprep.subr.bf16.mxu0 %v2205
    %3260 = vmatpush1.bf16.msra.mxu0 %v2204
    %3261 = vmatprep.subr.bf16.mxu0 %v2213
    %3262 = vmatpush1.bf16.msra.mxu0 %v2212
    %3263 = vmatprep.subr.bf16.mxu0 %v2221
    %3264 = vmatpush1.bf16.msra.mxu0 %v2220
    %3265 = vmatprep.subr.bf16.mxu0 %v2229
    %3266 = vmatpush1.bf16.msra.mxu0 %v2228
    %3267 = vmatprep.subr.bf16.mxu0 %v2237
    %3268 = vmatpush1.bf16.msra.mxu0 %v2236
    %3269 = vmatprep.mubr.bf16.mxu0 %v3236
    %3270 = vmatmul.mubr.bf16.gmra.mrb[0].mxu0 %v3235
    %v3271 = vpop.f32.mrb[0].mxu0
    %v3272 = vadd.f32 %v1311, %v3271
    %v3273 = vpop.f32.mrb[0].mxu0
    %v3274 = vadd.f32 %v1315, %v3273
    %v3275 = vpop.f32.mrb[0].mxu0
    %v3276 = vpop.f32.mrb[0].mxu0
    %3277 = vdwg.mxu0
    %3278 = vmatprep.subr.bf16.mxu0 %v2245
    %3279 = vmatpush1.bf16.msra.mxu0 %v2244
    %3280 = vmatprep.subr.bf16.mxu0 %v2253
    %3281 = vmatpush1.bf16.msra.mxu0 %v2252
    %3282 = vmatprep.subr.bf16.mxu0 %v2261
    %3283 = vmatpush1.bf16.msra.mxu0 %v2260
    %3284 = vmatprep.subr.bf16.mxu0 %v2269
    %3285 = vmatpush1.bf16.msra.mxu0 %v2268
    %3286 = vmatprep.subr.bf16.mxu0 %v2277
    %3287 = vmatpush1.bf16.msra.mxu0 %v2276
    %3288 = vmatprep.subr.bf16.mxu0 %v2285
    %3289 = vmatpush1.bf16.msra.mxu0 %v2284
    %3290 = vmatprep.subr.bf16.mxu0 %v2293
    %3291 = vmatpush1.bf16.msra.mxu0 %v2292
    %3292 = vmatprep.subr.bf16.mxu0 %v2301
    %3293 = vmatpush1.bf16.msra.mxu0 %v2300
    %3294 = vmatprep.subr.bf16.mxu0 %v2309
    %3295 = vmatpush1.bf16.msra.mxu0 %v2308
    %3296 = vmatprep.subr.bf16.mxu0 %v2317
    %3297 = vmatpush1.bf16.msra.mxu0 %v2316
    %3298 = vmatprep.subr.bf16.mxu0 %v2325
    %3299 = vmatpush1.bf16.msra.mxu0 %v2324
    %3300 = vmatprep.subr.bf16.mxu0 %v2333
    %3301 = vmatpush1.bf16.msra.mxu0 %v2332
    %3302 = vmatprep.subr.bf16.mxu0 %v2341
    %3303 = vmatpush1.bf16.msra.mxu0 %v2340
    %3304 = vmatprep.subr.bf16.mxu0 %v2349
    %3305 = vmatpush1.bf16.msra.mxu0 %v2348
    %3306 = vmatprep.subr.bf16.mxu0 %v2357
    %3307 = vmatpush1.bf16.msra.mxu0 %v2356
    %3308 = vmatprep.subr.bf16.mxu0 %v2365
    %3309 = vmatpush1.bf16.msra.mxu0 %v2364
    %3310 = vmatprep.mubr.bf16.mxu0 %v3005
    %3311 = vmatmul.mubr.bf16.gmra.mrb[0].mxu0 %v3004
    %v3312 = vpop.f32.mrb[0].mxu0
    %v3313 = vadd.f32 %v3272, %v3312
    %v3314 = vpop.f32.mrb[0].mxu0
    %v3315 = vadd.f32 %v3274, %v3314
    %v3316 = vpop.f32.mrb[0].mxu0
    %v3317 = vpop.f32.mrb[0].mxu0
    %3318 = vdwg.mxu0
    %3319 = vmatprep.subr.bf16.mxu0 %v2119
    %3320 = vmatpush1.bf16.msra.mxu0 %v2118
    %3321 = vmatprep.subr.bf16.mxu0 %v2127
    %3322 = vmatpush1.bf16.msra.mxu0 %v2126
    %3323 = vmatprep.subr.bf16.mxu0 %v2135
    %3324 = vmatpush1.bf16.msra.mxu0 %v2134
    %3325 = vmatprep.subr.bf16.mxu0 %v2143
    %3326 = vmatpush1.bf16.msra.mxu0 %v2142
    %3327 = vmatprep.subr.bf16.mxu0 %v2151
    %3328 = vmatpush1.bf16.msra.mxu0 %v2150
    %3329 = vmatprep.subr.bf16.mxu0 %v2159
    %3330 = vmatpush1.bf16.msra.mxu0 %v2158
    %3331 = vmatprep.subr.bf16.mxu0 %v2167
    %3332 = vmatpush1.bf16.msra.mxu0 %v2166
    %3333 = vmatprep.subr.bf16.mxu0 %v2175
    %3334 = vmatpush1.bf16.msra.mxu0 %v2174
    %3335 = vmatprep.subr.bf16.mxu0 %v2183
    %3336 = vmatpush1.bf16.msra.mxu0 %v2182
    %3337 = vmatprep.subr.bf16.mxu0 %v2191
    %3338 = vmatpush1.bf16.msra.mxu0 %v2190
    %3339 = vmatprep.subr.bf16.mxu0 %v2199
    %3340 = vmatpush1.bf16.msra.mxu0 %v2198
    %3341 = vmatprep.subr.bf16.mxu0 %v2207
    %3342 = vmatpush1.bf16.msra.mxu0 %v2206
    %3343 = vmatprep.subr.bf16.mxu0 %v2215
    %3344 = vmatpush1.bf16.msra.mxu0 %v2214
    %3345 = vmatprep.subr.bf16.mxu0 %v2223
    %3346 = vmatpush1.bf16.msra.mxu0 %v2222
    %3347 = vmatprep.subr.bf16.mxu0 %v2231
    %3348 = vmatpush1.bf16.msra.mxu0 %v2230
    %3349 = vmatprep.subr.bf16.mxu0 %v2239
    %3350 = vmatpush1.bf16.msra.mxu0 %v2238
    %3351 = vmatprep.mubr.bf16.mxu0 %v3236
    %3352 = vmatmul.mubr.bf16.gmra.mrb[0].mxu0 %v3235
    %v3353 = vpop.f32.mrb[0].mxu0
    %v3354 = vadd.f32 %v1319, %v3353
    %v3355 = vpop.f32.mrb[0].mxu0
    %v3356 = vadd.f32 %v1323, %v3355
    %v3357 = vpop.f32.mrb[0].mxu0
    %v3358 = vpop.f32.mrb[0].mxu0
    %3359 = vdwg.mxu0
    %3360 = vmatprep.subr.bf16.mxu0 %v2247
    %3361 = vmatpush1.bf16.msra.mxu0 %v2246
    %3362 = vmatprep.subr.bf16.mxu0 %v2255
    %3363 = vmatpush1.bf16.msra.mxu0 %v2254
    %3364 = vmatprep.subr.bf16.mxu0 %v2263
    %3365 = vmatpush1.bf16.msra.mxu0 %v2262
    %3366 = vmatprep.subr.bf16.mxu0 %v2271
    %3367 = vmatpush1.bf16.msra.mxu0 %v2270
    %3368 = vmatprep.subr.bf16.mxu0 %v2279
    %3369 = vmatpush1.bf16.msra.mxu0 %v2278
    %3370 = vmatprep.subr.bf16.mxu0 %v2287
    %3371 = vmatpush1.bf16.msra.mxu0 %v2286
    %3372 = vmatprep.subr.bf16.mxu0 %v2295
    %3373 = vmatpush1.bf16.msra.mxu0 %v2294
    %3374 = vmatprep.subr.bf16.mxu0 %v2303
    %3375 = vmatpush1.bf16.msra.mxu0 %v2302
    %3376 = vmatprep.subr.bf16.mxu0 %v2311
    %3377 = vmatpush1.bf16.msra.mxu0 %v2310
    %3378 = vmatprep.subr.bf16.mxu0 %v2319
    %3379 = vmatpush1.bf16.msra.mxu0 %v2318
    %3380 = vmatprep.subr.bf16.mxu0 %v2327
    %3381 = vmatpush1.bf16.msra.mxu0 %v2326
    %3382 = vmatprep.subr.bf16.mxu0 %v2335
    %3383 = vmatpush1.bf16.msra.mxu0 %v2334
    %3384 = vmatprep.subr.bf16.mxu0 %v2343
    %3385 = vmatpush1.bf16.msra.mxu0 %v2342
    %3386 = vmatprep.subr.bf16.mxu0 %v2351
    %3387 = vmatpush1.bf16.msra.mxu0 %v2350
    %3388 = vmatprep.subr.bf16.mxu0 %v2359
    %3389 = vmatpush1.bf16.msra.mxu0 %v2358
    %3390 = vmatprep.subr.bf16.mxu0 %v2367
    %3391 = vmatpush1.bf16.msra.mxu0 %v2366
    %3392 = vmatprep.mubr.bf16.mxu0 %v3005
    %3393 = vmatmul.mubr.bf16.gmra.mrb[0].mxu0 %v3004
    %v3394 = vpop.f32.mrb[0].mxu0
    %v3395 = vadd.f32 %v3354, %v3394
    %v3396 = vpop.f32.mrb[0].mxu0
    %v3397 = vadd.f32 %v3356, %v3396
    %v3398 = vpop.f32.mrb[0].mxu0
    %v3399 = vpop.f32.mrb[0].mxu0
    %3400 = vdwg.mxu0
    %3401 = vmatprep.subr.bf16.mxu0 %v2121
    %3402 = vmatpush1.bf16.msra.mxu0 %v2120
    %3403 = vmatprep.subr.bf16.mxu0 %v2129
    %3404 = vmatpush1.bf16.msra.mxu0 %v2128
    %3405 = vmatprep.subr.bf16.mxu0 %v2137
    %3406 = vmatpush1.bf16.msra.mxu0 %v2136
    %3407 = vmatprep.subr.bf16.mxu0 %v2145
    %3408 = vmatpush1.bf16.msra.mxu0 %v2144
    %3409 = vmatprep.subr.bf16.mxu0 %v2153
    %3410 = vmatpush1.bf16.msra.mxu0 %v2152
    %3411 = vmatprep.subr.bf16.mxu0 %v2161
    %3412 = vmatpush1.bf16.msra.mxu0 %v2160
    %3413 = vmatprep.subr.bf16.mxu0 %v2169
    %3414 = vmatpush1.bf16.msra.mxu0 %v2168
    %3415 = vmatprep.subr.bf16.mxu0 %v2177
    %3416 = vmatpush1.bf16.msra.mxu0 %v2176
    %3417 = vmatprep.subr.bf16.mxu0 %v2185
    %3418 = vmatpush1.bf16.msra.mxu0 %v2184
    %3419 = vmatprep.subr.bf16.mxu0 %v2193
    %3420 = vmatpush1.bf16.msra.mxu0 %v2192
    %3421 = vmatprep.subr.bf16.mxu0 %v2201
    %3422 = vmatpush1.bf16.msra.mxu0 %v2200
    %3423 = vmatprep.subr.bf16.mxu0 %v2209
    %3424 = vmatpush1.bf16.msra.mxu0 %v2208
    %3425 = vmatprep.subr.bf16.mxu0 %v2217
    %3426 = vmatpush1.bf16.msra.mxu0 %v2216
    %3427 = vmatprep.subr.bf16.mxu0 %v2225
    %3428 = vmatpush1.bf16.msra.mxu0 %v2224
    %3429 = vmatprep.subr.bf16.mxu0 %v2233
    %3430 = vmatpush1.bf16.msra.mxu0 %v2232
    %3431 = vmatprep.subr.bf16.mxu0 %v2241
    %3432 = vmatpush1.bf16.msra.mxu0 %v2240
    %3433 = vmatprep.mubr.bf16.mxu0 %v3236
    %3434 = vmatmul.mubr.bf16.gmra.mrb[0].mxu0 %v3235
    %v3435 = vpop.f32.mrb[0].mxu0
    %v3436 = vadd.f32 %v1327, %v3435
    %v3437 = vpop.f32.mrb[0].mxu0
    %v3438 = vadd.f32 %v1331, %v3437
    %v3439 = vpop.f32.mrb[0].mxu0
    %v3440 = vpop.f32.mrb[0].mxu0
    %3441 = vdwg.mxu0
    %3442 = vmatprep.subr.bf16.mxu0 %v2249
    %3443 = vmatpush1.bf16.msra.mxu0 %v2248
    %3444 = vmatprep.subr.bf16.mxu0 %v2257
    %3445 = vmatpush1.bf16.msra.mxu0 %v2256
    %3446 = vmatprep.subr.bf16.mxu0 %v2265
    %3447 = vmatpush1.bf16.msra.mxu0 %v2264
    %3448 = vmatprep.subr.bf16.mxu0 %v2273
    %3449 = vmatpush1.bf16.msra.mxu0 %v2272
    %3450 = vmatprep.subr.bf16.mxu0 %v2281
    %3451 = vmatpush1.bf16.msra.mxu0 %v2280
    %3452 = vmatprep.subr.bf16.mxu0 %v2289
    %3453 = vmatpush1.bf16.msra.mxu0 %v2288
    %3454 = vmatprep.subr.bf16.mxu0 %v2297
    %3455 = vmatpush1.bf16.msra.mxu0 %v2296
    %3456 = vmatprep.subr.bf16.mxu0 %v2305
    %3457 = vmatpush1.bf16.msra.mxu0 %v2304
    %3458 = vmatprep.subr.bf16.mxu0 %v2313
    %3459 = vmatpush1.bf16.msra.mxu0 %v2312
    %3460 = vmatprep.subr.bf16.mxu0 %v2321
    %3461 = vmatpush1.bf16.msra.mxu0 %v2320
    %3462 = vmatprep.subr.bf16.mxu0 %v2329
    %3463 = vmatpush1.bf16.msra.mxu0 %v2328
    %3464 = vmatprep.subr.bf16.mxu0 %v2337
    %3465 = vmatpush1.bf16.msra.mxu0 %v2336
    %3466 = vmatprep.subr.bf16.mxu0 %v2345
    %3467 = vmatpush1.bf16.msra.mxu0 %v2344
    %3468 = vmatprep.subr.bf16.mxu0 %v2353
    %3469 = vmatpush1.bf16.msra.mxu0 %v2352
    %3470 = vmatprep.subr.bf16.mxu0 %v2361
    %3471 = vmatpush1.bf16.msra.mxu0 %v2360
    %3472 = vmatprep.subr.bf16.mxu0 %v2369
    %3473 = vmatpush1.bf16.msra.mxu0 %v2368
    %3474 = vmatprep.mubr.bf16.mxu0 %v3005
    %3475 = vmatmul.mubr.bf16.gmra.mrb[0].mxu0 %v3004
    %v3476 = vpop.f32.mrb[0].mxu0
    %v3477 = vadd.f32 %v3436, %v3476
    %v3478 = vpop.f32.mrb[0].mxu0
    %v3479 = vadd.f32 %v3438, %v3478
    %v3480 = vpop.f32.mrb[0].mxu0
    %v3481 = vpop.f32.mrb[0].mxu0
    %3482 = vdwg.mxu0
    %3483 = vmatprep.subr.bf16.mxu0 %v2123
    %3484 = vmatpush1.bf16.msra.mxu0 %v2122
    %3485 = vmatprep.subr.bf16.mxu0 %v2131
    %3486 = vmatpush1.bf16.msra.mxu0 %v2130
    %3487 = vmatprep.subr.bf16.mxu0 %v2139
    %3488 = vmatpush1.bf16.msra.mxu0 %v2138
    %3489 = vmatprep.subr.bf16.mxu0 %v2147
    %3490 = vmatpush1.bf16.msra.mxu0 %v2146
    %3491 = vmatprep.subr.bf16.mxu0 %v2155
    %3492 = vmatpush1.bf16.msra.mxu0 %v2154
    %3493 = vmatprep.subr.bf16.mxu0 %v2163
    %3494 = vmatpush1.bf16.msra.mxu0 %v2162
    %3495 = vmatprep.subr.bf16.mxu0 %v2171
    %3496 = vmatpush1.bf16.msra.mxu0 %v2170
    %3497 = vmatprep.subr.bf16.mxu0 %v2179
    %3498 = vmatpush1.bf16.msra.mxu0 %v2178
    %3499 = vmatprep.subr.bf16.mxu0 %v2187
    %3500 = vmatpush1.bf16.msra.mxu0 %v2186
    %3501 = vmatprep.subr.bf16.mxu0 %v2195
    %3502 = vmatpush1.bf16.msra.mxu0 %v2194
    %3503 = vmatprep.subr.bf16.mxu0 %v2203
    %3504 = vmatpush1.bf16.msra.mxu0 %v2202
    %3505 = vmatprep.subr.bf16.mxu0 %v2211
    %3506 = vmatpush1.bf16.msra.mxu0 %v2210
    %3507 = vmatprep.subr.bf16.mxu0 %v2219
    %3508 = vmatpush1.bf16.msra.mxu0 %v2218
    %3509 = vmatprep.subr.bf16.mxu0 %v2227
    %3510 = vmatpush1.bf16.msra.mxu0 %v2226
    %3511 = vmatprep.subr.bf16.mxu0 %v2235
    %3512 = vmatpush1.bf16.msra.mxu0 %v2234
    %3513 = vmatprep.subr.bf16.mxu0 %v2243
    %3514 = vmatpush1.bf16.msra.mxu0 %v2242
    %3515 = vmatprep.mubr.bf16.mxu0 %v3236
    %3516 = vmatmul.mubr.bf16.gmra.mrb[0].mxu0 %v3235
    %v3517 = vpop.f32.mrb[0].mxu0
    %v3518 = vadd.f32 %v1335, %v3517
    %v3519 = vpop.f32.mrb[0].mxu0
    %v3520 = vadd.f32 %v1339, %v3519
    %v3521 = vpop.f32.mrb[0].mxu0
    %v3522 = vpop.f32.mrb[0].mxu0
    %3523 = vdwg.mxu0
    %3524 = vmatprep.subr.bf16.mxu0 %v2251
    %3525 = vmatpush1.bf16.msra.mxu0 %v2250
    %3526 = vmatprep.subr.bf16.mxu0 %v2259
    %3527 = vmatpush1.bf16.msra.mxu0 %v2258
    %3528 = vmatprep.subr.bf16.mxu0 %v2267
    %3529 = vmatpush1.bf16.msra.mxu0 %v2266
    %3530 = vmatprep.subr.bf16.mxu0 %v2275
    %3531 = vmatpush1.bf16.msra.mxu0 %v2274
    %3532 = vmatprep.subr.bf16.mxu0 %v2283
    %3533 = vmatpush1.bf16.msra.mxu0 %v2282
    %3534 = vmatprep.subr.bf16.mxu0 %v2291
    %3535 = vmatpush1.bf16.msra.mxu0 %v2290
    %3536 = vmatprep.subr.bf16.mxu0 %v2299
    %3537 = vmatpush1.bf16.msra.mxu0 %v2298
    %3538 = vmatprep.subr.bf16.mxu0 %v2307
    %3539 = vmatpush1.bf16.msra.mxu0 %v2306
    %3540 = vmatprep.subr.bf16.mxu0 %v2315
    %3541 = vmatpush1.bf16.msra.mxu0 %v2314
    %3542 = vmatprep.subr.bf16.mxu0 %v2323
    %3543 = vmatpush1.bf16.msra.mxu0 %v2322
    %3544 = vmatprep.subr.bf16.mxu0 %v2331
    %3545 = vmatpush1.bf16.msra.mxu0 %v2330
    %3546 = vmatprep.subr.bf16.mxu0 %v2339
    %3547 = vmatpush1.bf16.msra.mxu0 %v2338
    %3548 = vmatprep.subr.bf16.mxu0 %v2347
    %3549 = vmatpush1.bf16.msra.mxu0 %v2346
    %3550 = vmatprep.subr.bf16.mxu0 %v2355
    %3551 = vmatpush1.bf16.msra.mxu0 %v2354
    %3552 = vmatprep.subr.bf16.mxu0 %v2363
    %3553 = vmatpush1.bf16.msra.mxu0 %v2362
    %3554 = vmatprep.subr.bf16.mxu0 %v2371
    %3555 = vmatpush1.bf16.msra.mxu0 %v2370
    %3556 = vmatprep.mubr.bf16.mxu0 %v3005
    %3557 = vmatmul.mubr.bf16.gmra.mrb[0].mxu0 %v3004
    %v3558 = vpop.f32.mrb[0].mxu0
    %v3559 = vadd.f32 %v3518, %v3558
    %v3560 = vpop.f32.mrb[0].mxu0
    %v3561 = vadd.f32 %v3520, %v3560
    %v3562 = vpop.f32.mrb[0].mxu0
    %v3563 = vpop.f32.mrb[0].mxu0
    %3564 = vdwg.mxu0
    %v3565 = vxor.u32 %v3313, 2147483648
    %v3566 = vxor.u32 %v3315, 2147483648
    %v3567 = vxor.u32 %v3395, 2147483648
    %v3568 = vxor.u32 %v3397, 2147483648
    %v3569 = vxor.u32 %v3477, 2147483648
    %v3570 = vxor.u32 %v3479, 2147483648
    %v3571 = vmul.f32 %v3565, 1.442695
    %v3572 = vpow.pop %v3571
    %v3573 = vmul.f32 %v3566, 1.442695
    %v3574 = vpow.pop %v3573
    %v3575 = vmul.f32 %v3567, 1.442695
    %v3576 = vpow.pop %v3575
    %v3577 = vmul.f32 %v3568, 1.442695
    %v3578 = vpow.pop %v3577
    %v3579 = vmul.f32 %v3569, 1.442695
    %v3580 = vpow.pop %v3579
    %v3581 = vmul.f32 %v3570, 1.442695
    %v3582 = vpow.pop %v3581
    %v3583 = vadd.f32 %v3572, 1.0
    %v3584 = vadd.f32 %v3574, 1.0
    %v3585 = vadd.f32 %v3576, 1.0
    %v3586 = vadd.f32 %v3578, 1.0
    %v3587 = vadd.f32 %v3580, 1.0
    %v3588 = vadd.f32 %v3582, 1.0
    %v3589 = vrcp.pop %v3583
    %v3590 = vmul.f32 1.0, %v3589
    %v3591 = vrcp.pop %v3584
    %v3592 = vmul.f32 1.0, %v3591
    %v3593 = vrcp.pop %v3585
    %v3594 = vmul.f32 1.0, %v3593
    %v3595 = vrcp.pop %v3586
    %v3596 = vmul.f32 1.0, %v3595
    %v3597 = vrcp.pop %v3587
    %v3598 = vmul.f32 1.0, %v3597
    %v3599 = vrcp.pop %v3588
    %v3600 = vmul.f32 1.0, %v3599
    %v3601 = vtanh.pop %v3559
    %v3602 = vtanh.pop %v3561
    %v3603 = vmul.f32 %v3594, %v2998
    %v3604 = vmul.f32 %v3596, %v2999
    %v3605 = vmul.f32 %v3590, %v3601
    %v3606 = vmul.f32 %v3592, %v3602
    %v3607 = vadd.f32 %v3603, %v3605
    %v3608 = vadd.f32 %v3604, %v3606
    %v3609 = vtanh.pop %v3607
    %v3610 = vtanh.pop %v3608
    %v3611 = vmul.f32 %v3598, %v3609
    %v3612 = vmul.f32 %v3600, %v3610
    %v3613 = vpack.c.bf16 %v3611, %v3611
    %v3614 = vpack.c.bf16 %v3612, %v3612
    %s3615 = scalar_lea.vmem %s0, 128
    %v3616 = vld [vmem:[%s3615] sm:$0xff]
    %v3617 = vld [vmem:[%s3615 + $0x8] sm:$0xff]
    %v3618 = vld [vmem:[%s3615 + $0x10] sm:$0xff]
    %v3619 = vld [vmem:[%s3615 + $0x18] sm:$0xff]
    %v3620 = vld [vmem:[%s3615 + $0x20] sm:$0xff]
    %v3621 = vld [vmem:[%s3615 + $0x28] sm:$0xff]
    %v3622 = vld [vmem:[%s3615 + $0x30] sm:$0xff]
    %v3623 = vld [vmem:[%s3615 + $0x38] sm:$0xff]
    %3624 = vmatprep.subr.bf16.mxu0 %v830
    %3625 = vmatpush1.bf16.msra.mxu0 %v829
    %3626 = vmatprep.subr.bf16.mxu0 %v838
    %3627 = vmatpush1.bf16.msra.mxu0 %v837
    %3628 = vmatprep.subr.bf16.mxu0 %v846
    %3629 = vmatpush1.bf16.msra.mxu0 %v845
    %3630 = vmatprep.subr.bf16.mxu0 %v854
    %3631 = vmatpush1.bf16.msra.mxu0 %v853
    %3632 = vmatprep.subr.bf16.mxu0 %v862
    %3633 = vmatpush1.bf16.msra.mxu0 %v861
    %3634 = vmatprep.subr.bf16.mxu0 %v870
    %3635 = vmatpush1.bf16.msra.mxu0 %v869
    %3636 = vmatprep.subr.bf16.mxu0 %v878
    %3637 = vmatpush1.bf16.msra.mxu0 %v877
    %3638 = vmatprep.subr.bf16.mxu0 %v886
    %3639 = vmatpush1.bf16.msra.mxu0 %v885
    %3640 = vmatprep.subr.bf16.mxu0 %v894
    %3641 = vmatpush1.bf16.msra.mxu0 %v893
    %3642 = vmatprep.subr.bf16.mxu0 %v902
    %3643 = vmatpush1.bf16.msra.mxu0 %v901
    %3644 = vmatprep.subr.bf16.mxu0 %v910
    %3645 = vmatpush1.bf16.msra.mxu0 %v909
    %3646 = vmatprep.subr.bf16.mxu0 %v918
    %3647 = vmatpush1.bf16.msra.mxu0 %v917
    %3648 = vmatprep.subr.bf16.mxu0 %v926
    %3649 = vmatpush1.bf16.msra.mxu0 %v925
    %3650 = vmatprep.subr.bf16.mxu0 %v934
    %3651 = vmatpush1.bf16.msra.mxu0 %v933
    %3652 = vmatprep.subr.bf16.mxu0 %v942
    %3653 = vmatpush1.bf16.msra.mxu0 %v941
    %3654 = vmatprep.subr.bf16.mxu0 %v950
    %3655 = vmatpush1.bf16.msra.mxu0 %v949
    %3656 = vmatprep.mubr.bf16.mxu0 %v3236
    %3657 = vmatmul.mubr.bf16.gmra.mrb[0].mxu0 %v3235
    %v3658 = vpop.f32.mrb[0].mxu0
    %v3659 = vadd.f32 0.0, %v3658
    %v3660 = vpop.f32.mrb[0].mxu0
    %v3661 = vadd.f32 0.0, %v3660
    %v3662 = vpop.f32.mrb[0].mxu0
    %v3663 = vpop.f32.mrb[0].mxu0
    %3664 = vdwg.mxu0
    %3665 = vmatprep.subr.bf16.mxu0 %v832
    %3666 = vmatpush1.bf16.msra.mxu0 %v831
    %3667 = vmatprep.subr.bf16.mxu0 %v840
    %3668 = vmatpush1.bf16.msra.mxu0 %v839
    %3669 = vmatprep.subr.bf16.mxu0 %v848
    %3670 = vmatpush1.bf16.msra.mxu0 %v847
    %3671 = vmatprep.subr.bf16.mxu0 %v856
    %3672 = vmatpush1.bf16.msra.mxu0 %v855
    %3673 = vmatprep.subr.bf16.mxu0 %v864
    %3674 = vmatpush1.bf16.msra.mxu0 %v863
    %3675 = vmatprep.subr.bf16.mxu0 %v872
    %3676 = vmatpush1.bf16.msra.mxu0 %v871
    %3677 = vmatprep.subr.bf16.mxu0 %v880
    %3678 = vmatpush1.bf16.msra.mxu0 %v879
    %3679 = vmatprep.subr.bf16.mxu0 %v888
    %3680 = vmatpush1.bf16.msra.mxu0 %v887
    %3681 = vmatprep.subr.bf16.mxu0 %v896
    %3682 = vmatpush1.bf16.msra.mxu0 %v895
    %3683 = vmatprep.subr.bf16.mxu0 %v904
    %3684 = vmatpush1.bf16.msra.mxu0 %v903
    %3685 = vmatprep.subr.bf16.mxu0 %v912
    %3686 = vmatpush1.bf16.msra.mxu0 %v911
    %3687 = vmatprep.subr.bf16.mxu0 %v920
    %3688 = vmatpush1.bf16.msra.mxu0 %v919
    %3689 = vmatprep.subr.bf16.mxu0 %v928
    %3690 = vmatpush1.bf16.msra.mxu0 %v927
    %3691 = vmatprep.subr.bf16.mxu0 %v936
    %3692 = vmatpush1.bf16.msra.mxu0 %v935
    %3693 = vmatprep.subr.bf16.mxu0 %v944
    %3694 = vmatpush1.bf16.msra.mxu0 %v943
    %3695 = vmatprep.subr.bf16.mxu0 %v952
    %3696 = vmatpush1.bf16.msra.mxu0 %v951
    %3697 = vmatprep.mubr.bf16.mxu0 %v3236
    %3698 = vmatmul.mubr.bf16.gmra.mrb[0].mxu0 %v3235
    %v3699 = vpop.f32.mrb[0].mxu0
    %v3700 = vadd.f32 0.0, %v3699
    %v3701 = vpop.f32.mrb[0].mxu0
    %v3702 = vadd.f32 0.0, %v3701
    %v3703 = vpop.f32.mrb[0].mxu0
    %v3704 = vpop.f32.mrb[0].mxu0
    %3705 = vdwg.mxu0
    %3706 = vmatprep.subr.bf16.mxu0 %v834
    %3707 = vmatpush1.bf16.msra.mxu0 %v833
    %3708 = vmatprep.subr.bf16.mxu0 %v842
    %3709 = vmatpush1.bf16.msra.mxu0 %v841
    %3710 = vmatprep.subr.bf16.mxu0 %v850
    %3711 = vmatpush1.bf16.msra.mxu0 %v849
    %3712 = vmatprep.subr.bf16.mxu0 %v858
    %3713 = vmatpush1.bf16.msra.mxu0 %v857
    %3714 = vmatprep.subr.bf16.mxu0 %v866
    %3715 = vmatpush1.bf16.msra.mxu0 %v865
    %3716 = vmatprep.subr.bf16.mxu0 %v874
    %3717 = vmatpush1.bf16.msra.mxu0 %v873
    %3718 = vmatprep.subr.bf16.mxu0 %v882
    %3719 = vmatpush1.bf16.msra.mxu0 %v881
    %3720 = vmatprep.subr.bf16.mxu0 %v890
    %3721 = vmatpush1.bf16.msra.mxu0 %v889
    %3722 = vmatprep.subr.bf16.mxu0 %v898
    %3723 = vmatpush1.bf16.msra.mxu0 %v897
    %3724 = vmatprep.subr.bf16.mxu0 %v906
    %3725 = vmatpush1.bf16.msra.mxu0 %v905
    %3726 = vmatprep.subr.bf16.mxu0 %v914
    %3727 = vmatpush1.bf16.msra.mxu0 %v913
    %3728 = vmatprep.subr.bf16.mxu0 %v922
    %3729 = vmatpush1.bf16.msra.mxu0 %v921
    %3730 = vmatprep.subr.bf16.mxu0 %v930
    %3731 = vmatpush1.bf16.msra.mxu0 %v929
    %3732 = vmatprep.subr.bf16.mxu0 %v938
    %3733 = vmatpush1.bf16.msra.mxu0 %v937
    %3734 = vmatprep.subr.bf16.mxu0 %v946
    %3735 = vmatpush1.bf16.msra.mxu0 %v945
    %3736 = vmatprep.subr.bf16.mxu0 %v954
    %3737 = vmatpush1.bf16.msra.mxu0 %v953
    %3738 = vmatprep.mubr.bf16.mxu0 %v3236
    %3739 = vmatmul.mubr.bf16.gmra.mrb[0].mxu0 %v3235
    %v3740 = vpop.f32.mrb[0].mxu0
    %v3741 = vadd.f32 0.0, %v3740
    %v3742 = vpop.f32.mrb[0].mxu0
    %v3743 = vadd.f32 0.0, %v3742
    %v3744 = vpop.f32.mrb[0].mxu0
    %v3745 = vpop.f32.mrb[0].mxu0
    %3746 = vdwg.mxu0
    %3747 = vmatprep.subr.bf16.mxu0 %v836
    %3748 = vmatpush1.bf16.msra.mxu0 %v835
    %3749 = vmatprep.subr.bf16.mxu0 %v844
    %3750 = vmatpush1.bf16.msra.mxu0 %v843
    %3751 = vmatprep.subr.bf16.mxu0 %v852
    %3752 = vmatpush1.bf16.msra.mxu0 %v851
    %3753 = vmatprep.subr.bf16.mxu0 %v860
    %3754 = vmatpush1.bf16.msra.mxu0 %v859
    %3755 = vmatprep.subr.bf16.mxu0 %v868
    %3756 = vmatpush1.bf16.msra.mxu0 %v867
    %3757 = vmatprep.subr.bf16.mxu0 %v876
    %3758 = vmatpush1.bf16.msra.mxu0 %v875
    %3759 = vmatprep.subr.bf16.mxu0 %v884
    %3760 = vmatpush1.bf16.msra.mxu0 %v883
    %3761 = vmatprep.subr.bf16.mxu0 %v892
    %3762 = vmatpush1.bf16.msra.mxu0 %v891
    %3763 = vmatprep.subr.bf16.mxu0 %v900
    %3764 = vmatpush1.bf16.msra.mxu0 %v899
    %3765 = vmatprep.subr.bf16.mxu0 %v908
    %3766 = vmatpush1.bf16.msra.mxu0 %v907
    %3767 = vmatprep.subr.bf16.mxu0 %v916
    %3768 = vmatpush1.bf16.msra.mxu0 %v915
    %3769 = vmatprep.subr.bf16.mxu0 %v924
    %3770 = vmatpush1.bf16.msra.mxu0 %v923
    %3771 = vmatprep.subr.bf16.mxu0 %v932
    %3772 = vmatpush1.bf16.msra.mxu0 %v931
    %3773 = vmatprep.subr.bf16.mxu0 %v940
    %3774 = vmatpush1.bf16.msra.mxu0 %v939
    %3775 = vmatprep.subr.bf16.mxu0 %v948
    %3776 = vmatpush1.bf16.msra.mxu0 %v947
    %3777 = vmatprep.subr.bf16.mxu0 %v956
    %3778 = vmatpush1.bf16.msra.mxu0 %v955
    %3779 = vmatprep.mubr.bf16.mxu0 %v3236
    %3780 = vmatmul.mubr.bf16.gmra.mrb[0].mxu0 %v3235
    %v3781 = vpop.f32.mrb[0].mxu0
    %v3782 = vadd.f32 0.0, %v3781
    %v3783 = vpop.f32.mrb[0].mxu0
    %v3784 = vadd.f32 0.0, %v3783
    %v3785 = vpop.f32.mrb[0].mxu0
    %v3786 = vpop.f32.mrb[0].mxu0
    %3787 = vdwg.mxu0
    %v3788 = vadd.f32 %v3616, %v3659
    %v3789 = vadd.f32 %v3617, %v3661
    %v3790 = vadd.f32 %v3618, %v3700
    %v3791 = vadd.f32 %v3619, %v3702
    %v3792 = vadd.f32 %v3620, %v3741
    %v3793 = vadd.f32 %v3621, %v3743
    %v3794 = vadd.f32 %v3622, %v3782
    %v3795 = vadd.f32 %v3623, %v3784
    %v3796 = vxor.u32 %v3788, 2147483648
    %v3797 = vxor.u32 %v3789, 2147483648
    %v3798 = vxor.u32 %v3790, 2147483648
    %v3799 = vxor.u32 %v3791, 2147483648
    %v3800 = vxor.u32 %v3792, 2147483648
    %v3801 = vxor.u32 %v3793, 2147483648
    %v3802 = vmul.f32 %v3796, 1.442695
    %v3803 = vpow.pop %v3802
    %v3804 = vmul.f32 %v3797, 1.442695
    %v3805 = vpow.pop %v3804
    %v3806 = vmul.f32 %v3798, 1.442695
    %v3807 = vpow.pop %v3806
    %v3808 = vmul.f32 %v3799, 1.442695
    %v3809 = vpow.pop %v3808
    %v3810 = vmul.f32 %v3800, 1.442695
    %v3811 = vpow.pop %v3810
    %v3812 = vmul.f32 %v3801, 1.442695
    %v3813 = vpow.pop %v3812
    %v3814 = vadd.f32 %v3803, 1.0
    %v3815 = vadd.f32 %v3805, 1.0
    %v3816 = vadd.f32 %v3807, 1.0
    %v3817 = vadd.f32 %v3809, 1.0
    %v3818 = vadd.f32 %v3811, 1.0
    %v3819 = vadd.f32 %v3813, 1.0
    %v3820 = vrcp.pop %v3814
    %v3821 = vmul.f32 1.0, %v3820
    %v3822 = vrcp.pop %v3815
    %v3823 = vmul.f32 1.0, %v3822
    %v3824 = vrcp.pop %v3816
    %v3825 = vmul.f32 1.0, %v3824
    %v3826 = vrcp.pop %v3817
    %v3827 = vmul.f32 1.0, %v3826
    %v3828 = vrcp.pop %v3818
    %v3829 = vmul.f32 1.0, %v3828
    %v3830 = vrcp.pop %v3819
    %v3831 = vmul.f32 1.0, %v3830
    %v3832 = vtanh.pop %v3794
    %v3833 = vtanh.pop %v3795
    %v3834 = vmul.f32 %v3825, %v3229
    %v3835 = vmul.f32 %v3827, %v3230
    %v3836 = vmul.f32 %v3821, %v3832
    %v3837 = vmul.f32 %v3823, %v3833
    %v3838 = vadd.f32 %v3834, %v3836
    %v3839 = vadd.f32 %v3835, %v3837
    %v3840 = vtanh.pop %v3838
    %v3841 = vtanh.pop %v3839
    %v3842 = vmul.f32 %v3829, %v3840
    %v3843 = vmul.f32 %v3831, %v3841
    %v3844 = vpack.c.bf16 %v3842, %v3842
    %v3845 = vpack.c.bf16 %v3843, %v3843
    %3846 = vmatprep.subr.bf16.mxu0 %v2117
    %3847 = vmatpush1.bf16.msra.mxu0 %v2116
    %3848 = vmatprep.subr.bf16.mxu0 %v2125
    %3849 = vmatpush1.bf16.msra.mxu0 %v2124
    %3850 = vmatprep.subr.bf16.mxu0 %v2133
    %3851 = vmatpush1.bf16.msra.mxu0 %v2132
    %3852 = vmatprep.subr.bf16.mxu0 %v2141
    %3853 = vmatpush1.bf16.msra.mxu0 %v2140
    %3854 = vmatprep.subr.bf16.mxu0 %v2149
    %3855 = vmatpush1.bf16.msra.mxu0 %v2148
    %3856 = vmatprep.subr.bf16.mxu0 %v2157
    %3857 = vmatpush1.bf16.msra.mxu0 %v2156
    %3858 = vmatprep.subr.bf16.mxu0 %v2165
    %3859 = vmatpush1.bf16.msra.mxu0 %v2164
    %3860 = vmatprep.subr.bf16.mxu0 %v2173
    %3861 = vmatpush1.bf16.msra.mxu0 %v2172
    %3862 = vmatprep.subr.bf16.mxu0 %v2181
    %3863 = vmatpush1.bf16.msra.mxu0 %v2180
    %3864 = vmatprep.subr.bf16.mxu0 %v2189
    %3865 = vmatpush1.bf16.msra.mxu0 %v2188
    %3866 = vmatprep.subr.bf16.mxu0 %v2197
    %3867 = vmatpush1.bf16.msra.mxu0 %v2196
    %3868 = vmatprep.subr.bf16.mxu0 %v2205
    %3869 = vmatpush1.bf16.msra.mxu0 %v2204
    %3870 = vmatprep.subr.bf16.mxu0 %v2213
    %3871 = vmatpush1.bf16.msra.mxu0 %v2212
    %3872 = vmatprep.subr.bf16.mxu0 %v2221
    %3873 = vmatpush1.bf16.msra.mxu0 %v2220
    %3874 = vmatprep.subr.bf16.mxu0 %v2229
    %3875 = vmatpush1.bf16.msra.mxu0 %v2228
    %3876 = vmatprep.subr.bf16.mxu0 %v2237
    %3877 = vmatpush1.bf16.msra.mxu0 %v2236
    %3878 = vmatprep.mubr.bf16.mxu0 %v3845
    %3879 = vmatmul.mubr.bf16.gmra.mrb[0].mxu0 %v3844
    %v3880 = vpop.f32.mrb[0].mxu0
    %v3881 = vadd.f32 %v1311, %v3880
    %v3882 = vpop.f32.mrb[0].mxu0
    %v3883 = vadd.f32 %v1315, %v3882
    %v3884 = vpop.f32.mrb[0].mxu0
    %v3885 = vpop.f32.mrb[0].mxu0
    %3886 = vdwg.mxu0
    %3887 = vmatprep.subr.bf16.mxu0 %v2245
    %3888 = vmatpush1.bf16.msra.mxu0 %v2244
    %3889 = vmatprep.subr.bf16.mxu0 %v2253
    %3890 = vmatpush1.bf16.msra.mxu0 %v2252
    %3891 = vmatprep.subr.bf16.mxu0 %v2261
    %3892 = vmatpush1.bf16.msra.mxu0 %v2260
    %3893 = vmatprep.subr.bf16.mxu0 %v2269
    %3894 = vmatpush1.bf16.msra.mxu0 %v2268
    %3895 = vmatprep.subr.bf16.mxu0 %v2277
    %3896 = vmatpush1.bf16.msra.mxu0 %v2276
    %3897 = vmatprep.subr.bf16.mxu0 %v2285
    %3898 = vmatpush1.bf16.msra.mxu0 %v2284
    %3899 = vmatprep.subr.bf16.mxu0 %v2293
    %3900 = vmatpush1.bf16.msra.mxu0 %v2292
    %3901 = vmatprep.subr.bf16.mxu0 %v2301
    %3902 = vmatpush1.bf16.msra.mxu0 %v2300
    %3903 = vmatprep.subr.bf16.mxu0 %v2309
    %3904 = vmatpush1.bf16.msra.mxu0 %v2308
    %3905 = vmatprep.subr.bf16.mxu0 %v2317
    %3906 = vmatpush1.bf16.msra.mxu0 %v2316
    %3907 = vmatprep.subr.bf16.mxu0 %v2325
    %3908 = vmatpush1.bf16.msra.mxu0 %v2324
    %3909 = vmatprep.subr.bf16.mxu0 %v2333
    %3910 = vmatpush1.bf16.msra.mxu0 %v2332
    %3911 = vmatprep.subr.bf16.mxu0 %v2341
    %3912 = vmatpush1.bf16.msra.mxu0 %v2340
    %3913 = vmatprep.subr.bf16.mxu0 %v2349
    %3914 = vmatpush1.bf16.msra.mxu0 %v2348
    %3915 = vmatprep.subr.bf16.mxu0 %v2357
    %3916 = vmatpush1.bf16.msra.mxu0 %v2356
    %3917 = vmatprep.subr.bf16.mxu0 %v2365
    %3918 = vmatpush1.bf16.msra.mxu0 %v2364
    %3919 = vmatprep.mubr.bf16.mxu0 %v3614
    %3920 = vmatmul.mubr.bf16.gmra.mrb[0].mxu0 %v3613
    %v3921 = vpop.f32.mrb[0].mxu0
    %v3922 = vadd.f32 %v3881, %v3921
    %v3923 = vpop.f32.mrb[0].mxu0
    %v3924 = vadd.f32 %v3883, %v3923
    %v3925 = vpop.f32.mrb[0].mxu0
    %v3926 = vpop.f32.mrb[0].mxu0
    %3927 = vdwg.mxu0
    %3928 = vmatprep.subr.bf16.mxu0 %v2119
    %3929 = vmatpush1.bf16.msra.mxu0 %v2118
    %3930 = vmatprep.subr.bf16.mxu0 %v2127
    %3931 = vmatpush1.bf16.msra.mxu0 %v2126
    %3932 = vmatprep.subr.bf16.mxu0 %v2135
    %3933 = vmatpush1.bf16.msra.mxu0 %v2134
    %3934 = vmatprep.subr.bf16.mxu0 %v2143
    %3935 = vmatpush1.bf16.msra.mxu0 %v2142
    %3936 = vmatprep.subr.bf16.mxu0 %v2151
    %3937 = vmatpush1.bf16.msra.mxu0 %v2150
    %3938 = vmatprep.subr.bf16.mxu0 %v2159
    %3939 = vmatpush1.bf16.msra.mxu0 %v2158
    %3940 = vmatprep.subr.bf16.mxu0 %v2167
    %3941 = vmatpush1.bf16.msra.mxu0 %v2166
    %3942 = vmatprep.subr.bf16.mxu0 %v2175
    %3943 = vmatpush1.bf16.msra.mxu0 %v2174
    %3944 = vmatprep.subr.bf16.mxu0 %v2183
    %3945 = vmatpush1.bf16.msra.mxu0 %v2182
    %3946 = vmatprep.subr.bf16.mxu0 %v2191
    %3947 = vmatpush1.bf16.msra.mxu0 %v2190
    %3948 = vmatprep.subr.bf16.mxu0 %v2199
    %3949 = vmatpush1.bf16.msra.mxu0 %v2198
    %3950 = vmatprep.subr.bf16.mxu0 %v2207
    %3951 = vmatpush1.bf16.msra.mxu0 %v2206
    %3952 = vmatprep.subr.bf16.mxu0 %v2215
    %3953 = vmatpush1.bf16.msra.mxu0 %v2214
    %3954 = vmatprep.subr.bf16.mxu0 %v2223
    %3955 = vmatpush1.bf16.msra.mxu0 %v2222
    %3956 = vmatprep.subr.bf16.mxu0 %v2231
    %3957 = vmatpush1.bf16.msra.mxu0 %v2230
    %3958 = vmatprep.subr.bf16.mxu0 %v2239
    %3959 = vmatpush1.bf16.msra.mxu0 %v2238
    %3960 = vmatprep.mubr.bf16.mxu0 %v3845
    %3961 = vmatmul.mubr.bf16.gmra.mrb[0].mxu0 %v3844
    %v3962 = vpop.f32.mrb[0].mxu0
    %v3963 = vadd.f32 %v1319, %v3962
    %v3964 = vpop.f32.mrb[0].mxu0
    %v3965 = vadd.f32 %v1323, %v3964
    %v3966 = vpop.f32.mrb[0].mxu0
    %v3967 = vpop.f32.mrb[0].mxu0
    %3968 = vdwg.mxu0
    %3969 = vmatprep.subr.bf16.mxu0 %v2247
    %3970 = vmatpush1.bf16.msra.mxu0 %v2246
    %3971 = vmatprep.subr.bf16.mxu0 %v2255
    %3972 = vmatpush1.bf16.msra.mxu0 %v2254
    %3973 = vmatprep.subr.bf16.mxu0 %v2263
    %3974 = vmatpush1.bf16.msra.mxu0 %v2262
    %3975 = vmatprep.subr.bf16.mxu0 %v2271
    %3976 = vmatpush1.bf16.msra.mxu0 %v2270
    %3977 = vmatprep.subr.bf16.mxu0 %v2279
    %3978 = vmatpush1.bf16.msra.mxu0 %v2278
    %3979 = vmatprep.subr.bf16.mxu0 %v2287
    %3980 = vmatpush1.bf16.msra.mxu0 %v2286
    %3981 = vmatprep.subr.bf16.mxu0 %v2295
    %3982 = vmatpush1.bf16.msra.mxu0 %v2294
    %3983 = vmatprep.subr.bf16.mxu0 %v2303
    %3984 = vmatpush1.bf16.msra.mxu0 %v2302
    %3985 = vmatprep.subr.bf16.mxu0 %v2311
    %3986 = vmatpush1.bf16.msra.mxu0 %v2310
    %3987 = vmatprep.subr.bf16.mxu0 %v2319
    %3988 = vmatpush1.bf16.msra.mxu0 %v2318
    %3989 = vmatprep.subr.bf16.mxu0 %v2327
    %3990 = vmatpush1.bf16.msra.mxu0 %v2326
    %3991 = vmatprep.subr.bf16.mxu0 %v2335
    %3992 = vmatpush1.bf16.msra.mxu0 %v2334
    %3993 = vmatprep.subr.bf16.mxu0 %v2343
    %3994 = vmatpush1.bf16.msra.mxu0 %v2342
    %3995 = vmatprep.subr.bf16.mxu0 %v2351
    %3996 = vmatpush1.bf16.msra.mxu0 %v2350
    %3997 = vmatprep.subr.bf16.mxu0 %v2359
    %3998 = vmatpush1.bf16.msra.mxu0 %v2358
    %3999 = vmatprep.subr.bf16.mxu0 %v2367
    %4000 = vmatpush1.bf16.msra.mxu0 %v2366
    %4001 = vmatprep.mubr.bf16.mxu0 %v3614
    %4002 = vmatmul.mubr.bf16.gmra.mrb[0].mxu0 %v3613
    %v4003 = vpop.f32.mrb[0].mxu0
    %v4004 = vadd.f32 %v3963, %v4003
    %v4005 = vpop.f32.mrb[0].mxu0
    %v4006 = vadd.f32 %v3965, %v4005
    %v4007 = vpop.f32.mrb[0].mxu0
    %v4008 = vpop.f32.mrb[0].mxu0
    %4009 = vdwg.mxu0
    %4010 = vmatprep.subr.bf16.mxu0 %v2121
    %4011 = vmatpush1.bf16.msra.mxu0 %v2120
    %4012 = vmatprep.subr.bf16.mxu0 %v2129
    %4013 = vmatpush1.bf16.msra.mxu0 %v2128
    %4014 = vmatprep.subr.bf16.mxu0 %v2137
    %4015 = vmatpush1.bf16.msra.mxu0 %v2136
    %4016 = vmatprep.subr.bf16.mxu0 %v2145
    %4017 = vmatpush1.bf16.msra.mxu0 %v2144
    %4018 = vmatprep.subr.bf16.mxu0 %v2153
    %4019 = vmatpush1.bf16.msra.mxu0 %v2152
    %4020 = vmatprep.subr.bf16.mxu0 %v2161
    %4021 = vmatpush1.bf16.msra.mxu0 %v2160
    %4022 = vmatprep.subr.bf16.mxu0 %v2169
    %4023 = vmatpush1.bf16.msra.mxu0 %v2168
    %4024 = vmatprep.subr.bf16.mxu0 %v2177
    %4025 = vmatpush1.bf16.msra.mxu0 %v2176
    %4026 = vmatprep.subr.bf16.mxu0 %v2185
    %4027 = vmatpush1.bf16.msra.mxu0 %v2184
    %4028 = vmatprep.subr.bf16.mxu0 %v2193
    %4029 = vmatpush1.bf16.msra.mxu0 %v2192
    %4030 = vmatprep.subr.bf16.mxu0 %v2201
    %4031 = vmatpush1.bf16.msra.mxu0 %v2200
    %4032 = vmatprep.subr.bf16.mxu0 %v2209
    %4033 = vmatpush1.bf16.msra.mxu0 %v2208
    %4034 = vmatprep.subr.bf16.mxu0 %v2217
    %4035 = vmatpush1.bf16.msra.mxu0 %v2216
    %4036 = vmatprep.subr.bf16.mxu0 %v2225
    %4037 = vmatpush1.bf16.msra.mxu0 %v2224
    %4038 = vmatprep.subr.bf16.mxu0 %v2233
    %4039 = vmatpush1.bf16.msra.mxu0 %v2232
    %4040 = vmatprep.subr.bf16.mxu0 %v2241
    %4041 = vmatpush1.bf16.msra.mxu0 %v2240
    %4042 = vmatprep.mubr.bf16.mxu0 %v3845
    %4043 = vmatmul.mubr.bf16.gmra.mrb[0].mxu0 %v3844
    %v4044 = vpop.f32.mrb[0].mxu0
    %v4045 = vadd.f32 %v1327, %v4044
    %v4046 = vpop.f32.mrb[0].mxu0
    %v4047 = vadd.f32 %v1331, %v4046
    %v4048 = vpop.f32.mrb[0].mxu0
    %v4049 = vpop.f32.mrb[0].mxu0
    %4050 = vdwg.mxu0
    %4051 = vmatprep.subr.bf16.mxu0 %v2249
    %4052 = vmatpush1.bf16.msra.mxu0 %v2248
    %4053 = vmatprep.subr.bf16.mxu0 %v2257
    %4054 = vmatpush1.bf16.msra.mxu0 %v2256
    %4055 = vmatprep.subr.bf16.mxu0 %v2265
    %4056 = vmatpush1.bf16.msra.mxu0 %v2264
    %4057 = vmatprep.subr.bf16.mxu0 %v2273
    %4058 = vmatpush1.bf16.msra.mxu0 %v2272
    %4059 = vmatprep.subr.bf16.mxu0 %v2281
    %4060 = vmatpush1.bf16.msra.mxu0 %v2280
    %4061 = vmatprep.subr.bf16.mxu0 %v2289
    %4062 = vmatpush1.bf16.msra.mxu0 %v2288
    %4063 = vmatprep.subr.bf16.mxu0 %v2297
    %4064 = vmatpush1.bf16.msra.mxu0 %v2296
    %4065 = vmatprep.subr.bf16.mxu0 %v2305
    %4066 = vmatpush1.bf16.msra.mxu0 %v2304
    %4067 = vmatprep.subr.bf16.mxu0 %v2313
    %4068 = vmatpush1.bf16.msra.mxu0 %v2312
    %4069 = vmatprep.subr.bf16.mxu0 %v2321
    %4070 = vmatpush1.bf16.msra.mxu0 %v2320
    %4071 = vmatprep.subr.bf16.mxu0 %v2329
    %4072 = vmatpush1.bf16.msra.mxu0 %v2328
    %4073 = vmatprep.subr.bf16.mxu0 %v2337
    %4074 = vmatpush1.bf16.msra.mxu0 %v2336
    %4075 = vmatprep.subr.bf16.mxu0 %v2345
    %4076 = vmatpush1.bf16.msra.mxu0 %v2344
    %4077 = vmatprep.subr.bf16.mxu0 %v2353
    %4078 = vmatpush1.bf16.msra.mxu0 %v2352
    %4079 = vmatprep.subr.bf16.mxu0 %v2361
    %4080 = vmatpush1.bf16.msra.mxu0 %v2360
    %4081 = vmatprep.subr.bf16.mxu0 %v2369
    %4082 = vmatpush1.bf16.msra.mxu0 %v2368
    %4083 = vmatprep.mubr.bf16.mxu0 %v3614
    %4084 = vmatmul.mubr.bf16.gmra.mrb[0].mxu0 %v3613
    %v4085 = vpop.f32.mrb[0].mxu0
    %v4086 = vadd.f32 %v4045, %v4085
    %v4087 = vpop.f32.mrb[0].mxu0
    %v4088 = vadd.f32 %v4047, %v4087
    %v4089 = vpop.f32.mrb[0].mxu0
    %v4090 = vpop.f32.mrb[0].mxu0
    %4091 = vdwg.mxu0
    %4092 = vmatprep.subr.bf16.mxu0 %v2123
    %4093 = vmatpush1.bf16.msra.mxu0 %v2122
    %4094 = vmatprep.subr.bf16.mxu0 %v2131
    %4095 = vmatpush1.bf16.msra.mxu0 %v2130
    %4096 = vmatprep.subr.bf16.mxu0 %v2139
    %4097 = vmatpush1.bf16.msra.mxu0 %v2138
    %4098 = vmatprep.subr.bf16.mxu0 %v2147
    %4099 = vmatpush1.bf16.msra.mxu0 %v2146
    %4100 = vmatprep.subr.bf16.mxu0 %v2155
    %4101 = vmatpush1.bf16.msra.mxu0 %v2154
    %4102 = vmatprep.subr.bf16.mxu0 %v2163
    %4103 = vmatpush1.bf16.msra.mxu0 %v2162
    %4104 = vmatprep.subr.bf16.mxu0 %v2171
    %4105 = vmatpush1.bf16.msra.mxu0 %v2170
    %4106 = vmatprep.subr.bf16.mxu0 %v2179
    %4107 = vmatpush1.bf16.msra.mxu0 %v2178
    %4108 = vmatprep.subr.bf16.mxu0 %v2187
    %4109 = vmatpush1.bf16.msra.mxu0 %v2186
    %4110 = vmatprep.subr.bf16.mxu0 %v2195
    %4111 = vmatpush1.bf16.msra.mxu0 %v2194
    %4112 = vmatprep.subr.bf16.mxu0 %v2203
    %4113 = vmatpush1.bf16.msra.mxu0 %v2202
    %4114 = vmatprep.subr.bf16.mxu0 %v2211
    %4115 = vmatpush1.bf16.msra.mxu0 %v2210
    %4116 = vmatprep.subr.bf16.mxu0 %v2219
    %4117 = vmatpush1.bf16.msra.mxu0 %v2218
    %4118 = vmatprep.subr.bf16.mxu0 %v2227
    %4119 = vmatpush1.bf16.msra.mxu0 %v2226
    %4120 = vmatprep.subr.bf16.mxu0 %v2235
    %4121 = vmatpush1.bf16.msra.mxu0 %v2234
    %4122 = vmatprep.subr.bf16.mxu0 %v2243
    %4123 = vmatpush1.bf16.msra.mxu0 %v2242
    %4124 = vmatprep.mubr.bf16.mxu0 %v3845
    %4125 = vmatmul.mubr.bf16.gmra.mrb[0].mxu0 %v3844
    %v4126 = vpop.f32.mrb[0].mxu0
    %v4127 = vadd.f32 %v1335, %v4126
    %v4128 = vpop.f32.mrb[0].mxu0
    %v4129 = vadd.f32 %v1339, %v4128
    %v4130 = vpop.f32.mrb[0].mxu0
    %v4131 = vpop.f32.mrb[0].mxu0
    %4132 = vdwg.mxu0
    %4133 = vmatprep.subr.bf16.mxu0 %v2251
    %4134 = vmatpush1.bf16.msra.mxu0 %v2250
    %4135 = vmatprep.subr.bf16.mxu0 %v2259
    %4136 = vmatpush1.bf16.msra.mxu0 %v2258
    %4137 = vmatprep.subr.bf16.mxu0 %v2267
    %4138 = vmatpush1.bf16.msra.mxu0 %v2266
    %4139 = vmatprep.subr.bf16.mxu0 %v2275
    %4140 = vmatpush1.bf16.msra.mxu0 %v2274
    %4141 = vmatprep.subr.bf16.mxu0 %v2283
    %4142 = vmatpush1.bf16.msra.mxu0 %v2282
    %4143 = vmatprep.subr.bf16.mxu0 %v2291
    %4144 = vmatpush1.bf16.msra.mxu0 %v2290
    %4145 = vmatprep.subr.bf16.mxu0 %v2299
    %4146 = vmatpush1.bf16.msra.mxu0 %v2298
    %4147 = vmatprep.subr.bf16.mxu0 %v2307
    %4148 = vmatpush1.bf16.msra.mxu0 %v2306
    %4149 = vmatprep.subr.bf16.mxu0 %v2315
    %4150 = vmatpush1.bf16.msra.mxu0 %v2314
    %4151 = vmatprep.subr.bf16.mxu0 %v2323
    %4152 = vmatpush1.bf16.msra.mxu0 %v2322
    %4153 = vmatprep.subr.bf16.mxu0 %v2331
    %4154 = vmatpush1.bf16.msra.mxu0 %v2330
    %4155 = vmatprep.subr.bf16.mxu0 %v2339
    %4156 = vmatpush1.bf16.msra.mxu0 %v2338
    %4157 = vmatprep.subr.bf16.mxu0 %v2347
    %4158 = vmatpush1.bf16.msra.mxu0 %v2346
    %4159 = vmatprep.subr.bf16.mxu0 %v2355
    %4160 = vmatpush1.bf16.msra.mxu0 %v2354
    %4161 = vmatprep.subr.bf16.mxu0 %v2363
    %4162 = vmatpush1.bf16.msra.mxu0 %v2362
    %4163 = vmatprep.subr.bf16.mxu0 %v2371
    %4164 = vmatpush1.bf16.msra.mxu0 %v2370
    %4165 = vmatprep.mubr.bf16.mxu0 %v3614
    %4166 = vmatmul.mubr.bf16.gmra.mrb[0].mxu0 %v3613
    %v4167 = vpop.f32.mrb[0].mxu0
    %v4168 = vadd.f32 %v4127, %v4167
    %v4169 = vpop.f32.mrb[0].mxu0
    %v4170 = vadd.f32 %v4129, %v4169
    %v4171 = vpop.f32.mrb[0].mxu0
    %v4172 = vpop.f32.mrb[0].mxu0
    %4173 = vdwg.mxu0
    %v4174 = vxor.u32 %v3922, 2147483648
    %v4175 = vxor.u32 %v3924, 2147483648
    %v4176 = vxor.u32 %v4004, 2147483648
    %v4177 = vxor.u32 %v4006, 2147483648
    %v4178 = vxor.u32 %v4086, 2147483648
    %v4179 = vxor.u32 %v4088, 2147483648
    %v4180 = vmul.f32 %v4174, 1.442695
    %v4181 = vpow.pop %v4180
    %v4182 = vmul.f32 %v4175, 1.442695
    %v4183 = vpow.pop %v4182
    %v4184 = vmul.f32 %v4176, 1.442695
    %v4185 = vpow.pop %v4184
    %v4186 = vmul.f32 %v4177, 1.442695
    %v4187 = vpow.pop %v4186
    %v4188 = vmul.f32 %v4178, 1.442695
    %v4189 = vpow.pop %v4188
    %v4190 = vmul.f32 %v4179, 1.442695
    %v4191 = vpow.pop %v4190
    %v4192 = vadd.f32 %v4181, 1.0
    %v4193 = vadd.f32 %v4183, 1.0
    %v4194 = vadd.f32 %v4185, 1.0
    %v4195 = vadd.f32 %v4187, 1.0
    %v4196 = vadd.f32 %v4189, 1.0
    %v4197 = vadd.f32 %v4191, 1.0
    %v4198 = vrcp.pop %v4192
    %v4199 = vmul.f32 1.0, %v4198
    %v4200 = vrcp.pop %v4193
    %v4201 = vmul.f32 1.0, %v4200
    %v4202 = vrcp.pop %v4194
    %v4203 = vmul.f32 1.0, %v4202
    %v4204 = vrcp.pop %v4195
    %v4205 = vmul.f32 1.0, %v4204
    %v4206 = vrcp.pop %v4196
    %v4207 = vmul.f32 1.0, %v4206
    %v4208 = vrcp.pop %v4197
    %v4209 = vmul.f32 1.0, %v4208
    %v4210 = vtanh.pop %v4168
    %v4211 = vtanh.pop %v4170
    %v4212 = vmul.f32 %v4203, %v3607
    %v4213 = vmul.f32 %v4205, %v3608
    %v4214 = vmul.f32 %v4199, %v4210
    %v4215 = vmul.f32 %v4201, %v4211
    %v4216 = vadd.f32 %v4212, %v4214
    %v4217 = vadd.f32 %v4213, %v4215
    %v4218 = vtanh.pop %v4216
    %v4219 = vtanh.pop %v4217
    %v4220 = vmul.f32 %v4207, %v4218
    %v4221 = vmul.f32 %v4209, %v4219
    %v4222 = vpack.c.bf16 %v4220, %v4220
    %v4223 = vpack.c.bf16 %v4221, %v4221
    %s4224 = scalar_lea.vmem %s0, 192
    %v4225 = vld [vmem:[%s4224] sm:$0xff]
    %v4226 = vld [vmem:[%s4224 + $0x8] sm:$0xff]
    %v4227 = vld [vmem:[%s4224 + $0x10] sm:$0xff]
    %v4228 = vld [vmem:[%s4224 + $0x18] sm:$0xff]
    %v4229 = vld [vmem:[%s4224 + $0x20] sm:$0xff]
    %v4230 = vld [vmem:[%s4224 + $0x28] sm:$0xff]
    %v4231 = vld [vmem:[%s4224 + $0x30] sm:$0xff]
    %v4232 = vld [vmem:[%s4224 + $0x38] sm:$0xff]
    %4233 = vmatprep.subr.bf16.mxu0 %v830
    %4234 = vmatpush1.bf16.msra.mxu0 %v829
    %4235 = vmatprep.subr.bf16.mxu0 %v838
    %4236 = vmatpush1.bf16.msra.mxu0 %v837
    %4237 = vmatprep.subr.bf16.mxu0 %v846
    %4238 = vmatpush1.bf16.msra.mxu0 %v845
    %4239 = vmatprep.subr.bf16.mxu0 %v854
    %4240 = vmatpush1.bf16.msra.mxu0 %v853
    %4241 = vmatprep.subr.bf16.mxu0 %v862
    %4242 = vmatpush1.bf16.msra.mxu0 %v861
    %4243 = vmatprep.subr.bf16.mxu0 %v870
    %4244 = vmatpush1.bf16.msra.mxu0 %v869
    %4245 = vmatprep.subr.bf16.mxu0 %v878
    %4246 = vmatpush1.bf16.msra.mxu0 %v877
    %4247 = vmatprep.subr.bf16.mxu0 %v886
    %4248 = vmatpush1.bf16.msra.mxu0 %v885
    %4249 = vmatprep.subr.bf16.mxu0 %v894
    %4250 = vmatpush1.bf16.msra.mxu0 %v893
    %4251 = vmatprep.subr.bf16.mxu0 %v902
    %4252 = vmatpush1.bf16.msra.mxu0 %v901
    %4253 = vmatprep.subr.bf16.mxu0 %v910
    %4254 = vmatpush1.bf16.msra.mxu0 %v909
    %4255 = vmatprep.subr.bf16.mxu0 %v918
    %4256 = vmatpush1.bf16.msra.mxu0 %v917
    %4257 = vmatprep.subr.bf16.mxu0 %v926
    %4258 = vmatpush1.bf16.msra.mxu0 %v925
    %4259 = vmatprep.subr.bf16.mxu0 %v934
    %4260 = vmatpush1.bf16.msra.mxu0 %v933
    %4261 = vmatprep.subr.bf16.mxu0 %v942
    %4262 = vmatpush1.bf16.msra.mxu0 %v941
    %4263 = vmatprep.subr.bf16.mxu0 %v950
    %4264 = vmatpush1.bf16.msra.mxu0 %v949
    %4265 = vmatprep.mubr.bf16.mxu0 %v3845
    %4266 = vmatmul.mubr.bf16.gmra.mrb[0].mxu0 %v3844
    %v4267 = vpop.f32.mrb[0].mxu0
    %v4268 = vadd.f32 0.0, %v4267
    %v4269 = vpop.f32.mrb[0].mxu0
    %v4270 = vadd.f32 0.0, %v4269
    %v4271 = vpop.f32.mrb[0].mxu0
    %v4272 = vpop.f32.mrb[0].mxu0
    %4273 = vdwg.mxu0
    %4274 = vmatprep.subr.bf16.mxu0 %v832
    %4275 = vmatpush1.bf16.msra.mxu0 %v831
    %4276 = vmatprep.subr.bf16.mxu0 %v840
    %4277 = vmatpush1.bf16.msra.mxu0 %v839
    %4278 = vmatprep.subr.bf16.mxu0 %v848
    %4279 = vmatpush1.bf16.msra.mxu0 %v847
    %4280 = vmatprep.subr.bf16.mxu0 %v856
    %4281 = vmatpush1.bf16.msra.mxu0 %v855
    %4282 = vmatprep.subr.bf16.mxu0 %v864
    %4283 = vmatpush1.bf16.msra.mxu0 %v863
    %4284 = vmatprep.subr.bf16.mxu0 %v872
    %4285 = vmatpush1.bf16.msra.mxu0 %v871
    %4286 = vmatprep.subr.bf16.mxu0 %v880
    %4287 = vmatpush1.bf16.msra.mxu0 %v879
    %4288 = vmatprep.subr.bf16.mxu0 %v888
    %4289 = vmatpush1.bf16.msra.mxu0 %v887
    %4290 = vmatprep.subr.bf16.mxu0 %v896
    %4291 = vmatpush1.bf16.msra.mxu0 %v895
    %4292 = vmatprep.subr.bf16.mxu0 %v904
    %4293 = vmatpush1.bf16.msra.mxu0 %v903
    %4294 = vmatprep.subr.bf16.mxu0 %v912
    %4295 = vmatpush1.bf16.msra.mxu0 %v911
    %4296 = vmatprep.subr.bf16.mxu0 %v920
    %4297 = vmatpush1.bf16.msra.mxu0 %v919
    %4298 = vmatprep.subr.bf16.mxu0 %v928
    %4299 = vmatpush1.bf16.msra.mxu0 %v927
    %4300 = vmatprep.subr.bf16.mxu0 %v936
    %4301 = vmatpush1.bf16.msra.mxu0 %v935
    %4302 = vmatprep.subr.bf16.mxu0 %v944
    %4303 = vmatpush1.bf16.msra.mxu0 %v943
    %4304 = vmatprep.subr.bf16.mxu0 %v952
    %4305 = vmatpush1.bf16.msra.mxu0 %v951
    %4306 = vmatprep.mubr.bf16.mxu0 %v3845
    %4307 = vmatmul.mubr.bf16.gmra.mrb[0].mxu0 %v3844
    %v4308 = vpop.f32.mrb[0].mxu0
    %v4309 = vadd.f32 0.0, %v4308
    %v4310 = vpop.f32.mrb[0].mxu0
    %v4311 = vadd.f32 0.0, %v4310
    %v4312 = vpop.f32.mrb[0].mxu0
    %v4313 = vpop.f32.mrb[0].mxu0
    %4314 = vdwg.mxu0
    %4315 = vmatprep.subr.bf16.mxu0 %v834
    %4316 = vmatpush1.bf16.msra.mxu0 %v833
    %4317 = vmatprep.subr.bf16.mxu0 %v842
    %4318 = vmatpush1.bf16.msra.mxu0 %v841
    %4319 = vmatprep.subr.bf16.mxu0 %v850
    %4320 = vmatpush1.bf16.msra.mxu0 %v849
    %4321 = vmatprep.subr.bf16.mxu0 %v858
    %4322 = vmatpush1.bf16.msra.mxu0 %v857
    %4323 = vmatprep.subr.bf16.mxu0 %v866
    %4324 = vmatpush1.bf16.msra.mxu0 %v865
    %4325 = vmatprep.subr.bf16.mxu0 %v874
    %4326 = vmatpush1.bf16.msra.mxu0 %v873
    %4327 = vmatprep.subr.bf16.mxu0 %v882
    %4328 = vmatpush1.bf16.msra.mxu0 %v881
    %4329 = vmatprep.subr.bf16.mxu0 %v890
    %4330 = vmatpush1.bf16.msra.mxu0 %v889
    %4331 = vmatprep.subr.bf16.mxu0 %v898
    %4332 = vmatpush1.bf16.msra.mxu0 %v897
    %4333 = vmatprep.subr.bf16.mxu0 %v906
    %4334 = vmatpush1.bf16.msra.mxu0 %v905
    %4335 = vmatprep.subr.bf16.mxu0 %v914
    %4336 = vmatpush1.bf16.msra.mxu0 %v913
    %4337 = vmatprep.subr.bf16.mxu0 %v922
    %4338 = vmatpush1.bf16.msra.mxu0 %v921
    %4339 = vmatprep.subr.bf16.mxu0 %v930
    %4340 = vmatpush1.bf16.msra.mxu0 %v929
    %4341 = vmatprep.subr.bf16.mxu0 %v938
    %4342 = vmatpush1.bf16.msra.mxu0 %v937
    %4343 = vmatprep.subr.bf16.mxu0 %v946
    %4344 = vmatpush1.bf16.msra.mxu0 %v945
    %4345 = vmatprep.subr.bf16.mxu0 %v954
    %4346 = vmatpush1.bf16.msra.mxu0 %v953
    %4347 = vmatprep.mubr.bf16.mxu0 %v3845
    %4348 = vmatmul.mubr.bf16.gmra.mrb[0].mxu0 %v3844
    %v4349 = vpop.f32.mrb[0].mxu0
    %v4350 = vadd.f32 0.0, %v4349
    %v4351 = vpop.f32.mrb[0].mxu0
    %v4352 = vadd.f32 0.0, %v4351
    %v4353 = vpop.f32.mrb[0].mxu0
    %v4354 = vpop.f32.mrb[0].mxu0
    %4355 = vdwg.mxu0
    %4356 = vmatprep.subr.bf16.mxu0 %v836
    %4357 = vmatpush1.bf16.msra.mxu0 %v835
    %4358 = vmatprep.subr.bf16.mxu0 %v844
    %4359 = vmatpush1.bf16.msra.mxu0 %v843
    %4360 = vmatprep.subr.bf16.mxu0 %v852
    %4361 = vmatpush1.bf16.msra.mxu0 %v851
    %4362 = vmatprep.subr.bf16.mxu0 %v860
    %4363 = vmatpush1.bf16.msra.mxu0 %v859
    %4364 = vmatprep.subr.bf16.mxu0 %v868
    %4365 = vmatpush1.bf16.msra.mxu0 %v867
    %4366 = vmatprep.subr.bf16.mxu0 %v876
    %4367 = vmatpush1.bf16.msra.mxu0 %v875
    %4368 = vmatprep.subr.bf16.mxu0 %v884
    %4369 = vmatpush1.bf16.msra.mxu0 %v883
    %4370 = vmatprep.subr.bf16.mxu0 %v892
    %4371 = vmatpush1.bf16.msra.mxu0 %v891
    %4372 = vmatprep.subr.bf16.mxu0 %v900
    %4373 = vmatpush1.bf16.msra.mxu0 %v899
    %4374 = vmatprep.subr.bf16.mxu0 %v908
    %4375 = vmatpush1.bf16.msra.mxu0 %v907
    %4376 = vmatprep.subr.bf16.mxu0 %v916
    %4377 = vmatpush1.bf16.msra.mxu0 %v915
    %4378 = vmatprep.subr.bf16.mxu0 %v924
    %4379 = vmatpush1.bf16.msra.mxu0 %v923
    %4380 = vmatprep.subr.bf16.mxu0 %v932
    %4381 = vmatpush1.bf16.msra.mxu0 %v931
    %4382 = vmatprep.subr.bf16.mxu0 %v940
    %4383 = vmatpush1.bf16.msra.mxu0 %v939
    %4384 = vmatprep.subr.bf16.mxu0 %v948
    %4385 = vmatpush1.bf16.msra.mxu0 %v947
    %4386 = vmatprep.subr.bf16.mxu0 %v956
    %4387 = vmatpush1.bf16.msra.mxu0 %v955
    %4388 = vmatprep.mubr.bf16.mxu0 %v3845
    %4389 = vmatmul.mubr.bf16.gmra.mrb[0].mxu0 %v3844
    %v4390 = vpop.f32.mrb[0].mxu0
    %v4391 = vadd.f32 0.0, %v4390
    %v4392 = vpop.f32.mrb[0].mxu0
    %v4393 = vadd.f32 0.0, %v4392
    %v4394 = vpop.f32.mrb[0].mxu0
    %v4395 = vpop.f32.mrb[0].mxu0
    %4396 = vdwg.mxu0
    %v4397 = vadd.f32 %v4225, %v4268
    %v4398 = vadd.f32 %v4226, %v4270
    %v4399 = vadd.f32 %v4227, %v4309
    %v4400 = vadd.f32 %v4228, %v4311
    %v4401 = vadd.f32 %v4229, %v4350
    %v4402 = vadd.f32 %v4230, %v4352
    %v4403 = vadd.f32 %v4231, %v4391
    %v4404 = vadd.f32 %v4232, %v4393
    %v4405 = vxor.u32 %v4397, 2147483648
    %v4406 = vxor.u32 %v4398, 2147483648
    %v4407 = vxor.u32 %v4399, 2147483648
    %v4408 = vxor.u32 %v4400, 2147483648
    %v4409 = vxor.u32 %v4401, 2147483648
    %v4410 = vxor.u32 %v4402, 2147483648
    %v4411 = vmul.f32 %v4405, 1.442695
    %v4412 = vpow.pop %v4411
    %v4413 = vmul.f32 %v4406, 1.442695
    %v4414 = vpow.pop %v4413
    %v4415 = vmul.f32 %v4407, 1.442695
    %v4416 = vpow.pop %v4415
    %v4417 = vmul.f32 %v4408, 1.442695
    %v4418 = vpow.pop %v4417
    %v4419 = vmul.f32 %v4409, 1.442695
    %v4420 = vpow.pop %v4419
    %v4421 = vmul.f32 %v4410, 1.442695
    %v4422 = vpow.pop %v4421
    %v4423 = vadd.f32 %v4412, 1.0
    %v4424 = vadd.f32 %v4414, 1.0
    %v4425 = vadd.f32 %v4416, 1.0
    %v4426 = vadd.f32 %v4418, 1.0
    %v4427 = vadd.f32 %v4420, 1.0
    %v4428 = vadd.f32 %v4422, 1.0
    %v4429 = vrcp.pop %v4423
    %v4430 = vmul.f32 1.0, %v4429
    %v4431 = vrcp.pop %v4424
    %v4432 = vmul.f32 1.0, %v4431
    %v4433 = vrcp.pop %v4425
    %v4434 = vmul.f32 1.0, %v4433
    %v4435 = vrcp.pop %v4426
    %v4436 = vmul.f32 1.0, %v4435
    %v4437 = vrcp.pop %v4427
    %v4438 = vmul.f32 1.0, %v4437
    %v4439 = vrcp.pop %v4428
    %v4440 = vmul.f32 1.0, %v4439
    %v4441 = vtanh.pop %v4403
    %v4442 = vtanh.pop %v4404
    %v4443 = vmul.f32 %v4434, %v3838
    %v4444 = vmul.f32 %v4436, %v3839
    %v4445 = vmul.f32 %v4430, %v4441
    %v4446 = vmul.f32 %v4432, %v4442
    %v4447 = vadd.f32 %v4443, %v4445
    %v4448 = vadd.f32 %v4444, %v4446
    %v4449 = vtanh.pop %v4447
    %v4450 = vtanh.pop %v4448
    %v4451 = vmul.f32 %v4438, %v4449
    %v4452 = vmul.f32 %v4440, %v4450
    %v4453 = vpack.c.bf16 %v4451, %v4451
    %v4454 = vpack.c.bf16 %v4452, %v4452
    %4455 = vmatprep.subr.bf16.mxu0 %v2117
    %4456 = vmatpush1.bf16.msra.mxu0 %v2116
    %4457 = vmatprep.subr.bf16.mxu0 %v2125
    %4458 = vmatpush1.bf16.msra.mxu0 %v2124
    %4459 = vmatprep.subr.bf16.mxu0 %v2133
    %4460 = vmatpush1.bf16.msra.mxu0 %v2132
    %4461 = vmatprep.subr.bf16.mxu0 %v2141
    %4462 = vmatpush1.bf16.msra.mxu0 %v2140
    %4463 = vmatprep.subr.bf16.mxu0 %v2149
    %4464 = vmatpush1.bf16.msra.mxu0 %v2148
    %4465 = vmatprep.subr.bf16.mxu0 %v2157
    %4466 = vmatpush1.bf16.msra.mxu0 %v2156
    %4467 = vmatprep.subr.bf16.mxu0 %v2165
    %4468 = vmatpush1.bf16.msra.mxu0 %v2164
    %4469 = vmatprep.subr.bf16.mxu0 %v2173
    %4470 = vmatpush1.bf16.msra.mxu0 %v2172
    %4471 = vmatprep.subr.bf16.mxu0 %v2181
    %4472 = vmatpush1.bf16.msra.mxu0 %v2180
    %4473 = vmatprep.subr.bf16.mxu0 %v2189
    %4474 = vmatpush1.bf16.msra.mxu0 %v2188
    %4475 = vmatprep.subr.bf16.mxu0 %v2197
    %4476 = vmatpush1.bf16.msra.mxu0 %v2196
    %4477 = vmatprep.subr.bf16.mxu0 %v2205
    %4478 = vmatpush1.bf16.msra.mxu0 %v2204
    %4479 = vmatprep.subr.bf16.mxu0 %v2213
    %4480 = vmatpush1.bf16.msra.mxu0 %v2212
    %4481 = vmatprep.subr.bf16.mxu0 %v2221
    %4482 = vmatpush1.bf16.msra.mxu0 %v2220
    %4483 = vmatprep.subr.bf16.mxu0 %v2229
    %4484 = vmatpush1.bf16.msra.mxu0 %v2228
    %4485 = vmatprep.subr.bf16.mxu0 %v2237
    %4486 = vmatpush1.bf16.msra.mxu0 %v2236
    %4487 = vmatprep.mubr.bf16.mxu0 %v4454
    %4488 = vmatmul.mubr.bf16.gmra.mrb[0].mxu0 %v4453
    %v4489 = vpop.f32.mrb[0].mxu0
    %v4490 = vadd.f32 %v1311, %v4489
    %v4491 = vpop.f32.mrb[0].mxu0
    %v4492 = vadd.f32 %v1315, %v4491
    %v4493 = vpop.f32.mrb[0].mxu0
    %v4494 = vpop.f32.mrb[0].mxu0
    %4495 = vdwg.mxu0
    %4496 = vmatprep.subr.bf16.mxu0 %v2245
    %4497 = vmatpush1.bf16.msra.mxu0 %v2244
    %4498 = vmatprep.subr.bf16.mxu0 %v2253
    %4499 = vmatpush1.bf16.msra.mxu0 %v2252
    %4500 = vmatprep.subr.bf16.mxu0 %v2261
    %4501 = vmatpush1.bf16.msra.mxu0 %v2260
    %4502 = vmatprep.subr.bf16.mxu0 %v2269
    %4503 = vmatpush1.bf16.msra.mxu0 %v2268
    %4504 = vmatprep.subr.bf16.mxu0 %v2277
    %4505 = vmatpush1.bf16.msra.mxu0 %v2276
    %4506 = vmatprep.subr.bf16.mxu0 %v2285
    %4507 = vmatpush1.bf16.msra.mxu0 %v2284
    %4508 = vmatprep.subr.bf16.mxu0 %v2293
    %4509 = vmatpush1.bf16.msra.mxu0 %v2292
    %4510 = vmatprep.subr.bf16.mxu0 %v2301
    %4511 = vmatpush1.bf16.msra.mxu0 %v2300
    %4512 = vmatprep.subr.bf16.mxu0 %v2309
    %4513 = vmatpush1.bf16.msra.mxu0 %v2308
    %4514 = vmatprep.subr.bf16.mxu0 %v2317
    %4515 = vmatpush1.bf16.msra.mxu0 %v2316
    %4516 = vmatprep.subr.bf16.mxu0 %v2325
    %4517 = vmatpush1.bf16.msra.mxu0 %v2324
    %4518 = vmatprep.subr.bf16.mxu0 %v2333
    %4519 = vmatpush1.bf16.msra.mxu0 %v2332
    %4520 = vmatprep.subr.bf16.mxu0 %v2341
    %4521 = vmatpush1.bf16.msra.mxu0 %v2340
    %4522 = vmatprep.subr.bf16.mxu0 %v2349
    %4523 = vmatpush1.bf16.msra.mxu0 %v2348
    %4524 = vmatprep.subr.bf16.mxu0 %v2357
    %4525 = vmatpush1.bf16.msra.mxu0 %v2356
    %4526 = vmatprep.subr.bf16.mxu0 %v2365
    %4527 = vmatpush1.bf16.msra.mxu0 %v2364
    %4528 = vmatprep.mubr.bf16.mxu0 %v4223
    %4529 = vmatmul.mubr.bf16.gmra.mrb[0].mxu0 %v4222
    %v4530 = vpop.f32.mrb[0].mxu0
    %v4531 = vadd.f32 %v4490, %v4530
    %v4532 = vpop.f32.mrb[0].mxu0
    %v4533 = vadd.f32 %v4492, %v4532
    %v4534 = vpop.f32.mrb[0].mxu0
    %v4535 = vpop.f32.mrb[0].mxu0
    %4536 = vdwg.mxu0
    %4537 = vmatprep.subr.bf16.mxu0 %v2119
    %4538 = vmatpush1.bf16.msra.mxu0 %v2118
    %4539 = vmatprep.subr.bf16.mxu0 %v2127
    %4540 = vmatpush1.bf16.msra.mxu0 %v2126
    %4541 = vmatprep.subr.bf16.mxu0 %v2135
    %4542 = vmatpush1.bf16.msra.mxu0 %v2134
    %4543 = vmatprep.subr.bf16.mxu0 %v2143
    %4544 = vmatpush1.bf16.msra.mxu0 %v2142
    %4545 = vmatprep.subr.bf16.mxu0 %v2151
    %4546 = vmatpush1.bf16.msra.mxu0 %v2150
    %4547 = vmatprep.subr.bf16.mxu0 %v2159
    %4548 = vmatpush1.bf16.msra.mxu0 %v2158
    %4549 = vmatprep.subr.bf16.mxu0 %v2167
    %4550 = vmatpush1.bf16.msra.mxu0 %v2166
    %4551 = vmatprep.subr.bf16.mxu0 %v2175
    %4552 = vmatpush1.bf16.msra.mxu0 %v2174
    %4553 = vmatprep.subr.bf16.mxu0 %v2183
    %4554 = vmatpush1.bf16.msra.mxu0 %v2182
    %4555 = vmatprep.subr.bf16.mxu0 %v2191
    %4556 = vmatpush1.bf16.msra.mxu0 %v2190
    %4557 = vmatprep.subr.bf16.mxu0 %v2199
    %4558 = vmatpush1.bf16.msra.mxu0 %v2198
    %4559 = vmatprep.subr.bf16.mxu0 %v2207
    %4560 = vmatpush1.bf16.msra.mxu0 %v2206
    %4561 = vmatprep.subr.bf16.mxu0 %v2215
    %4562 = vmatpush1.bf16.msra.mxu0 %v2214
    %4563 = vmatprep.subr.bf16.mxu0 %v2223
    %4564 = vmatpush1.bf16.msra.mxu0 %v2222
    %4565 = vmatprep.subr.bf16.mxu0 %v2231
    %4566 = vmatpush1.bf16.msra.mxu0 %v2230
    %4567 = vmatprep.subr.bf16.mxu0 %v2239
    %4568 = vmatpush1.bf16.msra.mxu0 %v2238
    %4569 = vmatprep.mubr.bf16.mxu0 %v4454
    %4570 = vmatmul.mubr.bf16.gmra.mrb[0].mxu0 %v4453
    %v4571 = vpop.f32.mrb[0].mxu0
    %v4572 = vadd.f32 %v1319, %v4571
    %v4573 = vpop.f32.mrb[0].mxu0
    %v4574 = vadd.f32 %v1323, %v4573
    %v4575 = vpop.f32.mrb[0].mxu0
    %v4576 = vpop.f32.mrb[0].mxu0
    %4577 = vdwg.mxu0
    %4578 = vmatprep.subr.bf16.mxu0 %v2247
    %4579 = vmatpush1.bf16.msra.mxu0 %v2246
    %4580 = vmatprep.subr.bf16.mxu0 %v2255
    %4581 = vmatpush1.bf16.msra.mxu0 %v2254
    %4582 = vmatprep.subr.bf16.mxu0 %v2263
    %4583 = vmatpush1.bf16.msra.mxu0 %v2262
    %4584 = vmatprep.subr.bf16.mxu0 %v2271
    %4585 = vmatpush1.bf16.msra.mxu0 %v2270
    %4586 = vmatprep.subr.bf16.mxu0 %v2279
    %4587 = vmatpush1.bf16.msra.mxu0 %v2278
    %4588 = vmatprep.subr.bf16.mxu0 %v2287
    %4589 = vmatpush1.bf16.msra.mxu0 %v2286
    %4590 = vmatprep.subr.bf16.mxu0 %v2295
    %4591 = vmatpush1.bf16.msra.mxu0 %v2294
    %4592 = vmatprep.subr.bf16.mxu0 %v2303
    %4593 = vmatpush1.bf16.msra.mxu0 %v2302
    %4594 = vmatprep.subr.bf16.mxu0 %v2311
    %4595 = vmatpush1.bf16.msra.mxu0 %v2310
    %4596 = vmatprep.subr.bf16.mxu0 %v2319
    %4597 = vmatpush1.bf16.msra.mxu0 %v2318
    %4598 = vmatprep.subr.bf16.mxu0 %v2327
    %4599 = vmatpush1.bf16.msra.mxu0 %v2326
    %4600 = vmatprep.subr.bf16.mxu0 %v2335
    %4601 = vmatpush1.bf16.msra.mxu0 %v2334
    %4602 = vmatprep.subr.bf16.mxu0 %v2343
    %4603 = vmatpush1.bf16.msra.mxu0 %v2342
    %4604 = vmatprep.subr.bf16.mxu0 %v2351
    %4605 = vmatpush1.bf16.msra.mxu0 %v2350
    %4606 = vmatprep.subr.bf16.mxu0 %v2359
    %4607 = vmatpush1.bf16.msra.mxu0 %v2358
    %4608 = vmatprep.subr.bf16.mxu0 %v2367
    %4609 = vmatpush1.bf16.msra.mxu0 %v2366
    %4610 = vmatprep.mubr.bf16.mxu0 %v4223
    %4611 = vmatmul.mubr.bf16.gmra.mrb[0].mxu0 %v4222
    %v4612 = vpop.f32.mrb[0].mxu0
    %v4613 = vadd.f32 %v4572, %v4612
    %v4614 = vpop.f32.mrb[0].mxu0
    %v4615 = vadd.f32 %v4574, %v4614
    %v4616 = vpop.f32.mrb[0].mxu0
    %v4617 = vpop.f32.mrb[0].mxu0
    %4618 = vdwg.mxu0
    %4619 = vmatprep.subr.bf16.mxu0 %v2121
    %4620 = vmatpush1.bf16.msra.mxu0 %v2120
    %4621 = vmatprep.subr.bf16.mxu0 %v2129
    %4622 = vmatpush1.bf16.msra.mxu0 %v2128
    %4623 = vmatprep.subr.bf16.mxu0 %v2137
    %4624 = vmatpush1.bf16.msra.mxu0 %v2136
    %4625 = vmatprep.subr.bf16.mxu0 %v2145
    %4626 = vmatpush1.bf16.msra.mxu0 %v2144
    %4627 = vmatprep.subr.bf16.mxu0 %v2153
    %4628 = vmatpush1.bf16.msra.mxu0 %v2152
    %4629 = vmatprep.subr.bf16.mxu0 %v2161
    %4630 = vmatpush1.bf16.msra.mxu0 %v2160
    %4631 = vmatprep.subr.bf16.mxu0 %v2169
    %4632 = vmatpush1.bf16.msra.mxu0 %v2168
    %4633 = vmatprep.subr.bf16.mxu0 %v2177
    %4634 = vmatpush1.bf16.msra.mxu0 %v2176
    %4635 = vmatprep.subr.bf16.mxu0 %v2185
    %4636 = vmatpush1.bf16.msra.mxu0 %v2184
    %4637 = vmatprep.subr.bf16.mxu0 %v2193
    %4638 = vmatpush1.bf16.msra.mxu0 %v2192
    %4639 = vmatprep.subr.bf16.mxu0 %v2201
    %4640 = vmatpush1.bf16.msra.mxu0 %v2200
    %4641 = vmatprep.subr.bf16.mxu0 %v2209
    %4642 = vmatpush1.bf16.msra.mxu0 %v2208
    %4643 = vmatprep.subr.bf16.mxu0 %v2217
    %4644 = vmatpush1.bf16.msra.mxu0 %v2216
    %4645 = vmatprep.subr.bf16.mxu0 %v2225
    %4646 = vmatpush1.bf16.msra.mxu0 %v2224
    %4647 = vmatprep.subr.bf16.mxu0 %v2233
    %4648 = vmatpush1.bf16.msra.mxu0 %v2232
    %4649 = vmatprep.subr.bf16.mxu0 %v2241
    %4650 = vmatpush1.bf16.msra.mxu0 %v2240
    %4651 = vmatprep.mubr.bf16.mxu0 %v4454
    %4652 = vmatmul.mubr.bf16.gmra.mrb[0].mxu0 %v4453
    %v4653 = vpop.f32.mrb[0].mxu0
    %v4654 = vadd.f32 %v1327, %v4653
    %v4655 = vpop.f32.mrb[0].mxu0
    %v4656 = vadd.f32 %v1331, %v4655
    %v4657 = vpop.f32.mrb[0].mxu0
    %v4658 = vpop.f32.mrb[0].mxu0
    %4659 = vdwg.mxu0
    %4660 = vmatprep.subr.bf16.mxu0 %v2249
    %4661 = vmatpush1.bf16.msra.mxu0 %v2248
    %4662 = vmatprep.subr.bf16.mxu0 %v2257
    %4663 = vmatpush1.bf16.msra.mxu0 %v2256
    %4664 = vmatprep.subr.bf16.mxu0 %v2265
    %4665 = vmatpush1.bf16.msra.mxu0 %v2264
    %4666 = vmatprep.subr.bf16.mxu0 %v2273
    %4667 = vmatpush1.bf16.msra.mxu0 %v2272
    %4668 = vmatprep.subr.bf16.mxu0 %v2281
    %4669 = vmatpush1.bf16.msra.mxu0 %v2280
    %4670 = vmatprep.subr.bf16.mxu0 %v2289
    %4671 = vmatpush1.bf16.msra.mxu0 %v2288
    %4672 = vmatprep.subr.bf16.mxu0 %v2297
    %4673 = vmatpush1.bf16.msra.mxu0 %v2296
    %4674 = vmatprep.subr.bf16.mxu0 %v2305
    %4675 = vmatpush1.bf16.msra.mxu0 %v2304
    %4676 = vmatprep.subr.bf16.mxu0 %v2313
    %4677 = vmatpush1.bf16.msra.mxu0 %v2312
    %4678 = vmatprep.subr.bf16.mxu0 %v2321
    %4679 = vmatpush1.bf16.msra.mxu0 %v2320
    %4680 = vmatprep.subr.bf16.mxu0 %v2329
    %4681 = vmatpush1.bf16.msra.mxu0 %v2328
    %4682 = vmatprep.subr.bf16.mxu0 %v2337
    %4683 = vmatpush1.bf16.msra.mxu0 %v2336
    %4684 = vmatprep.subr.bf16.mxu0 %v2345
    %4685 = vmatpush1.bf16.msra.mxu0 %v2344
    %4686 = vmatprep.subr.bf16.mxu0 %v2353
    %4687 = vmatpush1.bf16.msra.mxu0 %v2352
    %4688 = vmatprep.subr.bf16.mxu0 %v2361
    %4689 = vmatpush1.bf16.msra.mxu0 %v2360
    %4690 = vmatprep.subr.bf16.mxu0 %v2369
    %4691 = vmatpush1.bf16.msra.mxu0 %v2368
    %4692 = vmatprep.mubr.bf16.mxu0 %v4223
    %4693 = vmatmul.mubr.bf16.gmra.mrb[0].mxu0 %v4222
    %v4694 = vpop.f32.mrb[0].mxu0
    %v4695 = vadd.f32 %v4654, %v4694
    %v4696 = vpop.f32.mrb[0].mxu0
    %v4697 = vadd.f32 %v4656, %v4696
    %v4698 = vpop.f32.mrb[0].mxu0
    %v4699 = vpop.f32.mrb[0].mxu0
    %4700 = vdwg.mxu0
    %4701 = vmatprep.subr.bf16.mxu0 %v2123
    %4702 = vmatpush1.bf16.msra.mxu0 %v2122
    %4703 = vmatprep.subr.bf16.mxu0 %v2131
    %4704 = vmatpush1.bf16.msra.mxu0 %v2130
    %4705 = vmatprep.subr.bf16.mxu0 %v2139
    %4706 = vmatpush1.bf16.msra.mxu0 %v2138
    %4707 = vmatprep.subr.bf16.mxu0 %v2147
    %4708 = vmatpush1.bf16.msra.mxu0 %v2146
    %4709 = vmatprep.subr.bf16.mxu0 %v2155
    %4710 = vmatpush1.bf16.msra.mxu0 %v2154
    %4711 = vmatprep.subr.bf16.mxu0 %v2163
    %4712 = vmatpush1.bf16.msra.mxu0 %v2162
    %4713 = vmatprep.subr.bf16.mxu0 %v2171
    %4714 = vmatpush1.bf16.msra.mxu0 %v2170
    %4715 = vmatprep.subr.bf16.mxu0 %v2179
    %4716 = vmatpush1.bf16.msra.mxu0 %v2178
    %4717 = vmatprep.subr.bf16.mxu0 %v2187
    %4718 = vmatpush1.bf16.msra.mxu0 %v2186
    %4719 = vmatprep.subr.bf16.mxu0 %v2195
    %4720 = vmatpush1.bf16.msra.mxu0 %v2194
    %4721 = vmatprep.subr.bf16.mxu0 %v2203
    %4722 = vmatpush1.bf16.msra.mxu0 %v2202
    %4723 = vmatprep.subr.bf16.mxu0 %v2211
    %4724 = vmatpush1.bf16.msra.mxu0 %v2210
    %4725 = vmatprep.subr.bf16.mxu0 %v2219
    %4726 = vmatpush1.bf16.msra.mxu0 %v2218
    %4727 = vmatprep.subr.bf16.mxu0 %v2227
    %4728 = vmatpush1.bf16.msra.mxu0 %v2226
    %4729 = vmatprep.subr.bf16.mxu0 %v2235
    %4730 = vmatpush1.bf16.msra.mxu0 %v2234
    %4731 = vmatprep.subr.bf16.mxu0 %v2243
    %4732 = vmatpush1.bf16.msra.mxu0 %v2242
    %4733 = vmatprep.mubr.bf16.mxu0 %v4454
    %4734 = vmatmul.mubr.bf16.gmra.mrb[0].mxu0 %v4453
    %v4735 = vpop.f32.mrb[0].mxu0
    %v4736 = vadd.f32 %v1335, %v4735
    %v4737 = vpop.f32.mrb[0].mxu0
    %v4738 = vadd.f32 %v1339, %v4737
    %v4739 = vpop.f32.mrb[0].mxu0
    %v4740 = vpop.f32.mrb[0].mxu0
    %4741 = vdwg.mxu0
    %4742 = vmatprep.subr.bf16.mxu0 %v2251
    %4743 = vmatpush1.bf16.msra.mxu0 %v2250
    %4744 = vmatprep.subr.bf16.mxu0 %v2259
    %4745 = vmatpush1.bf16.msra.mxu0 %v2258
    %4746 = vmatprep.subr.bf16.mxu0 %v2267
    %4747 = vmatpush1.bf16.msra.mxu0 %v2266
    %4748 = vmatprep.subr.bf16.mxu0 %v2275
    %4749 = vmatpush1.bf16.msra.mxu0 %v2274
    %4750 = vmatprep.subr.bf16.mxu0 %v2283
    %4751 = vmatpush1.bf16.msra.mxu0 %v2282
    %4752 = vmatprep.subr.bf16.mxu0 %v2291
    %4753 = vmatpush1.bf16.msra.mxu0 %v2290
    %4754 = vmatprep.subr.bf16.mxu0 %v2299
    %4755 = vmatpush1.bf16.msra.mxu0 %v2298
    %4756 = vmatprep.subr.bf16.mxu0 %v2307
    %4757 = vmatpush1.bf16.msra.mxu0 %v2306
    %4758 = vmatprep.subr.bf16.mxu0 %v2315
    %4759 = vmatpush1.bf16.msra.mxu0 %v2314
    %4760 = vmatprep.subr.bf16.mxu0 %v2323
    %4761 = vmatpush1.bf16.msra.mxu0 %v2322
    %4762 = vmatprep.subr.bf16.mxu0 %v2331
    %4763 = vmatpush1.bf16.msra.mxu0 %v2330
    %4764 = vmatprep.subr.bf16.mxu0 %v2339
    %4765 = vmatpush1.bf16.msra.mxu0 %v2338
    %4766 = vmatprep.subr.bf16.mxu0 %v2347
    %4767 = vmatpush1.bf16.msra.mxu0 %v2346
    %4768 = vmatprep.subr.bf16.mxu0 %v2355
    %4769 = vmatpush1.bf16.msra.mxu0 %v2354
    %4770 = vmatprep.subr.bf16.mxu0 %v2363
    %4771 = vmatpush1.bf16.msra.mxu0 %v2362
    %4772 = vmatprep.subr.bf16.mxu0 %v2371
    %4773 = vmatpush1.bf16.msra.mxu0 %v2370
    %4774 = vmatprep.mubr.bf16.mxu0 %v4223
    %4775 = vmatmul.mubr.bf16.gmra.mrb[0].mxu0 %v4222
    %v4776 = vpop.f32.mrb[0].mxu0
    %v4777 = vadd.f32 %v4736, %v4776
    %v4778 = vpop.f32.mrb[0].mxu0
    %v4779 = vadd.f32 %v4738, %v4778
    %v4780 = vpop.f32.mrb[0].mxu0
    %v4781 = vpop.f32.mrb[0].mxu0
    %4782 = vdwg.mxu0
    %v4783 = vxor.u32 %v4531, 2147483648
    %v4784 = vxor.u32 %v4533, 2147483648
    %v4785 = vxor.u32 %v4613, 2147483648
    %v4786 = vxor.u32 %v4615, 2147483648
    %v4787 = vxor.u32 %v4695, 2147483648
    %v4788 = vxor.u32 %v4697, 2147483648
    %v4789 = vmul.f32 %v4783, 1.442695
    %v4790 = vpow.pop %v4789
    %v4791 = vmul.f32 %v4784, 1.442695
    %v4792 = vpow.pop %v4791
    %v4793 = vmul.f32 %v4785, 1.442695
    %v4794 = vpow.pop %v4793
    %v4795 = vmul.f32 %v4786, 1.442695
    %v4796 = vpow.pop %v4795
    %v4797 = vmul.f32 %v4787, 1.442695
    %v4798 = vpow.pop %v4797
    %v4799 = vmul.f32 %v4788, 1.442695
    %v4800 = vpow.pop %v4799
    %v4801 = vadd.f32 %v4790, 1.0
    %v4802 = vadd.f32 %v4792, 1.0
    %v4803 = vadd.f32 %v4794, 1.0
    %v4804 = vadd.f32 %v4796, 1.0
    %v4805 = vadd.f32 %v4798, 1.0
    %v4806 = vadd.f32 %v4800, 1.0
    %v4807 = vrcp.pop %v4801
    %v4808 = vmul.f32 1.0, %v4807
    %v4809 = vrcp.pop %v4802
    %v4810 = vmul.f32 1.0, %v4809
    %v4811 = vrcp.pop %v4803
    %v4812 = vmul.f32 1.0, %v4811
    %v4813 = vrcp.pop %v4804
    %v4814 = vmul.f32 1.0, %v4813
    %v4815 = vrcp.pop %v4805
    %v4816 = vmul.f32 1.0, %v4815
    %v4817 = vrcp.pop %v4806
    %v4818 = vmul.f32 1.0, %v4817
    %v4819 = vtanh.pop %v4777
    %v4820 = vtanh.pop %v4779
    %v4821 = vmul.f32 %v4812, %v4216
    %v4822 = vmul.f32 %v4814, %v4217
    %v4823 = vmul.f32 %v4808, %v4819
    %v4824 = vmul.f32 %v4810, %v4820
    %v4825 = vadd.f32 %v4821, %v4823
    %v4826 = vadd.f32 %v4822, %v4824
    %v4827 = vtanh.pop %v4825
    %v4828 = vtanh.pop %v4826
    %v4829 = vmul.f32 %v4816, %v4827
    %v4830 = vmul.f32 %v4818, %v4828
    %v4831 = vpack.c.bf16 %v4829, %v4829
    %v4832 = vpack.c.bf16 %v4830, %v4830
    %s4833 = scalar_lea.vmem %s0, 256
    %v4834 = vld [vmem:[%s4833] sm:$0xff]
    %v4835 = vld [vmem:[%s4833 + $0x8] sm:$0xff]
    %v4836 = vld [vmem:[%s4833 + $0x10] sm:$0xff]
    %v4837 = vld [vmem:[%s4833 + $0x18] sm:$0xff]
    %v4838 = vld [vmem:[%s4833 + $0x20] sm:$0xff]
    %v4839 = vld [vmem:[%s4833 + $0x28] sm:$0xff]
    %v4840 = vld [vmem:[%s4833 + $0x30] sm:$0xff]
    %v4841 = vld [vmem:[%s4833 + $0x38] sm:$0xff]
    %4842 = vmatprep.subr.bf16.mxu0 %v830
    %4843 = vmatpush1.bf16.msra.mxu0 %v829
    %4844 = vmatprep.subr.bf16.mxu0 %v838
    %4845 = vmatpush1.bf16.msra.mxu0 %v837
    %4846 = vmatprep.subr.bf16.mxu0 %v846
    %4847 = vmatpush1.bf16.msra.mxu0 %v845
    %4848 = vmatprep.subr.bf16.mxu0 %v854
    %4849 = vmatpush1.bf16.msra.mxu0 %v853
    %4850 = vmatprep.subr.bf16.mxu0 %v862
    %4851 = vmatpush1.bf16.msra.mxu0 %v861
    %4852 = vmatprep.subr.bf16.mxu0 %v870
    %4853 = vmatpush1.bf16.msra.mxu0 %v869
    %4854 = vmatprep.subr.bf16.mxu0 %v878
    %4855 = vmatpush1.bf16.msra.mxu0 %v877
    %4856 = vmatprep.subr.bf16.mxu0 %v886
    %4857 = vmatpush1.bf16.msra.mxu0 %v885
    %4858 = vmatprep.subr.bf16.mxu0 %v894
    %4859 = vmatpush1.bf16.msra.mxu0 %v893
    %4860 = vmatprep.subr.bf16.mxu0 %v902
    %4861 = vmatpush1.bf16.msra.mxu0 %v901
    %4862 = vmatprep.subr.bf16.mxu0 %v910
    %4863 = vmatpush1.bf16.msra.mxu0 %v909
    %4864 = vmatprep.subr.bf16.mxu0 %v918
    %4865 = vmatpush1.bf16.msra.mxu0 %v917
    %4866 = vmatprep.subr.bf16.mxu0 %v926
    %4867 = vmatpush1.bf16.msra.mxu0 %v925
    %4868 = vmatprep.subr.bf16.mxu0 %v934
    %4869 = vmatpush1.bf16.msra.mxu0 %v933
    %4870 = vmatprep.subr.bf16.mxu0 %v942
    %4871 = vmatpush1.bf16.msra.mxu0 %v941
    %4872 = vmatprep.subr.bf16.mxu0 %v950
    %4873 = vmatpush1.bf16.msra.mxu0 %v949
    %4874 = vmatprep.mubr.bf16.mxu0 %v4454
    %4875 = vmatmul.mubr.bf16.gmra.mrb[0].mxu0 %v4453
    %v4876 = vpop.f32.mrb[0].mxu0
    %v4877 = vadd.f32 0.0, %v4876
    %v4878 = vpop.f32.mrb[0].mxu0
    %v4879 = vadd.f32 0.0, %v4878
    %v4880 = vpop.f32.mrb[0].mxu0
    %v4881 = vpop.f32.mrb[0].mxu0
    %4882 = vdwg.mxu0
    %4883 = vmatprep.subr.bf16.mxu0 %v832
    %4884 = vmatpush1.bf16.msra.mxu0 %v831
    %4885 = vmatprep.subr.bf16.mxu0 %v840
    %4886 = vmatpush1.bf16.msra.mxu0 %v839
    %4887 = vmatprep.subr.bf16.mxu0 %v848
    %4888 = vmatpush1.bf16.msra.mxu0 %v847
    %4889 = vmatprep.subr.bf16.mxu0 %v856
    %4890 = vmatpush1.bf16.msra.mxu0 %v855
    %4891 = vmatprep.subr.bf16.mxu0 %v864
    %4892 = vmatpush1.bf16.msra.mxu0 %v863
    %4893 = vmatprep.subr.bf16.mxu0 %v872
    %4894 = vmatpush1.bf16.msra.mxu0 %v871
    %4895 = vmatprep.subr.bf16.mxu0 %v880
    %4896 = vmatpush1.bf16.msra.mxu0 %v879
    %4897 = vmatprep.subr.bf16.mxu0 %v888
    %4898 = vmatpush1.bf16.msra.mxu0 %v887
    %4899 = vmatprep.subr.bf16.mxu0 %v896
    %4900 = vmatpush1.bf16.msra.mxu0 %v895
    %4901 = vmatprep.subr.bf16.mxu0 %v904
    %4902 = vmatpush1.bf16.msra.mxu0 %v903
    %4903 = vmatprep.subr.bf16.mxu0 %v912
    %4904 = vmatpush1.bf16.msra.mxu0 %v911
    %4905 = vmatprep.subr.bf16.mxu0 %v920
    %4906 = vmatpush1.bf16.msra.mxu0 %v919
    %4907 = vmatprep.subr.bf16.mxu0 %v928
    %4908 = vmatpush1.bf16.msra.mxu0 %v927
    %4909 = vmatprep.subr.bf16.mxu0 %v936
    %4910 = vmatpush1.bf16.msra.mxu0 %v935
    %4911 = vmatprep.subr.bf16.mxu0 %v944
    %4912 = vmatpush1.bf16.msra.mxu0 %v943
    %4913 = vmatprep.subr.bf16.mxu0 %v952
    %4914 = vmatpush1.bf16.msra.mxu0 %v951
    %4915 = vmatprep.mubr.bf16.mxu0 %v4454
    %4916 = vmatmul.mubr.bf16.gmra.mrb[0].mxu0 %v4453
    %v4917 = vpop.f32.mrb[0].mxu0
    %v4918 = vadd.f32 0.0, %v4917
    %v4919 = vpop.f32.mrb[0].mxu0
    %v4920 = vadd.f32 0.0, %v4919
    %v4921 = vpop.f32.mrb[0].mxu0
    %v4922 = vpop.f32.mrb[0].mxu0
    %4923 = vdwg.mxu0
    %4924 = vmatprep.subr.bf16.mxu0 %v834
    %4925 = vmatpush1.bf16.msra.mxu0 %v833
    %4926 = vmatprep.subr.bf16.mxu0 %v842
    %4927 = vmatpush1.bf16.msra.mxu0 %v841
    %4928 = vmatprep.subr.bf16.mxu0 %v850
    %4929 = vmatpush1.bf16.msra.mxu0 %v849
    %4930 = vmatprep.subr.bf16.mxu0 %v858
    %4931 = vmatpush1.bf16.msra.mxu0 %v857
    %4932 = vmatprep.subr.bf16.mxu0 %v866
    %4933 = vmatpush1.bf16.msra.mxu0 %v865
    %4934 = vmatprep.subr.bf16.mxu0 %v874
    %4935 = vmatpush1.bf16.msra.mxu0 %v873
    %4936 = vmatprep.subr.bf16.mxu0 %v882
    %4937 = vmatpush1.bf16.msra.mxu0 %v881
    %4938 = vmatprep.subr.bf16.mxu0 %v890
    %4939 = vmatpush1.bf16.msra.mxu0 %v889
    %4940 = vmatprep.subr.bf16.mxu0 %v898
    %4941 = vmatpush1.bf16.msra.mxu0 %v897
    %4942 = vmatprep.subr.bf16.mxu0 %v906
    %4943 = vmatpush1.bf16.msra.mxu0 %v905
    %4944 = vmatprep.subr.bf16.mxu0 %v914
    %4945 = vmatpush1.bf16.msra.mxu0 %v913
    %4946 = vmatprep.subr.bf16.mxu0 %v922
    %4947 = vmatpush1.bf16.msra.mxu0 %v921
    %4948 = vmatprep.subr.bf16.mxu0 %v930
    %4949 = vmatpush1.bf16.msra.mxu0 %v929
    %4950 = vmatprep.subr.bf16.mxu0 %v938
    %4951 = vmatpush1.bf16.msra.mxu0 %v937
    %4952 = vmatprep.subr.bf16.mxu0 %v946
    %4953 = vmatpush1.bf16.msra.mxu0 %v945
    %4954 = vmatprep.subr.bf16.mxu0 %v954
    %4955 = vmatpush1.bf16.msra.mxu0 %v953
    %4956 = vmatprep.mubr.bf16.mxu0 %v4454
    %4957 = vmatmul.mubr.bf16.gmra.mrb[0].mxu0 %v4453
    %v4958 = vpop.f32.mrb[0].mxu0
    %v4959 = vadd.f32 0.0, %v4958
    %v4960 = vpop.f32.mrb[0].mxu0
    %v4961 = vadd.f32 0.0, %v4960
    %v4962 = vpop.f32.mrb[0].mxu0
    %v4963 = vpop.f32.mrb[0].mxu0
    %4964 = vdwg.mxu0
    %4965 = vmatprep.subr.bf16.mxu0 %v836
    %4966 = vmatpush1.bf16.msra.mxu0 %v835
    %4967 = vmatprep.subr.bf16.mxu0 %v844
    %4968 = vmatpush1.bf16.msra.mxu0 %v843
    %4969 = vmatprep.subr.bf16.mxu0 %v852
    %4970 = vmatpush1.bf16.msra.mxu0 %v851
    %4971 = vmatprep.subr.bf16.mxu0 %v860
    %4972 = vmatpush1.bf16.msra.mxu0 %v859
    %4973 = vmatprep.subr.bf16.mxu0 %v868
    %4974 = vmatpush1.bf16.msra.mxu0 %v867
    %4975 = vmatprep.subr.bf16.mxu0 %v876
    %4976 = vmatpush1.bf16.msra.mxu0 %v875
    %4977 = vmatprep.subr.bf16.mxu0 %v884
    %4978 = vmatpush1.bf16.msra.mxu0 %v883
    %4979 = vmatprep.subr.bf16.mxu0 %v892
    %4980 = vmatpush1.bf16.msra.mxu0 %v891
    %4981 = vmatprep.subr.bf16.mxu0 %v900
    %4982 = vmatpush1.bf16.msra.mxu0 %v899
    %4983 = vmatprep.subr.bf16.mxu0 %v908
    %4984 = vmatpush1.bf16.msra.mxu0 %v907
    %4985 = vmatprep.subr.bf16.mxu0 %v916
    %4986 = vmatpush1.bf16.msra.mxu0 %v915
    %4987 = vmatprep.subr.bf16.mxu0 %v924
    %4988 = vmatpush1.bf16.msra.mxu0 %v923
    %4989 = vmatprep.subr.bf16.mxu0 %v932
    %4990 = vmatpush1.bf16.msra.mxu0 %v931
    %4991 = vmatprep.subr.bf16.mxu0 %v940
    %4992 = vmatpush1.bf16.msra.mxu0 %v939
    %4993 = vmatprep.subr.bf16.mxu0 %v948
    %4994 = vmatpush1.bf16.msra.mxu0 %v947
    %4995 = vmatprep.subr.bf16.mxu0 %v956
    %4996 = vmatpush1.bf16.msra.mxu0 %v955
    %4997 = vmatprep.mubr.bf16.mxu0 %v4454
    %4998 = vmatmul.mubr.bf16.gmra.mrb[0].mxu0 %v4453
    %v4999 = vpop.f32.mrb[0].mxu0
    %v5000 = vadd.f32 0.0, %v4999
    %v5001 = vpop.f32.mrb[0].mxu0
    %v5002 = vadd.f32 0.0, %v5001
    %v5003 = vpop.f32.mrb[0].mxu0
    %v5004 = vpop.f32.mrb[0].mxu0
    %5005 = vdwg.mxu0
    %v5006 = vadd.f32 %v4834, %v4877
    %v5007 = vadd.f32 %v4835, %v4879
    %v5008 = vadd.f32 %v4836, %v4918
    %v5009 = vadd.f32 %v4837, %v4920
    %v5010 = vadd.f32 %v4838, %v4959
    %v5011 = vadd.f32 %v4839, %v4961
    %v5012 = vadd.f32 %v4840, %v5000
    %v5013 = vadd.f32 %v4841, %v5002
    %v5014 = vxor.u32 %v5006, 2147483648
    %v5015 = vxor.u32 %v5007, 2147483648
    %v5016 = vxor.u32 %v5008, 2147483648
    %v5017 = vxor.u32 %v5009, 2147483648
    %v5018 = vxor.u32 %v5010, 2147483648
    %v5019 = vxor.u32 %v5011, 2147483648
    %v5020 = vmul.f32 %v5014, 1.442695
    %v5021 = vpow.pop %v5020
    %v5022 = vmul.f32 %v5015, 1.442695
    %v5023 = vpow.pop %v5022
    %v5024 = vmul.f32 %v5016, 1.442695
    %v5025 = vpow.pop %v5024
    %v5026 = vmul.f32 %v5017, 1.442695
    %v5027 = vpow.pop %v5026
    %v5028 = vmul.f32 %v5018, 1.442695
    %v5029 = vpow.pop %v5028
    %v5030 = vmul.f32 %v5019, 1.442695
    %v5031 = vpow.pop %v5030
    %v5032 = vadd.f32 %v5021, 1.0
    %v5033 = vadd.f32 %v5023, 1.0
    %v5034 = vadd.f32 %v5025, 1.0
    %v5035 = vadd.f32 %v5027, 1.0
    %v5036 = vadd.f32 %v5029, 1.0
    %v5037 = vadd.f32 %v5031, 1.0
    %v5038 = vrcp.pop %v5032
    %v5039 = vmul.f32 1.0, %v5038
    %v5040 = vrcp.pop %v5033
    %v5041 = vmul.f32 1.0, %v5040
    %v5042 = vrcp.pop %v5034
    %v5043 = vmul.f32 1.0, %v5042
    %v5044 = vrcp.pop %v5035
    %v5045 = vmul.f32 1.0, %v5044
    %v5046 = vrcp.pop %v5036
    %v5047 = vmul.f32 1.0, %v5046
    %v5048 = vrcp.pop %v5037
    %v5049 = vmul.f32 1.0, %v5048
    %v5050 = vtanh.pop %v5012
    %v5051 = vtanh.pop %v5013
    %v5052 = vmul.f32 %v5043, %v4447
    %v5053 = vmul.f32 %v5045, %v4448
    %v5054 = vmul.f32 %v5039, %v5050
    %v5055 = vmul.f32 %v5041, %v5051
    %v5056 = vadd.f32 %v5052, %v5054
    %v5057 = vadd.f32 %v5053, %v5055
    %v5058 = vtanh.pop %v5056
    %v5059 = vtanh.pop %v5057
    %v5060 = vmul.f32 %v5047, %v5058
    %v5061 = vmul.f32 %v5049, %v5059
    %v5062 = vpack.c.bf16 %v5060, %v5060
    %v5063 = vpack.c.bf16 %v5061, %v5061
    %5064 = vmatprep.subr.bf16.mxu0 %v2117
    %5065 = vmatpush1.bf16.msra.mxu0 %v2116
    %5066 = vmatprep.subr.bf16.mxu0 %v2125
    %5067 = vmatpush1.bf16.msra.mxu0 %v2124
    %5068 = vmatprep.subr.bf16.mxu0 %v2133
    %5069 = vmatpush1.bf16.msra.mxu0 %v2132
    %5070 = vmatprep.subr.bf16.mxu0 %v2141
    %5071 = vmatpush1.bf16.msra.mxu0 %v2140
    %5072 = vmatprep.subr.bf16.mxu0 %v2149
    %5073 = vmatpush1.bf16.msra.mxu0 %v2148
    %5074 = vmatprep.subr.bf16.mxu0 %v2157
    %5075 = vmatpush1.bf16.msra.mxu0 %v2156
    %5076 = vmatprep.subr.bf16.mxu0 %v2165
    %5077 = vmatpush1.bf16.msra.mxu0 %v2164
    %5078 = vmatprep.subr.bf16.mxu0 %v2173
    %5079 = vmatpush1.bf16.msra.mxu0 %v2172
    %5080 = vmatprep.subr.bf16.mxu0 %v2181
    %5081 = vmatpush1.bf16.msra.mxu0 %v2180
    %5082 = vmatprep.subr.bf16.mxu0 %v2189
    %5083 = vmatpush1.bf16.msra.mxu0 %v2188
    %5084 = vmatprep.subr.bf16.mxu0 %v2197
    %5085 = vmatpush1.bf16.msra.mxu0 %v2196
    %5086 = vmatprep.subr.bf16.mxu0 %v2205
    %5087 = vmatpush1.bf16.msra.mxu0 %v2204
    %5088 = vmatprep.subr.bf16.mxu0 %v2213
    %5089 = vmatpush1.bf16.msra.mxu0 %v2212
    %5090 = vmatprep.subr.bf16.mxu0 %v2221
    %5091 = vmatpush1.bf16.msra.mxu0 %v2220
    %5092 = vmatprep.subr.bf16.mxu0 %v2229
    %5093 = vmatpush1.bf16.msra.mxu0 %v2228
    %5094 = vmatprep.subr.bf16.mxu0 %v2237
    %5095 = vmatpush1.bf16.msra.mxu0 %v2236
    %5096 = vmatprep.mubr.bf16.mxu0 %v5063
    %5097 = vmatmul.mubr.bf16.gmra.mrb[0].mxu0 %v5062
    %v5098 = vpop.f32.mrb[0].mxu0
    %v5099 = vadd.f32 %v1311, %v5098
    %v5100 = vpop.f32.mrb[0].mxu0
    %v5101 = vadd.f32 %v1315, %v5100
    %v5102 = vpop.f32.mrb[0].mxu0
    %v5103 = vpop.f32.mrb[0].mxu0
    %5104 = vdwg.mxu0
    %5105 = vmatprep.subr.bf16.mxu0 %v2245
    %5106 = vmatpush1.bf16.msra.mxu0 %v2244
    %5107 = vmatprep.subr.bf16.mxu0 %v2253
    %5108 = vmatpush1.bf16.msra.mxu0 %v2252
    %5109 = vmatprep.subr.bf16.mxu0 %v2261
    %5110 = vmatpush1.bf16.msra.mxu0 %v2260
    %5111 = vmatprep.subr.bf16.mxu0 %v2269
    %5112 = vmatpush1.bf16.msra.mxu0 %v2268
    %5113 = vmatprep.subr.bf16.mxu0 %v2277
    %5114 = vmatpush1.bf16.msra.mxu0 %v2276
    %5115 = vmatprep.subr.bf16.mxu0 %v2285
    %5116 = vmatpush1.bf16.msra.mxu0 %v2284
    %5117 = vmatprep.subr.bf16.mxu0 %v2293
    %5118 = vmatpush1.bf16.msra.mxu0 %v2292
    %5119 = vmatprep.subr.bf16.mxu0 %v2301
    %5120 = vmatpush1.bf16.msra.mxu0 %v2300
    %5121 = vmatprep.subr.bf16.mxu0 %v2309
    %5122 = vmatpush1.bf16.msra.mxu0 %v2308
    %5123 = vmatprep.subr.bf16.mxu0 %v2317
    %5124 = vmatpush1.bf16.msra.mxu0 %v2316
    %5125 = vmatprep.subr.bf16.mxu0 %v2325
    %5126 = vmatpush1.bf16.msra.mxu0 %v2324
    %5127 = vmatprep.subr.bf16.mxu0 %v2333
    %5128 = vmatpush1.bf16.msra.mxu0 %v2332
    %5129 = vmatprep.subr.bf16.mxu0 %v2341
    %5130 = vmatpush1.bf16.msra.mxu0 %v2340
    %5131 = vmatprep.subr.bf16.mxu0 %v2349
    %5132 = vmatpush1.bf16.msra.mxu0 %v2348
    %5133 = vmatprep.subr.bf16.mxu0 %v2357
    %5134 = vmatpush1.bf16.msra.mxu0 %v2356
    %5135 = vmatprep.subr.bf16.mxu0 %v2365
    %5136 = vmatpush1.bf16.msra.mxu0 %v2364
    %5137 = vmatprep.mubr.bf16.mxu0 %v4832
    %5138 = vmatmul.mubr.bf16.gmra.mrb[0].mxu0 %v4831
    %v5139 = vpop.f32.mrb[0].mxu0
    %v5140 = vadd.f32 %v5099, %v5139
    %v5141 = vpop.f32.mrb[0].mxu0
    %v5142 = vadd.f32 %v5101, %v5141
    %v5143 = vpop.f32.mrb[0].mxu0
    %v5144 = vpop.f32.mrb[0].mxu0
    %5145 = vdwg.mxu0
    %5146 = vmatprep.subr.bf16.mxu0 %v2119
    %5147 = vmatpush1.bf16.msra.mxu0 %v2118
    %5148 = vmatprep.subr.bf16.mxu0 %v2127
    %5149 = vmatpush1.bf16.msra.mxu0 %v2126
    %5150 = vmatprep.subr.bf16.mxu0 %v2135
    %5151 = vmatpush1.bf16.msra.mxu0 %v2134
    %5152 = vmatprep.subr.bf16.mxu0 %v2143
    %5153 = vmatpush1.bf16.msra.mxu0 %v2142
    %5154 = vmatprep.subr.bf16.mxu0 %v2151
    %5155 = vmatpush1.bf16.msra.mxu0 %v2150
    %5156 = vmatprep.subr.bf16.mxu0 %v2159
    %5157 = vmatpush1.bf16.msra.mxu0 %v2158
    %5158 = vmatprep.subr.bf16.mxu0 %v2167
    %5159 = vmatpush1.bf16.msra.mxu0 %v2166
    %5160 = vmatprep.subr.bf16.mxu0 %v2175
    %5161 = vmatpush1.bf16.msra.mxu0 %v2174
    %5162 = vmatprep.subr.bf16.mxu0 %v2183
    %5163 = vmatpush1.bf16.msra.mxu0 %v2182
    %5164 = vmatprep.subr.bf16.mxu0 %v2191
    %5165 = vmatpush1.bf16.msra.mxu0 %v2190
    %5166 = vmatprep.subr.bf16.mxu0 %v2199
    %5167 = vmatpush1.bf16.msra.mxu0 %v2198
    %5168 = vmatprep.subr.bf16.mxu0 %v2207
    %5169 = vmatpush1.bf16.msra.mxu0 %v2206
    %5170 = vmatprep.subr.bf16.mxu0 %v2215
    %5171 = vmatpush1.bf16.msra.mxu0 %v2214
    %5172 = vmatprep.subr.bf16.mxu0 %v2223
    %5173 = vmatpush1.bf16.msra.mxu0 %v2222
    %5174 = vmatprep.subr.bf16.mxu0 %v2231
    %5175 = vmatpush1.bf16.msra.mxu0 %v2230
    %5176 = vmatprep.subr.bf16.mxu0 %v2239
    %5177 = vmatpush1.bf16.msra.mxu0 %v2238
    %5178 = vmatprep.mubr.bf16.mxu0 %v5063
    %5179 = vmatmul.mubr.bf16.gmra.mrb[0].mxu0 %v5062
    %v5180 = vpop.f32.mrb[0].mxu0
    %v5181 = vadd.f32 %v1319, %v5180
    %v5182 = vpop.f32.mrb[0].mxu0
    %v5183 = vadd.f32 %v1323, %v5182
    %v5184 = vpop.f32.mrb[0].mxu0
    %v5185 = vpop.f32.mrb[0].mxu0
    %5186 = vdwg.mxu0
    %5187 = vmatprep.subr.bf16.mxu0 %v2247
    %5188 = vmatpush1.bf16.msra.mxu0 %v2246
    %5189 = vmatprep.subr.bf16.mxu0 %v2255
    %5190 = vmatpush1.bf16.msra.mxu0 %v2254
    %5191 = vmatprep.subr.bf16.mxu0 %v2263
    %5192 = vmatpush1.bf16.msra.mxu0 %v2262
    %5193 = vmatprep.subr.bf16.mxu0 %v2271
    %5194 = vmatpush1.bf16.msra.mxu0 %v2270
    %5195 = vmatprep.subr.bf16.mxu0 %v2279
    %5196 = vmatpush1.bf16.msra.mxu0 %v2278
    %5197 = vmatprep.subr.bf16.mxu0 %v2287
    %5198 = vmatpush1.bf16.msra.mxu0 %v2286
    %5199 = vmatprep.subr.bf16.mxu0 %v2295
    %5200 = vmatpush1.bf16.msra.mxu0 %v2294
    %5201 = vmatprep.subr.bf16.mxu0 %v2303
    %5202 = vmatpush1.bf16.msra.mxu0 %v2302
    %5203 = vmatprep.subr.bf16.mxu0 %v2311
    %5204 = vmatpush1.bf16.msra.mxu0 %v2310
    %5205 = vmatprep.subr.bf16.mxu0 %v2319
    %5206 = vmatpush1.bf16.msra.mxu0 %v2318
    %5207 = vmatprep.subr.bf16.mxu0 %v2327
    %5208 = vmatpush1.bf16.msra.mxu0 %v2326
    %5209 = vmatprep.subr.bf16.mxu0 %v2335
    %5210 = vmatpush1.bf16.msra.mxu0 %v2334
    %5211 = vmatprep.subr.bf16.mxu0 %v2343
    %5212 = vmatpush1.bf16.msra.mxu0 %v2342
    %5213 = vmatprep.subr.bf16.mxu0 %v2351
    %5214 = vmatpush1.bf16.msra.mxu0 %v2350
    %5215 = vmatprep.subr.bf16.mxu0 %v2359
    %5216 = vmatpush1.bf16.msra.mxu0 %v2358
    %5217 = vmatprep.subr.bf16.mxu0 %v2367
    %5218 = vmatpush1.bf16.msra.mxu0 %v2366
    %5219 = vmatprep.mubr.bf16.mxu0 %v4832
    %5220 = vmatmul.mubr.bf16.gmra.mrb[0].mxu0 %v4831
    %v5221 = vpop.f32.mrb[0].mxu0
    %v5222 = vadd.f32 %v5181, %v5221
    %v5223 = vpop.f32.mrb[0].mxu0
    %v5224 = vadd.f32 %v5183, %v5223
    %v5225 = vpop.f32.mrb[0].mxu0
    %v5226 = vpop.f32.mrb[0].mxu0
    %5227 = vdwg.mxu0
    %5228 = vmatprep.subr.bf16.mxu0 %v2121
    %5229 = vmatpush1.bf16.msra.mxu0 %v2120
    %5230 = vmatprep.subr.bf16.mxu0 %v2129
    %5231 = vmatpush1.bf16.msra.mxu0 %v2128
    %5232 = vmatprep.subr.bf16.mxu0 %v2137
    %5233 = vmatpush1.bf16.msra.mxu0 %v2136
    %5234 = vmatprep.subr.bf16.mxu0 %v2145
    %5235 = vmatpush1.bf16.msra.mxu0 %v2144
    %5236 = vmatprep.subr.bf16.mxu0 %v2153
    %5237 = vmatpush1.bf16.msra.mxu0 %v2152
    %5238 = vmatprep.subr.bf16.mxu0 %v2161
    %5239 = vmatpush1.bf16.msra.mxu0 %v2160
    %5240 = vmatprep.subr.bf16.mxu0 %v2169
    %5241 = vmatpush1.bf16.msra.mxu0 %v2168
    %5242 = vmatprep.subr.bf16.mxu0 %v2177
    %5243 = vmatpush1.bf16.msra.mxu0 %v2176
    %5244 = vmatprep.subr.bf16.mxu0 %v2185
    %5245 = vmatpush1.bf16.msra.mxu0 %v2184
    %5246 = vmatprep.subr.bf16.mxu0 %v2193
    %5247 = vmatpush1.bf16.msra.mxu0 %v2192
    %5248 = vmatprep.subr.bf16.mxu0 %v2201
    %5249 = vmatpush1.bf16.msra.mxu0 %v2200
    %5250 = vmatprep.subr.bf16.mxu0 %v2209
    %5251 = vmatpush1.bf16.msra.mxu0 %v2208
    %5252 = vmatprep.subr.bf16.mxu0 %v2217
    %5253 = vmatpush1.bf16.msra.mxu0 %v2216
    %5254 = vmatprep.subr.bf16.mxu0 %v2225
    %5255 = vmatpush1.bf16.msra.mxu0 %v2224
    %5256 = vmatprep.subr.bf16.mxu0 %v2233
    %5257 = vmatpush1.bf16.msra.mxu0 %v2232
    %5258 = vmatprep.subr.bf16.mxu0 %v2241
    %5259 = vmatpush1.bf16.msra.mxu0 %v2240
    %5260 = vmatprep.mubr.bf16.mxu0 %v5063
    %5261 = vmatmul.mubr.bf16.gmra.mrb[0].mxu0 %v5062
    %v5262 = vpop.f32.mrb[0].mxu0
    %v5263 = vadd.f32 %v1327, %v5262
    %v5264 = vpop.f32.mrb[0].mxu0
    %v5265 = vadd.f32 %v1331, %v5264
    %v5266 = vpop.f32.mrb[0].mxu0
    %v5267 = vpop.f32.mrb[0].mxu0
    %5268 = vdwg.mxu0
    %5269 = vmatprep.subr.bf16.mxu0 %v2249
    %5270 = vmatpush1.bf16.msra.mxu0 %v2248
    %5271 = vmatprep.subr.bf16.mxu0 %v2257
    %5272 = vmatpush1.bf16.msra.mxu0 %v2256
    %5273 = vmatprep.subr.bf16.mxu0 %v2265
    %5274 = vmatpush1.bf16.msra.mxu0 %v2264
    %5275 = vmatprep.subr.bf16.mxu0 %v2273
    %5276 = vmatpush1.bf16.msra.mxu0 %v2272
    %5277 = vmatprep.subr.bf16.mxu0 %v2281
    %5278 = vmatpush1.bf16.msra.mxu0 %v2280
    %5279 = vmatprep.subr.bf16.mxu0 %v2289
    %5280 = vmatpush1.bf16.msra.mxu0 %v2288
    %5281 = vmatprep.subr.bf16.mxu0 %v2297
    %5282 = vmatpush1.bf16.msra.mxu0 %v2296
    %5283 = vmatprep.subr.bf16.mxu0 %v2305
    %5284 = vmatpush1.bf16.msra.mxu0 %v2304
    %5285 = vmatprep.subr.bf16.mxu0 %v2313
    %5286 = vmatpush1.bf16.msra.mxu0 %v2312
    %5287 = vmatprep.subr.bf16.mxu0 %v2321
    %5288 = vmatpush1.bf16.msra.mxu0 %v2320
    %5289 = vmatprep.subr.bf16.mxu0 %v2329
    %5290 = vmatpush1.bf16.msra.mxu0 %v2328
    %5291 = vmatprep.subr.bf16.mxu0 %v2337
    %5292 = vmatpush1.bf16.msra.mxu0 %v2336
    %5293 = vmatprep.subr.bf16.mxu0 %v2345
    %5294 = vmatpush1.bf16.msra.mxu0 %v2344
    %5295 = vmatprep.subr.bf16.mxu0 %v2353
    %5296 = vmatpush1.bf16.msra.mxu0 %v2352
    %5297 = vmatprep.subr.bf16.mxu0 %v2361
    %5298 = vmatpush1.bf16.msra.mxu0 %v2360
    %5299 = vmatprep.subr.bf16.mxu0 %v2369
    %5300 = vmatpush1.bf16.msra.mxu0 %v2368
    %5301 = vmatprep.mubr.bf16.mxu0 %v4832
    %5302 = vmatmul.mubr.bf16.gmra.mrb[0].mxu0 %v4831
    %v5303 = vpop.f32.mrb[0].mxu0
    %v5304 = vadd.f32 %v5263, %v5303
    %v5305 = vpop.f32.mrb[0].mxu0
    %v5306 = vadd.f32 %v5265, %v5305
    %v5307 = vpop.f32.mrb[0].mxu0
    %v5308 = vpop.f32.mrb[0].mxu0
    %5309 = vdwg.mxu0
    %5310 = vmatprep.subr.bf16.mxu0 %v2123
    %5311 = vmatpush1.bf16.msra.mxu0 %v2122
    %5312 = vmatprep.subr.bf16.mxu0 %v2131
    %5313 = vmatpush1.bf16.msra.mxu0 %v2130
    %5314 = vmatprep.subr.bf16.mxu0 %v2139
    %5315 = vmatpush1.bf16.msra.mxu0 %v2138
    %5316 = vmatprep.subr.bf16.mxu0 %v2147
    %5317 = vmatpush1.bf16.msra.mxu0 %v2146
    %5318 = vmatprep.subr.bf16.mxu0 %v2155
    %5319 = vmatpush1.bf16.msra.mxu0 %v2154
    %5320 = vmatprep.subr.bf16.mxu0 %v2163
    %5321 = vmatpush1.bf16.msra.mxu0 %v2162
    %5322 = vmatprep.subr.bf16.mxu0 %v2171
    %5323 = vmatpush1.bf16.msra.mxu0 %v2170
    %5324 = vmatprep.subr.bf16.mxu0 %v2179
    %5325 = vmatpush1.bf16.msra.mxu0 %v2178
    %5326 = vmatprep.subr.bf16.mxu0 %v2187
    %5327 = vmatpush1.bf16.msra.mxu0 %v2186
    %5328 = vmatprep.subr.bf16.mxu0 %v2195
    %5329 = vmatpush1.bf16.msra.mxu0 %v2194
    %5330 = vmatprep.subr.bf16.mxu0 %v2203
    %5331 = vmatpush1.bf16.msra.mxu0 %v2202
    %5332 = vmatprep.subr.bf16.mxu0 %v2211
    %5333 = vmatpush1.bf16.msra.mxu0 %v2210
    %5334 = vmatprep.subr.bf16.mxu0 %v2219
    %5335 = vmatpush1.bf16.msra.mxu0 %v2218
    %5336 = vmatprep.subr.bf16.mxu0 %v2227
    %5337 = vmatpush1.bf16.msra.mxu0 %v2226
    %5338 = vmatprep.subr.bf16.mxu0 %v2235
    %5339 = vmatpush1.bf16.msra.mxu0 %v2234
    %5340 = vmatprep.subr.bf16.mxu0 %v2243
    %5341 = vmatpush1.bf16.msra.mxu0 %v2242
    %5342 = vmatprep.mubr.bf16.mxu0 %v5063
    %5343 = vmatmul.mubr.bf16.gmra.mrb[0].mxu0 %v5062
    %v5344 = vpop.f32.mrb[0].mxu0
    %v5345 = vadd.f32 %v1335, %v5344
    %v5346 = vpop.f32.mrb[0].mxu0
    %v5347 = vadd.f32 %v1339, %v5346
    %v5348 = vpop.f32.mrb[0].mxu0
    %v5349 = vpop.f32.mrb[0].mxu0
    %5350 = vdwg.mxu0
    %5351 = vmatprep.subr.bf16.mxu0 %v2251
    %5352 = vmatpush1.bf16.msra.mxu0 %v2250
    %5353 = vmatprep.subr.bf16.mxu0 %v2259
    %5354 = vmatpush1.bf16.msra.mxu0 %v2258
    %5355 = vmatprep.subr.bf16.mxu0 %v2267
    %5356 = vmatpush1.bf16.msra.mxu0 %v2266
    %5357 = vmatprep.subr.bf16.mxu0 %v2275
    %5358 = vmatpush1.bf16.msra.mxu0 %v2274
    %5359 = vmatprep.subr.bf16.mxu0 %v2283
    %5360 = vmatpush1.bf16.msra.mxu0 %v2282
    %5361 = vmatprep.subr.bf16.mxu0 %v2291
    %5362 = vmatpush1.bf16.msra.mxu0 %v2290
    %5363 = vmatprep.subr.bf16.mxu0 %v2299
    %5364 = vmatpush1.bf16.msra.mxu0 %v2298
    %5365 = vmatprep.subr.bf16.mxu0 %v2307
    %5366 = vmatpush1.bf16.msra.mxu0 %v2306
    %5367 = vmatprep.subr.bf16.mxu0 %v2315
    %5368 = vmatpush1.bf16.msra.mxu0 %v2314
    %5369 = vmatprep.subr.bf16.mxu0 %v2323
    %5370 = vmatpush1.bf16.msra.mxu0 %v2322
    %5371 = vmatprep.subr.bf16.mxu0 %v2331
    %5372 = vmatpush1.bf16.msra.mxu0 %v2330
    %5373 = vmatprep.subr.bf16.mxu0 %v2339
    %5374 = vmatpush1.bf16.msra.mxu0 %v2338
    %5375 = vmatprep.subr.bf16.mxu0 %v2347
    %5376 = vmatpush1.bf16.msra.mxu0 %v2346
    %5377 = vmatprep.subr.bf16.mxu0 %v2355
    %5378 = vmatpush1.bf16.msra.mxu0 %v2354
    %5379 = vmatprep.subr.bf16.mxu0 %v2363
    %5380 = vmatpush1.bf16.msra.mxu0 %v2362
    %5381 = vmatprep.subr.bf16.mxu0 %v2371
    %5382 = vmatpush1.bf16.msra.mxu0 %v2370
    %5383 = vmatprep.mubr.bf16.mxu0 %v4832
    %5384 = vmatmul.mubr.bf16.gmra.mrb[0].mxu0 %v4831
    %v5385 = vpop.f32.mrb[0].mxu0
    %v5386 = vadd.f32 %v5345, %v5385
    %v5387 = vpop.f32.mrb[0].mxu0
    %v5388 = vadd.f32 %v5347, %v5387
    %v5389 = vpop.f32.mrb[0].mxu0
    %v5390 = vpop.f32.mrb[0].mxu0
    %5391 = vdwg.mxu0
    %v5392 = vxor.u32 %v5140, 2147483648
    %v5393 = vxor.u32 %v5142, 2147483648
    %v5394 = vxor.u32 %v5222, 2147483648
    %v5395 = vxor.u32 %v5224, 2147483648
    %v5396 = vxor.u32 %v5304, 2147483648
    %v5397 = vxor.u32 %v5306, 2147483648
    %v5398 = vmul.f32 %v5392, 1.442695
    %v5399 = vpow.pop %v5398
    %v5400 = vmul.f32 %v5393, 1.442695
    %v5401 = vpow.pop %v5400
    %v5402 = vmul.f32 %v5394, 1.442695
    %v5403 = vpow.pop %v5402
    %v5404 = vmul.f32 %v5395, 1.442695
    %v5405 = vpow.pop %v5404
    %v5406 = vmul.f32 %v5396, 1.442695
    %v5407 = vpow.pop %v5406
    %v5408 = vmul.f32 %v5397, 1.442695
    %v5409 = vpow.pop %v5408
    %v5410 = vadd.f32 %v5399, 1.0
    %v5411 = vadd.f32 %v5401, 1.0
    %v5412 = vadd.f32 %v5403, 1.0
    %v5413 = vadd.f32 %v5405, 1.0
    %v5414 = vadd.f32 %v5407, 1.0
    %v5415 = vadd.f32 %v5409, 1.0
    %v5416 = vrcp.pop %v5410
    %v5417 = vmul.f32 1.0, %v5416
    %v5418 = vrcp.pop %v5411
    %v5419 = vmul.f32 1.0, %v5418
    %v5420 = vrcp.pop %v5412
    %v5421 = vmul.f32 1.0, %v5420
    %v5422 = vrcp.pop %v5413
    %v5423 = vmul.f32 1.0, %v5422
    %v5424 = vrcp.pop %v5414
    %v5425 = vmul.f32 1.0, %v5424
    %v5426 = vrcp.pop %v5415
    %v5427 = vmul.f32 1.0, %v5426
    %v5428 = vtanh.pop %v5386
    %v5429 = vtanh.pop %v5388
    %v5430 = vmul.f32 %v5421, %v4825
    %v5431 = vmul.f32 %v5423, %v4826
    %v5432 = vmul.f32 %v5417, %v5428
    %v5433 = vmul.f32 %v5419, %v5429
    %v5434 = vadd.f32 %v5430, %v5432
    %v5435 = vadd.f32 %v5431, %v5433
    %v5436 = vtanh.pop %v5434
    %v5437 = vtanh.pop %v5435
    %v5438 = vmul.f32 %v5425, %v5436
    %v5439 = vmul.f32 %v5427, %v5437
    %v5440 = vpack.c.bf16 %v5438, %v5438
    %v5441 = vpack.c.bf16 %v5439, %v5439
    %s5442 = scalar_lea.vmem %s0, 320
    %v5443 = vld [vmem:[%s5442] sm:$0xff]
    %v5444 = vld [vmem:[%s5442 + $0x8] sm:$0xff]
    %v5445 = vld [vmem:[%s5442 + $0x10] sm:$0xff]
    %v5446 = vld [vmem:[%s5442 + $0x18] sm:$0xff]
    %v5447 = vld [vmem:[%s5442 + $0x20] sm:$0xff]
    %v5448 = vld [vmem:[%s5442 + $0x28] sm:$0xff]
    %v5449 = vld [vmem:[%s5442 + $0x30] sm:$0xff]
    %v5450 = vld [vmem:[%s5442 + $0x38] sm:$0xff]
    %5451 = vmatprep.subr.bf16.mxu0 %v830
    %5452 = vmatpush1.bf16.msra.mxu0 %v829
    %5453 = vmatprep.subr.bf16.mxu0 %v838
    %5454 = vmatpush1.bf16.msra.mxu0 %v837
    %5455 = vmatprep.subr.bf16.mxu0 %v846
    %5456 = vmatpush1.bf16.msra.mxu0 %v845
    %5457 = vmatprep.subr.bf16.mxu0 %v854
    %5458 = vmatpush1.bf16.msra.mxu0 %v853
    %5459 = vmatprep.subr.bf16.mxu0 %v862
    %5460 = vmatpush1.bf16.msra.mxu0 %v861
    %5461 = vmatprep.subr.bf16.mxu0 %v870
    %5462 = vmatpush1.bf16.msra.mxu0 %v869
    %5463 = vmatprep.subr.bf16.mxu0 %v878
    %5464 = vmatpush1.bf16.msra.mxu0 %v877
    %5465 = vmatprep.subr.bf16.mxu0 %v886
    %5466 = vmatpush1.bf16.msra.mxu0 %v885
    %5467 = vmatprep.subr.bf16.mxu0 %v894
    %5468 = vmatpush1.bf16.msra.mxu0 %v893
    %5469 = vmatprep.subr.bf16.mxu0 %v902
    %5470 = vmatpush1.bf16.msra.mxu0 %v901
    %5471 = vmatprep.subr.bf16.mxu0 %v910
    %5472 = vmatpush1.bf16.msra.mxu0 %v909
    %5473 = vmatprep.subr.bf16.mxu0 %v918
    %5474 = vmatpush1.bf16.msra.mxu0 %v917
    %5475 = vmatprep.subr.bf16.mxu0 %v926
    %5476 = vmatpush1.bf16.msra.mxu0 %v925
    %5477 = vmatprep.subr.bf16.mxu0 %v934
    %5478 = vmatpush1.bf16.msra.mxu0 %v933
    %5479 = vmatprep.subr.bf16.mxu0 %v942
    %5480 = vmatpush1.bf16.msra.mxu0 %v941
    %5481 = vmatprep.subr.bf16.mxu0 %v950
    %5482 = vmatpush1.bf16.msra.mxu0 %v949
    %5483 = vmatprep.mubr.bf16.mxu0 %v5063
    %5484 = vmatmul.mubr.bf16.gmra.mrb[0].mxu0 %v5062
    %v5485 = vpop.f32.mrb[0].mxu0
    %v5486 = vadd.f32 0.0, %v5485
    %v5487 = vpop.f32.mrb[0].mxu0
    %v5488 = vadd.f32 0.0, %v5487
    %v5489 = vpop.f32.mrb[0].mxu0
    %v5490 = vpop.f32.mrb[0].mxu0
    %5491 = vdwg.mxu0
    %5492 = vmatprep.subr.bf16.mxu0 %v832
    %5493 = vmatpush1.bf16.msra.mxu0 %v831
    %5494 = vmatprep.subr.bf16.mxu0 %v840
    %5495 = vmatpush1.bf16.msra.mxu0 %v839
    %5496 = vmatprep.subr.bf16.mxu0 %v848
    %5497 = vmatpush1.bf16.msra.mxu0 %v847
    %5498 = vmatprep.subr.bf16.mxu0 %v856
    %5499 = vmatpush1.bf16.msra.mxu0 %v855
    %5500 = vmatprep.subr.bf16.mxu0 %v864
    %5501 = vmatpush1.bf16.msra.mxu0 %v863
    %5502 = vmatprep.subr.bf16.mxu0 %v872
    %5503 = vmatpush1.bf16.msra.mxu0 %v871
    %5504 = vmatprep.subr.bf16.mxu0 %v880
    %5505 = vmatpush1.bf16.msra.mxu0 %v879
    %5506 = vmatprep.subr.bf16.mxu0 %v888
    %5507 = vmatpush1.bf16.msra.mxu0 %v887
    %5508 = vmatprep.subr.bf16.mxu0 %v896
    %5509 = vmatpush1.bf16.msra.mxu0 %v895
    %5510 = vmatprep.subr.bf16.mxu0 %v904
    %5511 = vmatpush1.bf16.msra.mxu0 %v903
    %5512 = vmatprep.subr.bf16.mxu0 %v912
    %5513 = vmatpush1.bf16.msra.mxu0 %v911
    %5514 = vmatprep.subr.bf16.mxu0 %v920
    %5515 = vmatpush1.bf16.msra.mxu0 %v919
    %5516 = vmatprep.subr.bf16.mxu0 %v928
    %5517 = vmatpush1.bf16.msra.mxu0 %v927
    %5518 = vmatprep.subr.bf16.mxu0 %v936
    %5519 = vmatpush1.bf16.msra.mxu0 %v935
    %5520 = vmatprep.subr.bf16.mxu0 %v944
    %5521 = vmatpush1.bf16.msra.mxu0 %v943
    %5522 = vmatprep.subr.bf16.mxu0 %v952
    %5523 = vmatpush1.bf16.msra.mxu0 %v951
    %5524 = vmatprep.mubr.bf16.mxu0 %v5063
    %5525 = vmatmul.mubr.bf16.gmra.mrb[0].mxu0 %v5062
    %v5526 = vpop.f32.mrb[0].mxu0
    %v5527 = vadd.f32 0.0, %v5526
    %v5528 = vpop.f32.mrb[0].mxu0
    %v5529 = vadd.f32 0.0, %v5528
    %v5530 = vpop.f32.mrb[0].mxu0
    %v5531 = vpop.f32.mrb[0].mxu0
    %5532 = vdwg.mxu0
    %5533 = vmatprep.subr.bf16.mxu0 %v834
    %5534 = vmatpush1.bf16.msra.mxu0 %v833
    %5535 = vmatprep.subr.bf16.mxu0 %v842
    %5536 = vmatpush1.bf16.msra.mxu0 %v841
    %5537 = vmatprep.subr.bf16.mxu0 %v850
    %5538 = vmatpush1.bf16.msra.mxu0 %v849
    %5539 = vmatprep.subr.bf16.mxu0 %v858
    %5540 = vmatpush1.bf16.msra.mxu0 %v857
    %5541 = vmatprep.subr.bf16.mxu0 %v866
    %5542 = vmatpush1.bf16.msra.mxu0 %v865
    %5543 = vmatprep.subr.bf16.mxu0 %v874
    %5544 = vmatpush1.bf16.msra.mxu0 %v873
    %5545 = vmatprep.subr.bf16.mxu0 %v882
    %5546 = vmatpush1.bf16.msra.mxu0 %v881
    %5547 = vmatprep.subr.bf16.mxu0 %v890
    %5548 = vmatpush1.bf16.msra.mxu0 %v889
    %5549 = vmatprep.subr.bf16.mxu0 %v898
    %5550 = vmatpush1.bf16.msra.mxu0 %v897
    %5551 = vmatprep.subr.bf16.mxu0 %v906
    %5552 = vmatpush1.bf16.msra.mxu0 %v905
    %5553 = vmatprep.subr.bf16.mxu0 %v914
    %5554 = vmatpush1.bf16.msra.mxu0 %v913
    %5555 = vmatprep.subr.bf16.mxu0 %v922
    %5556 = vmatpush1.bf16.msra.mxu0 %v921
    %5557 = vmatprep.subr.bf16.mxu0 %v930
    %5558 = vmatpush1.bf16.msra.mxu0 %v929
    %5559 = vmatprep.subr.bf16.mxu0 %v938
    %5560 = vmatpush1.bf16.msra.mxu0 %v937
    %5561 = vmatprep.subr.bf16.mxu0 %v946
    %5562 = vmatpush1.bf16.msra.mxu0 %v945
    %5563 = vmatprep.subr.bf16.mxu0 %v954
    %5564 = vmatpush1.bf16.msra.mxu0 %v953
    %5565 = vmatprep.mubr.bf16.mxu0 %v5063
    %5566 = vmatmul.mubr.bf16.gmra.mrb[0].mxu0 %v5062
    %v5567 = vpop.f32.mrb[0].mxu0
    %v5568 = vadd.f32 0.0, %v5567
    %v5569 = vpop.f32.mrb[0].mxu0
    %v5570 = vadd.f32 0.0, %v5569
    %v5571 = vpop.f32.mrb[0].mxu0
    %v5572 = vpop.f32.mrb[0].mxu0
    %5573 = vdwg.mxu0
    %5574 = vmatprep.subr.bf16.mxu0 %v836
    %5575 = vmatpush1.bf16.msra.mxu0 %v835
    %5576 = vmatprep.subr.bf16.mxu0 %v844
    %5577 = vmatpush1.bf16.msra.mxu0 %v843
    %5578 = vmatprep.subr.bf16.mxu0 %v852
    %5579 = vmatpush1.bf16.msra.mxu0 %v851
    %5580 = vmatprep.subr.bf16.mxu0 %v860
    %5581 = vmatpush1.bf16.msra.mxu0 %v859
    %5582 = vmatprep.subr.bf16.mxu0 %v868
    %5583 = vmatpush1.bf16.msra.mxu0 %v867
    %5584 = vmatprep.subr.bf16.mxu0 %v876
    %5585 = vmatpush1.bf16.msra.mxu0 %v875
    %5586 = vmatprep.subr.bf16.mxu0 %v884
    %5587 = vmatpush1.bf16.msra.mxu0 %v883
    %5588 = vmatprep.subr.bf16.mxu0 %v892
    %5589 = vmatpush1.bf16.msra.mxu0 %v891
    %5590 = vmatprep.subr.bf16.mxu0 %v900
    %5591 = vmatpush1.bf16.msra.mxu0 %v899
    %5592 = vmatprep.subr.bf16.mxu0 %v908
    %5593 = vmatpush1.bf16.msra.mxu0 %v907
    %5594 = vmatprep.subr.bf16.mxu0 %v916
    %5595 = vmatpush1.bf16.msra.mxu0 %v915
    %5596 = vmatprep.subr.bf16.mxu0 %v924
    %5597 = vmatpush1.bf16.msra.mxu0 %v923
    %5598 = vmatprep.subr.bf16.mxu0 %v932
    %5599 = vmatpush1.bf16.msra.mxu0 %v931
    %5600 = vmatprep.subr.bf16.mxu0 %v940
    %5601 = vmatpush1.bf16.msra.mxu0 %v939
    %5602 = vmatprep.subr.bf16.mxu0 %v948
    %5603 = vmatpush1.bf16.msra.mxu0 %v947
    %5604 = vmatprep.subr.bf16.mxu0 %v956
    %5605 = vmatpush1.bf16.msra.mxu0 %v955
    %5606 = vmatprep.mubr.bf16.mxu0 %v5063
    %5607 = vmatmul.mubr.bf16.gmra.mrb[0].mxu0 %v5062
    %v5608 = vpop.f32.mrb[0].mxu0
    %v5609 = vadd.f32 0.0, %v5608
    %v5610 = vpop.f32.mrb[0].mxu0
    %v5611 = vadd.f32 0.0, %v5610
    %v5612 = vpop.f32.mrb[0].mxu0
    %v5613 = vpop.f32.mrb[0].mxu0
    %5614 = vdwg.mxu0
    %v5615 = vadd.f32 %v5443, %v5486
    %v5616 = vadd.f32 %v5444, %v5488
    %v5617 = vadd.f32 %v5445, %v5527
    %v5618 = vadd.f32 %v5446, %v5529
    %v5619 = vadd.f32 %v5447, %v5568
    %v5620 = vadd.f32 %v5448, %v5570
    %v5621 = vadd.f32 %v5449, %v5609
    %v5622 = vadd.f32 %v5450, %v5611
    %v5623 = vxor.u32 %v5615, 2147483648
    %v5624 = vxor.u32 %v5616, 2147483648
    %v5625 = vxor.u32 %v5617, 2147483648
    %v5626 = vxor.u32 %v5618, 2147483648
    %v5627 = vxor.u32 %v5619, 2147483648
    %v5628 = vxor.u32 %v5620, 2147483648
    %v5629 = vmul.f32 %v5623, 1.442695
    %v5630 = vpow.pop %v5629
    %v5631 = vmul.f32 %v5624, 1.442695
    %v5632 = vpow.pop %v5631
    %v5633 = vmul.f32 %v5625, 1.442695
    %v5634 = vpow.pop %v5633
    %v5635 = vmul.f32 %v5626, 1.442695
    %v5636 = vpow.pop %v5635
    %v5637 = vmul.f32 %v5627, 1.442695
    %v5638 = vpow.pop %v5637
    %v5639 = vmul.f32 %v5628, 1.442695
    %v5640 = vpow.pop %v5639
    %v5641 = vadd.f32 %v5630, 1.0
    %v5642 = vadd.f32 %v5632, 1.0
    %v5643 = vadd.f32 %v5634, 1.0
    %v5644 = vadd.f32 %v5636, 1.0
    %v5645 = vadd.f32 %v5638, 1.0
    %v5646 = vadd.f32 %v5640, 1.0
    %v5647 = vrcp.pop %v5641
    %v5648 = vmul.f32 1.0, %v5647
    %v5649 = vrcp.pop %v5642
    %v5650 = vmul.f32 1.0, %v5649
    %v5651 = vrcp.pop %v5643
    %v5652 = vmul.f32 1.0, %v5651
    %v5653 = vrcp.pop %v5644
    %v5654 = vmul.f32 1.0, %v5653
    %v5655 = vrcp.pop %v5645
    %v5656 = vmul.f32 1.0, %v5655
    %v5657 = vrcp.pop %v5646
    %v5658 = vmul.f32 1.0, %v5657
    %v5659 = vtanh.pop %v5621
    %v5660 = vtanh.pop %v5622
    %v5661 = vmul.f32 %v5652, %v5056
    %v5662 = vmul.f32 %v5654, %v5057
    %v5663 = vmul.f32 %v5648, %v5659
    %v5664 = vmul.f32 %v5650, %v5660
    %v5665 = vadd.f32 %v5661, %v5663
    %v5666 = vadd.f32 %v5662, %v5664
    %v5667 = vtanh.pop %v5665
    %v5668 = vtanh.pop %v5666
    %v5669 = vmul.f32 %v5656, %v5667
    %v5670 = vmul.f32 %v5658, %v5668
    %v5671 = vpack.c.bf16 %v5669, %v5669
    %v5672 = vpack.c.bf16 %v5670, %v5670
    %5673 = vmatprep.subr.bf16.mxu0 %v2117
    %5674 = vmatpush1.bf16.msra.mxu0 %v2116
    %5675 = vmatprep.subr.bf16.mxu0 %v2125
    %5676 = vmatpush1.bf16.msra.mxu0 %v2124
    %5677 = vmatprep.subr.bf16.mxu0 %v2133
    %5678 = vmatpush1.bf16.msra.mxu0 %v2132
    %5679 = vmatprep.subr.bf16.mxu0 %v2141
    %5680 = vmatpush1.bf16.msra.mxu0 %v2140
    %5681 = vmatprep.subr.bf16.mxu0 %v2149
    %5682 = vmatpush1.bf16.msra.mxu0 %v2148
    %5683 = vmatprep.subr.bf16.mxu0 %v2157
    %5684 = vmatpush1.bf16.msra.mxu0 %v2156
    %5685 = vmatprep.subr.bf16.mxu0 %v2165
    %5686 = vmatpush1.bf16.msra.mxu0 %v2164
    %5687 = vmatprep.subr.bf16.mxu0 %v2173
    %5688 = vmatpush1.bf16.msra.mxu0 %v2172
    %5689 = vmatprep.subr.bf16.mxu0 %v2181
    %5690 = vmatpush1.bf16.msra.mxu0 %v2180
    %5691 = vmatprep.subr.bf16.mxu0 %v2189
    %5692 = vmatpush1.bf16.msra.mxu0 %v2188
    %5693 = vmatprep.subr.bf16.mxu0 %v2197
    %5694 = vmatpush1.bf16.msra.mxu0 %v2196
    %5695 = vmatprep.subr.bf16.mxu0 %v2205
    %5696 = vmatpush1.bf16.msra.mxu0 %v2204
    %5697 = vmatprep.subr.bf16.mxu0 %v2213
    %5698 = vmatpush1.bf16.msra.mxu0 %v2212
    %5699 = vmatprep.subr.bf16.mxu0 %v2221
    %5700 = vmatpush1.bf16.msra.mxu0 %v2220
    %5701 = vmatprep.subr.bf16.mxu0 %v2229
    %5702 = vmatpush1.bf16.msra.mxu0 %v2228
    %5703 = vmatprep.subr.bf16.mxu0 %v2237
    %5704 = vmatpush1.bf16.msra.mxu0 %v2236
    %5705 = vmatprep.mubr.bf16.mxu0 %v5672
    %5706 = vmatmul.mubr.bf16.gmra.mrb[0].mxu0 %v5671
    %v5707 = vpop.f32.mrb[0].mxu0
    %v5708 = vadd.f32 %v1311, %v5707
    %v5709 = vpop.f32.mrb[0].mxu0
    %v5710 = vadd.f32 %v1315, %v5709
    %v5711 = vpop.f32.mrb[0].mxu0
    %v5712 = vpop.f32.mrb[0].mxu0
    %5713 = vdwg.mxu0
    %5714 = vmatprep.subr.bf16.mxu0 %v2245
    %5715 = vmatpush1.bf16.msra.mxu0 %v2244
    %5716 = vmatprep.subr.bf16.mxu0 %v2253
    %5717 = vmatpush1.bf16.msra.mxu0 %v2252
    %5718 = vmatprep.subr.bf16.mxu0 %v2261
    %5719 = vmatpush1.bf16.msra.mxu0 %v2260
    %5720 = vmatprep.subr.bf16.mxu0 %v2269
    %5721 = vmatpush1.bf16.msra.mxu0 %v2268
    %5722 = vmatprep.subr.bf16.mxu0 %v2277
    %5723 = vmatpush1.bf16.msra.mxu0 %v2276
    %5724 = vmatprep.subr.bf16.mxu0 %v2285
    %5725 = vmatpush1.bf16.msra.mxu0 %v2284
    %5726 = vmatprep.subr.bf16.mxu0 %v2293
    %5727 = vmatpush1.bf16.msra.mxu0 %v2292
    %5728 = vmatprep.subr.bf16.mxu0 %v2301
    %5729 = vmatpush1.bf16.msra.mxu0 %v2300
    %5730 = vmatprep.subr.bf16.mxu0 %v2309
    %5731 = vmatpush1.bf16.msra.mxu0 %v2308
    %5732 = vmatprep.subr.bf16.mxu0 %v2317
    %5733 = vmatpush1.bf16.msra.mxu0 %v2316
    %5734 = vmatprep.subr.bf16.mxu0 %v2325
    %5735 = vmatpush1.bf16.msra.mxu0 %v2324
    %5736 = vmatprep.subr.bf16.mxu0 %v2333
    %5737 = vmatpush1.bf16.msra.mxu0 %v2332
    %5738 = vmatprep.subr.bf16.mxu0 %v2341
    %5739 = vmatpush1.bf16.msra.mxu0 %v2340
    %5740 = vmatprep.subr.bf16.mxu0 %v2349
    %5741 = vmatpush1.bf16.msra.mxu0 %v2348
    %5742 = vmatprep.subr.bf16.mxu0 %v2357
    %5743 = vmatpush1.bf16.msra.mxu0 %v2356
    %5744 = vmatprep.subr.bf16.mxu0 %v2365
    %5745 = vmatpush1.bf16.msra.mxu0 %v2364
    %5746 = vmatprep.mubr.bf16.mxu0 %v5441
    %5747 = vmatmul.mubr.bf16.gmra.mrb[0].mxu0 %v5440
    %v5748 = vpop.f32.mrb[0].mxu0
    %v5749 = vadd.f32 %v5708, %v5748
    %v5750 = vpop.f32.mrb[0].mxu0
    %v5751 = vadd.f32 %v5710, %v5750
    %v5752 = vpop.f32.mrb[0].mxu0
    %v5753 = vpop.f32.mrb[0].mxu0
    %5754 = vdwg.mxu0
    %5755 = vmatprep.subr.bf16.mxu0 %v2119
    %5756 = vmatpush1.bf16.msra.mxu0 %v2118
    %5757 = vmatprep.subr.bf16.mxu0 %v2127
    %5758 = vmatpush1.bf16.msra.mxu0 %v2126
    %5759 = vmatprep.subr.bf16.mxu0 %v2135
    %5760 = vmatpush1.bf16.msra.mxu0 %v2134
    %5761 = vmatprep.subr.bf16.mxu0 %v2143
    %5762 = vmatpush1.bf16.msra.mxu0 %v2142
    %5763 = vmatprep.subr.bf16.mxu0 %v2151
    %5764 = vmatpush1.bf16.msra.mxu0 %v2150
    %5765 = vmatprep.subr.bf16.mxu0 %v2159
    %5766 = vmatpush1.bf16.msra.mxu0 %v2158
    %5767 = vmatprep.subr.bf16.mxu0 %v2167
    %5768 = vmatpush1.bf16.msra.mxu0 %v2166
    %5769 = vmatprep.subr.bf16.mxu0 %v2175
    %5770 = vmatpush1.bf16.msra.mxu0 %v2174
    %5771 = vmatprep.subr.bf16.mxu0 %v2183
    %5772 = vmatpush1.bf16.msra.mxu0 %v2182
    %5773 = vmatprep.subr.bf16.mxu0 %v2191
    %5774 = vmatpush1.bf16.msra.mxu0 %v2190
    %5775 = vmatprep.subr.bf16.mxu0 %v2199
    %5776 = vmatpush1.bf16.msra.mxu0 %v2198
    %5777 = vmatprep.subr.bf16.mxu0 %v2207
    %5778 = vmatpush1.bf16.msra.mxu0 %v2206
    %5779 = vmatprep.subr.bf16.mxu0 %v2215
    %5780 = vmatpush1.bf16.msra.mxu0 %v2214
    %5781 = vmatprep.subr.bf16.mxu0 %v2223
    %5782 = vmatpush1.bf16.msra.mxu0 %v2222
    %5783 = vmatprep.subr.bf16.mxu0 %v2231
    %5784 = vmatpush1.bf16.msra.mxu0 %v2230
    %5785 = vmatprep.subr.bf16.mxu0 %v2239
    %5786 = vmatpush1.bf16.msra.mxu0 %v2238
    %5787 = vmatprep.mubr.bf16.mxu0 %v5672
    %5788 = vmatmul.mubr.bf16.gmra.mrb[0].mxu0 %v5671
    %v5789 = vpop.f32.mrb[0].mxu0
    %v5790 = vadd.f32 %v1319, %v5789
    %v5791 = vpop.f32.mrb[0].mxu0
    %v5792 = vadd.f32 %v1323, %v5791
    %v5793 = vpop.f32.mrb[0].mxu0
    %v5794 = vpop.f32.mrb[0].mxu0
    %5795 = vdwg.mxu0
    %5796 = vmatprep.subr.bf16.mxu0 %v2247
    %5797 = vmatpush1.bf16.msra.mxu0 %v2246
    %5798 = vmatprep.subr.bf16.mxu0 %v2255
    %5799 = vmatpush1.bf16.msra.mxu0 %v2254
    %5800 = vmatprep.subr.bf16.mxu0 %v2263
    %5801 = vmatpush1.bf16.msra.mxu0 %v2262
    %5802 = vmatprep.subr.bf16.mxu0 %v2271
    %5803 = vmatpush1.bf16.msra.mxu0 %v2270
    %5804 = vmatprep.subr.bf16.mxu0 %v2279
    %5805 = vmatpush1.bf16.msra.mxu0 %v2278
    %5806 = vmatprep.subr.bf16.mxu0 %v2287
    %5807 = vmatpush1.bf16.msra.mxu0 %v2286
    %5808 = vmatprep.subr.bf16.mxu0 %v2295
    %5809 = vmatpush1.bf16.msra.mxu0 %v2294
    %5810 = vmatprep.subr.bf16.mxu0 %v2303
    %5811 = vmatpush1.bf16.msra.mxu0 %v2302
    %5812 = vmatprep.subr.bf16.mxu0 %v2311
    %5813 = vmatpush1.bf16.msra.mxu0 %v2310
    %5814 = vmatprep.subr.bf16.mxu0 %v2319
    %5815 = vmatpush1.bf16.msra.mxu0 %v2318
    %5816 = vmatprep.subr.bf16.mxu0 %v2327
    %5817 = vmatpush1.bf16.msra.mxu0 %v2326
    %5818 = vmatprep.subr.bf16.mxu0 %v2335
    %5819 = vmatpush1.bf16.msra.mxu0 %v2334
    %5820 = vmatprep.subr.bf16.mxu0 %v2343
    %5821 = vmatpush1.bf16.msra.mxu0 %v2342
    %5822 = vmatprep.subr.bf16.mxu0 %v2351
    %5823 = vmatpush1.bf16.msra.mxu0 %v2350
    %5824 = vmatprep.subr.bf16.mxu0 %v2359
    %5825 = vmatpush1.bf16.msra.mxu0 %v2358
    %5826 = vmatprep.subr.bf16.mxu0 %v2367
    %5827 = vmatpush1.bf16.msra.mxu0 %v2366
    %5828 = vmatprep.mubr.bf16.mxu0 %v5441
    %5829 = vmatmul.mubr.bf16.gmra.mrb[0].mxu0 %v5440
    %v5830 = vpop.f32.mrb[0].mxu0
    %v5831 = vadd.f32 %v5790, %v5830
    %v5832 = vpop.f32.mrb[0].mxu0
    %v5833 = vadd.f32 %v5792, %v5832
    %v5834 = vpop.f32.mrb[0].mxu0
    %v5835 = vpop.f32.mrb[0].mxu0
    %5836 = vdwg.mxu0
    %5837 = vmatprep.subr.bf16.mxu0 %v2121
    %5838 = vmatpush1.bf16.msra.mxu0 %v2120
    %5839 = vmatprep.subr.bf16.mxu0 %v2129
    %5840 = vmatpush1.bf16.msra.mxu0 %v2128
    %5841 = vmatprep.subr.bf16.mxu0 %v2137
    %5842 = vmatpush1.bf16.msra.mxu0 %v2136
    %5843 = vmatprep.subr.bf16.mxu0 %v2145
    %5844 = vmatpush1.bf16.msra.mxu0 %v2144
    %5845 = vmatprep.subr.bf16.mxu0 %v2153
    %5846 = vmatpush1.bf16.msra.mxu0 %v2152
    %5847 = vmatprep.subr.bf16.mxu0 %v2161
    %5848 = vmatpush1.bf16.msra.mxu0 %v2160
    %5849 = vmatprep.subr.bf16.mxu0 %v2169
    %5850 = vmatpush1.bf16.msra.mxu0 %v2168
    %5851 = vmatprep.subr.bf16.mxu0 %v2177
    %5852 = vmatpush1.bf16.msra.mxu0 %v2176
    %5853 = vmatprep.subr.bf16.mxu0 %v2185
    %5854 = vmatpush1.bf16.msra.mxu0 %v2184
    %5855 = vmatprep.subr.bf16.mxu0 %v2193
    %5856 = vmatpush1.bf16.msra.mxu0 %v2192
    %5857 = vmatprep.subr.bf16.mxu0 %v2201
    %5858 = vmatpush1.bf16.msra.mxu0 %v2200
    %5859 = vmatprep.subr.bf16.mxu0 %v2209
    %5860 = vmatpush1.bf16.msra.mxu0 %v2208
    %5861 = vmatprep.subr.bf16.mxu0 %v2217
    %5862 = vmatpush1.bf16.msra.mxu0 %v2216
    %5863 = vmatprep.subr.bf16.mxu0 %v2225
    %5864 = vmatpush1.bf16.msra.mxu0 %v2224
    %5865 = vmatprep.subr.bf16.mxu0 %v2233
    %5866 = vmatpush1.bf16.msra.mxu0 %v2232
    %5867 = vmatprep.subr.bf16.mxu0 %v2241
    %5868 = vmatpush1.bf16.msra.mxu0 %v2240
    %5869 = vmatprep.mubr.bf16.mxu0 %v5672
    %5870 = vmatmul.mubr.bf16.gmra.mrb[0].mxu0 %v5671
    %v5871 = vpop.f32.mrb[0].mxu0
    %v5872 = vadd.f32 %v1327, %v5871
    %v5873 = vpop.f32.mrb[0].mxu0
    %v5874 = vadd.f32 %v1331, %v5873
    %v5875 = vpop.f32.mrb[0].mxu0
    %v5876 = vpop.f32.mrb[0].mxu0
    %5877 = vdwg.mxu0
    %5878 = vmatprep.subr.bf16.mxu0 %v2249
    %5879 = vmatpush1.bf16.msra.mxu0 %v2248
    %5880 = vmatprep.subr.bf16.mxu0 %v2257
    %5881 = vmatpush1.bf16.msra.mxu0 %v2256
    %5882 = vmatprep.subr.bf16.mxu0 %v2265
    %5883 = vmatpush1.bf16.msra.mxu0 %v2264
    %5884 = vmatprep.subr.bf16.mxu0 %v2273
    %5885 = vmatpush1.bf16.msra.mxu0 %v2272
    %5886 = vmatprep.subr.bf16.mxu0 %v2281
    %5887 = vmatpush1.bf16.msra.mxu0 %v2280
    %5888 = vmatprep.subr.bf16.mxu0 %v2289
    %5889 = vmatpush1.bf16.msra.mxu0 %v2288
    %5890 = vmatprep.subr.bf16.mxu0 %v2297
    %5891 = vmatpush1.bf16.msra.mxu0 %v2296
    %5892 = vmatprep.subr.bf16.mxu0 %v2305
    %5893 = vmatpush1.bf16.msra.mxu0 %v2304
    %5894 = vmatprep.subr.bf16.mxu0 %v2313
    %5895 = vmatpush1.bf16.msra.mxu0 %v2312
    %5896 = vmatprep.subr.bf16.mxu0 %v2321
    %5897 = vmatpush1.bf16.msra.mxu0 %v2320
    %5898 = vmatprep.subr.bf16.mxu0 %v2329
    %5899 = vmatpush1.bf16.msra.mxu0 %v2328
    %5900 = vmatprep.subr.bf16.mxu0 %v2337
    %5901 = vmatpush1.bf16.msra.mxu0 %v2336
    %5902 = vmatprep.subr.bf16.mxu0 %v2345
    %5903 = vmatpush1.bf16.msra.mxu0 %v2344
    %5904 = vmatprep.subr.bf16.mxu0 %v2353
    %5905 = vmatpush1.bf16.msra.mxu0 %v2352
    %5906 = vmatprep.subr.bf16.mxu0 %v2361
    %5907 = vmatpush1.bf16.msra.mxu0 %v2360
    %5908 = vmatprep.subr.bf16.mxu0 %v2369
    %5909 = vmatpush1.bf16.msra.mxu0 %v2368
    %5910 = vmatprep.mubr.bf16.mxu0 %v5441
    %5911 = vmatmul.mubr.bf16.gmra.mrb[0].mxu0 %v5440
    %v5912 = vpop.f32.mrb[0].mxu0
    %v5913 = vadd.f32 %v5872, %v5912
    %v5914 = vpop.f32.mrb[0].mxu0
    %v5915 = vadd.f32 %v5874, %v5914
    %v5916 = vpop.f32.mrb[0].mxu0
    %v5917 = vpop.f32.mrb[0].mxu0
    %5918 = vdwg.mxu0
    %5919 = vmatprep.subr.bf16.mxu0 %v2123
    %5920 = vmatpush1.bf16.msra.mxu0 %v2122
    %5921 = vmatprep.subr.bf16.mxu0 %v2131
    %5922 = vmatpush1.bf16.msra.mxu0 %v2130
    %5923 = vmatprep.subr.bf16.mxu0 %v2139
    %5924 = vmatpush1.bf16.msra.mxu0 %v2138
    %5925 = vmatprep.subr.bf16.mxu0 %v2147
    %5926 = vmatpush1.bf16.msra.mxu0 %v2146
    %5927 = vmatprep.subr.bf16.mxu0 %v2155
    %5928 = vmatpush1.bf16.msra.mxu0 %v2154
    %5929 = vmatprep.subr.bf16.mxu0 %v2163
    %5930 = vmatpush1.bf16.msra.mxu0 %v2162
    %5931 = vmatprep.subr.bf16.mxu0 %v2171
    %5932 = vmatpush1.bf16.msra.mxu0 %v2170
    %5933 = vmatprep.subr.bf16.mxu0 %v2179
    %5934 = vmatpush1.bf16.msra.mxu0 %v2178
    %5935 = vmatprep.subr.bf16.mxu0 %v2187
    %5936 = vmatpush1.bf16.msra.mxu0 %v2186
    %5937 = vmatprep.subr.bf16.mxu0 %v2195
    %5938 = vmatpush1.bf16.msra.mxu0 %v2194
    %5939 = vmatprep.subr.bf16.mxu0 %v2203
    %5940 = vmatpush1.bf16.msra.mxu0 %v2202
    %5941 = vmatprep.subr.bf16.mxu0 %v2211
    %5942 = vmatpush1.bf16.msra.mxu0 %v2210
    %5943 = vmatprep.subr.bf16.mxu0 %v2219
    %5944 = vmatpush1.bf16.msra.mxu0 %v2218
    %5945 = vmatprep.subr.bf16.mxu0 %v2227
    %5946 = vmatpush1.bf16.msra.mxu0 %v2226
    %5947 = vmatprep.subr.bf16.mxu0 %v2235
    %5948 = vmatpush1.bf16.msra.mxu0 %v2234
    %5949 = vmatprep.subr.bf16.mxu0 %v2243
    %5950 = vmatpush1.bf16.msra.mxu0 %v2242
    %5951 = vmatprep.mubr.bf16.mxu0 %v5672
    %5952 = vmatmul.mubr.bf16.gmra.mrb[0].mxu0 %v5671
    %v5953 = vpop.f32.mrb[0].mxu0
    %v5954 = vadd.f32 %v1335, %v5953
    %v5955 = vpop.f32.mrb[0].mxu0
    %v5956 = vadd.f32 %v1339, %v5955
    %v5957 = vpop.f32.mrb[0].mxu0
    %v5958 = vpop.f32.mrb[0].mxu0
    %5959 = vdwg.mxu0
    %5960 = vmatprep.subr.bf16.mxu0 %v2251
    %5961 = vmatpush1.bf16.msra.mxu0 %v2250
    %5962 = vmatprep.subr.bf16.mxu0 %v2259
    %5963 = vmatpush1.bf16.msra.mxu0 %v2258
    %5964 = vmatprep.subr.bf16.mxu0 %v2267
    %5965 = vmatpush1.bf16.msra.mxu0 %v2266
    %5966 = vmatprep.subr.bf16.mxu0 %v2275
    %5967 = vmatpush1.bf16.msra.mxu0 %v2274
    %5968 = vmatprep.subr.bf16.mxu0 %v2283
    %5969 = vmatpush1.bf16.msra.mxu0 %v2282
    %5970 = vmatprep.subr.bf16.mxu0 %v2291
    %5971 = vmatpush1.bf16.msra.mxu0 %v2290
    %5972 = vmatprep.subr.bf16.mxu0 %v2299
    %5973 = vmatpush1.bf16.msra.mxu0 %v2298
    %5974 = vmatprep.subr.bf16.mxu0 %v2307
    %5975 = vmatpush1.bf16.msra.mxu0 %v2306
    %5976 = vmatprep.subr.bf16.mxu0 %v2315
    %5977 = vmatpush1.bf16.msra.mxu0 %v2314
    %5978 = vmatprep.subr.bf16.mxu0 %v2323
    %5979 = vmatpush1.bf16.msra.mxu0 %v2322
    %5980 = vmatprep.subr.bf16.mxu0 %v2331
    %5981 = vmatpush1.bf16.msra.mxu0 %v2330
    %5982 = vmatprep.subr.bf16.mxu0 %v2339
    %5983 = vmatpush1.bf16.msra.mxu0 %v2338
    %5984 = vmatprep.subr.bf16.mxu0 %v2347
    %5985 = vmatpush1.bf16.msra.mxu0 %v2346
    %5986 = vmatprep.subr.bf16.mxu0 %v2355
    %5987 = vmatpush1.bf16.msra.mxu0 %v2354
    %5988 = vmatprep.subr.bf16.mxu0 %v2363
    %5989 = vmatpush1.bf16.msra.mxu0 %v2362
    %5990 = vmatprep.subr.bf16.mxu0 %v2371
    %5991 = vmatpush1.bf16.msra.mxu0 %v2370
    %5992 = vmatprep.mubr.bf16.mxu0 %v5441
    %5993 = vmatmul.mubr.bf16.gmra.mrb[0].mxu0 %v5440
    %v5994 = vpop.f32.mrb[0].mxu0
    %v5995 = vadd.f32 %v5954, %v5994
    %v5996 = vpop.f32.mrb[0].mxu0
    %v5997 = vadd.f32 %v5956, %v5996
    %v5998 = vpop.f32.mrb[0].mxu0
    %v5999 = vpop.f32.mrb[0].mxu0
    %6000 = vdwg.mxu0
    %v6001 = vxor.u32 %v5749, 2147483648
    %v6002 = vxor.u32 %v5751, 2147483648
    %v6003 = vxor.u32 %v5831, 2147483648
    %v6004 = vxor.u32 %v5833, 2147483648
    %v6005 = vxor.u32 %v5913, 2147483648
    %v6006 = vxor.u32 %v5915, 2147483648
    %v6007 = vmul.f32 %v6001, 1.442695
    %v6008 = vpow.pop %v6007
    %v6009 = vmul.f32 %v6002, 1.442695
    %v6010 = vpow.pop %v6009
    %v6011 = vmul.f32 %v6003, 1.442695
    %v6012 = vpow.pop %v6011
    %v6013 = vmul.f32 %v6004, 1.442695
    %v6014 = vpow.pop %v6013
    %v6015 = vmul.f32 %v6005, 1.442695
    %v6016 = vpow.pop %v6015
    %v6017 = vmul.f32 %v6006, 1.442695
    %v6018 = vpow.pop %v6017
    %v6019 = vadd.f32 %v6008, 1.0
    %v6020 = vadd.f32 %v6010, 1.0
    %v6021 = vadd.f32 %v6012, 1.0
    %v6022 = vadd.f32 %v6014, 1.0
    %v6023 = vadd.f32 %v6016, 1.0
    %v6024 = vadd.f32 %v6018, 1.0
    %v6025 = vrcp.pop %v6019
    %v6026 = vmul.f32 1.0, %v6025
    %v6027 = vrcp.pop %v6020
    %v6028 = vmul.f32 1.0, %v6027
    %v6029 = vrcp.pop %v6021
    %v6030 = vmul.f32 1.0, %v6029
    %v6031 = vrcp.pop %v6022
    %v6032 = vmul.f32 1.0, %v6031
    %v6033 = vrcp.pop %v6023
    %v6034 = vmul.f32 1.0, %v6033
    %v6035 = vrcp.pop %v6024
    %v6036 = vmul.f32 1.0, %v6035
    %v6037 = vtanh.pop %v5995
    %v6038 = vtanh.pop %v5997
    %v6039 = vmul.f32 %v6030, %v5434
    %v6040 = vmul.f32 %v6032, %v5435
    %v6041 = vmul.f32 %v6026, %v6037
    %v6042 = vmul.f32 %v6028, %v6038
    %v6043 = vadd.f32 %v6039, %v6041
    %v6044 = vadd.f32 %v6040, %v6042
    %v6045 = vtanh.pop %v6043
    %v6046 = vtanh.pop %v6044
    %v6047 = vmul.f32 %v6034, %v6045
    %v6048 = vmul.f32 %v6036, %v6046
    %v6049 = vpack.c.bf16 %v6047, %v6047
    %v6050 = vpack.c.bf16 %v6048, %v6048
    %s6051 = scalar_lea.vmem %s0, 384
    %v6052 = vld [vmem:[%s6051] sm:$0xff]
    %v6053 = vld [vmem:[%s6051 + $0x8] sm:$0xff]
    %v6054 = vld [vmem:[%s6051 + $0x10] sm:$0xff]
    %v6055 = vld [vmem:[%s6051 + $0x18] sm:$0xff]
    %v6056 = vld [vmem:[%s6051 + $0x20] sm:$0xff]
    %v6057 = vld [vmem:[%s6051 + $0x28] sm:$0xff]
    %v6058 = vld [vmem:[%s6051 + $0x30] sm:$0xff]
    %v6059 = vld [vmem:[%s6051 + $0x38] sm:$0xff]
    %6060 = vmatprep.subr.bf16.mxu0 %v830
    %6061 = vmatpush1.bf16.msra.mxu0 %v829
    %6062 = vmatprep.subr.bf16.mxu0 %v838
    %6063 = vmatpush1.bf16.msra.mxu0 %v837
    %6064 = vmatprep.subr.bf16.mxu0 %v846
    %6065 = vmatpush1.bf16.msra.mxu0 %v845
    %6066 = vmatprep.subr.bf16.mxu0 %v854
    %6067 = vmatpush1.bf16.msra.mxu0 %v853
    %6068 = vmatprep.subr.bf16.mxu0 %v862
    %6069 = vmatpush1.bf16.msra.mxu0 %v861
    %6070 = vmatprep.subr.bf16.mxu0 %v870
    %6071 = vmatpush1.bf16.msra.mxu0 %v869
    %6072 = vmatprep.subr.bf16.mxu0 %v878
    %6073 = vmatpush1.bf16.msra.mxu0 %v877
    %6074 = vmatprep.subr.bf16.mxu0 %v886
    %6075 = vmatpush1.bf16.msra.mxu0 %v885
    %6076 = vmatprep.subr.bf16.mxu0 %v894
    %6077 = vmatpush1.bf16.msra.mxu0 %v893
    %6078 = vmatprep.subr.bf16.mxu0 %v902
    %6079 = vmatpush1.bf16.msra.mxu0 %v901
    %6080 = vmatprep.subr.bf16.mxu0 %v910
    %6081 = vmatpush1.bf16.msra.mxu0 %v909
    %6082 = vmatprep.subr.bf16.mxu0 %v918
    %6083 = vmatpush1.bf16.msra.mxu0 %v917
    %6084 = vmatprep.subr.bf16.mxu0 %v926
    %6085 = vmatpush1.bf16.msra.mxu0 %v925
    %6086 = vmatprep.subr.bf16.mxu0 %v934
    %6087 = vmatpush1.bf16.msra.mxu0 %v933
    %6088 = vmatprep.subr.bf16.mxu0 %v942
    %6089 = vmatpush1.bf16.msra.mxu0 %v941
    %6090 = vmatprep.subr.bf16.mxu0 %v950
    %6091 = vmatpush1.bf16.msra.mxu0 %v949
    %6092 = vmatprep.mubr.bf16.mxu0 %v5672
    %6093 = vmatmul.mubr.bf16.gmra.mrb[0].mxu0 %v5671
    %v6094 = vpop.f32.mrb[0].mxu0
    %v6095 = vadd.f32 0.0, %v6094
    %v6096 = vpop.f32.mrb[0].mxu0
    %v6097 = vadd.f32 0.0, %v6096
    %v6098 = vpop.f32.mrb[0].mxu0
    %v6099 = vpop.f32.mrb[0].mxu0
    %6100 = vdwg.mxu0
    %6101 = vmatprep.subr.bf16.mxu0 %v832
    %6102 = vmatpush1.bf16.msra.mxu0 %v831
    %6103 = vmatprep.subr.bf16.mxu0 %v840
    %6104 = vmatpush1.bf16.msra.mxu0 %v839
    %6105 = vmatprep.subr.bf16.mxu0 %v848
    %6106 = vmatpush1.bf16.msra.mxu0 %v847
    %6107 = vmatprep.subr.bf16.mxu0 %v856
    %6108 = vmatpush1.bf16.msra.mxu0 %v855
    %6109 = vmatprep.subr.bf16.mxu0 %v864
    %6110 = vmatpush1.bf16.msra.mxu0 %v863
    %6111 = vmatprep.subr.bf16.mxu0 %v872
    %6112 = vmatpush1.bf16.msra.mxu0 %v871
    %6113 = vmatprep.subr.bf16.mxu0 %v880
    %6114 = vmatpush1.bf16.msra.mxu0 %v879
    %6115 = vmatprep.subr.bf16.mxu0 %v888
    %6116 = vmatpush1.bf16.msra.mxu0 %v887
    %6117 = vmatprep.subr.bf16.mxu0 %v896
    %6118 = vmatpush1.bf16.msra.mxu0 %v895
    %6119 = vmatprep.subr.bf16.mxu0 %v904
    %6120 = vmatpush1.bf16.msra.mxu0 %v903
    %6121 = vmatprep.subr.bf16.mxu0 %v912
    %6122 = vmatpush1.bf16.msra.mxu0 %v911
    %6123 = vmatprep.subr.bf16.mxu0 %v920
    %6124 = vmatpush1.bf16.msra.mxu0 %v919
    %6125 = vmatprep.subr.bf16.mxu0 %v928
    %6126 = vmatpush1.bf16.msra.mxu0 %v927
    %6127 = vmatprep.subr.bf16.mxu0 %v936
    %6128 = vmatpush1.bf16.msra.mxu0 %v935
    %6129 = vmatprep.subr.bf16.mxu0 %v944
    %6130 = vmatpush1.bf16.msra.mxu0 %v943
    %6131 = vmatprep.subr.bf16.mxu0 %v952
    %6132 = vmatpush1.bf16.msra.mxu0 %v951
    %6133 = vmatprep.mubr.bf16.mxu0 %v5672
    %6134 = vmatmul.mubr.bf16.gmra.mrb[0].mxu0 %v5671
    %v6135 = vpop.f32.mrb[0].mxu0
    %v6136 = vadd.f32 0.0, %v6135
    %v6137 = vpop.f32.mrb[0].mxu0
    %v6138 = vadd.f32 0.0, %v6137
    %v6139 = vpop.f32.mrb[0].mxu0
    %v6140 = vpop.f32.mrb[0].mxu0
    %6141 = vdwg.mxu0
    %6142 = vmatprep.subr.bf16.mxu0 %v834
    %6143 = vmatpush1.bf16.msra.mxu0 %v833
    %6144 = vmatprep.subr.bf16.mxu0 %v842
    %6145 = vmatpush1.bf16.msra.mxu0 %v841
    %6146 = vmatprep.subr.bf16.mxu0 %v850
    %6147 = vmatpush1.bf16.msra.mxu0 %v849
    %6148 = vmatprep.subr.bf16.mxu0 %v858
    %6149 = vmatpush1.bf16.msra.mxu0 %v857
    %6150 = vmatprep.subr.bf16.mxu0 %v866
    %6151 = vmatpush1.bf16.msra.mxu0 %v865
    %6152 = vmatprep.subr.bf16.mxu0 %v874
    %6153 = vmatpush1.bf16.msra.mxu0 %v873
    %6154 = vmatprep.subr.bf16.mxu0 %v882
    %6155 = vmatpush1.bf16.msra.mxu0 %v881
    %6156 = vmatprep.subr.bf16.mxu0 %v890
    %6157 = vmatpush1.bf16.msra.mxu0 %v889
    %6158 = vmatprep.subr.bf16.mxu0 %v898
    %6159 = vmatpush1.bf16.msra.mxu0 %v897
    %6160 = vmatprep.subr.bf16.mxu0 %v906
    %6161 = vmatpush1.bf16.msra.mxu0 %v905
    %6162 = vmatprep.subr.bf16.mxu0 %v914
    %6163 = vmatpush1.bf16.msra.mxu0 %v913
    %6164 = vmatprep.subr.bf16.mxu0 %v922
    %6165 = vmatpush1.bf16.msra.mxu0 %v921
    %6166 = vmatprep.subr.bf16.mxu0 %v930
    %6167 = vmatpush1.bf16.msra.mxu0 %v929
    %6168 = vmatprep.subr.bf16.mxu0 %v938
    %6169 = vmatpush1.bf16.msra.mxu0 %v937
    %6170 = vmatprep.subr.bf16.mxu0 %v946
    %6171 = vmatpush1.bf16.msra.mxu0 %v945
    %6172 = vmatprep.subr.bf16.mxu0 %v954
    %6173 = vmatpush1.bf16.msra.mxu0 %v953
    %6174 = vmatprep.mubr.bf16.mxu0 %v5672
    %6175 = vmatmul.mubr.bf16.gmra.mrb[0].mxu0 %v5671
    %v6176 = vpop.f32.mrb[0].mxu0
    %v6177 = vadd.f32 0.0, %v6176
    %v6178 = vpop.f32.mrb[0].mxu0
    %v6179 = vadd.f32 0.0, %v6178
    %v6180 = vpop.f32.mrb[0].mxu0
    %v6181 = vpop.f32.mrb[0].mxu0
    %6182 = vdwg.mxu0
    %6183 = vmatprep.subr.bf16.mxu0 %v836
    %6184 = vmatpush1.bf16.msra.mxu0 %v835
    %6185 = vmatprep.subr.bf16.mxu0 %v844
    %6186 = vmatpush1.bf16.msra.mxu0 %v843
    %6187 = vmatprep.subr.bf16.mxu0 %v852
    %6188 = vmatpush1.bf16.msra.mxu0 %v851
    %6189 = vmatprep.subr.bf16.mxu0 %v860
    %6190 = vmatpush1.bf16.msra.mxu0 %v859
    %6191 = vmatprep.subr.bf16.mxu0 %v868
    %6192 = vmatpush1.bf16.msra.mxu0 %v867
    %6193 = vmatprep.subr.bf16.mxu0 %v876
    %6194 = vmatpush1.bf16.msra.mxu0 %v875
    %6195 = vmatprep.subr.bf16.mxu0 %v884
    %6196 = vmatpush1.bf16.msra.mxu0 %v883
    %6197 = vmatprep.subr.bf16.mxu0 %v892
    %6198 = vmatpush1.bf16.msra.mxu0 %v891
    %6199 = vmatprep.subr.bf16.mxu0 %v900
    %6200 = vmatpush1.bf16.msra.mxu0 %v899
    %6201 = vmatprep.subr.bf16.mxu0 %v908
    %6202 = vmatpush1.bf16.msra.mxu0 %v907
    %6203 = vmatprep.subr.bf16.mxu0 %v916
    %6204 = vmatpush1.bf16.msra.mxu0 %v915
    %6205 = vmatprep.subr.bf16.mxu0 %v924
    %6206 = vmatpush1.bf16.msra.mxu0 %v923
    %6207 = vmatprep.subr.bf16.mxu0 %v932
    %6208 = vmatpush1.bf16.msra.mxu0 %v931
    %6209 = vmatprep.subr.bf16.mxu0 %v940
    %6210 = vmatpush1.bf16.msra.mxu0 %v939
    %6211 = vmatprep.subr.bf16.mxu0 %v948
    %6212 = vmatpush1.bf16.msra.mxu0 %v947
    %6213 = vmatprep.subr.bf16.mxu0 %v956
    %6214 = vmatpush1.bf16.msra.mxu0 %v955
    %6215 = vmatprep.mubr.bf16.mxu0 %v5672
    %6216 = vmatmul.mubr.bf16.gmra.mrb[0].mxu0 %v5671
    %v6217 = vpop.f32.mrb[0].mxu0
    %v6218 = vadd.f32 0.0, %v6217
    %v6219 = vpop.f32.mrb[0].mxu0
    %v6220 = vadd.f32 0.0, %v6219
    %v6221 = vpop.f32.mrb[0].mxu0
    %v6222 = vpop.f32.mrb[0].mxu0
    %6223 = vdwg.mxu0
    %v6224 = vadd.f32 %v6052, %v6095
    %v6225 = vadd.f32 %v6053, %v6097
    %v6226 = vadd.f32 %v6054, %v6136
    %v6227 = vadd.f32 %v6055, %v6138
    %v6228 = vadd.f32 %v6056, %v6177
    %v6229 = vadd.f32 %v6057, %v6179
    %v6230 = vadd.f32 %v6058, %v6218
    %v6231 = vadd.f32 %v6059, %v6220
    %v6232 = vxor.u32 %v6224, 2147483648
    %v6233 = vxor.u32 %v6225, 2147483648
    %v6234 = vxor.u32 %v6226, 2147483648
    %v6235 = vxor.u32 %v6227, 2147483648
    %v6236 = vxor.u32 %v6228, 2147483648
    %v6237 = vxor.u32 %v6229, 2147483648
    %v6238 = vmul.f32 %v6232, 1.442695
    %v6239 = vpow.pop %v6238
    %v6240 = vmul.f32 %v6233, 1.442695
    %v6241 = vpow.pop %v6240
    %v6242 = vmul.f32 %v6234, 1.442695
    %v6243 = vpow.pop %v6242
    %v6244 = vmul.f32 %v6235, 1.442695
    %v6245 = vpow.pop %v6244
    %v6246 = vmul.f32 %v6236, 1.442695
    %v6247 = vpow.pop %v6246
    %v6248 = vmul.f32 %v6237, 1.442695
    %v6249 = vpow.pop %v6248
    %v6250 = vadd.f32 %v6239, 1.0
    %v6251 = vadd.f32 %v6241, 1.0
    %v6252 = vadd.f32 %v6243, 1.0
    %v6253 = vadd.f32 %v6245, 1.0
    %v6254 = vadd.f32 %v6247, 1.0
    %v6255 = vadd.f32 %v6249, 1.0
    %v6256 = vrcp.pop %v6250
    %v6257 = vmul.f32 1.0, %v6256
    %v6258 = vrcp.pop %v6251
    %v6259 = vmul.f32 1.0, %v6258
    %v6260 = vrcp.pop %v6252
    %v6261 = vmul.f32 1.0, %v6260
    %v6262 = vrcp.pop %v6253
    %v6263 = vmul.f32 1.0, %v6262
    %v6264 = vrcp.pop %v6254
    %v6265 = vmul.f32 1.0, %v6264
    %v6266 = vrcp.pop %v6255
    %v6267 = vmul.f32 1.0, %v6266
    %v6268 = vtanh.pop %v6230
    %v6269 = vtanh.pop %v6231
    %v6270 = vmul.f32 %v6261, %v5665
    %v6271 = vmul.f32 %v6263, %v5666
    %v6272 = vmul.f32 %v6257, %v6268
    %v6273 = vmul.f32 %v6259, %v6269
    %v6274 = vadd.f32 %v6270, %v6272
    %v6275 = vadd.f32 %v6271, %v6273
    %v6276 = vtanh.pop %v6274
    %v6277 = vtanh.pop %v6275
    %v6278 = vmul.f32 %v6265, %v6276
    %v6279 = vmul.f32 %v6267, %v6277
    %v6280 = vpack.c.bf16 %v6278, %v6278
    %v6281 = vpack.c.bf16 %v6279, %v6279
    %6282 = vmatprep.subr.bf16.mxu0 %v2117
    %6283 = vmatpush1.bf16.msra.mxu0 %v2116
    %6284 = vmatprep.subr.bf16.mxu0 %v2125
    %6285 = vmatpush1.bf16.msra.mxu0 %v2124
    %6286 = vmatprep.subr.bf16.mxu0 %v2133
    %6287 = vmatpush1.bf16.msra.mxu0 %v2132
    %6288 = vmatprep.subr.bf16.mxu0 %v2141
    %6289 = vmatpush1.bf16.msra.mxu0 %v2140
    %6290 = vmatprep.subr.bf16.mxu0 %v2149
    %6291 = vmatpush1.bf16.msra.mxu0 %v2148
    %6292 = vmatprep.subr.bf16.mxu0 %v2157
    %6293 = vmatpush1.bf16.msra.mxu0 %v2156
    %6294 = vmatprep.subr.bf16.mxu0 %v2165
    %6295 = vmatpush1.bf16.msra.mxu0 %v2164
    %6296 = vmatprep.subr.bf16.mxu0 %v2173
    %6297 = vmatpush1.bf16.msra.mxu0 %v2172
    %6298 = vmatprep.subr.bf16.mxu0 %v2181
    %6299 = vmatpush1.bf16.msra.mxu0 %v2180
    %6300 = vmatprep.subr.bf16.mxu0 %v2189
    %6301 = vmatpush1.bf16.msra.mxu0 %v2188
    %6302 = vmatprep.subr.bf16.mxu0 %v2197
    %6303 = vmatpush1.bf16.msra.mxu0 %v2196
    %6304 = vmatprep.subr.bf16.mxu0 %v2205
    %6305 = vmatpush1.bf16.msra.mxu0 %v2204
    %6306 = vmatprep.subr.bf16.mxu0 %v2213
    %6307 = vmatpush1.bf16.msra.mxu0 %v2212
    %6308 = vmatprep.subr.bf16.mxu0 %v2221
    %6309 = vmatpush1.bf16.msra.mxu0 %v2220
    %6310 = vmatprep.subr.bf16.mxu0 %v2229
    %6311 = vmatpush1.bf16.msra.mxu0 %v2228
    %6312 = vmatprep.subr.bf16.mxu0 %v2237
    %6313 = vmatpush1.bf16.msra.mxu0 %v2236
    %6314 = vmatprep.mubr.bf16.mxu0 %v6281
    %6315 = vmatmul.mubr.bf16.gmra.mrb[0].mxu0 %v6280
    %v6316 = vpop.f32.mrb[0].mxu0
    %v6317 = vadd.f32 %v1311, %v6316
    %v6318 = vpop.f32.mrb[0].mxu0
    %v6319 = vadd.f32 %v1315, %v6318
    %v6320 = vpop.f32.mrb[0].mxu0
    %v6321 = vpop.f32.mrb[0].mxu0
    %6322 = vdwg.mxu0
    %6323 = vmatprep.subr.bf16.mxu0 %v2245
    %6324 = vmatpush1.bf16.msra.mxu0 %v2244
    %6325 = vmatprep.subr.bf16.mxu0 %v2253
    %6326 = vmatpush1.bf16.msra.mxu0 %v2252
    %6327 = vmatprep.subr.bf16.mxu0 %v2261
    %6328 = vmatpush1.bf16.msra.mxu0 %v2260
    %6329 = vmatprep.subr.bf16.mxu0 %v2269
    %6330 = vmatpush1.bf16.msra.mxu0 %v2268
    %6331 = vmatprep.subr.bf16.mxu0 %v2277
    %6332 = vmatpush1.bf16.msra.mxu0 %v2276
    %6333 = vmatprep.subr.bf16.mxu0 %v2285
    %6334 = vmatpush1.bf16.msra.mxu0 %v2284
    %6335 = vmatprep.subr.bf16.mxu0 %v2293
    %6336 = vmatpush1.bf16.msra.mxu0 %v2292
    %6337 = vmatprep.subr.bf16.mxu0 %v2301
    %6338 = vmatpush1.bf16.msra.mxu0 %v2300
    %6339 = vmatprep.subr.bf16.mxu0 %v2309
    %6340 = vmatpush1.bf16.msra.mxu0 %v2308
    %6341 = vmatprep.subr.bf16.mxu0 %v2317
    %6342 = vmatpush1.bf16.msra.mxu0 %v2316
    %6343 = vmatprep.subr.bf16.mxu0 %v2325
    %6344 = vmatpush1.bf16.msra.mxu0 %v2324
    %6345 = vmatprep.subr.bf16.mxu0 %v2333
    %6346 = vmatpush1.bf16.msra.mxu0 %v2332
    %6347 = vmatprep.subr.bf16.mxu0 %v2341
    %6348 = vmatpush1.bf16.msra.mxu0 %v2340
    %6349 = vmatprep.subr.bf16.mxu0 %v2349
    %6350 = vmatpush1.bf16.msra.mxu0 %v2348
    %6351 = vmatprep.subr.bf16.mxu0 %v2357
    %6352 = vmatpush1.bf16.msra.mxu0 %v2356
    %6353 = vmatprep.subr.bf16.mxu0 %v2365
    %6354 = vmatpush1.bf16.msra.mxu0 %v2364
    %6355 = vmatprep.mubr.bf16.mxu0 %v6050
    %6356 = vmatmul.mubr.bf16.gmra.mrb[0].mxu0 %v6049
    %v6357 = vpop.f32.mrb[0].mxu0
    %v6358 = vadd.f32 %v6317, %v6357
    %v6359 = vpop.f32.mrb[0].mxu0
    %v6360 = vadd.f32 %v6319, %v6359
    %v6361 = vpop.f32.mrb[0].mxu0
    %v6362 = vpop.f32.mrb[0].mxu0
    %6363 = vdwg.mxu0
    %6364 = vmatprep.subr.bf16.mxu0 %v2119
    %6365 = vmatpush1.bf16.msra.mxu0 %v2118
    %6366 = vmatprep.subr.bf16.mxu0 %v2127
    %6367 = vmatpush1.bf16.msra.mxu0 %v2126
    %6368 = vmatprep.subr.bf16.mxu0 %v2135
    %6369 = vmatpush1.bf16.msra.mxu0 %v2134
    %6370 = vmatprep.subr.bf16.mxu0 %v2143
    %6371 = vmatpush1.bf16.msra.mxu0 %v2142
    %6372 = vmatprep.subr.bf16.mxu0 %v2151
    %6373 = vmatpush1.bf16.msra.mxu0 %v2150
    %6374 = vmatprep.subr.bf16.mxu0 %v2159
    %6375 = vmatpush1.bf16.msra.mxu0 %v2158
    %6376 = vmatprep.subr.bf16.mxu0 %v2167
    %6377 = vmatpush1.bf16.msra.mxu0 %v2166
    %6378 = vmatprep.subr.bf16.mxu0 %v2175
    %6379 = vmatpush1.bf16.msra.mxu0 %v2174
    %6380 = vmatprep.subr.bf16.mxu0 %v2183
    %6381 = vmatpush1.bf16.msra.mxu0 %v2182
    %6382 = vmatprep.subr.bf16.mxu0 %v2191
    %6383 = vmatpush1.bf16.msra.mxu0 %v2190
    %6384 = vmatprep.subr.bf16.mxu0 %v2199
    %6385 = vmatpush1.bf16.msra.mxu0 %v2198
    %6386 = vmatprep.subr.bf16.mxu0 %v2207
    %6387 = vmatpush1.bf16.msra.mxu0 %v2206
    %6388 = vmatprep.subr.bf16.mxu0 %v2215
    %6389 = vmatpush1.bf16.msra.mxu0 %v2214
    %6390 = vmatprep.subr.bf16.mxu0 %v2223
    %6391 = vmatpush1.bf16.msra.mxu0 %v2222
    %6392 = vmatprep.subr.bf16.mxu0 %v2231
    %6393 = vmatpush1.bf16.msra.mxu0 %v2230
    %6394 = vmatprep.subr.bf16.mxu0 %v2239
    %6395 = vmatpush1.bf16.msra.mxu0 %v2238
    %6396 = vmatprep.mubr.bf16.mxu0 %v6281
    %6397 = vmatmul.mubr.bf16.gmra.mrb[0].mxu0 %v6280
    %v6398 = vpop.f32.mrb[0].mxu0
    %v6399 = vadd.f32 %v1319, %v6398
    %v6400 = vpop.f32.mrb[0].mxu0
    %v6401 = vadd.f32 %v1323, %v6400
    %v6402 = vpop.f32.mrb[0].mxu0
    %v6403 = vpop.f32.mrb[0].mxu0
    %6404 = vdwg.mxu0
    %6405 = vmatprep.subr.bf16.mxu0 %v2247
    %6406 = vmatpush1.bf16.msra.mxu0 %v2246
    %6407 = vmatprep.subr.bf16.mxu0 %v2255
    %6408 = vmatpush1.bf16.msra.mxu0 %v2254
    %6409 = vmatprep.subr.bf16.mxu0 %v2263
    %6410 = vmatpush1.bf16.msra.mxu0 %v2262
    %6411 = vmatprep.subr.bf16.mxu0 %v2271
    %6412 = vmatpush1.bf16.msra.mxu0 %v2270
    %6413 = vmatprep.subr.bf16.mxu0 %v2279
    %6414 = vmatpush1.bf16.msra.mxu0 %v2278
    %6415 = vmatprep.subr.bf16.mxu0 %v2287
    %6416 = vmatpush1.bf16.msra.mxu0 %v2286
    %6417 = vmatprep.subr.bf16.mxu0 %v2295
    %6418 = vmatpush1.bf16.msra.mxu0 %v2294
    %6419 = vmatprep.subr.bf16.mxu0 %v2303
    %6420 = vmatpush1.bf16.msra.mxu0 %v2302
    %6421 = vmatprep.subr.bf16.mxu0 %v2311
    %6422 = vmatpush1.bf16.msra.mxu0 %v2310
    %6423 = vmatprep.subr.bf16.mxu0 %v2319
    %6424 = vmatpush1.bf16.msra.mxu0 %v2318
    %6425 = vmatprep.subr.bf16.mxu0 %v2327
    %6426 = vmatpush1.bf16.msra.mxu0 %v2326
    %6427 = vmatprep.subr.bf16.mxu0 %v2335
    %6428 = vmatpush1.bf16.msra.mxu0 %v2334
    %6429 = vmatprep.subr.bf16.mxu0 %v2343
    %6430 = vmatpush1.bf16.msra.mxu0 %v2342
    %6431 = vmatprep.subr.bf16.mxu0 %v2351
    %6432 = vmatpush1.bf16.msra.mxu0 %v2350
    %6433 = vmatprep.subr.bf16.mxu0 %v2359
    %6434 = vmatpush1.bf16.msra.mxu0 %v2358
    %6435 = vmatprep.subr.bf16.mxu0 %v2367
    %6436 = vmatpush1.bf16.msra.mxu0 %v2366
    %6437 = vmatprep.mubr.bf16.mxu0 %v6050
    %6438 = vmatmul.mubr.bf16.gmra.mrb[0].mxu0 %v6049
    %v6439 = vpop.f32.mrb[0].mxu0
    %v6440 = vadd.f32 %v6399, %v6439
    %v6441 = vpop.f32.mrb[0].mxu0
    %v6442 = vadd.f32 %v6401, %v6441
    %v6443 = vpop.f32.mrb[0].mxu0
    %v6444 = vpop.f32.mrb[0].mxu0
    %6445 = vdwg.mxu0
    %6446 = vmatprep.subr.bf16.mxu0 %v2121
    %6447 = vmatpush1.bf16.msra.mxu0 %v2120
    %6448 = vmatprep.subr.bf16.mxu0 %v2129
    %6449 = vmatpush1.bf16.msra.mxu0 %v2128
    %6450 = vmatprep.subr.bf16.mxu0 %v2137
    %6451 = vmatpush1.bf16.msra.mxu0 %v2136
    %6452 = vmatprep.subr.bf16.mxu0 %v2145
    %6453 = vmatpush1.bf16.msra.mxu0 %v2144
    %6454 = vmatprep.subr.bf16.mxu0 %v2153
    %6455 = vmatpush1.bf16.msra.mxu0 %v2152
    %6456 = vmatprep.subr.bf16.mxu0 %v2161
    %6457 = vmatpush1.bf16.msra.mxu0 %v2160
    %6458 = vmatprep.subr.bf16.mxu0 %v2169
    %6459 = vmatpush1.bf16.msra.mxu0 %v2168
    %6460 = vmatprep.subr.bf16.mxu0 %v2177
    %6461 = vmatpush1.bf16.msra.mxu0 %v2176
    %6462 = vmatprep.subr.bf16.mxu0 %v2185
    %6463 = vmatpush1.bf16.msra.mxu0 %v2184
    %6464 = vmatprep.subr.bf16.mxu0 %v2193
    %6465 = vmatpush1.bf16.msra.mxu0 %v2192
    %6466 = vmatprep.subr.bf16.mxu0 %v2201
    %6467 = vmatpush1.bf16.msra.mxu0 %v2200
    %6468 = vmatprep.subr.bf16.mxu0 %v2209
    %6469 = vmatpush1.bf16.msra.mxu0 %v2208
    %6470 = vmatprep.subr.bf16.mxu0 %v2217
    %6471 = vmatpush1.bf16.msra.mxu0 %v2216
    %6472 = vmatprep.subr.bf16.mxu0 %v2225
    %6473 = vmatpush1.bf16.msra.mxu0 %v2224
    %6474 = vmatprep.subr.bf16.mxu0 %v2233
    %6475 = vmatpush1.bf16.msra.mxu0 %v2232
    %6476 = vmatprep.subr.bf16.mxu0 %v2241
    %6477 = vmatpush1.bf16.msra.mxu0 %v2240
    %6478 = vmatprep.mubr.bf16.mxu0 %v6281
    %6479 = vmatmul.mubr.bf16.gmra.mrb[0].mxu0 %v6280
    %v6480 = vpop.f32.mrb[0].mxu0
    %v6481 = vadd.f32 %v1327, %v6480
    %v6482 = vpop.f32.mrb[0].mxu0
    %v6483 = vadd.f32 %v1331, %v6482
    %v6484 = vpop.f32.mrb[0].mxu0
    %v6485 = vpop.f32.mrb[0].mxu0
    %6486 = vdwg.mxu0
    %6487 = vmatprep.subr.bf16.mxu0 %v2249
    %6488 = vmatpush1.bf16.msra.mxu0 %v2248
    %6489 = vmatprep.subr.bf16.mxu0 %v2257
    %6490 = vmatpush1.bf16.msra.mxu0 %v2256
    %6491 = vmatprep.subr.bf16.mxu0 %v2265
    %6492 = vmatpush1.bf16.msra.mxu0 %v2264
    %6493 = vmatprep.subr.bf16.mxu0 %v2273
    %6494 = vmatpush1.bf16.msra.mxu0 %v2272
    %6495 = vmatprep.subr.bf16.mxu0 %v2281
    %6496 = vmatpush1.bf16.msra.mxu0 %v2280
    %6497 = vmatprep.subr.bf16.mxu0 %v2289
    %6498 = vmatpush1.bf16.msra.mxu0 %v2288
    %6499 = vmatprep.subr.bf16.mxu0 %v2297
    %6500 = vmatpush1.bf16.msra.mxu0 %v2296
    %6501 = vmatprep.subr.bf16.mxu0 %v2305
    %6502 = vmatpush1.bf16.msra.mxu0 %v2304
    %6503 = vmatprep.subr.bf16.mxu0 %v2313
    %6504 = vmatpush1.bf16.msra.mxu0 %v2312
    %6505 = vmatprep.subr.bf16.mxu0 %v2321
    %6506 = vmatpush1.bf16.msra.mxu0 %v2320
    %6507 = vmatprep.subr.bf16.mxu0 %v2329
    %6508 = vmatpush1.bf16.msra.mxu0 %v2328
    %6509 = vmatprep.subr.bf16.mxu0 %v2337
    %6510 = vmatpush1.bf16.msra.mxu0 %v2336
    %6511 = vmatprep.subr.bf16.mxu0 %v2345
    %6512 = vmatpush1.bf16.msra.mxu0 %v2344
    %6513 = vmatprep.subr.bf16.mxu0 %v2353
    %6514 = vmatpush1.bf16.msra.mxu0 %v2352
    %6515 = vmatprep.subr.bf16.mxu0 %v2361
    %6516 = vmatpush1.bf16.msra.mxu0 %v2360
    %6517 = vmatprep.subr.bf16.mxu0 %v2369
    %6518 = vmatpush1.bf16.msra.mxu0 %v2368
    %6519 = vmatprep.mubr.bf16.mxu0 %v6050
    %6520 = vmatmul.mubr.bf16.gmra.mrb[0].mxu0 %v6049
    %v6521 = vpop.f32.mrb[0].mxu0
    %v6522 = vadd.f32 %v6481, %v6521
    %v6523 = vpop.f32.mrb[0].mxu0
    %v6524 = vadd.f32 %v6483, %v6523
    %v6525 = vpop.f32.mrb[0].mxu0
    %v6526 = vpop.f32.mrb[0].mxu0
    %6527 = vdwg.mxu0
    %6528 = vmatprep.subr.bf16.mxu0 %v2123
    %6529 = vmatpush1.bf16.msra.mxu0 %v2122
    %6530 = vmatprep.subr.bf16.mxu0 %v2131
    %6531 = vmatpush1.bf16.msra.mxu0 %v2130
    %6532 = vmatprep.subr.bf16.mxu0 %v2139
    %6533 = vmatpush1.bf16.msra.mxu0 %v2138
    %6534 = vmatprep.subr.bf16.mxu0 %v2147
    %6535 = vmatpush1.bf16.msra.mxu0 %v2146
    %6536 = vmatprep.subr.bf16.mxu0 %v2155
    %6537 = vmatpush1.bf16.msra.mxu0 %v2154
    %6538 = vmatprep.subr.bf16.mxu0 %v2163
    %6539 = vmatpush1.bf16.msra.mxu0 %v2162
    %6540 = vmatprep.subr.bf16.mxu0 %v2171
    %6541 = vmatpush1.bf16.msra.mxu0 %v2170
    %6542 = vmatprep.subr.bf16.mxu0 %v2179
    %6543 = vmatpush1.bf16.msra.mxu0 %v2178
    %6544 = vmatprep.subr.bf16.mxu0 %v2187
    %6545 = vmatpush1.bf16.msra.mxu0 %v2186
    %6546 = vmatprep.subr.bf16.mxu0 %v2195
    %6547 = vmatpush1.bf16.msra.mxu0 %v2194
    %6548 = vmatprep.subr.bf16.mxu0 %v2203
    %6549 = vmatpush1.bf16.msra.mxu0 %v2202
    %6550 = vmatprep.subr.bf16.mxu0 %v2211
    %6551 = vmatpush1.bf16.msra.mxu0 %v2210
    %6552 = vmatprep.subr.bf16.mxu0 %v2219
    %6553 = vmatpush1.bf16.msra.mxu0 %v2218
    %6554 = vmatprep.subr.bf16.mxu0 %v2227
    %6555 = vmatpush1.bf16.msra.mxu0 %v2226
    %6556 = vmatprep.subr.bf16.mxu0 %v2235
    %6557 = vmatpush1.bf16.msra.mxu0 %v2234
    %6558 = vmatprep.subr.bf16.mxu0 %v2243
    %6559 = vmatpush1.bf16.msra.mxu0 %v2242
    %6560 = vmatprep.mubr.bf16.mxu0 %v6281
    %6561 = vmatmul.mubr.bf16.gmra.mrb[0].mxu0 %v6280
    %v6562 = vpop.f32.mrb[0].mxu0
    %v6563 = vadd.f32 %v1335, %v6562
    %v6564 = vpop.f32.mrb[0].mxu0
    %v6565 = vadd.f32 %v1339, %v6564
    %v6566 = vpop.f32.mrb[0].mxu0
    %v6567 = vpop.f32.mrb[0].mxu0
    %6568 = vdwg.mxu0
    %6569 = vmatprep.subr.bf16.mxu0 %v2251
    %6570 = vmatpush1.bf16.msra.mxu0 %v2250
    %6571 = vmatprep.subr.bf16.mxu0 %v2259
    %6572 = vmatpush1.bf16.msra.mxu0 %v2258
    %6573 = vmatprep.subr.bf16.mxu0 %v2267
    %6574 = vmatpush1.bf16.msra.mxu0 %v2266
    %6575 = vmatprep.subr.bf16.mxu0 %v2275
    %6576 = vmatpush1.bf16.msra.mxu0 %v2274
    %6577 = vmatprep.subr.bf16.mxu0 %v2283
    %6578 = vmatpush1.bf16.msra.mxu0 %v2282
    %6579 = vmatprep.subr.bf16.mxu0 %v2291
    %6580 = vmatpush1.bf16.msra.mxu0 %v2290
    %6581 = vmatprep.subr.bf16.mxu0 %v2299
    %6582 = vmatpush1.bf16.msra.mxu0 %v2298
    %6583 = vmatprep.subr.bf16.mxu0 %v2307
    %6584 = vmatpush1.bf16.msra.mxu0 %v2306
    %6585 = vmatprep.subr.bf16.mxu0 %v2315
    %6586 = vmatpush1.bf16.msra.mxu0 %v2314
    %6587 = vmatprep.subr.bf16.mxu0 %v2323
    %6588 = vmatpush1.bf16.msra.mxu0 %v2322
    %6589 = vmatprep.subr.bf16.mxu0 %v2331
    %6590 = vmatpush1.bf16.msra.mxu0 %v2330
    %6591 = vmatprep.subr.bf16.mxu0 %v2339
    %6592 = vmatpush1.bf16.msra.mxu0 %v2338
    %6593 = vmatprep.subr.bf16.mxu0 %v2347
    %6594 = vmatpush1.bf16.msra.mxu0 %v2346
    %6595 = vmatprep.subr.bf16.mxu0 %v2355
    %6596 = vmatpush1.bf16.msra.mxu0 %v2354
    %6597 = vmatprep.subr.bf16.mxu0 %v2363
    %6598 = vmatpush1.bf16.msra.mxu0 %v2362
    %6599 = vmatprep.subr.bf16.mxu0 %v2371
    %6600 = vmatpush1.bf16.msra.mxu0 %v2370
    %6601 = vmatprep.mubr.bf16.mxu0 %v6050
    %6602 = vmatmul.mubr.bf16.gmra.mrb[0].mxu0 %v6049
    %v6603 = vpop.f32.mrb[0].mxu0
    %v6604 = vadd.f32 %v6563, %v6603
    %v6605 = vpop.f32.mrb[0].mxu0
    %v6606 = vadd.f32 %v6565, %v6605
    %v6607 = vpop.f32.mrb[0].mxu0
    %v6608 = vpop.f32.mrb[0].mxu0
    %6609 = vdwg.mxu0
    %v6610 = vxor.u32 %v6358, 2147483648
    %v6611 = vxor.u32 %v6360, 2147483648
    %v6612 = vxor.u32 %v6440, 2147483648
    %v6613 = vxor.u32 %v6442, 2147483648
    %v6614 = vxor.u32 %v6522, 2147483648
    %v6615 = vxor.u32 %v6524, 2147483648
    %v6616 = vmul.f32 %v6610, 1.442695
    %v6617 = vpow.pop %v6616
    %v6618 = vmul.f32 %v6611, 1.442695
    %v6619 = vpow.pop %v6618
    %v6620 = vmul.f32 %v6612, 1.442695
    %v6621 = vpow.pop %v6620
    %v6622 = vmul.f32 %v6613, 1.442695
    %v6623 = vpow.pop %v6622
    %v6624 = vmul.f32 %v6614, 1.442695
    %v6625 = vpow.pop %v6624
    %v6626 = vmul.f32 %v6615, 1.442695
    %v6627 = vpow.pop %v6626
    %v6628 = vadd.f32 %v6617, 1.0
    %v6629 = vadd.f32 %v6619, 1.0
    %v6630 = vadd.f32 %v6621, 1.0
    %v6631 = vadd.f32 %v6623, 1.0
    %v6632 = vadd.f32 %v6625, 1.0
    %v6633 = vadd.f32 %v6627, 1.0
    %v6634 = vrcp.pop %v6628
    %v6635 = vmul.f32 1.0, %v6634
    %v6636 = vrcp.pop %v6629
    %v6637 = vmul.f32 1.0, %v6636
    %v6638 = vrcp.pop %v6630
    %v6639 = vmul.f32 1.0, %v6638
    %v6640 = vrcp.pop %v6631
    %v6641 = vmul.f32 1.0, %v6640
    %v6642 = vrcp.pop %v6632
    %v6643 = vmul.f32 1.0, %v6642
    %v6644 = vrcp.pop %v6633
    %v6645 = vmul.f32 1.0, %v6644
    %v6646 = vtanh.pop %v6604
    %v6647 = vtanh.pop %v6606
    %v6648 = vmul.f32 %v6639, %v6043
    %v6649 = vmul.f32 %v6641, %v6044
    %v6650 = vmul.f32 %v6635, %v6646
    %v6651 = vmul.f32 %v6637, %v6647
    %v6652 = vadd.f32 %v6648, %v6650
    %v6653 = vadd.f32 %v6649, %v6651
    %v6654 = vtanh.pop %v6652
    %v6655 = vtanh.pop %v6653
    %v6656 = vmul.f32 %v6643, %v6654
    %v6657 = vmul.f32 %v6645, %v6655
    %v6658 = vpack.c.bf16 %v6656, %v6656
    %v6659 = vpack.c.bf16 %v6657, %v6657
    %s6660 = scalar_lea.vmem %s0, 448
    %v6661 = vld [vmem:[%s6660] sm:$0xff]
    %v6662 = vld [vmem:[%s6660 + $0x8] sm:$0xff]
    %v6663 = vld [vmem:[%s6660 + $0x10] sm:$0xff]
    %v6664 = vld [vmem:[%s6660 + $0x18] sm:$0xff]
    %v6665 = vld [vmem:[%s6660 + $0x20] sm:$0xff]
    %v6666 = vld [vmem:[%s6660 + $0x28] sm:$0xff]
    %v6667 = vld [vmem:[%s6660 + $0x30] sm:$0xff]
    %v6668 = vld [vmem:[%s6660 + $0x38] sm:$0xff]
    %6669 = vmatprep.subr.bf16.mxu0 %v830
    %6670 = vmatpush1.bf16.msra.mxu0 %v829
    %6671 = vmatprep.subr.bf16.mxu0 %v838
    %6672 = vmatpush1.bf16.msra.mxu0 %v837
    %6673 = vmatprep.subr.bf16.mxu0 %v846
    %6674 = vmatpush1.bf16.msra.mxu0 %v845
    %6675 = vmatprep.subr.bf16.mxu0 %v854
    %6676 = vmatpush1.bf16.msra.mxu0 %v853
    %6677 = vmatprep.subr.bf16.mxu0 %v862
    %6678 = vmatpush1.bf16.msra.mxu0 %v861
    %6679 = vmatprep.subr.bf16.mxu0 %v870
    %6680 = vmatpush1.bf16.msra.mxu0 %v869
    %6681 = vmatprep.subr.bf16.mxu0 %v878
    %6682 = vmatpush1.bf16.msra.mxu0 %v877
    %6683 = vmatprep.subr.bf16.mxu0 %v886
    %6684 = vmatpush1.bf16.msra.mxu0 %v885
    %6685 = vmatprep.subr.bf16.mxu0 %v894
    %6686 = vmatpush1.bf16.msra.mxu0 %v893
    %6687 = vmatprep.subr.bf16.mxu0 %v902
    %6688 = vmatpush1.bf16.msra.mxu0 %v901
    %6689 = vmatprep.subr.bf16.mxu0 %v910
    %6690 = vmatpush1.bf16.msra.mxu0 %v909
    %6691 = vmatprep.subr.bf16.mxu0 %v918
    %6692 = vmatpush1.bf16.msra.mxu0 %v917
    %6693 = vmatprep.subr.bf16.mxu0 %v926
    %6694 = vmatpush1.bf16.msra.mxu0 %v925
    %6695 = vmatprep.subr.bf16.mxu0 %v934
    %6696 = vmatpush1.bf16.msra.mxu0 %v933
    %6697 = vmatprep.subr.bf16.mxu0 %v942
    %6698 = vmatpush1.bf16.msra.mxu0 %v941
    %6699 = vmatprep.subr.bf16.mxu0 %v950
    %6700 = vmatpush1.bf16.msra.mxu0 %v949
    %6701 = vmatprep.mubr.bf16.mxu0 %v6281
    %6702 = vmatmul.mubr.bf16.gmra.mrb[0].mxu0 %v6280
    %v6703 = vpop.f32.mrb[0].mxu0
    %v6704 = vadd.f32 0.0, %v6703
    %v6705 = vpop.f32.mrb[0].mxu0
    %v6706 = vadd.f32 0.0, %v6705
    %v6707 = vpop.f32.mrb[0].mxu0
    %v6708 = vpop.f32.mrb[0].mxu0
    %6709 = vdwg.mxu0
    %6710 = vmatprep.subr.bf16.mxu0 %v832
    %6711 = vmatpush1.bf16.msra.mxu0 %v831
    %6712 = vmatprep.subr.bf16.mxu0 %v840
    %6713 = vmatpush1.bf16.msra.mxu0 %v839
    %6714 = vmatprep.subr.bf16.mxu0 %v848
    %6715 = vmatpush1.bf16.msra.mxu0 %v847
    %6716 = vmatprep.subr.bf16.mxu0 %v856
    %6717 = vmatpush1.bf16.msra.mxu0 %v855
    %6718 = vmatprep.subr.bf16.mxu0 %v864
    %6719 = vmatpush1.bf16.msra.mxu0 %v863
    %6720 = vmatprep.subr.bf16.mxu0 %v872
    %6721 = vmatpush1.bf16.msra.mxu0 %v871
    %6722 = vmatprep.subr.bf16.mxu0 %v880
    %6723 = vmatpush1.bf16.msra.mxu0 %v879
    %6724 = vmatprep.subr.bf16.mxu0 %v888
    %6725 = vmatpush1.bf16.msra.mxu0 %v887
    %6726 = vmatprep.subr.bf16.mxu0 %v896
    %6727 = vmatpush1.bf16.msra.mxu0 %v895
    %6728 = vmatprep.subr.bf16.mxu0 %v904
    %6729 = vmatpush1.bf16.msra.mxu0 %v903
    %6730 = vmatprep.subr.bf16.mxu0 %v912
    %6731 = vmatpush1.bf16.msra.mxu0 %v911
    %6732 = vmatprep.subr.bf16.mxu0 %v920
    %6733 = vmatpush1.bf16.msra.mxu0 %v919
    %6734 = vmatprep.subr.bf16.mxu0 %v928
    %6735 = vmatpush1.bf16.msra.mxu0 %v927
    %6736 = vmatprep.subr.bf16.mxu0 %v936
    %6737 = vmatpush1.bf16.msra.mxu0 %v935
    %6738 = vmatprep.subr.bf16.mxu0 %v944
    %6739 = vmatpush1.bf16.msra.mxu0 %v943
    %6740 = vmatprep.subr.bf16.mxu0 %v952
    %6741 = vmatpush1.bf16.msra.mxu0 %v951
    %6742 = vmatprep.mubr.bf16.mxu0 %v6281
    %6743 = vmatmul.mubr.bf16.gmra.mrb[0].mxu0 %v6280
    %v6744 = vpop.f32.mrb[0].mxu0
    %v6745 = vadd.f32 0.0, %v6744
    %v6746 = vpop.f32.mrb[0].mxu0
    %v6747 = vadd.f32 0.0, %v6746
    %v6748 = vpop.f32.mrb[0].mxu0
    %v6749 = vpop.f32.mrb[0].mxu0
    %6750 = vdwg.mxu0
    %6751 = vmatprep.subr.bf16.mxu0 %v834
    %6752 = vmatpush1.bf16.msra.mxu0 %v833
    %6753 = vmatprep.subr.bf16.mxu0 %v842
    %6754 = vmatpush1.bf16.msra.mxu0 %v841
    %6755 = vmatprep.subr.bf16.mxu0 %v850
    %6756 = vmatpush1.bf16.msra.mxu0 %v849
    %6757 = vmatprep.subr.bf16.mxu0 %v858
    %6758 = vmatpush1.bf16.msra.mxu0 %v857
    %6759 = vmatprep.subr.bf16.mxu0 %v866
    %6760 = vmatpush1.bf16.msra.mxu0 %v865
    %6761 = vmatprep.subr.bf16.mxu0 %v874
    %6762 = vmatpush1.bf16.msra.mxu0 %v873
    %6763 = vmatprep.subr.bf16.mxu0 %v882
    %6764 = vmatpush1.bf16.msra.mxu0 %v881
    %6765 = vmatprep.subr.bf16.mxu0 %v890
    %6766 = vmatpush1.bf16.msra.mxu0 %v889
    %6767 = vmatprep.subr.bf16.mxu0 %v898
    %6768 = vmatpush1.bf16.msra.mxu0 %v897
    %6769 = vmatprep.subr.bf16.mxu0 %v906
    %6770 = vmatpush1.bf16.msra.mxu0 %v905
    %6771 = vmatprep.subr.bf16.mxu0 %v914
    %6772 = vmatpush1.bf16.msra.mxu0 %v913
    %6773 = vmatprep.subr.bf16.mxu0 %v922
    %6774 = vmatpush1.bf16.msra.mxu0 %v921
    %6775 = vmatprep.subr.bf16.mxu0 %v930
    %6776 = vmatpush1.bf16.msra.mxu0 %v929
    %6777 = vmatprep.subr.bf16.mxu0 %v938
    %6778 = vmatpush1.bf16.msra.mxu0 %v937
    %6779 = vmatprep.subr.bf16.mxu0 %v946
    %6780 = vmatpush1.bf16.msra.mxu0 %v945
    %6781 = vmatprep.subr.bf16.mxu0 %v954
    %6782 = vmatpush1.bf16.msra.mxu0 %v953
    %6783 = vmatprep.mubr.bf16.mxu0 %v6281
    %6784 = vmatmul.mubr.bf16.gmra.mrb[0].mxu0 %v6280
    %v6785 = vpop.f32.mrb[0].mxu0
    %v6786 = vadd.f32 0.0, %v6785
    %v6787 = vpop.f32.mrb[0].mxu0
    %v6788 = vadd.f32 0.0, %v6787
    %v6789 = vpop.f32.mrb[0].mxu0
    %v6790 = vpop.f32.mrb[0].mxu0
    %6791 = vdwg.mxu0
    %6792 = vmatprep.subr.bf16.mxu0 %v836
    %6793 = vmatpush1.bf16.msra.mxu0 %v835
    %6794 = vmatprep.subr.bf16.mxu0 %v844
    %6795 = vmatpush1.bf16.msra.mxu0 %v843
    %6796 = vmatprep.subr.bf16.mxu0 %v852
    %6797 = vmatpush1.bf16.msra.mxu0 %v851
    %6798 = vmatprep.subr.bf16.mxu0 %v860
    %6799 = vmatpush1.bf16.msra.mxu0 %v859
    %6800 = vmatprep.subr.bf16.mxu0 %v868
    %6801 = vmatpush1.bf16.msra.mxu0 %v867
    %6802 = vmatprep.subr.bf16.mxu0 %v876
    %6803 = vmatpush1.bf16.msra.mxu0 %v875
    %6804 = vmatprep.subr.bf16.mxu0 %v884
    %6805 = vmatpush1.bf16.msra.mxu0 %v883
    %6806 = vmatprep.subr.bf16.mxu0 %v892
    %6807 = vmatpush1.bf16.msra.mxu0 %v891
    %6808 = vmatprep.subr.bf16.mxu0 %v900
    %6809 = vmatpush1.bf16.msra.mxu0 %v899
    %6810 = vmatprep.subr.bf16.mxu0 %v908
    %6811 = vmatpush1.bf16.msra.mxu0 %v907
    %6812 = vmatprep.subr.bf16.mxu0 %v916
    %6813 = vmatpush1.bf16.msra.mxu0 %v915
    %6814 = vmatprep.subr.bf16.mxu0 %v924
    %6815 = vmatpush1.bf16.msra.mxu0 %v923
    %6816 = vmatprep.subr.bf16.mxu0 %v932
    %6817 = vmatpush1.bf16.msra.mxu0 %v931
    %6818 = vmatprep.subr.bf16.mxu0 %v940
    %6819 = vmatpush1.bf16.msra.mxu0 %v939
    %6820 = vmatprep.subr.bf16.mxu0 %v948
    %6821 = vmatpush1.bf16.msra.mxu0 %v947
    %6822 = vmatprep.subr.bf16.mxu0 %v956
    %6823 = vmatpush1.bf16.msra.mxu0 %v955
    %6824 = vmatprep.mubr.bf16.mxu0 %v6281
    %6825 = vmatmul.mubr.bf16.gmra.mrb[0].mxu0 %v6280
    %v6826 = vpop.f32.mrb[0].mxu0
    %v6827 = vadd.f32 0.0, %v6826
    %v6828 = vpop.f32.mrb[0].mxu0
    %v6829 = vadd.f32 0.0, %v6828
    %v6830 = vpop.f32.mrb[0].mxu0
    %v6831 = vpop.f32.mrb[0].mxu0
    %6832 = vdwg.mxu0
    %v6833 = vadd.f32 %v6661, %v6704
    %v6834 = vadd.f32 %v6662, %v6706
    %v6835 = vadd.f32 %v6663, %v6745
    %v6836 = vadd.f32 %v6664, %v6747
    %v6837 = vadd.f32 %v6665, %v6786
    %v6838 = vadd.f32 %v6666, %v6788
    %v6839 = vadd.f32 %v6667, %v6827
    %v6840 = vadd.f32 %v6668, %v6829
    %v6841 = vxor.u32 %v6833, 2147483648
    %v6842 = vxor.u32 %v6834, 2147483648
    %v6843 = vxor.u32 %v6835, 2147483648
    %v6844 = vxor.u32 %v6836, 2147483648
    %v6845 = vxor.u32 %v6837, 2147483648
    %v6846 = vxor.u32 %v6838, 2147483648
    %v6847 = vmul.f32 %v6841, 1.442695
    %v6848 = vpow.pop %v6847
    %v6849 = vmul.f32 %v6842, 1.442695
    %v6850 = vpow.pop %v6849
    %v6851 = vmul.f32 %v6843, 1.442695
    %v6852 = vpow.pop %v6851
    %v6853 = vmul.f32 %v6844, 1.442695
    %v6854 = vpow.pop %v6853
    %v6855 = vmul.f32 %v6845, 1.442695
    %v6856 = vpow.pop %v6855
    %v6857 = vmul.f32 %v6846, 1.442695
    %v6858 = vpow.pop %v6857
    %v6859 = vadd.f32 %v6848, 1.0
    %v6860 = vadd.f32 %v6850, 1.0
    %v6861 = vadd.f32 %v6852, 1.0
    %v6862 = vadd.f32 %v6854, 1.0
    %v6863 = vadd.f32 %v6856, 1.0
    %v6864 = vadd.f32 %v6858, 1.0
    %v6865 = vrcp.pop %v6859
    %v6866 = vmul.f32 1.0, %v6865
    %v6867 = vrcp.pop %v6860
    %v6868 = vmul.f32 1.0, %v6867
    %v6869 = vrcp.pop %v6861
    %v6870 = vmul.f32 1.0, %v6869
    %v6871 = vrcp.pop %v6862
    %v6872 = vmul.f32 1.0, %v6871
    %v6873 = vrcp.pop %v6863
    %v6874 = vmul.f32 1.0, %v6873
    %v6875 = vrcp.pop %v6864
    %v6876 = vmul.f32 1.0, %v6875
    %v6877 = vtanh.pop %v6839
    %v6878 = vtanh.pop %v6840
    %v6879 = vmul.f32 %v6870, %v6274
    %v6880 = vmul.f32 %v6872, %v6275
    %v6881 = vmul.f32 %v6866, %v6877
    %v6882 = vmul.f32 %v6868, %v6878
    %v6883 = vadd.f32 %v6879, %v6881
    %v6884 = vadd.f32 %v6880, %v6882
    %v6885 = vtanh.pop %v6883
    %v6886 = vtanh.pop %v6884
    %v6887 = vmul.f32 %v6874, %v6885
    %v6888 = vmul.f32 %v6876, %v6886
    %v6889 = vpack.c.bf16 %v6887, %v6887
    %v6890 = vpack.c.bf16 %v6888, %v6888
    %6891 = vmatprep.subr.bf16.mxu0 %v2117
    %6892 = vmatpush1.bf16.msra.mxu0 %v2116
    %6893 = vmatprep.subr.bf16.mxu0 %v2125
    %6894 = vmatpush1.bf16.msra.mxu0 %v2124
    %6895 = vmatprep.subr.bf16.mxu0 %v2133
    %6896 = vmatpush1.bf16.msra.mxu0 %v2132
    %6897 = vmatprep.subr.bf16.mxu0 %v2141
    %6898 = vmatpush1.bf16.msra.mxu0 %v2140
    %6899 = vmatprep.subr.bf16.mxu0 %v2149
    %6900 = vmatpush1.bf16.msra.mxu0 %v2148
    %6901 = vmatprep.subr.bf16.mxu0 %v2157
    %6902 = vmatpush1.bf16.msra.mxu0 %v2156
    %6903 = vmatprep.subr.bf16.mxu0 %v2165
    %6904 = vmatpush1.bf16.msra.mxu0 %v2164
    %6905 = vmatprep.subr.bf16.mxu0 %v2173
    %6906 = vmatpush1.bf16.msra.mxu0 %v2172
    %6907 = vmatprep.subr.bf16.mxu0 %v2181
    %6908 = vmatpush1.bf16.msra.mxu0 %v2180
    %6909 = vmatprep.subr.bf16.mxu0 %v2189
    %6910 = vmatpush1.bf16.msra.mxu0 %v2188
    %6911 = vmatprep.subr.bf16.mxu0 %v2197
    %6912 = vmatpush1.bf16.msra.mxu0 %v2196
    %6913 = vmatprep.subr.bf16.mxu0 %v2205
    %6914 = vmatpush1.bf16.msra.mxu0 %v2204
    %6915 = vmatprep.subr.bf16.mxu0 %v2213
    %6916 = vmatpush1.bf16.msra.mxu0 %v2212
    %6917 = vmatprep.subr.bf16.mxu0 %v2221
    %6918 = vmatpush1.bf16.msra.mxu0 %v2220
    %6919 = vmatprep.subr.bf16.mxu0 %v2229
    %6920 = vmatpush1.bf16.msra.mxu0 %v2228
    %6921 = vmatprep.subr.bf16.mxu0 %v2237
    %6922 = vmatpush1.bf16.msra.mxu0 %v2236
    %6923 = vmatprep.mubr.bf16.mxu0 %v6890
    %6924 = vmatmul.mubr.bf16.gmra.mrb[0].mxu0 %v6889
    %v6925 = vpop.f32.mrb[0].mxu0
    %v6926 = vadd.f32 %v1311, %v6925
    %v6927 = vpop.f32.mrb[0].mxu0
    %v6928 = vadd.f32 %v1315, %v6927
    %v6929 = vpop.f32.mrb[0].mxu0
    %v6930 = vpop.f32.mrb[0].mxu0
    %6931 = vdwg.mxu0
    %6932 = vmatprep.subr.bf16.mxu0 %v2245
    %6933 = vmatpush1.bf16.msra.mxu0 %v2244
    %6934 = vmatprep.subr.bf16.mxu0 %v2253
    %6935 = vmatpush1.bf16.msra.mxu0 %v2252
    %6936 = vmatprep.subr.bf16.mxu0 %v2261
    %6937 = vmatpush1.bf16.msra.mxu0 %v2260
    %6938 = vmatprep.subr.bf16.mxu0 %v2269
    %6939 = vmatpush1.bf16.msra.mxu0 %v2268
    %6940 = vmatprep.subr.bf16.mxu0 %v2277
    %6941 = vmatpush1.bf16.msra.mxu0 %v2276
    %6942 = vmatprep.subr.bf16.mxu0 %v2285
    %6943 = vmatpush1.bf16.msra.mxu0 %v2284
    %6944 = vmatprep.subr.bf16.mxu0 %v2293
    %6945 = vmatpush1.bf16.msra.mxu0 %v2292
    %6946 = vmatprep.subr.bf16.mxu0 %v2301
    %6947 = vmatpush1.bf16.msra.mxu0 %v2300
    %6948 = vmatprep.subr.bf16.mxu0 %v2309
    %6949 = vmatpush1.bf16.msra.mxu0 %v2308
    %6950 = vmatprep.subr.bf16.mxu0 %v2317
    %6951 = vmatpush1.bf16.msra.mxu0 %v2316
    %6952 = vmatprep.subr.bf16.mxu0 %v2325
    %6953 = vmatpush1.bf16.msra.mxu0 %v2324
    %6954 = vmatprep.subr.bf16.mxu0 %v2333
    %6955 = vmatpush1.bf16.msra.mxu0 %v2332
    %6956 = vmatprep.subr.bf16.mxu0 %v2341
    %6957 = vmatpush1.bf16.msra.mxu0 %v2340
    %6958 = vmatprep.subr.bf16.mxu0 %v2349
    %6959 = vmatpush1.bf16.msra.mxu0 %v2348
    %6960 = vmatprep.subr.bf16.mxu0 %v2357
    %6961 = vmatpush1.bf16.msra.mxu0 %v2356
    %6962 = vmatprep.subr.bf16.mxu0 %v2365
    %6963 = vmatpush1.bf16.msra.mxu0 %v2364
    %6964 = vmatprep.mubr.bf16.mxu0 %v6659
    %6965 = vmatmul.mubr.bf16.gmra.mrb[0].mxu0 %v6658
    %v6966 = vpop.f32.mrb[0].mxu0
    %v6967 = vadd.f32 %v6926, %v6966
    %v6968 = vpop.f32.mrb[0].mxu0
    %v6969 = vadd.f32 %v6928, %v6968
    %v6970 = vpop.f32.mrb[0].mxu0
    %v6971 = vpop.f32.mrb[0].mxu0
    %6972 = vdwg.mxu0
    %6973 = vmatprep.subr.bf16.mxu0 %v2119
    %6974 = vmatpush1.bf16.msra.mxu0 %v2118
    %6975 = vmatprep.subr.bf16.mxu0 %v2127
    %6976 = vmatpush1.bf16.msra.mxu0 %v2126
    %6977 = vmatprep.subr.bf16.mxu0 %v2135
    %6978 = vmatpush1.bf16.msra.mxu0 %v2134
    %6979 = vmatprep.subr.bf16.mxu0 %v2143
    %6980 = vmatpush1.bf16.msra.mxu0 %v2142
    %6981 = vmatprep.subr.bf16.mxu0 %v2151
    %6982 = vmatpush1.bf16.msra.mxu0 %v2150
    %6983 = vmatprep.subr.bf16.mxu0 %v2159
    %6984 = vmatpush1.bf16.msra.mxu0 %v2158
    %6985 = vmatprep.subr.bf16.mxu0 %v2167
    %6986 = vmatpush1.bf16.msra.mxu0 %v2166
    %6987 = vmatprep.subr.bf16.mxu0 %v2175
    %6988 = vmatpush1.bf16.msra.mxu0 %v2174
    %6989 = vmatprep.subr.bf16.mxu0 %v2183
    %6990 = vmatpush1.bf16.msra.mxu0 %v2182
    %6991 = vmatprep.subr.bf16.mxu0 %v2191
    %6992 = vmatpush1.bf16.msra.mxu0 %v2190
    %6993 = vmatprep.subr.bf16.mxu0 %v2199
    %6994 = vmatpush1.bf16.msra.mxu0 %v2198
    %6995 = vmatprep.subr.bf16.mxu0 %v2207
    %6996 = vmatpush1.bf16.msra.mxu0 %v2206
    %6997 = vmatprep.subr.bf16.mxu0 %v2215
    %6998 = vmatpush1.bf16.msra.mxu0 %v2214
    %6999 = vmatprep.subr.bf16.mxu0 %v2223
    %7000 = vmatpush1.bf16.msra.mxu0 %v2222
    %7001 = vmatprep.subr.bf16.mxu0 %v2231
    %7002 = vmatpush1.bf16.msra.mxu0 %v2230
    %7003 = vmatprep.subr.bf16.mxu0 %v2239
    %7004 = vmatpush1.bf16.msra.mxu0 %v2238
    %7005 = vmatprep.mubr.bf16.mxu0 %v6890
    %7006 = vmatmul.mubr.bf16.gmra.mrb[0].mxu0 %v6889
    %v7007 = vpop.f32.mrb[0].mxu0
    %v7008 = vadd.f32 %v1319, %v7007
    %v7009 = vpop.f32.mrb[0].mxu0
    %v7010 = vadd.f32 %v1323, %v7009
    %v7011 = vpop.f32.mrb[0].mxu0
    %v7012 = vpop.f32.mrb[0].mxu0
    %7013 = vdwg.mxu0
    %7014 = vmatprep.subr.bf16.mxu0 %v2247
    %7015 = vmatpush1.bf16.msra.mxu0 %v2246
    %7016 = vmatprep.subr.bf16.mxu0 %v2255
    %7017 = vmatpush1.bf16.msra.mxu0 %v2254
    %7018 = vmatprep.subr.bf16.mxu0 %v2263
    %7019 = vmatpush1.bf16.msra.mxu0 %v2262
    %7020 = vmatprep.subr.bf16.mxu0 %v2271
    %7021 = vmatpush1.bf16.msra.mxu0 %v2270
    %7022 = vmatprep.subr.bf16.mxu0 %v2279
    %7023 = vmatpush1.bf16.msra.mxu0 %v2278
    %7024 = vmatprep.subr.bf16.mxu0 %v2287
    %7025 = vmatpush1.bf16.msra.mxu0 %v2286
    %7026 = vmatprep.subr.bf16.mxu0 %v2295
    %7027 = vmatpush1.bf16.msra.mxu0 %v2294
    %7028 = vmatprep.subr.bf16.mxu0 %v2303
    %7029 = vmatpush1.bf16.msra.mxu0 %v2302
    %7030 = vmatprep.subr.bf16.mxu0 %v2311
    %7031 = vmatpush1.bf16.msra.mxu0 %v2310
    %7032 = vmatprep.subr.bf16.mxu0 %v2319
    %7033 = vmatpush1.bf16.msra.mxu0 %v2318
    %7034 = vmatprep.subr.bf16.mxu0 %v2327
    %7035 = vmatpush1.bf16.msra.mxu0 %v2326
    %7036 = vmatprep.subr.bf16.mxu0 %v2335
    %7037 = vmatpush1.bf16.msra.mxu0 %v2334
    %7038 = vmatprep.subr.bf16.mxu0 %v2343
    %7039 = vmatpush1.bf16.msra.mxu0 %v2342
    %7040 = vmatprep.subr.bf16.mxu0 %v2351
    %7041 = vmatpush1.bf16.msra.mxu0 %v2350
    %7042 = vmatprep.subr.bf16.mxu0 %v2359
    %7043 = vmatpush1.bf16.msra.mxu0 %v2358
    %7044 = vmatprep.subr.bf16.mxu0 %v2367
    %7045 = vmatpush1.bf16.msra.mxu0 %v2366
    %7046 = vmatprep.mubr.bf16.mxu0 %v6659
    %7047 = vmatmul.mubr.bf16.gmra.mrb[0].mxu0 %v6658
    %v7048 = vpop.f32.mrb[0].mxu0
    %v7049 = vadd.f32 %v7008, %v7048
    %v7050 = vpop.f32.mrb[0].mxu0
    %v7051 = vadd.f32 %v7010, %v7050
    %v7052 = vpop.f32.mrb[0].mxu0
    %v7053 = vpop.f32.mrb[0].mxu0
    %7054 = vdwg.mxu0
    %7055 = vmatprep.subr.bf16.mxu0 %v2121
    %7056 = vmatpush1.bf16.msra.mxu0 %v2120
    %7057 = vmatprep.subr.bf16.mxu0 %v2129
    %7058 = vmatpush1.bf16.msra.mxu0 %v2128
    %7059 = vmatprep.subr.bf16.mxu0 %v2137
    %7060 = vmatpush1.bf16.msra.mxu0 %v2136
    %7061 = vmatprep.subr.bf16.mxu0 %v2145
    %7062 = vmatpush1.bf16.msra.mxu0 %v2144
    %7063 = vmatprep.subr.bf16.mxu0 %v2153
    %7064 = vmatpush1.bf16.msra.mxu0 %v2152
    %7065 = vmatprep.subr.bf16.mxu0 %v2161
    %7066 = vmatpush1.bf16.msra.mxu0 %v2160
    %7067 = vmatprep.subr.bf16.mxu0 %v2169
    %7068 = vmatpush1.bf16.msra.mxu0 %v2168
    %7069 = vmatprep.subr.bf16.mxu0 %v2177
    %7070 = vmatpush1.bf16.msra.mxu0 %v2176
    %7071 = vmatprep.subr.bf16.mxu0 %v2185
    %7072 = vmatpush1.bf16.msra.mxu0 %v2184
    %7073 = vmatprep.subr.bf16.mxu0 %v2193
    %7074 = vmatpush1.bf16.msra.mxu0 %v2192
    %7075 = vmatprep.subr.bf16.mxu0 %v2201
    %7076 = vmatpush1.bf16.msra.mxu0 %v2200
    %7077 = vmatprep.subr.bf16.mxu0 %v2209
    %7078 = vmatpush1.bf16.msra.mxu0 %v2208
    %7079 = vmatprep.subr.bf16.mxu0 %v2217
    %7080 = vmatpush1.bf16.msra.mxu0 %v2216
    %7081 = vmatprep.subr.bf16.mxu0 %v2225
    %7082 = vmatpush1.bf16.msra.mxu0 %v2224
    %7083 = vmatprep.subr.bf16.mxu0 %v2233
    %7084 = vmatpush1.bf16.msra.mxu0 %v2232
    %7085 = vmatprep.subr.bf16.mxu0 %v2241
    %7086 = vmatpush1.bf16.msra.mxu0 %v2240
    %7087 = vmatprep.mubr.bf16.mxu0 %v6890
    %7088 = vmatmul.mubr.bf16.gmra.mrb[0].mxu0 %v6889
    %v7089 = vpop.f32.mrb[0].mxu0
    %v7090 = vadd.f32 %v1327, %v7089
    %v7091 = vpop.f32.mrb[0].mxu0
    %v7092 = vadd.f32 %v1331, %v7091
    %v7093 = vpop.f32.mrb[0].mxu0
    %v7094 = vpop.f32.mrb[0].mxu0
    %7095 = vdwg.mxu0
    %7096 = vmatprep.subr.bf16.mxu0 %v2249
    %7097 = vmatpush1.bf16.msra.mxu0 %v2248
    %7098 = vmatprep.subr.bf16.mxu0 %v2257
    %7099 = vmatpush1.bf16.msra.mxu0 %v2256
    %7100 = vmatprep.subr.bf16.mxu0 %v2265
    %7101 = vmatpush1.bf16.msra.mxu0 %v2264
    %7102 = vmatprep.subr.bf16.mxu0 %v2273
    %7103 = vmatpush1.bf16.msra.mxu0 %v2272
    %7104 = vmatprep.subr.bf16.mxu0 %v2281
    %7105 = vmatpush1.bf16.msra.mxu0 %v2280
    %7106 = vmatprep.subr.bf16.mxu0 %v2289
    %7107 = vmatpush1.bf16.msra.mxu0 %v2288
    %7108 = vmatprep.subr.bf16.mxu0 %v2297
    %7109 = vmatpush1.bf16.msra.mxu0 %v2296
    %7110 = vmatprep.subr.bf16.mxu0 %v2305
    %7111 = vmatpush1.bf16.msra.mxu0 %v2304
    %7112 = vmatprep.subr.bf16.mxu0 %v2313
    %7113 = vmatpush1.bf16.msra.mxu0 %v2312
    %7114 = vmatprep.subr.bf16.mxu0 %v2321
    %7115 = vmatpush1.bf16.msra.mxu0 %v2320
    %7116 = vmatprep.subr.bf16.mxu0 %v2329
    %7117 = vmatpush1.bf16.msra.mxu0 %v2328
    %7118 = vmatprep.subr.bf16.mxu0 %v2337
    %7119 = vmatpush1.bf16.msra.mxu0 %v2336
    %7120 = vmatprep.subr.bf16.mxu0 %v2345
    %7121 = vmatpush1.bf16.msra.mxu0 %v2344
    %7122 = vmatprep.subr.bf16.mxu0 %v2353
    %7123 = vmatpush1.bf16.msra.mxu0 %v2352
    %7124 = vmatprep.subr.bf16.mxu0 %v2361
    %7125 = vmatpush1.bf16.msra.mxu0 %v2360
    %7126 = vmatprep.subr.bf16.mxu0 %v2369
    %7127 = vmatpush1.bf16.msra.mxu0 %v2368
    %7128 = vmatprep.mubr.bf16.mxu0 %v6659
    %7129 = vmatmul.mubr.bf16.gmra.mrb[0].mxu0 %v6658
    %v7130 = vpop.f32.mrb[0].mxu0
    %v7131 = vadd.f32 %v7090, %v7130
    %v7132 = vpop.f32.mrb[0].mxu0
    %v7133 = vadd.f32 %v7092, %v7132
    %v7134 = vpop.f32.mrb[0].mxu0
    %v7135 = vpop.f32.mrb[0].mxu0
    %7136 = vdwg.mxu0
    %7137 = vmatprep.subr.bf16.mxu0 %v2123
    %7138 = vmatpush1.bf16.msra.mxu0 %v2122
    %7139 = vmatprep.subr.bf16.mxu0 %v2131
    %7140 = vmatpush1.bf16.msra.mxu0 %v2130
    %7141 = vmatprep.subr.bf16.mxu0 %v2139
    %7142 = vmatpush1.bf16.msra.mxu0 %v2138
    %7143 = vmatprep.subr.bf16.mxu0 %v2147
    %7144 = vmatpush1.bf16.msra.mxu0 %v2146
    %7145 = vmatprep.subr.bf16.mxu0 %v2155
    %7146 = vmatpush1.bf16.msra.mxu0 %v2154
    %7147 = vmatprep.subr.bf16.mxu0 %v2163
    %7148 = vmatpush1.bf16.msra.mxu0 %v2162
    %7149 = vmatprep.subr.bf16.mxu0 %v2171
    %7150 = vmatpush1.bf16.msra.mxu0 %v2170
    %7151 = vmatprep.subr.bf16.mxu0 %v2179
    %7152 = vmatpush1.bf16.msra.mxu0 %v2178
    %7153 = vmatprep.subr.bf16.mxu0 %v2187
    %7154 = vmatpush1.bf16.msra.mxu0 %v2186
    %7155 = vmatprep.subr.bf16.mxu0 %v2195
    %7156 = vmatpush1.bf16.msra.mxu0 %v2194
    %7157 = vmatprep.subr.bf16.mxu0 %v2203
    %7158 = vmatpush1.bf16.msra.mxu0 %v2202
    %7159 = vmatprep.subr.bf16.mxu0 %v2211
    %7160 = vmatpush1.bf16.msra.mxu0 %v2210
    %7161 = vmatprep.subr.bf16.mxu0 %v2219
    %7162 = vmatpush1.bf16.msra.mxu0 %v2218
    %7163 = vmatprep.subr.bf16.mxu0 %v2227
    %7164 = vmatpush1.bf16.msra.mxu0 %v2226
    %7165 = vmatprep.subr.bf16.mxu0 %v2235
    %7166 = vmatpush1.bf16.msra.mxu0 %v2234
    %7167 = vmatprep.subr.bf16.mxu0 %v2243
    %7168 = vmatpush1.bf16.msra.mxu0 %v2242
    %7169 = vmatprep.mubr.bf16.mxu0 %v6890
    %7170 = vmatmul.mubr.bf16.gmra.mrb[0].mxu0 %v6889
    %v7171 = vpop.f32.mrb[0].mxu0
    %v7172 = vadd.f32 %v1335, %v7171
    %v7173 = vpop.f32.mrb[0].mxu0
    %v7174 = vadd.f32 %v1339, %v7173
    %v7175 = vpop.f32.mrb[0].mxu0
    %v7176 = vpop.f32.mrb[0].mxu0
    %7177 = vdwg.mxu0
    %7178 = vmatprep.subr.bf16.mxu0 %v2251
    %7179 = vmatpush1.bf16.msra.mxu0 %v2250
    %7180 = vmatprep.subr.bf16.mxu0 %v2259
    %7181 = vmatpush1.bf16.msra.mxu0 %v2258
    %7182 = vmatprep.subr.bf16.mxu0 %v2267
    %7183 = vmatpush1.bf16.msra.mxu0 %v2266
    %7184 = vmatprep.subr.bf16.mxu0 %v2275
    %7185 = vmatpush1.bf16.msra.mxu0 %v2274
    %7186 = vmatprep.subr.bf16.mxu0 %v2283
    %7187 = vmatpush1.bf16.msra.mxu0 %v2282
    %7188 = vmatprep.subr.bf16.mxu0 %v2291
    %7189 = vmatpush1.bf16.msra.mxu0 %v2290
    %7190 = vmatprep.subr.bf16.mxu0 %v2299
    %7191 = vmatpush1.bf16.msra.mxu0 %v2298
    %7192 = vmatprep.subr.bf16.mxu0 %v2307
    %7193 = vmatpush1.bf16.msra.mxu0 %v2306
    %7194 = vmatprep.subr.bf16.mxu0 %v2315
    %7195 = vmatpush1.bf16.msra.mxu0 %v2314
    %7196 = vmatprep.subr.bf16.mxu0 %v2323
    %7197 = vmatpush1.bf16.msra.mxu0 %v2322
    %7198 = vmatprep.subr.bf16.mxu0 %v2331
    %7199 = vmatpush1.bf16.msra.mxu0 %v2330
    %7200 = vmatprep.subr.bf16.mxu0 %v2339
    %7201 = vmatpush1.bf16.msra.mxu0 %v2338
    %7202 = vmatprep.subr.bf16.mxu0 %v2347
    %7203 = vmatpush1.bf16.msra.mxu0 %v2346
    %7204 = vmatprep.subr.bf16.mxu0 %v2355
    %7205 = vmatpush1.bf16.msra.mxu0 %v2354
    %7206 = vmatprep.subr.bf16.mxu0 %v2363
    %7207 = vmatpush1.bf16.msra.mxu0 %v2362
    %7208 = vmatprep.subr.bf16.mxu0 %v2371
    %7209 = vmatpush1.bf16.msra.mxu0 %v2370
    %7210 = vmatprep.mubr.bf16.mxu0 %v6659
    %7211 = vmatmul.mubr.bf16.gmra.mrb[0].mxu0 %v6658
    %v7212 = vpop.f32.mrb[0].mxu0
    %v7213 = vadd.f32 %v7172, %v7212
    %v7214 = vpop.f32.mrb[0].mxu0
    %v7215 = vadd.f32 %v7174, %v7214
    %v7216 = vpop.f32.mrb[0].mxu0
    %v7217 = vpop.f32.mrb[0].mxu0
    %7218 = vdwg.mxu0
    %v7219 = vxor.u32 %v6967, 2147483648
    %v7220 = vxor.u32 %v6969, 2147483648
    %v7221 = vxor.u32 %v7049, 2147483648
    %v7222 = vxor.u32 %v7051, 2147483648
    %v7223 = vxor.u32 %v7131, 2147483648
    %v7224 = vxor.u32 %v7133, 2147483648
    %v7225 = vmul.f32 %v7219, 1.442695
    %v7226 = vpow.pop %v7225
    %v7227 = vmul.f32 %v7220, 1.442695
    %v7228 = vpow.pop %v7227
    %v7229 = vmul.f32 %v7221, 1.442695
    %v7230 = vpow.pop %v7229
    %v7231 = vmul.f32 %v7222, 1.442695
    %v7232 = vpow.pop %v7231
    %v7233 = vmul.f32 %v7223, 1.442695
    %v7234 = vpow.pop %v7233
    %v7235 = vmul.f32 %v7224, 1.442695
    %v7236 = vpow.pop %v7235
    %v7237 = vadd.f32 %v7226, 1.0
    %v7238 = vadd.f32 %v7228, 1.0
    %v7239 = vadd.f32 %v7230, 1.0
    %v7240 = vadd.f32 %v7232, 1.0
    %v7241 = vadd.f32 %v7234, 1.0
    %v7242 = vadd.f32 %v7236, 1.0
    %v7243 = vrcp.pop %v7237
    %v7244 = vmul.f32 1.0, %v7243
    %v7245 = vrcp.pop %v7238
    %v7246 = vmul.f32 1.0, %v7245
    %v7247 = vrcp.pop %v7239
    %v7248 = vmul.f32 1.0, %v7247
    %v7249 = vrcp.pop %v7240
    %v7250 = vmul.f32 1.0, %v7249
    %v7251 = vrcp.pop %v7241
    %v7252 = vmul.f32 1.0, %v7251
    %v7253 = vrcp.pop %v7242
    %v7254 = vmul.f32 1.0, %v7253
    %v7255 = vtanh.pop %v7213
    %v7256 = vtanh.pop %v7215
    %v7257 = vmul.f32 %v7248, %v6652
    %v7258 = vmul.f32 %v7250, %v6653
    %v7259 = vmul.f32 %v7244, %v7255
    %v7260 = vmul.f32 %v7246, %v7256
    %v7261 = vadd.f32 %v7257, %v7259
    %v7262 = vadd.f32 %v7258, %v7260
    %v7263 = vtanh.pop %v7261
    %v7264 = vtanh.pop %v7262
    %v7265 = vmul.f32 %v7252, %v7263
    %v7266 = vmul.f32 %v7254, %v7264
    %v7267 = vpack.c.bf16 %v7265, %v7265
    %v7268 = vpack.c.bf16 %v7266, %v7266
    %v7269 = vld [vmem:[#allocation4] sm:$0xf]
    %v7270 = vld [vmem:[#allocation4 + $0x4] sm:$0xf]
    %v7271 = vld [vmem:[#allocation4 + $0x8] sm:$0xf]
    %v7272 = vld [vmem:[#allocation4 + $0xc] sm:$0xf]
    %v7273 = vld [vmem:[#allocation4 + $0x10] sm:$0xf]
    %v7274 = vld [vmem:[#allocation4 + $0x14] sm:$0xf]
    %v7275 = vld [vmem:[#allocation4 + $0x18] sm:$0xf]
    %v7276 = vld [vmem:[#allocation4 + $0x1c] sm:$0xf]
    %v7277 = vld [vmem:[#allocation4 + $0x20] sm:$0xf]
    %v7278 = vld [vmem:[#allocation4 + $0x24] sm:$0xf]
    %v7279 = vld [vmem:[#allocation4 + $0x28] sm:$0xf]
    %v7280 = vld [vmem:[#allocation4 + $0x2c] sm:$0xf]
    %v7281 = vld [vmem:[#allocation4 + $0x30] sm:$0xf]
    %v7282 = vld [vmem:[#allocation4 + $0x34] sm:$0xf]
    %v7283 = vld [vmem:[#allocation4 + $0x38] sm:$0xf]
    %v7284 = vld [vmem:[#allocation4 + $0x3c] sm:$0xf]
    %v7285 = vld [vmem:[#allocation4 + $0x40] sm:$0xf]
    %v7286 = vld [vmem:[#allocation4 + $0x44] sm:$0xf]
    %v7287 = vld [vmem:[#allocation4 + $0x48] sm:$0xf]
    %v7288 = vld [vmem:[#allocation4 + $0x4c] sm:$0xf]
    %v7289 = vld [vmem:[#allocation4 + $0x50] sm:$0xf]
    %v7290 = vld [vmem:[#allocation4 + $0x54] sm:$0xf]
    %v7291 = vld [vmem:[#allocation4 + $0x58] sm:$0xf]
    %v7292 = vld [vmem:[#allocation4 + $0x5c] sm:$0xf]
    %v7293 = vld [vmem:[#allocation4 + $0x60] sm:$0xf]
    %v7294 = vld [vmem:[#allocation4 + $0x64] sm:$0xf]
    %v7295 = vld [vmem:[#allocation4 + $0x68] sm:$0xf]
    %v7296 = vld [vmem:[#allocation4 + $0x6c] sm:$0xf]
    %v7297 = vld [vmem:[#allocation4 + $0x70] sm:$0xf]
    %v7298 = vld [vmem:[#allocation4 + $0x74] sm:$0xf]
    %v7299 = vld [vmem:[#allocation4 + $0x78] sm:$0xf]
    %v7300 = vld [vmem:[#allocation4 + $0x7c] sm:$0xf]
    %v7301 = vld [vmem:[%s5] sm:$0x1]
    %v7303 = vlaneseq
    %v7304 = vshrl.u32 %v7303, 7
    %v7305 = vsub.s32 0, %v7304
    %v7306 = vrot.slane %v7301, %v7305
    %v7340 = vunpack.c.l.b16 %v7269
    %v7341 = vunpack.c.l.b16 %v7270
    %v7342 = vunpack.c.l.b16 %v7271
    %v7343 = vunpack.c.l.b16 %v7272
    %v7344 = vunpack.c.l.b16 %v7273
    %v7345 = vunpack.c.l.b16 %v7274
    %v7346 = vunpack.c.l.b16 %v7275
    %v7347 = vunpack.c.l.b16 %v7276
    %v7348 = vunpack.c.l.b16 %v7277
    %v7349 = vunpack.c.l.b16 %v7278
    %v7350 = vunpack.c.l.b16 %v7279
    %v7351 = vunpack.c.l.b16 %v7280
    %v7352 = vunpack.c.l.b16 %v7281
    %v7353 = vunpack.c.l.b16 %v7282
    %v7354 = vunpack.c.l.b16 %v7283
    %v7355 = vunpack.c.l.b16 %v7284
    %v7356 = vunpack.c.l.b16 %v7285
    %v7357 = vunpack.c.l.b16 %v7286
    %v7358 = vunpack.c.l.b16 %v7287
    %v7359 = vunpack.c.l.b16 %v7288
    %v7360 = vunpack.c.l.b16 %v7289
    %v7361 = vunpack.c.l.b16 %v7290
    %v7362 = vunpack.c.l.b16 %v7291
    %v7363 = vunpack.c.l.b16 %v7292
    %v7364 = vunpack.c.l.b16 %v7293
    %v7365 = vunpack.c.l.b16 %v7294
    %v7366 = vunpack.c.l.b16 %v7295
    %v7367 = vunpack.c.l.b16 %v7296
    %v7368 = vunpack.c.l.b16 %v7297
    %v7369 = vunpack.c.l.b16 %v7298
    %v7370 = vunpack.c.l.b16 %v7299
    %v7371 = vunpack.c.l.b16 %v7300
    %v7372 = vpack.c.b16 %v7341, %v7340
    %v7373 = vpack.c.b16 %v7343, %v7342
    %v7374 = vpack.c.b16 %v7345, %v7344
    %v7375 = vpack.c.b16 %v7347, %v7346
    %v7376 = vpack.c.b16 %v7349, %v7348
    %v7377 = vpack.c.b16 %v7351, %v7350
    %v7378 = vpack.c.b16 %v7353, %v7352
    %v7379 = vpack.c.b16 %v7355, %v7354
    %v7380 = vpack.c.b16 %v7357, %v7356
    %v7381 = vpack.c.b16 %v7359, %v7358
    %v7382 = vpack.c.b16 %v7361, %v7360
    %v7383 = vpack.c.b16 %v7363, %v7362
    %v7384 = vpack.c.b16 %v7365, %v7364
    %v7385 = vpack.c.b16 %v7367, %v7366
    %v7386 = vpack.c.b16 %v7369, %v7368
    %v7387 = vpack.c.b16 %v7371, %v7370
    %7404 = vmatprep.subr.bf16.mxu0 0
    %7405 = vmatpush1.bf16.msra.mxu0 %v7372
    %7406 = vmatprep.subr.bf16.mxu0 0
    %7407 = vmatpush1.bf16.msra.mxu0 %v7373
    %7408 = vmatprep.subr.bf16.mxu0 0
    %7409 = vmatpush1.bf16.msra.mxu0 %v7374
    %7410 = vmatprep.subr.bf16.mxu0 0
    %7411 = vmatpush1.bf16.msra.mxu0 %v7375
    %7412 = vmatprep.subr.bf16.mxu0 0
    %7413 = vmatpush1.bf16.msra.mxu0 %v7376
    %7414 = vmatprep.subr.bf16.mxu0 0
    %7415 = vmatpush1.bf16.msra.mxu0 %v7377
    %7416 = vmatprep.subr.bf16.mxu0 0
    %7417 = vmatpush1.bf16.msra.mxu0 %v7378
    %7418 = vmatprep.subr.bf16.mxu0 0
    %7419 = vmatpush1.bf16.msra.mxu0 %v7379
    %7420 = vmatprep.subr.bf16.mxu0 0
    %7421 = vmatpush1.bf16.msra.mxu0 %v7380
    %7422 = vmatprep.subr.bf16.mxu0 0
    %7423 = vmatpush1.bf16.msra.mxu0 %v7381
    %7424 = vmatprep.subr.bf16.mxu0 0
    %7425 = vmatpush1.bf16.msra.mxu0 %v7382
    %7426 = vmatprep.subr.bf16.mxu0 0
    %7427 = vmatpush1.bf16.msra.mxu0 %v7383
    %7428 = vmatprep.subr.bf16.mxu0 0
    %7429 = vmatpush1.bf16.msra.mxu0 %v7384
    %7430 = vmatprep.subr.bf16.mxu0 0
    %7431 = vmatpush1.bf16.msra.mxu0 %v7385
    %7432 = vmatprep.subr.bf16.mxu0 0
    %7433 = vmatpush1.bf16.msra.mxu0 %v7386
    %7434 = vmatprep.subr.bf16.mxu0 0
    %7435 = vmatpush1.bf16.msra.mxu0 %v7387
    %7436 = vmatprep.mubr.bf16.mxu0 %v7268
    %7437 = vmatmul.mubr.bf16.gmra.mrb[0].mxu0 %v7267
    %v7438 = vpop.f32.mrb[0].mxu0
    %v7439 = vadd.f32 %v7306, %v7438
    %v7440 = vpop.f32.mrb[0].mxu0
    %v7441 = vpop.f32.mrb[0].mxu0
    %v7442 = vpop.f32.mrb[0].mxu0
    %7443 = vdwg.mxu0
    %7444 = vst [vmem:[%s6] sm:$0xff] %v7439
    // Predicated region
    $region34: #{char_lstm_forward.1} parent=1 // pred_check
      _
    $region35: #{char_lstm_forward.1} parent=1 // pred_check_branch
      %7446 = sbr.rel (0) target = $region37
    $region36: #{char_lstm_forward.1} parent=1 // pred_region
      _
    $region37: #{char_lstm_forward.1} parent=1 // pred_fallthru
      _
    // Predicated region
    $region38: #{char_lstm_forward.1} parent=1 // pred_check
      _
    $region39: #{char_lstm_forward.1} parent=1 // pred_check_branch
      %7448 = sbr.rel (0) target = $region41
    $region40: #{char_lstm_forward.1} parent=1 // pred_region
      _
    $region41: #{char_lstm_forward.1} parent=1 // pred_fallthru
      _
    %7449 = vsyncpa [#allocation3], 1
    %7450 = vsyncpa [#allocation5], 1

</llo_original>
